<compile_context>
chip_gen: v6e
topology: v6e:2x2x1
jax: 0.10.0
libtpu: 0.0.40
codegen_flags: <defaults>
</compile_context>

<pallas_src>
import functools
import math

import jax
import jax.numpy as jnp
from jax import lax
from jax.experimental import pallas as pl
from jax.experimental.pallas import tpu as pltpu


def _round_up(x, m):
    return (x + m - 1) // m * m


_VMEM_LIMIT = 32 * 1024 * 1024  # safe on v5e/v6e (128 MiB) and v7x (64 MiB)


# ----------------------------------------------------------------------------
# Tiled matmul + bias + fused activation (bf16 operands, f32 accumulation)
# ----------------------------------------------------------------------------
def _mm_kernel(a_ref, b_ref, bias_ref, o_ref, acc_ref, *, activation):
    @pl.when(pl.program_id(2) == 0)
    def _():
        acc_ref[...] = jnp.zeros_like(acc_ref)

    acc_ref[...] += jnp.dot(a_ref[...], b_ref[...],
                            preferred_element_type=jnp.float32)

    @pl.when(pl.program_id(2) == pl.num_programs(2) - 1)
    def _():
        out = acc_ref[...] + bias_ref[...]          # (1, tn) broadcast
        if activation == "relu":
            out = jnp.maximum(out, 0.0)
        elif activation == "sigmoid":
            out = jax.nn.sigmoid(out)
        o_ref[...] = out


def matmul_bias(a, b, bias, activation="none"):
    """a:(M,K) @ b:(K,N) + bias:(N,) with optional fused activation.

    Pads M/K/N so all blocks are (8,128)-aligned and the output last dim is a
    multiple of 128 (lane-dense stores).  Operands are cast to bf16; the MXU
    accumulates in f32.
    """
    M, K = a.shape
    _, N = b.shape

    # ---- tile / pad choices -------------------------------------------------
    if M > 512:
        Mp, tm = _round_up(M, 256), 256
    else:
        Mp = _round_up(M, 8)
        tm = Mp
    if K > 512:
        Kp = _round_up(K, 128)
        tk = 512 if Kp % 512 == 0 else (256 if Kp % 256 == 0 else 128)
    else:
        Kp, tk = K, K                       # single K tile (full-dim block)
    Np = _round_up(N, 128)
    tn = 512 if Np % 512 == 0 else (256 if Np % 256 == 0 else 128)

    a_p = jnp.pad(a, ((0, Mp - M), (0, Kp - K))).astype(jnp.bfloat16)
    b_p = jnp.pad(b, ((0, Kp - K), (0, Np - N))).astype(jnp.bfloat16)
    bias_p = jnp.pad(bias, (0, Np - N)).reshape(1, Np).astype(jnp.float32)

    grid = (Mp // tm, Np // tn, Kp // tk)
    out = pl.pallas_call(
        functools.partial(_mm_kernel, activation=activation),
        out_shape=jax.ShapeDtypeStruct((Mp, Np), jnp.float32),
        grid=grid,
        in_specs=[
            pl.BlockSpec((tm, tk), lambda i, j, k: (i, k)),
            pl.BlockSpec((tk, tn), lambda i, j, k: (k, j)),   # M-independent
            pl.BlockSpec((1, tn), lambda i, j, k: (0, j)),    # M-independent
        ],
        out_specs=pl.BlockSpec((tm, tn), lambda i, j, k: (i, j)),
        scratch_shapes=[pltpu.VMEM((tm, tn), jnp.float32)],
        compiler_params=pltpu.CompilerParams(
            dimension_semantics=("parallel", "parallel", "arbitrary"),
            vmem_limit_bytes=_VMEM_LIMIT),
    )(a_p, b_p, bias_p)
    return out[:M, :N]


# ----------------------------------------------------------------------------
# Self-attention: flash-style kernel (online softmax, attn map stays on-chip)
# ----------------------------------------------------------------------------
def _attn_kernel(q_ref, k_ref, v_ref, x_ref, gamma_ref, o_ref,
                 m_sc, l_sc, acc_sc):
    kv = pl.program_id(2)

    @pl.when(kv == 0)
    def _():
        m_sc[...] = jnp.full(m_sc.shape, -jnp.inf, jnp.float32)
        l_sc[...] = jnp.zeros(l_sc.shape, jnp.float32)
        acc_sc[...] = jnp.zeros(acc_sc.shape, jnp.float32)

    q = q_ref[0]                                    # (tq,  C8)  bf16
    k = k_ref[0]                                    # (tkv, C8)  bf16
    v = v_ref[0]                                    # (tkv, C)   bf16
    # energy[i, j] = sum_c q[i, c] * k[j, c]   (no explicit transpose needed)
    s = lax.dot_general(q, k, (((1,), (1,)), ((), ())),
                        preferred_element_type=jnp.float32)    # (tq, tkv)

    m_prev = m_sc[...]
    m_new = jnp.maximum(m_prev, s.max(axis=-1, keepdims=True))
    alpha = jnp.exp(m_prev - m_new)
    p = jnp.exp(s - m_new)
    l_sc[...] = alpha * l_sc[...] + p.sum(axis=-1, keepdims=True)
    acc_sc[...] = alpha * acc_sc[...] + jnp.dot(
        p.astype(v.dtype), v, preferred_element_type=jnp.float32)
    m_sc[...] = m_new

    @pl.when(kv == pl.num_programs(2) - 1)
    def _():
        out = acc_sc[...] * pl.reciprocal(l_sc[...], approx=True)
        o_ref[0] = gamma_ref[0, 0] * out + x_ref[0]


def self_attention(x, att):
    """x: NHWC (B,H,W,C).  SAGAN-style attention; softmax(dim=-1) over keys."""
    B, H, W, C = x.shape
    N = H * W
    C8 = C // 8
    xt = x.reshape(B * N, C)                        # channels already in lanes

    q = matmul_bias(xt, att["wq"].reshape(C8, C).T, att["bq"]).reshape(B, N, C8)
    k = matmul_bias(xt, att["wk"].reshape(C8, C).T, att["bk"]).reshape(B, N, C8)
    v = matmul_bias(xt, att["wv"].reshape(C, C).T, att["bv"]).reshape(B, N, C)
    x_nc = xt.reshape(B, N, C)
    gamma = att["gamma"].reshape(1, 1)

    tq = N
    for t in (128, 256, 64, 32, 16, 8):
        if N % t == 0:
            tq = t
            break
    tkv = tq
    grid = (B, N // tq, N // tkv)

    out = pl.pallas_call(
        _attn_kernel,
        out_shape=jax.ShapeDtypeStruct((B, N, C), jnp.float32),
        grid=grid,
        in_specs=[
            pl.BlockSpec((1, tq, C8), lambda b, qi, ki: (b, qi, 0)),
            pl.BlockSpec((1, tkv, C8), lambda b, qi, ki: (b, ki, 0)),
            pl.BlockSpec((1, tkv, C), lambda b, qi, ki: (b, ki, 0)),
            pl.BlockSpec((1, tq, C), lambda b, qi, ki: (b, qi, 0)),
            pl.BlockSpec((1, 1), lambda b, qi, ki: (0, 0)),
        ],
        out_specs=pl.BlockSpec((1, tq, C), lambda b, qi, ki: (b, qi, 0)),
        scratch_shapes=[
            pltpu.VMEM((tq, 1), jnp.float32),     # running max
            pltpu.VMEM((tq, 1), jnp.float32),     # running sum
            pltpu.VMEM((tq, C), jnp.float32),     # output accumulator
        ],
        compiler_params=pltpu.CompilerParams(
            dimension_semantics=("parallel", "parallel", "arbitrary"),
            vmem_limit_bytes=_VMEM_LIMIT),
    )(q.astype(jnp.bfloat16), k.astype(jnp.bfloat16),
      v.astype(jnp.bfloat16), x_nc, gamma)
    # Attention map is kept in VMEM only (never written to HBM); the original
    # module returns it but forward() discards it.
    return out.reshape(B, H, W, C)


# ----------------------------------------------------------------------------
# Conv2d (NHWC im2col, no transposes) and ConvTranspose2d (phase decomposition)
# ----------------------------------------------------------------------------
def conv2d(x, w, b, stride, pad, activation):
    """x:(B,H,W,C) NHWC, w:(OC,IC,kh,kw) torch layout -> (B,OH,OW,OC)."""
    # TODO(synk): patch extraction (im2col) is still materialized in HBM by
    # XLA; fusing shifted loads into the matmul kernel is a further step.
    B, H, W, C = x.shape
    OC, _, kh, kw = w.shape
    xp = jnp.pad(x, ((0, 0), (pad, pad), (pad, pad), (0, 0)))
    OH = (H + 2 * pad - kh) // stride + 1
    OW = (W + 2 * pad - kw) // stride + 1
    patches = []
    for i in range(kh):
        for j in range(kw):
            patches.append(xp[:, i:i + stride * (OH - 1) + 1:stride,
                                 j:j + stride * (OW - 1) + 1:stride, :])
    cols = jnp.concatenate(patches, axis=-1)            # (B,OH,OW, kh*kw*C)
    w2 = w.transpose(2, 3, 1, 0).reshape(kh * kw * C, OC)
    out = matmul_bias(cols.reshape(B * OH * OW, kh * kw * C), w2, b, activation)
    return out.reshape(B, OH, OW, OC)


def conv_transpose2d(x, w, b, activation):
    """ConvTranspose2d(k=3, stride=2, padding=1, output_padding=1), NHWC.

    Sub-pixel (phase) decomposition: output (2a+r, 2b+s) depends only on the
    2x2 input neighbourhood {a,a+1}x{b,b+1}, so all four phases come from one
    matmul  cols:(B*H*W, 4*Cin) @ Wall:(4*Cin, 4*Cout)  — no zero-dilated
    input and a well-shaped, lane-dense MXU problem.
    """
    B, H, W, Cin = x.shape
    _, Cout, kh, kw = w.shape                            # (Cin, Cout, 3, 3)
    xp = jnp.pad(x, ((0, 0), (0, 1), (0, 1), (0, 0)))    # bottom/right zero
    offs = ((0, 0), (0, 1), (1, 0), (1, 1))
    cols = jnp.concatenate(
        [xp[:, da:da + H, db:db + W, :] for (da, db) in offs], axis=-1)

    def _tap(phase, d):
        # kernel tap feeding output index 2a+phase from input a+d (stride 2, pad 1)
        if phase == 0:
            return 1 if d == 0 else None
        return 2 if d == 0 else 0

    wall = jnp.zeros((4, Cin, 4, Cout), w.dtype)
    for ti, (da, db) in enumerate(offs):                 # input offset block
        for pi, (r, s) in enumerate(offs):               # output phase block
            i = _tap(r, da)
            j = _tap(s, db)
            if i is not None and j is not None:
                wall = wall.at[ti, :, pi, :].set(w[:, :, i, j])
    wall = wall.reshape(4 * Cin, 4 * Cout)
    bias4 = jnp.tile(b, 4)

    out = matmul_bias(cols.reshape(B * H * W, 4 * Cin), wall, bias4, activation)
    out = out.reshape(B, H, W, 2, 2, Cout)               # (..., r, s, Cout)
    out = out.transpose(0, 1, 3, 2, 4, 5)                # (B, H, r, W, s, Cout)
    return out.reshape(B, 2 * H, 2 * W, Cout)


# ----------------------------------------------------------------------------
# Parameter init (deterministic, PyTorch-default-style uniform)
# ----------------------------------------------------------------------------
def _uniform(key, shape, bound):
    return jax.random.uniform(key, shape, jnp.float32, -bound, bound)


def init_conv(key, oc, ic, k):
    kw_, kb_ = jax.random.split(key)
    bound = 1.0 / math.sqrt(ic * k * k)
    return _uniform(kw_, (oc, ic, k, k), bound), _uniform(kb_, (oc,), bound)


def init_convT(key, ic, oc, k):
    kw_, kb_ = jax.random.split(key)
    bound = 1.0 / math.sqrt(ic * k * k)
    return _uniform(kw_, (ic, oc, k, k), bound), _uniform(kb_, (oc,), bound)


def init_linear(key, out_f, in_f):
    kw_, kb_ = jax.random.split(key)
    bound = 1.0 / math.sqrt(in_f)
    return _uniform(kw_, (out_f, in_f), bound), _uniform(kb_, (out_f,), bound)


def init_attention(key, C):
    k1, k2, k3 = jax.random.split(key, 3)
    wq, bq = init_conv(k1, C // 8, C, 1)
    wk, bk = init_conv(k2, C // 8, C, 1)
    wv, bv = init_conv(k3, C, C, 1)
    return {"wq": wq, "bq": bq, "wk": wk, "bk": bk, "wv": wv, "bv": bv,
            "gamma": jnp.zeros((1,), jnp.float32)}


def init_params(key, latent_dim, S):
    keys = jax.random.split(key, 11)
    F = 128 * (S // 8) ** 2
    p = {}
    p["conv1_w"], p["conv1_b"] = init_conv(keys[0], 32, 3, 3)
    p["att1"] = init_attention(keys[1], 32)
    p["conv2_w"], p["conv2_b"] = init_conv(keys[2], 64, 32, 3)
    p["att2"] = init_attention(keys[3], 64)
    p["conv3_w"], p["conv3_b"] = init_conv(keys[4], 128, 64, 3)
    p["fc_mu_w"], p["fc_mu_b"] = init_linear(keys[5], latent_dim, F)
    p["fc_logvar_w"], p["fc_logvar_b"] = init_linear(keys[6], latent_dim, F)
    p["fc_decode_w"], p["fc_decode_b"] = init_linear(keys[7], F, latent_dim)
    p["deconv1_w"], p["deconv1_b"] = init_convT(keys[8], 128, 64, 3)
    p["deconv2_w"], p["deconv2_b"] = init_convT(keys[9], 64, 32, 3)
    p["deconv3_w"], p["deconv3_b"] = init_convT(keys[10], 32, 3, 3)
    return p


# ----------------------------------------------------------------------------
# Forward pass (matches ConvVAE.forward: returns (recon, mu, logvar))
# ----------------------------------------------------------------------------
def forward(params, x, eps):
    B = x.shape[0]
    xh = x.transpose(0, 2, 3, 1)                    # NCHW -> NHWC (boundary)
    # ---- encode ----
    h = conv2d(xh, params["conv1_w"], params["conv1_b"], 2, 1, "relu")
    h = self_attention(h, params["att1"])
    h = conv2d(h, params["conv2_w"], params["conv2_b"], 2, 1, "relu")
    h = self_attention(h, params["att2"])
    h = conv2d(h, params["conv3_w"], params["conv3_b"], 2, 1, "relu")
    _, S8, _, C3 = h.shape
    flat = h.transpose(0, 3, 1, 2).reshape(B, C3 * S8 * S8)  # PyTorch NCHW flatten
    # fc_mu and fc_logvar fused into one lane-dense matmul
    L = params["fc_mu_w"].shape[0]
    w_cat = jnp.concatenate([params["fc_mu_w"], params["fc_logvar_w"]], axis=0)
    b_cat = jnp.concatenate([params["fc_mu_b"], params["fc_logvar_b"]])
    stats = matmul_bias(flat, w_cat.T, b_cat, "none")
    mu, logvar = stats[:, :L], stats[:, L:]
    # ---- reparametrize (tiny elementwise; left to XLA fusion per perf review)
    z = eps * jnp.exp(0.5 * logvar) + mu
    # ---- decode ----
    d = matmul_bias(z, params["fc_decode_w"].T, params["fc_decode_b"], "relu")
    d = d.reshape(B, C3, S8, S8).transpose(0, 2, 3, 1)        # NCHW view -> NHWC
    d = conv_transpose2d(d, params["deconv1_w"], params["deconv1_b"], "relu")
    d = conv_transpose2d(d, params["deconv2_w"], params["deconv2_b"], "relu")
    d = conv_transpose2d(d, params["deconv3_w"], params["deconv3_b"], "sigmoid")
    return d.transpose(0, 3, 1, 2), mu, logvar                # NHWC -> NCHW


if __name__ == "__main__":
    key = jax.random.PRNGKey(0)
    pkey, xkey, ekey = jax.random.split(key, 3)

    B, S, LATENT = 2, 32, 32          # small shapes; flatten = 128*(S/8)^2 = 2048
    params = init_params(pkey, LATENT, S)
    x = jax.random.uniform(xkey, (B, 3, S, S), jnp.float32)
    eps = jax.random.normal(ekey, (B, LATENT), jnp.float32)   # torch.randn_like(std)

    recon, mu, logvar = jax.jit(forward)(params, x, eps)
    jax.block_until_ready((recon, mu, logvar))

    assert recon.shape == (B, 3, S, S)
    assert mu.shape == (B, LATENT) and logvar.shape == (B, LATENT)
    assert bool(jnp.all(jnp.isfinite(recon)))
    assert bool(jnp.all((recon >= 0.0) & (recon <= 1.0)))     # sigmoid output
    print("KERNEL_OK")
</pallas_src>

<mosaic_0001>
module attributes {stable_mosaic.version = 11 : i64} {
  func.func @_mm_kernel(%arg0: i32, %arg1: i32, %arg2: i32, %arg3: memref<512x27xbf16, #tpu.memory_space<vmem>>, %arg4: memref<27x128xbf16, #tpu.memory_space<vmem>>, %arg5: memref<1x128xf32, #tpu.memory_space<vmem>>, %arg6: memref<512x128xf32, #tpu.memory_space<vmem>>, %arg7: memref<512x128xf32, #tpu.memory_space<vmem>>) attributes {dimension_semantics = [#tpu.dimension_semantics<parallel>, #tpu.dimension_semantics<parallel>, #tpu.dimension_semantics<arbitrary>], iteration_bounds = array<i64: 1, 1, 1>, scalar_prefetch = 0 : i64, scratch_operands = 1 : i64, tpu.core_type = #tpu.core_type<tc>, window_params = [{transform_indices = @transform_0, window_bounds = array<i64: 512, 27>}, {transform_indices = @transform_1, window_bounds = array<i64: 27, 128>}, {transform_indices = @transform_2, window_bounds = array<i64: 1, 128>}, {transform_indices = @transform_3, window_bounds = array<i64: 512, 128>}]} {
    %c0_i32 = arith.constant 0 : i32
    %0 = arith.cmpi eq, %arg2, %c0_i32 : i32
    %1 = arith.extui %0 : i1 to i32
    %c0_i32_0 = arith.constant 0 : i32
    %2 = arith.cmpi ne, %1, %c0_i32_0 : i32
    scf.if %2 {
      %cst_10 = arith.constant 0.000000e+00 : f32
      %12 = vector.broadcast %cst_10 : f32 to vector<512x128xf32>
      %c0_11 = arith.constant 0 : index
      %c0_12 = arith.constant 0 : index
      %13 = vector.load %arg7[%c0_11, %c0_12] : memref<512x128xf32, #tpu.memory_space<vmem>>, vector<512x128xf32>
      tpu.vector_store %arg7[%c0_11, %c0_12], %12 {strides = array<i32>} : memref<512x128xf32, #tpu.memory_space<vmem>>, vector<512x128xf32>,
    } else {
    }
    %c0 = arith.constant 0 : index
    %c0_1 = arith.constant 0 : index
    %3 = vector.load %arg7[%c0, %c0_1] : memref<512x128xf32, #tpu.memory_space<vmem>>, vector<512x128xf32>
    %c0_2 = arith.constant 0 : index
    %c0_3 = arith.constant 0 : index
    %4 = vector.load %arg3[%c0_2, %c0_3] : memref<512x27xbf16, #tpu.memory_space<vmem>>, vector<512x27xbf16>
    %c0_4 = arith.constant 0 : index
    %c0_5 = arith.constant 0 : index
    %5 = vector.load %arg4[%c0_4, %c0_5] : memref<27x128xbf16, #tpu.memory_space<vmem>>, vector<27x128xbf16>
    %cst = arith.constant dense<0.000000e+00> : vector<512x128xf32>
    %6 = tpu.matmul %4, %5, %cst {dimension_numbers = #tpu.dot_dimension_numbers<[1], [0], [0], [1], [0, 0, 1, 1], [], []>} : vector<512x27xbf16>, vector<27x128xbf16>, vector<512x128xf32> -> vector<512x128xf32>
    %7 = arith.addf %3, %6 : vector<512x128xf32>
    %c0_6 = arith.constant 0 : index
    %c0_7 = arith.constant 0 : index
    %8 = vector.load %arg7[%c0_6, %c0_7] : memref<512x128xf32, #tpu.memory_space<vmem>>, vector<512x128xf32>
    tpu.vector_store %arg7[%c0_6, %c0_7], %7 {strides = array<i32>} : memref<512x128xf32, #tpu.memory_space<vmem>>, vector<512x128xf32>,
    %c0_i32_8 = arith.constant 0 : i32
    %9 = arith.cmpi eq, %arg2, %c0_i32_8 : i32
    %10 = arith.extui %9 : i1 to i32
    %c0_i32_9 = arith.constant 0 : i32
    %11 = arith.cmpi ne, %10, %c0_i32_9 : i32
    scf.if %11 {
      %c0_10 = arith.constant 0 : index
      %c0_11 = arith.constant 0 : index
      %12 = vector.load %arg7[%c0_10, %c0_11] : memref<512x128xf32, #tpu.memory_space<vmem>>, vector<512x128xf32>
      %c0_12 = arith.constant 0 : index
      %c0_13 = arith.constant 0 : index
      %13 = vector.load %arg5[%c0_12, %c0_13] : memref<1x128xf32, #tpu.memory_space<vmem>>, vector<1x128xf32>
      %14 = vector.broadcast %13 : vector<1x128xf32> to vector<512x128xf32>
      %15 = arith.addf %12, %14 : vector<512x128xf32>
      %cst_14 = arith.constant 0.000000e+00 : f32
      %16 = vector.broadcast %cst_14 : f32 to vector<512x128xf32>
      %17 = arith.maximumf %15, %16 : vector<512x128xf32>
      %c0_15 = arith.constant 0 : index
      %c0_16 = arith.constant 0 : index
      %18 = vector.load %arg6[%c0_15, %c0_16] : memref<512x128xf32, #tpu.memory_space<vmem>>, vector<512x128xf32>
      tpu.vector_store %arg6[%c0_15, %c0_16], %17 {strides = array<i32>} : memref<512x128xf32, #tpu.memory_space<vmem>>, vector<512x128xf32>,
    } else {
    }
    return
  }
  func.func @transform_0(%arg0: i32, %arg1: i32, %arg2: i32) -> (i32, i32) {
    %c0_i32 = arith.constant 0 : i32
    return %arg0, %arg2 : i32, i32
  }
  func.func @transform_1(%arg0: i32, %arg1: i32, %arg2: i32) -> (i32, i32) {
    %c0_i32 = arith.constant 0 : i32
    return %arg2, %arg1 : i32, i32
  }
  func.func @transform_2(%arg0: i32, %arg1: i32, %arg2: i32) -> (i32, i32) {
    %c0_i32 = arith.constant 0 : i32
    %c0_i32_0 = arith.constant 0 : i32
    return %c0_i32, %arg1 : i32, i32
  }
  func.func @transform_3(%arg0: i32, %arg1: i32, %arg2: i32) -> (i32, i32) {
    %c0_i32 = arith.constant 0 : i32
    return %arg0, %arg1 : i32, i32
  }
}

module attributes {stable_mosaic.version = 11 : i64} {
  func.func @_mm_kernel(%arg0: i32, %arg1: i32, %arg2: i32, %arg3: memref<512x32xbf16, #tpu.memory_space<vmem>>, %arg4: memref<32x128xbf16, #tpu.memory_space<vmem>>, %arg5: memref<1x128xf32, #tpu.memory_space<vmem>>, %arg6: memref<512x128xf32, #tpu.memory_space<vmem>>, %arg7: memref<512x128xf32, #tpu.memory_space<vmem>>) attributes {dimension_semantics = [#tpu.dimension_semantics<parallel>, #tpu.dimension_semantics<parallel>, #tpu.dimension_semantics<arbitrary>], iteration_bounds = array<i64: 1, 1, 1>, scalar_prefetch = 0 : i64, scratch_operands = 1 : i64, tpu.core_type = #tpu.core_type<tc>, window_params = [{transform_indices = @transform_0, window_bounds = array<i64: 512, 32>}, {transform_indices = @transform_1, window_bounds = array<i64: 32, 128>}, {transform_indices = @transform_2, window_bounds = array<i64: 1, 128>}, {transform_indices = @transform_3, window_bounds = array<i64: 512, 128>}]} {
    %c0_i32 = arith.constant 0 : i32
    %0 = arith.cmpi eq, %arg2, %c0_i32 : i32
    %1 = arith.extui %0 : i1 to i32
    %c0_i32_0 = arith.constant 0 : i32
    %2 = arith.cmpi ne, %1, %c0_i32_0 : i32
    scf.if %2 {
      %cst_10 = arith.constant 0.000000e+00 : f32
      %12 = vector.broadcast %cst_10 : f32 to vector<512x128xf32>
      %c0_11 = arith.constant 0 : index
      %c0_12 = arith.constant 0 : index
      %13 = vector.load %arg7[%c0_11, %c0_12] : memref<512x128xf32, #tpu.memory_space<vmem>>, vector<512x128xf32>
      tpu.vector_store %arg7[%c0_11, %c0_12], %12 {strides = array<i32>} : memref<512x128xf32, #tpu.memory_space<vmem>>, vector<512x128xf32>,
    } else {
    }
    %c0 = arith.constant 0 : index
    %c0_1 = arith.constant 0 : index
    %3 = vector.load %arg7[%c0, %c0_1] : memref<512x128xf32, #tpu.memory_space<vmem>>, vector<512x128xf32>
    %c0_2 = arith.constant 0 : index
    %c0_3 = arith.constant 0 : index
    %4 = vector.load %arg3[%c0_2, %c0_3] : memref<512x32xbf16, #tpu.memory_space<vmem>>, vector<512x32xbf16>
    %c0_4 = arith.constant 0 : index
    %c0_5 = arith.constant 0 : index
    %5 = vector.load %arg4[%c0_4, %c0_5] : memref<32x128xbf16, #tpu.memory_space<vmem>>, vector<32x128xbf16>
    %cst = arith.constant dense<0.000000e+00> : vector<512x128xf32>
    %6 = tpu.matmul %4, %5, %cst {dimension_numbers = #tpu.dot_dimension_numbers<[1], [0], [0], [1], [0, 0, 1, 1], [], []>} : vector<512x32xbf16>, vector<32x128xbf16>, vector<512x128xf32> -> vector<512x128xf32>
    %7 = arith.addf %3, %6 : vector<512x128xf32>
    %c0_6 = arith.constant 0 : index
    %c0_7 = arith.constant 0 : index
    %8 = vector.load %arg7[%c0_6, %c0_7] : memref<512x128xf32, #tpu.memory_space<vmem>>, vector<512x128xf32>
    tpu.vector_store %arg7[%c0_6, %c0_7], %7 {strides = array<i32>} : memref<512x128xf32, #tpu.memory_space<vmem>>, vector<512x128xf32>,
    %c0_i32_8 = arith.constant 0 : i32
    %9 = arith.cmpi eq, %arg2, %c0_i32_8 : i32
    %10 = arith.extui %9 : i1 to i32
    %c0_i32_9 = arith.constant 0 : i32
    %11 = arith.cmpi ne, %10, %c0_i32_9 : i32
    scf.if %11 {
      %c0_10 = arith.constant 0 : index
      %c0_11 = arith.constant 0 : index
      %12 = vector.load %arg7[%c0_10, %c0_11] : memref<512x128xf32, #tpu.memory_space<vmem>>, vector<512x128xf32>
      %c0_12 = arith.constant 0 : index
      %c0_13 = arith.constant 0 : index
      %13 = vector.load %arg5[%c0_12, %c0_13] : memref<1x128xf32, #tpu.memory_space<vmem>>, vector<1x128xf32>
      %14 = vector.broadcast %13 : vector<1x128xf32> to vector<512x128xf32>
      %15 = arith.addf %12, %14 : vector<512x128xf32>
      %c0_14 = arith.constant 0 : index
      %c0_15 = arith.constant 0 : index
      %16 = vector.load %arg6[%c0_14, %c0_15] : memref<512x128xf32, #tpu.memory_space<vmem>>, vector<512x128xf32>
      tpu.vector_store %arg6[%c0_14, %c0_15], %15 {strides = array<i32>} : memref<512x128xf32, #tpu.memory_space<vmem>>, vector<512x128xf32>,
    } else {
    }
    return
  }
  func.func @transform_0(%arg0: i32, %arg1: i32, %arg2: i32) -> (i32, i32) {
    %c0_i32 = arith.constant 0 : i32
    return %arg0, %arg2 : i32, i32
  }
  func.func @transform_1(%arg0: i32, %arg1: i32, %arg2: i32) -> (i32, i32) {
    %c0_i32 = arith.constant 0 : i32
    return %arg2, %arg1 : i32, i32
  }
  func.func @transform_2(%arg0: i32, %arg1: i32, %arg2: i32) -> (i32, i32) {
    %c0_i32 = arith.constant 0 : i32
    %c0_i32_0 = arith.constant 0 : i32
    return %c0_i32, %arg1 : i32, i32
  }
  func.func @transform_3(%arg0: i32, %arg1: i32, %arg2: i32) -> (i32, i32) {
    %c0_i32 = arith.constant 0 : i32
    return %arg0, %arg1 : i32, i32
  }
}

module attributes {stable_mosaic.version = 11 : i64} {
  func.func @_attn_kernel(%arg0: i32, %arg1: i32, %arg2: i32, %arg3: memref<1x128x4xbf16, #tpu.memory_space<vmem>>, %arg4: memref<1x128x4xbf16, #tpu.memory_space<vmem>>, %arg5: memref<1x128x32xbf16, #tpu.memory_space<vmem>>, %arg6: memref<1x128x32xf32, #tpu.memory_space<vmem>>, %arg7: memref<1x1xf32, #tpu.memory_space<vmem>>, %arg8: memref<1x128x32xf32, #tpu.memory_space<vmem>>, %arg9: memref<128x1xf32, #tpu.memory_space<vmem>>, %arg10: memref<128x1xf32, #tpu.memory_space<vmem>>, %arg11: memref<128x32xf32, #tpu.memory_space<vmem>>) attributes {dimension_semantics = [#tpu.dimension_semantics<parallel>, #tpu.dimension_semantics<parallel>, #tpu.dimension_semantics<arbitrary>], iteration_bounds = array<i64: 2, 2, 2>, scalar_prefetch = 0 : i64, scratch_operands = 3 : i64, tpu.core_type = #tpu.core_type<tc>, window_params = [{transform_indices = @transform_0, window_bounds = array<i64: 1, 128, 4>}, {transform_indices = @transform_1, window_bounds = array<i64: 1, 128, 4>}, {transform_indices = @transform_2, window_bounds = array<i64: 1, 128, 32>}, {transform_indices = @transform_3, window_bounds = array<i64: 1, 128, 32>}, {pipeline_mode = #tpu.pipeline_mode<synchronous>, transform_indices = @transform_4, window_bounds = array<i64: 1, 1>}, {transform_indices = @transform_5, window_bounds = array<i64: 1, 128, 32>}]} {
    %c0_i32 = arith.constant 0 : i32
    %0 = arith.cmpi eq, %arg2, %c0_i32 : i32
    %1 = arith.extui %0 : i1 to i32
    %c0_i32_0 = arith.constant 0 : i32
    %2 = arith.cmpi ne, %1, %c0_i32_0 : i32
    scf.if %2 {
      %cst_25 = arith.constant 0xFF800000 : f32
      %36 = vector.broadcast %cst_25 : f32 to vector<128x1xf32>
      %c0_26 = arith.constant 0 : index
      %c0_27 = arith.constant 0 : index
      %37 = vector.load %arg9[%c0_26, %c0_27] : memref<128x1xf32, #tpu.memory_space<vmem>>, vector<128x1xf32>
      tpu.vector_store %arg9[%c0_26, %c0_27], %36 {strides = array<i32>} : memref<128x1xf32, #tpu.memory_space<vmem>>, vector<128x1xf32>,
      %cst_28 = arith.constant 0.000000e+00 : f32
      %38 = vector.broadcast %cst_28 : f32 to vector<128x1xf32>
      %c0_29 = arith.constant 0 : index
      %c0_30 = arith.constant 0 : index
      %39 = vector.load %arg10[%c0_29, %c0_30] : memref<128x1xf32, #tpu.memory_space<vmem>>, vector<128x1xf32>
      tpu.vector_store %arg10[%c0_29, %c0_30], %38 {strides = array<i32>} : memref<128x1xf32, #tpu.memory_space<vmem>>, vector<128x1xf32>,
      %cst_31 = arith.constant 0.000000e+00 : f32
      %40 = vector.broadcast %cst_31 : f32 to vector<128x32xf32>
      %c0_32 = arith.constant 0 : index
      %c0_33 = arith.constant 0 : index
      %41 = vector.load %arg11[%c0_32, %c0_33] : memref<128x32xf32, #tpu.memory_space<vmem>>, vector<128x32xf32>
      tpu.vector_store %arg11[%c0_32, %c0_33], %40 {strides = array<i32>} : memref<128x32xf32, #tpu.memory_space<vmem>>, vector<128x32xf32>,
    } else {
    }
    %c0 = arith.constant 0 : index
    %c0_1 = arith.constant 0 : index
    %c0_2 = arith.constant 0 : index
    %3 = vector.load %arg3[%c0, %c0_1, %c0_2] : memref<1x128x4xbf16, #tpu.memory_space<vmem>>, vector<1x128x4xbf16>
    %4 = vector.shape_cast %3 : vector<1x128x4xbf16> to vector<128x4xbf16>
    %c0_3 = arith.constant 0 : index
    %c0_4 = arith.constant 0 : index
    %c0_5 = arith.constant 0 : index
    %5 = vector.load %arg4[%c0_3, %c0_4, %c0_5] : memref<1x128x4xbf16, #tpu.memory_space<vmem>>, vector<1x128x4xbf16>
    %6 = vector.shape_cast %5 : vector<1x128x4xbf16> to vector<128x4xbf16>
    %c0_6 = arith.constant 0 : index
    %c0_7 = arith.constant 0 : index
    %c0_8 = arith.constant 0 : index
    %7 = vector.load %arg5[%c0_6, %c0_7, %c0_8] : memref<1x128x32xbf16, #tpu.memory_space<vmem>>, vector<1x128x32xbf16>
    %8 = vector.shape_cast %7 : vector<1x128x32xbf16> to vector<128x32xbf16>
    %cst = arith.constant dense<0.000000e+00> : vector<128x128xf32>
    %9 = tpu.matmul %4, %6, %cst {dimension_numbers = #tpu.dot_dimension_numbers<[1], [1], [0], [0], [0, 0, 1, 0], [], []>} : vector<128x4xbf16>, vector<128x4xbf16>, vector<128x128xf32> -> vector<128x128xf32>
    %c0_9 = arith.constant 0 : index
    %c0_10 = arith.constant 0 : index
    %10 = vector.load %arg9[%c0_9, %c0_10] : memref<128x1xf32, #tpu.memory_space<vmem>>, vector<128x1xf32>
    %cst_11 = arith.constant dense<0xFF800000> : vector<128xf32>
    %11 = vector.multi_reduction <maximumf>, %9, %cst_11 [1] : vector<128x128xf32> to vector<128xf32>
    %12 = vector.shape_cast %11 : vector<128xf32> to vector<128x1xf32>
    %13 = arith.maximumf %10, %12 : vector<128x1xf32>
    %14 = arith.subf %10, %13 : vector<128x1xf32>
    %15 = math.exp %14 : vector<128x1xf32>
    %16 = vector.broadcast %13 : vector<128x1xf32> to vector<128x128xf32>
    %17 = arith.subf %9, %16 : vector<128x128xf32>
    %18 = math.exp %17 : vector<128x128xf32>
    %c0_12 = arith.constant 0 : index
    %c0_13 = arith.constant 0 : index
    %19 = vector.load %arg10[%c0_12, %c0_13] : memref<128x1xf32, #tpu.memory_space<vmem>>, vector<128x1xf32>
    %20 = arith.mulf %15, %19 : vector<128x1xf32>
    %cst_14 = arith.constant dense<0.000000e+00> : vector<128xf32>
    %21 = vector.multi_reduction <add>, %18, %cst_14 [1] : vector<128x128xf32> to vector<128xf32>
    %22 = vector.shape_cast %21 : vector<128xf32> to vector<128x1xf32>
    %23 = arith.addf %20, %22 : vector<128x1xf32>
    %c0_15 = arith.constant 0 : index
    %c0_16 = arith.constant 0 : index
    %24 = vector.load %arg10[%c0_15, %c0_16] : memref<128x1xf32, #tpu.memory_space<vmem>>, vector<128x1xf32>
    tpu.vector_store %arg10[%c0_15, %c0_16], %23 {strides = array<i32>} : memref<128x1xf32, #tpu.memory_space<vmem>>, vector<128x1xf32>,
    %c0_17 = arith.constant 0 : index
    %c0_18 = arith.constant 0 : index
    %25 = vector.load %arg11[%c0_17, %c0_18] : memref<128x32xf32, #tpu.memory_space<vmem>>, vector<128x32xf32>
    %26 = vector.broadcast %15 : vector<128x1xf32> to vector<128x32xf32>
    %27 = arith.mulf %26, %25 : vector<128x32xf32>
    %28 = arith.truncf %18 : vector<128x128xf32> to vector<128x128xbf16>
    %cst_19 = arith.constant dense<0.000000e+00> : vector<128x32xf32>
    %29 = tpu.matmul %28, %8, %cst_19 {dimension_numbers = #tpu.dot_dimension_numbers<[1], [0], [0], [1], [0, 0, 1, 1], [], []>} : vector<128x128xbf16>, vector<128x32xbf16>, vector<128x32xf32> -> vector<128x32xf32>
    %30 = arith.addf %27, %29 : vector<128x32xf32>
    %c0_20 = arith.constant 0 : index
    %c0_21 = arith.constant 0 : index
    %31 = vector.load %arg11[%c0_20, %c0_21] : memref<128x32xf32, #tpu.memory_space<vmem>>, vector<128x32xf32>
    tpu.vector_store %arg11[%c0_20, %c0_21], %30 {strides = array<i32>} : memref<128x32xf32, #tpu.memory_space<vmem>>, vector<128x32xf32>,
    %c0_22 = arith.constant 0 : index
    %c0_23 = arith.constant 0 : index
    %32 = vector.load %arg9[%c0_22, %c0_23] : memref<128x1xf32, #tpu.memory_space<vmem>>, vector<128x1xf32>
    tpu.vector_store %arg9[%c0_22, %c0_23], %13 {strides = array<i32>} : memref<128x1xf32, #tpu.memory_space<vmem>>, vector<128x1xf32>,
    %c1_i32 = arith.constant 1 : i32
    %33 = arith.cmpi eq, %arg2, %c1_i32 : i32
    %34 = arith.extui %33 : i1 to i32
    %c0_i32_24 = arith.constant 0 : i32
    %35 = arith.cmpi ne, %34, %c0_i32_24 : i32
    scf.if %35 {
      %c0_25 = arith.constant 0 : index
      %c0_26 = arith.constant 0 : index
      %36 = vector.load %arg11[%c0_25, %c0_26] : memref<128x32xf32, #tpu.memory_space<vmem>>, vector<128x32xf32>
      %c0_27 = arith.constant 0 : index
      %c0_28 = arith.constant 0 : index
      %37 = vector.load %arg10[%c0_27, %c0_28] : memref<128x1xf32, #tpu.memory_space<vmem>>, vector<128x1xf32>
      %38 = tpu.reciprocal %37 {approx = true} : vector<128x1xf32> -> vector<128x1xf32>
      %39 = vector.broadcast %38 : vector<128x1xf32> to vector<128x32xf32>
      %40 = arith.mulf %36, %39 : vector<128x32xf32>
      %c0_29 = arith.constant 0 : index
      %c0_30 = arith.constant 0 : index
      %41 = vector.load %arg7[%c0_29, %c0_30] : memref<1x1xf32, #tpu.memory_space<vmem>>, vector<1x1xf32>
      %42 = vector.extract %41[0, 0] : f32 from vector<1x1xf32>
      %43 = vector.broadcast %42 : f32 to vector<128x32xf32>
      %44 = arith.mulf %43, %40 : vector<128x32xf32>
      %c0_31 = arith.constant 0 : index
      %c0_32 = arith.constant 0 : index
      %c0_33 = arith.constant 0 : index
      %45 = vector.load %arg6[%c0_31, %c0_32, %c0_33] : memref<1x128x32xf32, #tpu.memory_space<vmem>>, vector<1x128x32xf32>
      %46 = vector.shape_cast %45 : vector<1x128x32xf32> to vector<128x32xf32>
      %47 = arith.addf %44, %46 : vector<128x32xf32>
      %c0_34 = arith.constant 0 : index
      %c0_35 = arith.constant 0 : index
      %c0_36 = arith.constant 0 : index
      %48 = vector.load %arg8[%c0_34, %c0_35, %c0_36] : memref<1x128x32xf32, #tpu.memory_space<vmem>>, vector<1x128x32xf32>
      %49 = vector.shape_cast %48 : vector<1x128x32xf32> to vector<128x32xf32>
      %50 = vector.shape_cast %47 : vector<128x32xf32> to vector<1x128x32xf32>
      tpu.vector_store %arg8[%c0_34, %c0_35, %c0_36], %50 {strides = array<i32>} : memref<1x128x32xf32, #tpu.memory_space<vmem>>, vector<1x128x32xf32>,
    } else {
    }
    return
  }
  func.func @transform_0(%arg0: i32, %arg1: i32, %arg2: i32) -> (i32, i32, i32) {
    %c0_i32 = arith.constant 0 : i32
    %c0_i32_0 = arith.constant 0 : i32
    return %arg0, %arg1, %c0_i32 : i32, i32, i32
  }
  func.func @transform_1(%arg0: i32, %arg1: i32, %arg2: i32) -> (i32, i32, i32) {
    %c0_i32 = arith.constant 0 : i32
    %c0_i32_0 = arith.constant 0 : i32
    return %arg0, %arg2, %c0_i32 : i32, i32, i32
  }
  func.func @transform_2(%arg0: i32, %arg1: i32, %arg2: i32) -> (i32, i32, i32) {
    %c0_i32 = arith.constant 0 : i32
    %c0_i32_0 = arith.constant 0 : i32
    return %arg0, %arg2, %c0_i32 : i32, i32, i32
  }
  func.func @transform_3(%arg0: i32, %arg1: i32, %arg2: i32) -> (i32, i32, i32) {
    %c0_i32 = arith.constant 0 : i32
    %c0_i32_0 = arith.constant 0 : i32
    return %arg0, %arg1, %c0_i32 : i32, i32, i32
  }
  func.func @transform_4(%arg0: i32, %arg1: i32, %arg2: i32) -> (i32, i32) {
    %c0_i32 = arith.constant 0 : i32
    %c0_i32_0 = arith.constant 0 : i32
    %c0_i32_1 = arith.constant 0 : i32
    return %c0_i32, %c0_i32_0 : i32, i32
  }
  func.func @transform_5(%arg0: i32, %arg1: i32, %arg2: i32) -> (i32, i32, i32) {
    %c0_i32 = arith.constant 0 : i32
    %c0_i32_0 = arith.constant 0 : i32
    return %arg0, %arg1, %c0_i32 : i32, i32, i32
  }
}

module attributes {stable_mosaic.version = 11 : i64} {
  func.func @_mm_kernel(%arg0: i32, %arg1: i32, %arg2: i32, %arg3: memref<128x288xbf16, #tpu.memory_space<vmem>>, %arg4: memref<288x128xbf16, #tpu.memory_space<vmem>>, %arg5: memref<1x128xf32, #tpu.memory_space<vmem>>, %arg6: memref<128x128xf32, #tpu.memory_space<vmem>>, %arg7: memref<128x128xf32, #tpu.memory_space<vmem>>) attributes {dimension_semantics = [#tpu.dimension_semantics<parallel>, #tpu.dimension_semantics<parallel>, #tpu.dimension_semantics<arbitrary>], iteration_bounds = array<i64: 1, 1, 1>, scalar_prefetch = 0 : i64, scratch_operands = 1 : i64, tpu.core_type = #tpu.core_type<tc>, window_params = [{transform_indices = @transform_0, window_bounds = array<i64: 128, 288>}, {transform_indices = @transform_1, window_bounds = array<i64: 288, 128>}, {transform_indices = @transform_2, window_bounds = array<i64: 1, 128>}, {transform_indices = @transform_3, window_bounds = array<i64: 128, 128>}]} {
    %c0_i32 = arith.constant 0 : i32
    %0 = arith.cmpi eq, %arg2, %c0_i32 : i32
    %1 = arith.extui %0 : i1 to i32
    %c0_i32_0 = arith.constant 0 : i32
    %2 = arith.cmpi ne, %1, %c0_i32_0 : i32
    scf.if %2 {
      %cst_10 = arith.constant 0.000000e+00 : f32
      %12 = vector.broadcast %cst_10 : f32 to vector<128x128xf32>
      %c0_11 = arith.constant 0 : index
      %c0_12 = arith.constant 0 : index
      %13 = vector.load %arg7[%c0_11, %c0_12] : memref<128x128xf32, #tpu.memory_space<vmem>>, vector<128x128xf32>
      tpu.vector_store %arg7[%c0_11, %c0_12], %12 {strides = array<i32>} : memref<128x128xf32, #tpu.memory_space<vmem>>, vector<128x128xf32>,
    } else {
    }
    %c0 = arith.constant 0 : index
    %c0_1 = arith.constant 0 : index
    %3 = vector.load %arg7[%c0, %c0_1] : memref<128x128xf32, #tpu.memory_space<vmem>>, vector<128x128xf32>
    %c0_2 = arith.constant 0 : index
    %c0_3 = arith.constant 0 : index
    %4 = vector.load %arg3[%c0_2, %c0_3] : memref<128x288xbf16, #tpu.memory_space<vmem>>, vector<128x288xbf16>
    %c0_4 = arith.constant 0 : index
    %c0_5 = arith.constant 0 : index
    %5 = vector.load %arg4[%c0_4, %c0_5] : memref<288x128xbf16, #tpu.memory_space<vmem>>, vector<288x128xbf16>
    %cst = arith.constant dense<0.000000e+00> : vector<128x128xf32>
    %6 = tpu.matmul %4, %5, %cst {dimension_numbers = #tpu.dot_dimension_numbers<[1], [0], [0], [1], [0, 0, 1, 1], [], []>} : vector<128x288xbf16>, vector<288x128xbf16>, vector<128x128xf32> -> vector<128x128xf32>
    %7 = arith.addf %3, %6 : vector<128x128xf32>
    %c0_6 = arith.constant 0 : index
    %c0_7 = arith.constant 0 : index
    %8 = vector.load %arg7[%c0_6, %c0_7] : memref<128x128xf32, #tpu.memory_space<vmem>>, vector<128x128xf32>
    tpu.vector_store %arg7[%c0_6, %c0_7], %7 {strides = array<i32>} : memref<128x128xf32, #tpu.memory_space<vmem>>, vector<128x128xf32>,
    %c0_i32_8 = arith.constant 0 : i32
    %9 = arith.cmpi eq, %arg2, %c0_i32_8 : i32
    %10 = arith.extui %9 : i1 to i32
    %c0_i32_9 = arith.constant 0 : i32
    %11 = arith.cmpi ne, %10, %c0_i32_9 : i32
    scf.if %11 {
      %c0_10 = arith.constant 0 : index
      %c0_11 = arith.constant 0 : index
      %12 = vector.load %arg7[%c0_10, %c0_11] : memref<128x128xf32, #tpu.memory_space<vmem>>, vector<128x128xf32>
      %c0_12 = arith.constant 0 : index
      %c0_13 = arith.constant 0 : index
      %13 = vector.load %arg5[%c0_12, %c0_13] : memref<1x128xf32, #tpu.memory_space<vmem>>, vector<1x128xf32>
      %14 = vector.broadcast %13 : vector<1x128xf32> to vector<128x128xf32>
      %15 = arith.addf %12, %14 : vector<128x128xf32>
      %cst_14 = arith.constant 0.000000e+00 : f32
      %16 = vector.broadcast %cst_14 : f32 to vector<128x128xf32>
      %17 = arith.maximumf %15, %16 : vector<128x128xf32>
      %c0_15 = arith.constant 0 : index
      %c0_16 = arith.constant 0 : index
      %18 = vector.load %arg6[%c0_15, %c0_16] : memref<128x128xf32, #tpu.memory_space<vmem>>, vector<128x128xf32>
      tpu.vector_store %arg6[%c0_15, %c0_16], %17 {strides = array<i32>} : memref<128x128xf32, #tpu.memory_space<vmem>>, vector<128x128xf32>,
    } else {
    }
    return
  }
  func.func @transform_0(%arg0: i32, %arg1: i32, %arg2: i32) -> (i32, i32) {
    %c0_i32 = arith.constant 0 : i32
    return %arg0, %arg2 : i32, i32
  }
  func.func @transform_1(%arg0: i32, %arg1: i32, %arg2: i32) -> (i32, i32) {
    %c0_i32 = arith.constant 0 : i32
    return %arg2, %arg1 : i32, i32
  }
  func.func @transform_2(%arg0: i32, %arg1: i32, %arg2: i32) -> (i32, i32) {
    %c0_i32 = arith.constant 0 : i32
    %c0_i32_0 = arith.constant 0 : i32
    return %c0_i32, %arg1 : i32, i32
  }
  func.func @transform_3(%arg0: i32, %arg1: i32, %arg2: i32) -> (i32, i32) {
    %c0_i32 = arith.constant 0 : i32
    return %arg0, %arg1 : i32, i32
  }
}

module attributes {stable_mosaic.version = 11 : i64} {
  func.func @_mm_kernel(%arg0: i32, %arg1: i32, %arg2: i32, %arg3: memref<128x64xbf16, #tpu.memory_space<vmem>>, %arg4: memref<64x128xbf16, #tpu.memory_space<vmem>>, %arg5: memref<1x128xf32, #tpu.memory_space<vmem>>, %arg6: memref<128x128xf32, #tpu.memory_space<vmem>>, %arg7: memref<128x128xf32, #tpu.memory_space<vmem>>) attributes {dimension_semantics = [#tpu.dimension_semantics<parallel>, #tpu.dimension_semantics<parallel>, #tpu.dimension_semantics<arbitrary>], iteration_bounds = array<i64: 1, 1, 1>, scalar_prefetch = 0 : i64, scratch_operands = 1 : i64, tpu.core_type = #tpu.core_type<tc>, window_params = [{transform_indices = @transform_0, window_bounds = array<i64: 128, 64>}, {transform_indices = @transform_1, window_bounds = array<i64: 64, 128>}, {transform_indices = @transform_2, window_bounds = array<i64: 1, 128>}, {transform_indices = @transform_3, window_bounds = array<i64: 128, 128>}]} {
    %c0_i32 = arith.constant 0 : i32
    %0 = arith.cmpi eq, %arg2, %c0_i32 : i32
    %1 = arith.extui %0 : i1 to i32
    %c0_i32_0 = arith.constant 0 : i32
    %2 = arith.cmpi ne, %1, %c0_i32_0 : i32
    scf.if %2 {
      %cst_10 = arith.constant 0.000000e+00 : f32
      %12 = vector.broadcast %cst_10 : f32 to vector<128x128xf32>
      %c0_11 = arith.constant 0 : index
      %c0_12 = arith.constant 0 : index
      %13 = vector.load %arg7[%c0_11, %c0_12] : memref<128x128xf32, #tpu.memory_space<vmem>>, vector<128x128xf32>
      tpu.vector_store %arg7[%c0_11, %c0_12], %12 {strides = array<i32>} : memref<128x128xf32, #tpu.memory_space<vmem>>, vector<128x128xf32>,
    } else {
    }
    %c0 = arith.constant 0 : index
    %c0_1 = arith.constant 0 : index
    %3 = vector.load %arg7[%c0, %c0_1] : memref<128x128xf32, #tpu.memory_space<vmem>>, vector<128x128xf32>
    %c0_2 = arith.constant 0 : index
    %c0_3 = arith.constant 0 : index
    %4 = vector.load %arg3[%c0_2, %c0_3] : memref<128x64xbf16, #tpu.memory_space<vmem>>, vector<128x64xbf16>
    %c0_4 = arith.constant 0 : index
    %c0_5 = arith.constant 0 : index
    %5 = vector.load %arg4[%c0_4, %c0_5] : memref<64x128xbf16, #tpu.memory_space<vmem>>, vector<64x128xbf16>
    %cst = arith.constant dense<0.000000e+00> : vector<128x128xf32>
    %6 = tpu.matmul %4, %5, %cst {dimension_numbers = #tpu.dot_dimension_numbers<[1], [0], [0], [1], [0, 0, 1, 1], [], []>} : vector<128x64xbf16>, vector<64x128xbf16>, vector<128x128xf32> -> vector<128x128xf32>
    %7 = arith.addf %3, %6 : vector<128x128xf32>
    %c0_6 = arith.constant 0 : index
    %c0_7 = arith.constant 0 : index
    %8 = vector.load %arg7[%c0_6, %c0_7] : memref<128x128xf32, #tpu.memory_space<vmem>>, vector<128x128xf32>
    tpu.vector_store %arg7[%c0_6, %c0_7], %7 {strides = array<i32>} : memref<128x128xf32, #tpu.memory_space<vmem>>, vector<128x128xf32>,
    %c0_i32_8 = arith.constant 0 : i32
    %9 = arith.cmpi eq, %arg2, %c0_i32_8 : i32
    %10 = arith.extui %9 : i1 to i32
    %c0_i32_9 = arith.constant 0 : i32
    %11 = arith.cmpi ne, %10, %c0_i32_9 : i32
    scf.if %11 {
      %c0_10 = arith.constant 0 : index
      %c0_11 = arith.constant 0 : index
      %12 = vector.load %arg7[%c0_10, %c0_11] : memref<128x128xf32, #tpu.memory_space<vmem>>, vector<128x128xf32>
      %c0_12 = arith.constant 0 : index
      %c0_13 = arith.constant 0 : index
      %13 = vector.load %arg5[%c0_12, %c0_13] : memref<1x128xf32, #tpu.memory_space<vmem>>, vector<1x128xf32>
      %14 = vector.broadcast %13 : vector<1x128xf32> to vector<128x128xf32>
      %15 = arith.addf %12, %14 : vector<128x128xf32>
      %c0_14 = arith.constant 0 : index
      %c0_15 = arith.constant 0 : index
      %16 = vector.load %arg6[%c0_14, %c0_15] : memref<128x128xf32, #tpu.memory_space<vmem>>, vector<128x128xf32>
      tpu.vector_store %arg6[%c0_14, %c0_15], %15 {strides = array<i32>} : memref<128x128xf32, #tpu.memory_space<vmem>>, vector<128x128xf32>,
    } else {
    }
    return
  }
  func.func @transform_0(%arg0: i32, %arg1: i32, %arg2: i32) -> (i32, i32) {
    %c0_i32 = arith.constant 0 : i32
    return %arg0, %arg2 : i32, i32
  }
  func.func @transform_1(%arg0: i32, %arg1: i32, %arg2: i32) -> (i32, i32) {
    %c0_i32 = arith.constant 0 : i32
    return %arg2, %arg1 : i32, i32
  }
  func.func @transform_2(%arg0: i32, %arg1: i32, %arg2: i32) -> (i32, i32) {
    %c0_i32 = arith.constant 0 : i32
    %c0_i32_0 = arith.constant 0 : i32
    return %c0_i32, %arg1 : i32, i32
  }
  func.func @transform_3(%arg0: i32, %arg1: i32, %arg2: i32) -> (i32, i32) {
    %c0_i32 = arith.constant 0 : i32
    return %arg0, %arg1 : i32, i32
  }
}

module attributes {stable_mosaic.version = 11 : i64} {
  func.func @_attn_kernel(%arg0: i32, %arg1: i32, %arg2: i32, %arg3: memref<1x64x8xbf16, #tpu.memory_space<vmem>>, %arg4: memref<1x64x8xbf16, #tpu.memory_space<vmem>>, %arg5: memref<1x64x64xbf16, #tpu.memory_space<vmem>>, %arg6: memref<1x64x64xf32, #tpu.memory_space<vmem>>, %arg7: memref<1x1xf32, #tpu.memory_space<vmem>>, %arg8: memref<1x64x64xf32, #tpu.memory_space<vmem>>, %arg9: memref<64x1xf32, #tpu.memory_space<vmem>>, %arg10: memref<64x1xf32, #tpu.memory_space<vmem>>, %arg11: memref<64x64xf32, #tpu.memory_space<vmem>>) attributes {dimension_semantics = [#tpu.dimension_semantics<parallel>, #tpu.dimension_semantics<parallel>, #tpu.dimension_semantics<arbitrary>], iteration_bounds = array<i64: 2, 1, 1>, scalar_prefetch = 0 : i64, scratch_operands = 3 : i64, tpu.core_type = #tpu.core_type<tc>, window_params = [{transform_indices = @transform_0, window_bounds = array<i64: 1, 64, 8>}, {transform_indices = @transform_1, window_bounds = array<i64: 1, 64, 8>}, {transform_indices = @transform_2, window_bounds = array<i64: 1, 64, 64>}, {transform_indices = @transform_3, window_bounds = array<i64: 1, 64, 64>}, {pipeline_mode = #tpu.pipeline_mode<synchronous>, transform_indices = @transform_4, window_bounds = array<i64: 1, 1>}, {transform_indices = @transform_5, window_bounds = array<i64: 1, 64, 64>}]} {
    %c0_i32 = arith.constant 0 : i32
    %0 = arith.cmpi eq, %arg2, %c0_i32 : i32
    %1 = arith.extui %0 : i1 to i32
    %c0_i32_0 = arith.constant 0 : i32
    %2 = arith.cmpi ne, %1, %c0_i32_0 : i32
    scf.if %2 {
      %cst_26 = arith.constant 0xFF800000 : f32
      %36 = vector.broadcast %cst_26 : f32 to vector<64x1xf32>
      %c0_27 = arith.constant 0 : index
      %c0_28 = arith.constant 0 : index
      %37 = vector.load %arg9[%c0_27, %c0_28] : memref<64x1xf32, #tpu.memory_space<vmem>>, vector<64x1xf32>
      tpu.vector_store %arg9[%c0_27, %c0_28], %36 {strides = array<i32>} : memref<64x1xf32, #tpu.memory_space<vmem>>, vector<64x1xf32>,
      %cst_29 = arith.constant 0.000000e+00 : f32
      %38 = vector.broadcast %cst_29 : f32 to vector<64x1xf32>
      %c0_30 = arith.constant 0 : index
      %c0_31 = arith.constant 0 : index
      %39 = vector.load %arg10[%c0_30, %c0_31] : memref<64x1xf32, #tpu.memory_space<vmem>>, vector<64x1xf32>
      tpu.vector_store %arg10[%c0_30, %c0_31], %38 {strides = array<i32>} : memref<64x1xf32, #tpu.memory_space<vmem>>, vector<64x1xf32>,
      %cst_32 = arith.constant 0.000000e+00 : f32
      %40 = vector.broadcast %cst_32 : f32 to vector<64x64xf32>
      %c0_33 = arith.constant 0 : index
      %c0_34 = arith.constant 0 : index
      %41 = vector.load %arg11[%c0_33, %c0_34] : memref<64x64xf32, #tpu.memory_space<vmem>>, vector<64x64xf32>
      tpu.vector_store %arg11[%c0_33, %c0_34], %40 {strides = array<i32>} : memref<64x64xf32, #tpu.memory_space<vmem>>, vector<64x64xf32>,
    } else {
    }
    %c0 = arith.constant 0 : index
    %c0_1 = arith.constant 0 : index
    %c0_2 = arith.constant 0 : index
    %3 = vector.load %arg3[%c0, %c0_1, %c0_2] : memref<1x64x8xbf16, #tpu.memory_space<vmem>>, vector<1x64x8xbf16>
    %4 = vector.shape_cast %3 : vector<1x64x8xbf16> to vector<64x8xbf16>
    %c0_3 = arith.constant 0 : index
    %c0_4 = arith.constant 0 : index
    %c0_5 = arith.constant 0 : index
    %5 = vector.load %arg4[%c0_3, %c0_4, %c0_5] : memref<1x64x8xbf16, #tpu.memory_space<vmem>>, vector<1x64x8xbf16>
    %6 = vector.shape_cast %5 : vector<1x64x8xbf16> to vector<64x8xbf16>
    %c0_6 = arith.constant 0 : index
    %c0_7 = arith.constant 0 : index
    %c0_8 = arith.constant 0 : index
    %7 = vector.load %arg5[%c0_6, %c0_7, %c0_8] : memref<1x64x64xbf16, #tpu.memory_space<vmem>>, vector<1x64x64xbf16>
    %8 = vector.shape_cast %7 : vector<1x64x64xbf16> to vector<64x64xbf16>
    %cst = arith.constant dense<0.000000e+00> : vector<64x64xf32>
    %9 = tpu.matmul %4, %6, %cst {dimension_numbers = #tpu.dot_dimension_numbers<[1], [1], [0], [0], [0, 0, 1, 0], [], []>} : vector<64x8xbf16>, vector<64x8xbf16>, vector<64x64xf32> -> vector<64x64xf32>
    %c0_9 = arith.constant 0 : index
    %c0_10 = arith.constant 0 : index
    %10 = vector.load %arg9[%c0_9, %c0_10] : memref<64x1xf32, #tpu.memory_space<vmem>>, vector<64x1xf32>
    %cst_11 = arith.constant dense<0xFF800000> : vector<64xf32>
    %11 = vector.multi_reduction <maximumf>, %9, %cst_11 [1] : vector<64x64xf32> to vector<64xf32>
    %12 = vector.shape_cast %11 : vector<64xf32> to vector<64x1xf32>
    %13 = arith.maximumf %10, %12 : vector<64x1xf32>
    %14 = arith.subf %10, %13 : vector<64x1xf32>
    %15 = math.exp %14 : vector<64x1xf32>
    %16 = vector.broadcast %13 : vector<64x1xf32> to vector<64x64xf32>
    %17 = arith.subf %9, %16 : vector<64x64xf32>
    %18 = math.exp %17 : vector<64x64xf32>
    %c0_12 = arith.constant 0 : index
    %c0_13 = arith.constant 0 : index
    %19 = vector.load %arg10[%c0_12, %c0_13] : memref<64x1xf32, #tpu.memory_space<vmem>>, vector<64x1xf32>
    %20 = arith.mulf %15, %19 : vector<64x1xf32>
    %cst_14 = arith.constant dense<0.000000e+00> : vector<64xf32>
    %21 = vector.multi_reduction <add>, %18, %cst_14 [1] : vector<64x64xf32> to vector<64xf32>
    %22 = vector.shape_cast %21 : vector<64xf32> to vector<64x1xf32>
    %23 = arith.addf %20, %22 : vector<64x1xf32>
    %c0_15 = arith.constant 0 : index
    %c0_16 = arith.constant 0 : index
    %24 = vector.load %arg10[%c0_15, %c0_16] : memref<64x1xf32, #tpu.memory_space<vmem>>, vector<64x1xf32>
    tpu.vector_store %arg10[%c0_15, %c0_16], %23 {strides = array<i32>} : memref<64x1xf32, #tpu.memory_space<vmem>>, vector<64x1xf32>,
    %c0_17 = arith.constant 0 : index
    %c0_18 = arith.constant 0 : index
    %25 = vector.load %arg11[%c0_17, %c0_18] : memref<64x64xf32, #tpu.memory_space<vmem>>, vector<64x64xf32>
    %26 = vector.broadcast %15 : vector<64x1xf32> to vector<64x64xf32>
    %27 = arith.mulf %26, %25 : vector<64x64xf32>
    %28 = arith.truncf %18 : vector<64x64xf32> to vector<64x64xbf16>
    %cst_19 = arith.constant dense<0.000000e+00> : vector<64x64xf32>
    %29 = tpu.matmul %28, %8, %cst_19 {dimension_numbers = #tpu.dot_dimension_numbers<[1], [0], [0], [1], [0, 0, 1, 1], [], []>} : vector<64x64xbf16>, vector<64x64xbf16>, vector<64x64xf32> -> vector<64x64xf32>
    %30 = arith.addf %27, %29 : vector<64x64xf32>
    %c0_20 = arith.constant 0 : index
    %c0_21 = arith.constant 0 : index
    %31 = vector.load %arg11[%c0_20, %c0_21] : memref<64x64xf32, #tpu.memory_space<vmem>>, vector<64x64xf32>
    tpu.vector_store %arg11[%c0_20, %c0_21], %30 {strides = array<i32>} : memref<64x64xf32, #tpu.memory_space<vmem>>, vector<64x64xf32>,
    %c0_22 = arith.constant 0 : index
    %c0_23 = arith.constant 0 : index
    %32 = vector.load %arg9[%c0_22, %c0_23] : memref<64x1xf32, #tpu.memory_space<vmem>>, vector<64x1xf32>
    tpu.vector_store %arg9[%c0_22, %c0_23], %13 {strides = array<i32>} : memref<64x1xf32, #tpu.memory_space<vmem>>, vector<64x1xf32>,
    %c0_i32_24 = arith.constant 0 : i32
    %33 = arith.cmpi eq, %arg2, %c0_i32_24 : i32
    %34 = arith.extui %33 : i1 to i32
    %c0_i32_25 = arith.constant 0 : i32
    %35 = arith.cmpi ne, %34, %c0_i32_25 : i32
    scf.if %35 {
      %c0_26 = arith.constant 0 : index
      %c0_27 = arith.constant 0 : index
      %36 = vector.load %arg11[%c0_26, %c0_27] : memref<64x64xf32, #tpu.memory_space<vmem>>, vector<64x64xf32>
      %c0_28 = arith.constant 0 : index
      %c0_29 = arith.constant 0 : index
      %37 = vector.load %arg10[%c0_28, %c0_29] : memref<64x1xf32, #tpu.memory_space<vmem>>, vector<64x1xf32>
      %38 = tpu.reciprocal %37 {approx = true} : vector<64x1xf32> -> vector<64x1xf32>
      %39 = vector.broadcast %38 : vector<64x1xf32> to vector<64x64xf32>
      %40 = arith.mulf %36, %39 : vector<64x64xf32>
      %c0_30 = arith.constant 0 : index
      %c0_31 = arith.constant 0 : index
      %41 = vector.load %arg7[%c0_30, %c0_31] : memref<1x1xf32, #tpu.memory_space<vmem>>, vector<1x1xf32>
      %42 = vector.extract %41[0, 0] : f32 from vector<1x1xf32>
      %43 = vector.broadcast %42 : f32 to vector<64x64xf32>
      %44 = arith.mulf %43, %40 : vector<64x64xf32>
      %c0_32 = arith.constant 0 : index
      %c0_33 = arith.constant 0 : index
      %c0_34 = arith.constant 0 : index
      %45 = vector.load %arg6[%c0_32, %c0_33, %c0_34] : memref<1x64x64xf32, #tpu.memory_space<vmem>>, vector<1x64x64xf32>
      %46 = vector.shape_cast %45 : vector<1x64x64xf32> to vector<64x64xf32>
      %47 = arith.addf %44, %46 : vector<64x64xf32>
      %c0_35 = arith.constant 0 : index
      %c0_36 = arith.constant 0 : index
      %c0_37 = arith.constant 0 : index
      %48 = vector.load %arg8[%c0_35, %c0_36, %c0_37] : memref<1x64x64xf32, #tpu.memory_space<vmem>>, vector<1x64x64xf32>
      %49 = vector.shape_cast %48 : vector<1x64x64xf32> to vector<64x64xf32>
      %50 = vector.shape_cast %47 : vector<64x64xf32> to vector<1x64x64xf32>
      tpu.vector_store %arg8[%c0_35, %c0_36, %c0_37], %50 {strides = array<i32>} : memref<1x64x64xf32, #tpu.memory_space<vmem>>, vector<1x64x64xf32>,
    } else {
    }
    return
  }
  func.func @transform_0(%arg0: i32, %arg1: i32, %arg2: i32) -> (i32, i32, i32) {
    %c0_i32 = arith.constant 0 : i32
    %c0_i32_0 = arith.constant 0 : i32
    return %arg0, %arg1, %c0_i32 : i32, i32, i32
  }
  func.func @transform_1(%arg0: i32, %arg1: i32, %arg2: i32) -> (i32, i32, i32) {
    %c0_i32 = arith.constant 0 : i32
    %c0_i32_0 = arith.constant 0 : i32
    return %arg0, %arg2, %c0_i32 : i32, i32, i32
  }
  func.func @transform_2(%arg0: i32, %arg1: i32, %arg2: i32) -> (i32, i32, i32) {
    %c0_i32 = arith.constant 0 : i32
    %c0_i32_0 = arith.constant 0 : i32
    return %arg0, %arg2, %c0_i32 : i32, i32, i32
  }
  func.func @transform_3(%arg0: i32, %arg1: i32, %arg2: i32) -> (i32, i32, i32) {
    %c0_i32 = arith.constant 0 : i32
    %c0_i32_0 = arith.constant 0 : i32
    return %arg0, %arg1, %c0_i32 : i32, i32, i32
  }
  func.func @transform_4(%arg0: i32, %arg1: i32, %arg2: i32) -> (i32, i32) {
    %c0_i32 = arith.constant 0 : i32
    %c0_i32_0 = arith.constant 0 : i32
    %c0_i32_1 = arith.constant 0 : i32
    return %c0_i32, %c0_i32_0 : i32, i32
  }
  func.func @transform_5(%arg0: i32, %arg1: i32, %arg2: i32) -> (i32, i32, i32) {
    %c0_i32 = arith.constant 0 : i32
    %c0_i32_0 = arith.constant 0 : i32
    return %arg0, %arg1, %c0_i32 : i32, i32, i32
  }
}

module attributes {stable_mosaic.version = 11 : i64} {
  func.func @_mm_kernel(%arg0: i32, %arg1: i32, %arg2: i32, %arg3: memref<32x128xbf16, #tpu.memory_space<vmem>>, %arg4: memref<128x128xbf16, #tpu.memory_space<vmem>>, %arg5: memref<1x128xf32, #tpu.memory_space<vmem>>, %arg6: memref<32x128xf32, #tpu.memory_space<vmem>>, %arg7: memref<32x128xf32, #tpu.memory_space<vmem>>) attributes {dimension_semantics = [#tpu.dimension_semantics<parallel>, #tpu.dimension_semantics<parallel>, #tpu.dimension_semantics<arbitrary>], iteration_bounds = array<i64: 1, 1, 5>, scalar_prefetch = 0 : i64, scratch_operands = 1 : i64, tpu.core_type = #tpu.core_type<tc>, window_params = [{transform_indices = @transform_0, window_bounds = array<i64: 32, 128>}, {transform_indices = @transform_1, window_bounds = array<i64: 128, 128>}, {transform_indices = @transform_2, window_bounds = array<i64: 1, 128>}, {transform_indices = @transform_3, window_bounds = array<i64: 32, 128>}]} {
    %c0_i32 = arith.constant 0 : i32
    %0 = arith.cmpi eq, %arg2, %c0_i32 : i32
    %1 = arith.extui %0 : i1 to i32
    %c0_i32_0 = arith.constant 0 : i32
    %2 = arith.cmpi ne, %1, %c0_i32_0 : i32
    scf.if %2 {
      %cst_9 = arith.constant 0.000000e+00 : f32
      %12 = vector.broadcast %cst_9 : f32 to vector<32x128xf32>
      %c0_10 = arith.constant 0 : index
      %c0_11 = arith.constant 0 : index
      %13 = vector.load %arg7[%c0_10, %c0_11] : memref<32x128xf32, #tpu.memory_space<vmem>>, vector<32x128xf32>
      tpu.vector_store %arg7[%c0_10, %c0_11], %12 {strides = array<i32>} : memref<32x128xf32, #tpu.memory_space<vmem>>, vector<32x128xf32>,
    } else {
    }
    %c0 = arith.constant 0 : index
    %c0_1 = arith.constant 0 : index
    %3 = vector.load %arg7[%c0, %c0_1] : memref<32x128xf32, #tpu.memory_space<vmem>>, vector<32x128xf32>
    %c0_2 = arith.constant 0 : index
    %c0_3 = arith.constant 0 : index
    %4 = vector.load %arg3[%c0_2, %c0_3] : memref<32x128xbf16, #tpu.memory_space<vmem>>, vector<32x128xbf16>
    %c0_4 = arith.constant 0 : index
    %c0_5 = arith.constant 0 : index
    %5 = vector.load %arg4[%c0_4, %c0_5] : memref<128x128xbf16, #tpu.memory_space<vmem>>, vector<128x128xbf16>
    %cst = arith.constant dense<0.000000e+00> : vector<32x128xf32>
    %6 = tpu.matmul %4, %5, %cst {dimension_numbers = #tpu.dot_dimension_numbers<[1], [0], [0], [1], [0, 0, 1, 1], [], []>} : vector<32x128xbf16>, vector<128x128xbf16>, vector<32x128xf32> -> vector<32x128xf32>
    %7 = arith.addf %3, %6 : vector<32x128xf32>
    %c0_6 = arith.constant 0 : index
    %c0_7 = arith.constant 0 : index
    %8 = vector.load %arg7[%c0_6, %c0_7] : memref<32x128xf32, #tpu.memory_space<vmem>>, vector<32x128xf32>
    tpu.vector_store %arg7[%c0_6, %c0_7], %7 {strides = array<i32>} : memref<32x128xf32, #tpu.memory_space<vmem>>, vector<32x128xf32>,
    %c4_i32 = arith.constant 4 : i32
    %9 = arith.cmpi eq, %arg2, %c4_i32 : i32
    %10 = arith.extui %9 : i1 to i32
    %c0_i32_8 = arith.constant 0 : i32
    %11 = arith.cmpi ne, %10, %c0_i32_8 : i32
    scf.if %11 {
      %c0_9 = arith.constant 0 : index
      %c0_10 = arith.constant 0 : index
      %12 = vector.load %arg7[%c0_9, %c0_10] : memref<32x128xf32, #tpu.memory_space<vmem>>, vector<32x128xf32>
      %c0_11 = arith.constant 0 : index
      %c0_12 = arith.constant 0 : index
      %13 = vector.load %arg5[%c0_11, %c0_12] : memref<1x128xf32, #tpu.memory_space<vmem>>, vector<1x128xf32>
      %14 = vector.broadcast %13 : vector<1x128xf32> to vector<32x128xf32>
      %15 = arith.addf %12, %14 : vector<32x128xf32>
      %cst_13 = arith.constant 0.000000e+00 : f32
      %16 = vector.broadcast %cst_13 : f32 to vector<32x128xf32>
      %17 = arith.maximumf %15, %16 : vector<32x128xf32>
      %c0_14 = arith.constant 0 : index
      %c0_15 = arith.constant 0 : index
      %18 = vector.load %arg6[%c0_14, %c0_15] : memref<32x128xf32, #tpu.memory_space<vmem>>, vector<32x128xf32>
      tpu.vector_store %arg6[%c0_14, %c0_15], %17 {strides = array<i32>} : memref<32x128xf32, #tpu.memory_space<vmem>>, vector<32x128xf32>,
    } else {
    }
    return
  }
  func.func @transform_0(%arg0: i32, %arg1: i32, %arg2: i32) -> (i32, i32) {
    %c0_i32 = arith.constant 0 : i32
    return %arg0, %arg2 : i32, i32
  }
  func.func @transform_1(%arg0: i32, %arg1: i32, %arg2: i32) -> (i32, i32) {
    %c0_i32 = arith.constant 0 : i32
    return %arg2, %arg1 : i32, i32
  }
  func.func @transform_2(%arg0: i32, %arg1: i32, %arg2: i32) -> (i32, i32) {
    %c0_i32 = arith.constant 0 : i32
    %c0_i32_0 = arith.constant 0 : i32
    return %c0_i32, %arg1 : i32, i32
  }
  func.func @transform_3(%arg0: i32, %arg1: i32, %arg2: i32) -> (i32, i32) {
    %c0_i32 = arith.constant 0 : i32
    return %arg0, %arg1 : i32, i32
  }
}

module attributes {stable_mosaic.version = 11 : i64} {
  func.func @_mm_kernel(%arg0: i32, %arg1: i32, %arg2: i32, %arg3: memref<8x512xbf16, #tpu.memory_space<vmem>>, %arg4: memref<512x128xbf16, #tpu.memory_space<vmem>>, %arg5: memref<1x128xf32, #tpu.memory_space<vmem>>, %arg6: memref<8x128xf32, #tpu.memory_space<vmem>>, %arg7: memref<8x128xf32, #tpu.memory_space<vmem>>) attributes {dimension_semantics = [#tpu.dimension_semantics<parallel>, #tpu.dimension_semantics<parallel>, #tpu.dimension_semantics<arbitrary>], iteration_bounds = array<i64: 1, 1, 4>, scalar_prefetch = 0 : i64, scratch_operands = 1 : i64, tpu.core_type = #tpu.core_type<tc>, window_params = [{transform_indices = @transform_0, window_bounds = array<i64: 8, 512>}, {transform_indices = @transform_1, window_bounds = array<i64: 512, 128>}, {transform_indices = @transform_2, window_bounds = array<i64: 1, 128>}, {transform_indices = @transform_3, window_bounds = array<i64: 8, 128>}]} {
    %c0_i32 = arith.constant 0 : i32
    %0 = arith.cmpi eq, %arg2, %c0_i32 : i32
    %1 = arith.extui %0 : i1 to i32
    %c0_i32_0 = arith.constant 0 : i32
    %2 = arith.cmpi ne, %1, %c0_i32_0 : i32
    scf.if %2 {
      %cst_9 = arith.constant 0.000000e+00 : f32
      %12 = vector.broadcast %cst_9 : f32 to vector<8x128xf32>
      %c0_10 = arith.constant 0 : index
      %c0_11 = arith.constant 0 : index
      %13 = vector.load %arg7[%c0_10, %c0_11] : memref<8x128xf32, #tpu.memory_space<vmem>>, vector<8x128xf32>
      tpu.vector_store %arg7[%c0_10, %c0_11], %12 {strides = array<i32>} : memref<8x128xf32, #tpu.memory_space<vmem>>, vector<8x128xf32>,
    } else {
    }
    %c0 = arith.constant 0 : index
    %c0_1 = arith.constant 0 : index
    %3 = vector.load %arg7[%c0, %c0_1] : memref<8x128xf32, #tpu.memory_space<vmem>>, vector<8x128xf32>
    %c0_2 = arith.constant 0 : index
    %c0_3 = arith.constant 0 : index
    %4 = vector.load %arg3[%c0_2, %c0_3] : memref<8x512xbf16, #tpu.memory_space<vmem>>, vector<8x512xbf16>
    %c0_4 = arith.constant 0 : index
    %c0_5 = arith.constant 0 : index
    %5 = vector.load %arg4[%c0_4, %c0_5] : memref<512x128xbf16, #tpu.memory_space<vmem>>, vector<512x128xbf16>
    %cst = arith.constant dense<0.000000e+00> : vector<8x128xf32>
    %6 = tpu.matmul %4, %5, %cst {dimension_numbers = #tpu.dot_dimension_numbers<[1], [0], [0], [1], [0, 0, 1, 1], [], []>} : vector<8x512xbf16>, vector<512x128xbf16>, vector<8x128xf32> -> vector<8x128xf32>
    %7 = arith.addf %3, %6 : vector<8x128xf32>
    %c0_6 = arith.constant 0 : index
    %c0_7 = arith.constant 0 : index
    %8 = vector.load %arg7[%c0_6, %c0_7] : memref<8x128xf32, #tpu.memory_space<vmem>>, vector<8x128xf32>
    tpu.vector_store %arg7[%c0_6, %c0_7], %7 {strides = array<i32>} : memref<8x128xf32, #tpu.memory_space<vmem>>, vector<8x128xf32>,
    %c3_i32 = arith.constant 3 : i32
    %9 = arith.cmpi eq, %arg2, %c3_i32 : i32
    %10 = arith.extui %9 : i1 to i32
    %c0_i32_8 = arith.constant 0 : i32
    %11 = arith.cmpi ne, %10, %c0_i32_8 : i32
    scf.if %11 {
      %c0_9 = arith.constant 0 : index
      %c0_10 = arith.constant 0 : index
      %12 = vector.load %arg7[%c0_9, %c0_10] : memref<8x128xf32, #tpu.memory_space<vmem>>, vector<8x128xf32>
      %c0_11 = arith.constant 0 : index
      %c0_12 = arith.constant 0 : index
      %13 = vector.load %arg5[%c0_11, %c0_12] : memref<1x128xf32, #tpu.memory_space<vmem>>, vector<1x128xf32>
      %14 = vector.broadcast %13 : vector<1x128xf32> to vector<8x128xf32>
      %15 = arith.addf %12, %14 : vector<8x128xf32>
      %c0_13 = arith.constant 0 : index
      %c0_14 = arith.constant 0 : index
      %16 = vector.load %arg6[%c0_13, %c0_14] : memref<8x128xf32, #tpu.memory_space<vmem>>, vector<8x128xf32>
      tpu.vector_store %arg6[%c0_13, %c0_14], %15 {strides = array<i32>} : memref<8x128xf32, #tpu.memory_space<vmem>>, vector<8x128xf32>,
    } else {
    }
    return
  }
  func.func @transform_0(%arg0: i32, %arg1: i32, %arg2: i32) -> (i32, i32) {
    %c0_i32 = arith.constant 0 : i32
    return %arg0, %arg2 : i32, i32
  }
  func.func @transform_1(%arg0: i32, %arg1: i32, %arg2: i32) -> (i32, i32) {
    %c0_i32 = arith.constant 0 : i32
    return %arg2, %arg1 : i32, i32
  }
  func.func @transform_2(%arg0: i32, %arg1: i32, %arg2: i32) -> (i32, i32) {
    %c0_i32 = arith.constant 0 : i32
    %c0_i32_0 = arith.constant 0 : i32
    return %c0_i32, %arg1 : i32, i32
  }
  func.func @transform_3(%arg0: i32, %arg1: i32, %arg2: i32) -> (i32, i32) {
    %c0_i32 = arith.constant 0 : i32
    return %arg0, %arg1 : i32, i32
  }
}

module attributes {stable_mosaic.version = 11 : i64} {
  func.func @_mm_kernel(%arg0: i32, %arg1: i32, %arg2: i32, %arg3: memref<8x32xbf16, #tpu.memory_space<vmem>>, %arg4: memref<32x512xbf16, #tpu.memory_space<vmem>>, %arg5: memref<1x512xf32, #tpu.memory_space<vmem>>, %arg6: memref<8x512xf32, #tpu.memory_space<vmem>>, %arg7: memref<8x512xf32, #tpu.memory_space<vmem>>) attributes {dimension_semantics = [#tpu.dimension_semantics<parallel>, #tpu.dimension_semantics<parallel>, #tpu.dimension_semantics<arbitrary>], iteration_bounds = array<i64: 1, 4, 1>, scalar_prefetch = 0 : i64, scratch_operands = 1 : i64, tpu.core_type = #tpu.core_type<tc>, window_params = [{transform_indices = @transform_0, window_bounds = array<i64: 8, 32>}, {transform_indices = @transform_1, window_bounds = array<i64: 32, 512>}, {transform_indices = @transform_2, window_bounds = array<i64: 1, 512>}, {transform_indices = @transform_3, window_bounds = array<i64: 8, 512>}]} {
    %c0_i32 = arith.constant 0 : i32
    %0 = arith.cmpi eq, %arg2, %c0_i32 : i32
    %1 = arith.extui %0 : i1 to i32
    %c0_i32_0 = arith.constant 0 : i32
    %2 = arith.cmpi ne, %1, %c0_i32_0 : i32
    scf.if %2 {
      %cst_10 = arith.constant 0.000000e+00 : f32
      %12 = vector.broadcast %cst_10 : f32 to vector<8x512xf32>
      %c0_11 = arith.constant 0 : index
      %c0_12 = arith.constant 0 : index
      %13 = vector.load %arg7[%c0_11, %c0_12] : memref<8x512xf32, #tpu.memory_space<vmem>>, vector<8x512xf32>
      tpu.vector_store %arg7[%c0_11, %c0_12], %12 {strides = array<i32>} : memref<8x512xf32, #tpu.memory_space<vmem>>, vector<8x512xf32>,
    } else {
    }
    %c0 = arith.constant 0 : index
    %c0_1 = arith.constant 0 : index
    %3 = vector.load %arg7[%c0, %c0_1] : memref<8x512xf32, #tpu.memory_space<vmem>>, vector<8x512xf32>
    %c0_2 = arith.constant 0 : index
    %c0_3 = arith.constant 0 : index
    %4 = vector.load %arg3[%c0_2, %c0_3] : memref<8x32xbf16, #tpu.memory_space<vmem>>, vector<8x32xbf16>
    %c0_4 = arith.constant 0 : index
    %c0_5 = arith.constant 0 : index
    %5 = vector.load %arg4[%c0_4, %c0_5] : memref<32x512xbf16, #tpu.memory_space<vmem>>, vector<32x512xbf16>
    %cst = arith.constant dense<0.000000e+00> : vector<8x512xf32>
    %6 = tpu.matmul %4, %5, %cst {dimension_numbers = #tpu.dot_dimension_numbers<[1], [0], [0], [1], [0, 0, 1, 1], [], []>} : vector<8x32xbf16>, vector<32x512xbf16>, vector<8x512xf32> -> vector<8x512xf32>
    %7 = arith.addf %3, %6 : vector<8x512xf32>
    %c0_6 = arith.constant 0 : index
    %c0_7 = arith.constant 0 : index
    %8 = vector.load %arg7[%c0_6, %c0_7] : memref<8x512xf32, #tpu.memory_space<vmem>>, vector<8x512xf32>
    tpu.vector_store %arg7[%c0_6, %c0_7], %7 {strides = array<i32>} : memref<8x512xf32, #tpu.memory_space<vmem>>, vector<8x512xf32>,
    %c0_i32_8 = arith.constant 0 : i32
    %9 = arith.cmpi eq, %arg2, %c0_i32_8 : i32
    %10 = arith.extui %9 : i1 to i32
    %c0_i32_9 = arith.constant 0 : i32
    %11 = arith.cmpi ne, %10, %c0_i32_9 : i32
    scf.if %11 {
      %c0_10 = arith.constant 0 : index
      %c0_11 = arith.constant 0 : index
      %12 = vector.load %arg7[%c0_10, %c0_11] : memref<8x512xf32, #tpu.memory_space<vmem>>, vector<8x512xf32>
      %c0_12 = arith.constant 0 : index
      %c0_13 = arith.constant 0 : index
      %13 = vector.load %arg5[%c0_12, %c0_13] : memref<1x512xf32, #tpu.memory_space<vmem>>, vector<1x512xf32>
      %14 = vector.broadcast %13 : vector<1x512xf32> to vector<8x512xf32>
      %15 = arith.addf %12, %14 : vector<8x512xf32>
      %cst_14 = arith.constant 0.000000e+00 : f32
      %16 = vector.broadcast %cst_14 : f32 to vector<8x512xf32>
      %17 = arith.maximumf %15, %16 : vector<8x512xf32>
      %c0_15 = arith.constant 0 : index
      %c0_16 = arith.constant 0 : index
      %18 = vector.load %arg6[%c0_15, %c0_16] : memref<8x512xf32, #tpu.memory_space<vmem>>, vector<8x512xf32>
      tpu.vector_store %arg6[%c0_15, %c0_16], %17 {strides = array<i32>} : memref<8x512xf32, #tpu.memory_space<vmem>>, vector<8x512xf32>,
    } else {
    }
    return
  }
  func.func @transform_0(%arg0: i32, %arg1: i32, %arg2: i32) -> (i32, i32) {
    %c0_i32 = arith.constant 0 : i32
    return %arg0, %arg2 : i32, i32
  }
  func.func @transform_1(%arg0: i32, %arg1: i32, %arg2: i32) -> (i32, i32) {
    %c0_i32 = arith.constant 0 : i32
    return %arg2, %arg1 : i32, i32
  }
  func.func @transform_2(%arg0: i32, %arg1: i32, %arg2: i32) -> (i32, i32) {
    %c0_i32 = arith.constant 0 : i32
    %c0_i32_0 = arith.constant 0 : i32
    return %c0_i32, %arg1 : i32, i32
  }
  func.func @transform_3(%arg0: i32, %arg1: i32, %arg2: i32) -> (i32, i32) {
    %c0_i32 = arith.constant 0 : i32
    return %arg0, %arg1 : i32, i32
  }
}

module attributes {stable_mosaic.version = 11 : i64} {
  func.func @_mm_kernel(%arg0: i32, %arg1: i32, %arg2: i32, %arg3: memref<32x512xbf16, #tpu.memory_space<vmem>>, %arg4: memref<512x256xbf16, #tpu.memory_space<vmem>>, %arg5: memref<1x256xf32, #tpu.memory_space<vmem>>, %arg6: memref<32x256xf32, #tpu.memory_space<vmem>>, %arg7: memref<32x256xf32, #tpu.memory_space<vmem>>) attributes {dimension_semantics = [#tpu.dimension_semantics<parallel>, #tpu.dimension_semantics<parallel>, #tpu.dimension_semantics<arbitrary>], iteration_bounds = array<i64: 1, 1, 1>, scalar_prefetch = 0 : i64, scratch_operands = 1 : i64, tpu.core_type = #tpu.core_type<tc>, window_params = [{transform_indices = @transform_0, window_bounds = array<i64: 32, 512>}, {transform_indices = @transform_1, window_bounds = array<i64: 512, 256>}, {transform_indices = @transform_2, window_bounds = array<i64: 1, 256>}, {transform_indices = @transform_3, window_bounds = array<i64: 32, 256>}]} {
    %c0_i32 = arith.constant 0 : i32
    %0 = arith.cmpi eq, %arg2, %c0_i32 : i32
    %1 = arith.extui %0 : i1 to i32
    %c0_i32_0 = arith.constant 0 : i32
    %2 = arith.cmpi ne, %1, %c0_i32_0 : i32
    scf.if %2 {
      %cst_10 = arith.constant 0.000000e+00 : f32
      %12 = vector.broadcast %cst_10 : f32 to vector<32x256xf32>
      %c0_11 = arith.constant 0 : index
      %c0_12 = arith.constant 0 : index
      %13 = vector.load %arg7[%c0_11, %c0_12] : memref<32x256xf32, #tpu.memory_space<vmem>>, vector<32x256xf32>
      tpu.vector_store %arg7[%c0_11, %c0_12], %12 {strides = array<i32>} : memref<32x256xf32, #tpu.memory_space<vmem>>, vector<32x256xf32>,
    } else {
    }
    %c0 = arith.constant 0 : index
    %c0_1 = arith.constant 0 : index
    %3 = vector.load %arg7[%c0, %c0_1] : memref<32x256xf32, #tpu.memory_space<vmem>>, vector<32x256xf32>
    %c0_2 = arith.constant 0 : index
    %c0_3 = arith.constant 0 : index
    %4 = vector.load %arg3[%c0_2, %c0_3] : memref<32x512xbf16, #tpu.memory_space<vmem>>, vector<32x512xbf16>
    %c0_4 = arith.constant 0 : index
    %c0_5 = arith.constant 0 : index
    %5 = vector.load %arg4[%c0_4, %c0_5] : memref<512x256xbf16, #tpu.memory_space<vmem>>, vector<512x256xbf16>
    %cst = arith.constant dense<0.000000e+00> : vector<32x256xf32>
    %6 = tpu.matmul %4, %5, %cst {dimension_numbers = #tpu.dot_dimension_numbers<[1], [0], [0], [1], [0, 0, 1, 1], [], []>} : vector<32x512xbf16>, vector<512x256xbf16>, vector<32x256xf32> -> vector<32x256xf32>
    %7 = arith.addf %3, %6 : vector<32x256xf32>
    %c0_6 = arith.constant 0 : index
    %c0_7 = arith.constant 0 : index
    %8 = vector.load %arg7[%c0_6, %c0_7] : memref<32x256xf32, #tpu.memory_space<vmem>>, vector<32x256xf32>
    tpu.vector_store %arg7[%c0_6, %c0_7], %7 {strides = array<i32>} : memref<32x256xf32, #tpu.memory_space<vmem>>, vector<32x256xf32>,
    %c0_i32_8 = arith.constant 0 : i32
    %9 = arith.cmpi eq, %arg2, %c0_i32_8 : i32
    %10 = arith.extui %9 : i1 to i32
    %c0_i32_9 = arith.constant 0 : i32
    %11 = arith.cmpi ne, %10, %c0_i32_9 : i32
    scf.if %11 {
      %c0_10 = arith.constant 0 : index
      %c0_11 = arith.constant 0 : index
      %12 = vector.load %arg7[%c0_10, %c0_11] : memref<32x256xf32, #tpu.memory_space<vmem>>, vector<32x256xf32>
      %c0_12 = arith.constant 0 : index
      %c0_13 = arith.constant 0 : index
      %13 = vector.load %arg5[%c0_12, %c0_13] : memref<1x256xf32, #tpu.memory_space<vmem>>, vector<1x256xf32>
      %14 = vector.broadcast %13 : vector<1x256xf32> to vector<32x256xf32>
      %15 = arith.addf %12, %14 : vector<32x256xf32>
      %cst_14 = arith.constant 0.000000e+00 : f32
      %16 = vector.broadcast %cst_14 : f32 to vector<32x256xf32>
      %17 = arith.maximumf %15, %16 : vector<32x256xf32>
      %c0_15 = arith.constant 0 : index
      %c0_16 = arith.constant 0 : index
      %18 = vector.load %arg6[%c0_15, %c0_16] : memref<32x256xf32, #tpu.memory_space<vmem>>, vector<32x256xf32>
      tpu.vector_store %arg6[%c0_15, %c0_16], %17 {strides = array<i32>} : memref<32x256xf32, #tpu.memory_space<vmem>>, vector<32x256xf32>,
    } else {
    }
    return
  }
  func.func @transform_0(%arg0: i32, %arg1: i32, %arg2: i32) -> (i32, i32) {
    %c0_i32 = arith.constant 0 : i32
    return %arg0, %arg2 : i32, i32
  }
  func.func @transform_1(%arg0: i32, %arg1: i32, %arg2: i32) -> (i32, i32) {
    %c0_i32 = arith.constant 0 : i32
    return %arg2, %arg1 : i32, i32
  }
  func.func @transform_2(%arg0: i32, %arg1: i32, %arg2: i32) -> (i32, i32) {
    %c0_i32 = arith.constant 0 : i32
    %c0_i32_0 = arith.constant 0 : i32
    return %c0_i32, %arg1 : i32, i32
  }
  func.func @transform_3(%arg0: i32, %arg1: i32, %arg2: i32) -> (i32, i32) {
    %c0_i32 = arith.constant 0 : i32
    return %arg0, %arg1 : i32, i32
  }
}

module attributes {stable_mosaic.version = 11 : i64} {
  func.func @_mm_kernel(%arg0: i32, %arg1: i32, %arg2: i32, %arg3: memref<128x256xbf16, #tpu.memory_space<vmem>>, %arg4: memref<256x128xbf16, #tpu.memory_space<vmem>>, %arg5: memref<1x128xf32, #tpu.memory_space<vmem>>, %arg6: memref<128x128xf32, #tpu.memory_space<vmem>>, %arg7: memref<128x128xf32, #tpu.memory_space<vmem>>) attributes {dimension_semantics = [#tpu.dimension_semantics<parallel>, #tpu.dimension_semantics<parallel>, #tpu.dimension_semantics<arbitrary>], iteration_bounds = array<i64: 1, 1, 1>, scalar_prefetch = 0 : i64, scratch_operands = 1 : i64, tpu.core_type = #tpu.core_type<tc>, window_params = [{transform_indices = @transform_0, window_bounds = array<i64: 128, 256>}, {transform_indices = @transform_1, window_bounds = array<i64: 256, 128>}, {transform_indices = @transform_2, window_bounds = array<i64: 1, 128>}, {transform_indices = @transform_3, window_bounds = array<i64: 128, 128>}]} {
    %c0_i32 = arith.constant 0 : i32
    %0 = arith.cmpi eq, %arg2, %c0_i32 : i32
    %1 = arith.extui %0 : i1 to i32
    %c0_i32_0 = arith.constant 0 : i32
    %2 = arith.cmpi ne, %1, %c0_i32_0 : i32
    scf.if %2 {
      %cst_10 = arith.constant 0.000000e+00 : f32
      %12 = vector.broadcast %cst_10 : f32 to vector<128x128xf32>
      %c0_11 = arith.constant 0 : index
      %c0_12 = arith.constant 0 : index
      %13 = vector.load %arg7[%c0_11, %c0_12] : memref<128x128xf32, #tpu.memory_space<vmem>>, vector<128x128xf32>
      tpu.vector_store %arg7[%c0_11, %c0_12], %12 {strides = array<i32>} : memref<128x128xf32, #tpu.memory_space<vmem>>, vector<128x128xf32>,
    } else {
    }
    %c0 = arith.constant 0 : index
    %c0_1 = arith.constant 0 : index
    %3 = vector.load %arg7[%c0, %c0_1] : memref<128x128xf32, #tpu.memory_space<vmem>>, vector<128x128xf32>
    %c0_2 = arith.constant 0 : index
    %c0_3 = arith.constant 0 : index
    %4 = vector.load %arg3[%c0_2, %c0_3] : memref<128x256xbf16, #tpu.memory_space<vmem>>, vector<128x256xbf16>
    %c0_4 = arith.constant 0 : index
    %c0_5 = arith.constant 0 : index
    %5 = vector.load %arg4[%c0_4, %c0_5] : memref<256x128xbf16, #tpu.memory_space<vmem>>, vector<256x128xbf16>
    %cst = arith.constant dense<0.000000e+00> : vector<128x128xf32>
    %6 = tpu.matmul %4, %5, %cst {dimension_numbers = #tpu.dot_dimension_numbers<[1], [0], [0], [1], [0, 0, 1, 1], [], []>} : vector<128x256xbf16>, vector<256x128xbf16>, vector<128x128xf32> -> vector<128x128xf32>
    %7 = arith.addf %3, %6 : vector<128x128xf32>
    %c0_6 = arith.constant 0 : index
    %c0_7 = arith.constant 0 : index
    %8 = vector.load %arg7[%c0_6, %c0_7] : memref<128x128xf32, #tpu.memory_space<vmem>>, vector<128x128xf32>
    tpu.vector_store %arg7[%c0_6, %c0_7], %7 {strides = array<i32>} : memref<128x128xf32, #tpu.memory_space<vmem>>, vector<128x128xf32>,
    %c0_i32_8 = arith.constant 0 : i32
    %9 = arith.cmpi eq, %arg2, %c0_i32_8 : i32
    %10 = arith.extui %9 : i1 to i32
    %c0_i32_9 = arith.constant 0 : i32
    %11 = arith.cmpi ne, %10, %c0_i32_9 : i32
    scf.if %11 {
      %c0_10 = arith.constant 0 : index
      %c0_11 = arith.constant 0 : index
      %12 = vector.load %arg7[%c0_10, %c0_11] : memref<128x128xf32, #tpu.memory_space<vmem>>, vector<128x128xf32>
      %c0_12 = arith.constant 0 : index
      %c0_13 = arith.constant 0 : index
      %13 = vector.load %arg5[%c0_12, %c0_13] : memref<1x128xf32, #tpu.memory_space<vmem>>, vector<1x128xf32>
      %14 = vector.broadcast %13 : vector<1x128xf32> to vector<128x128xf32>
      %15 = arith.addf %12, %14 : vector<128x128xf32>
      %cst_14 = arith.constant 0.000000e+00 : f32
      %16 = vector.broadcast %cst_14 : f32 to vector<128x128xf32>
      %17 = arith.maximumf %15, %16 : vector<128x128xf32>
      %c0_15 = arith.constant 0 : index
      %c0_16 = arith.constant 0 : index
      %18 = vector.load %arg6[%c0_15, %c0_16] : memref<128x128xf32, #tpu.memory_space<vmem>>, vector<128x128xf32>
      tpu.vector_store %arg6[%c0_15, %c0_16], %17 {strides = array<i32>} : memref<128x128xf32, #tpu.memory_space<vmem>>, vector<128x128xf32>,
    } else {
    }
    return
  }
  func.func @transform_0(%arg0: i32, %arg1: i32, %arg2: i32) -> (i32, i32) {
    %c0_i32 = arith.constant 0 : i32
    return %arg0, %arg2 : i32, i32
  }
  func.func @transform_1(%arg0: i32, %arg1: i32, %arg2: i32) -> (i32, i32) {
    %c0_i32 = arith.constant 0 : i32
    return %arg2, %arg1 : i32, i32
  }
  func.func @transform_2(%arg0: i32, %arg1: i32, %arg2: i32) -> (i32, i32) {
    %c0_i32 = arith.constant 0 : i32
    %c0_i32_0 = arith.constant 0 : i32
    return %c0_i32, %arg1 : i32, i32
  }
  func.func @transform_3(%arg0: i32, %arg1: i32, %arg2: i32) -> (i32, i32) {
    %c0_i32 = arith.constant 0 : i32
    return %arg0, %arg1 : i32, i32
  }
}

module attributes {stable_mosaic.version = 11 : i64} {
  func.func @_mm_kernel(%arg0: i32, %arg1: i32, %arg2: i32, %arg3: memref<512x128xbf16, #tpu.memory_space<vmem>>, %arg4: memref<128x128xbf16, #tpu.memory_space<vmem>>, %arg5: memref<1x128xf32, #tpu.memory_space<vmem>>, %arg6: memref<512x128xf32, #tpu.memory_space<vmem>>, %arg7: memref<512x128xf32, #tpu.memory_space<vmem>>) attributes {dimension_semantics = [#tpu.dimension_semantics<parallel>, #tpu.dimension_semantics<parallel>, #tpu.dimension_semantics<arbitrary>], iteration_bounds = array<i64: 1, 1, 1>, scalar_prefetch = 0 : i64, scratch_operands = 1 : i64, tpu.core_type = #tpu.core_type<tc>, window_params = [{transform_indices = @transform_0, window_bounds = array<i64: 512, 128>}, {transform_indices = @transform_1, window_bounds = array<i64: 128, 128>}, {transform_indices = @transform_2, window_bounds = array<i64: 1, 128>}, {transform_indices = @transform_3, window_bounds = array<i64: 512, 128>}]} {
    %c0_i32 = arith.constant 0 : i32
    %0 = arith.cmpi eq, %arg2, %c0_i32 : i32
    %1 = arith.extui %0 : i1 to i32
    %c0_i32_0 = arith.constant 0 : i32
    %2 = arith.cmpi ne, %1, %c0_i32_0 : i32
    scf.if %2 {
      %cst_10 = arith.constant 0.000000e+00 : f32
      %12 = vector.broadcast %cst_10 : f32 to vector<512x128xf32>
      %c0_11 = arith.constant 0 : index
      %c0_12 = arith.constant 0 : index
      %13 = vector.load %arg7[%c0_11, %c0_12] : memref<512x128xf32, #tpu.memory_space<vmem>>, vector<512x128xf32>
      tpu.vector_store %arg7[%c0_11, %c0_12], %12 {strides = array<i32>} : memref<512x128xf32, #tpu.memory_space<vmem>>, vector<512x128xf32>,
    } else {
    }
    %c0 = arith.constant 0 : index
    %c0_1 = arith.constant 0 : index
    %3 = vector.load %arg7[%c0, %c0_1] : memref<512x128xf32, #tpu.memory_space<vmem>>, vector<512x128xf32>
    %c0_2 = arith.constant 0 : index
    %c0_3 = arith.constant 0 : index
    %4 = vector.load %arg3[%c0_2, %c0_3] : memref<512x128xbf16, #tpu.memory_space<vmem>>, vector<512x128xbf16>
    %c0_4 = arith.constant 0 : index
    %c0_5 = arith.constant 0 : index
    %5 = vector.load %arg4[%c0_4, %c0_5] : memref<128x128xbf16, #tpu.memory_space<vmem>>, vector<128x128xbf16>
    %cst = arith.constant dense<0.000000e+00> : vector<512x128xf32>
    %6 = tpu.matmul %4, %5, %cst {dimension_numbers = #tpu.dot_dimension_numbers<[1], [0], [0], [1], [0, 0, 1, 1], [], []>} : vector<512x128xbf16>, vector<128x128xbf16>, vector<512x128xf32> -> vector<512x128xf32>
    %7 = arith.addf %3, %6 : vector<512x128xf32>
    %c0_6 = arith.constant 0 : index
    %c0_7 = arith.constant 0 : index
    %8 = vector.load %arg7[%c0_6, %c0_7] : memref<512x128xf32, #tpu.memory_space<vmem>>, vector<512x128xf32>
    tpu.vector_store %arg7[%c0_6, %c0_7], %7 {strides = array<i32>} : memref<512x128xf32, #tpu.memory_space<vmem>>, vector<512x128xf32>,
    %c0_i32_8 = arith.constant 0 : i32
    %9 = arith.cmpi eq, %arg2, %c0_i32_8 : i32
    %10 = arith.extui %9 : i1 to i32
    %c0_i32_9 = arith.constant 0 : i32
    %11 = arith.cmpi ne, %10, %c0_i32_9 : i32
    scf.if %11 {
      %c0_10 = arith.constant 0 : index
      %c0_11 = arith.constant 0 : index
      %12 = vector.load %arg7[%c0_10, %c0_11] : memref<512x128xf32, #tpu.memory_space<vmem>>, vector<512x128xf32>
      %c0_12 = arith.constant 0 : index
      %c0_13 = arith.constant 0 : index
      %13 = vector.load %arg5[%c0_12, %c0_13] : memref<1x128xf32, #tpu.memory_space<vmem>>, vector<1x128xf32>
      %14 = vector.broadcast %13 : vector<1x128xf32> to vector<512x128xf32>
      %15 = arith.addf %12, %14 : vector<512x128xf32>
      %16 = arith.negf %15 : vector<512x128xf32>
      %17 = math.exp %16 : vector<512x128xf32>
      %cst_14 = arith.constant 1.000000e+00 : f32
      %18 = vector.broadcast %cst_14 : f32 to vector<512x128xf32>
      %19 = arith.addf %18, %17 : vector<512x128xf32>
      %20 = arith.divf %18, %19 : vector<512x128xf32>
      %c0_15 = arith.constant 0 : index
      %c0_16 = arith.constant 0 : index
      %21 = vector.load %arg6[%c0_15, %c0_16] : memref<512x128xf32, #tpu.memory_space<vmem>>, vector<512x128xf32>
      tpu.vector_store %arg6[%c0_15, %c0_16], %20 {strides = array<i32>} : memref<512x128xf32, #tpu.memory_space<vmem>>, vector<512x128xf32>,
    } else {
    }
    return
  }
  func.func @transform_0(%arg0: i32, %arg1: i32, %arg2: i32) -> (i32, i32) {
    %c0_i32 = arith.constant 0 : i32
    return %arg0, %arg2 : i32, i32
  }
  func.func @transform_1(%arg0: i32, %arg1: i32, %arg2: i32) -> (i32, i32) {
    %c0_i32 = arith.constant 0 : i32
    return %arg2, %arg1 : i32, i32
  }
  func.func @transform_2(%arg0: i32, %arg1: i32, %arg2: i32) -> (i32, i32) {
    %c0_i32 = arith.constant 0 : i32
    %c0_i32_0 = arith.constant 0 : i32
    return %c0_i32, %arg1 : i32, i32
  }
  func.func @transform_3(%arg0: i32, %arg1: i32, %arg2: i32) -> (i32, i32) {
    %c0_i32 = arith.constant 0 : i32
    return %arg0, %arg1 : i32, i32
  }
}

</mosaic_0001>

<llo_original>
// kernel: forward.18
$region0: #{forward.18}
  #allocation0 [shape = 'u32[]', space=smem, size = 0x4, offset = 0x4, fixed_abs, tag = 'smem constant byte address 0x4 - core index']
  #allocation1 [shape = 'u32[144,128]{1,0:T(1,128)}', space=vmem, size = 0x12000, scoped, tag = 'internal scratch']
  #allocation2 [shape = 'f32[512,128]{1,0:T(8,128)}', space=vmem, size = 0x40000, scoped, tag = 'scratch operand']
  %s0 = inlined_call_operand.vmem [shape: bf16[512,32], index: 0, kind: input, shape index: {}]
  %s1 = inlined_call_operand.vmem [shape: bf16[32,128], index: 1, kind: input, shape index: {}]
  %s2 = inlined_call_operand.vmem [shape: f32[1,128], index: 2, kind: input, shape index: {}]
  %s3 = inlined_call_operand.vmem [shape: f32[512,128], index: 3, kind: output, shape index: {}]
  %s4 = sld [smem:[#allocation0]]
  $region30: #{forward.18} parent=0
    _
  %s6 = ssub.s32 1, %s4
  %s7 = scalar_select 0, %s6, %s4
  // Predicated region
  $region2: #{forward.18} parent=0 // pred_check
    _
  $region3: #{forward.18} parent=0 // pred_check_branch
    %9 = sbr.rel (0) target = $region5
  $region4: #{forward.18} parent=0 // pred_region
    _
  $region5: #{forward.18} parent=0 // pred_fallthru
    _
  // Predicated region
  $region6: #{forward.18} parent=0 // pred_check
    _
  $region7: #{forward.18} parent=0 // pred_check_branch
    %11 = sbr.rel (0) target = $region9
  $region8: #{forward.18} parent=0 // pred_region
    _
  $region9: #{forward.18} parent=0 // pred_fallthru
    _
  // Predicated region
  $region10: #{forward.18} parent=0 // pred_check
    _
  $region11: #{forward.18} parent=0 // pred_check_branch
    %13 = sbr.rel (0) target = $region13
  $region12: #{forward.18} parent=0 // pred_region
    _
  $region13: #{forward.18} parent=0 // pred_fallthru
    _
  %p15 = scmp.eq.s32.totalorder 0, 0
  // Predicated region
  $region14: #{forward.18} parent=0 // pred_check
    %p16 = pneg %p15
  $region15: #{forward.18} parent=0 // pred_check_branch
    %18 = sbr.rel (%p16) target = $region17
  $region16: #{forward.18} parent=0 // pred_region
    %19 = vst [vmem:[#allocation2] sm:$0xff] 0.0
    %20 = vst [vmem:[#allocation2 + $0x8] sm:$0xff] 0.0
    %21 = vst [vmem:[#allocation2 + $0x10] sm:$0xff] 0.0
    %22 = vst [vmem:[#allocation2 + $0x18] sm:$0xff] 0.0
    %23 = vst [vmem:[#allocation2 + $0x20] sm:$0xff] 0.0
    %24 = vst [vmem:[#allocation2 + $0x28] sm:$0xff] 0.0
    %25 = vst [vmem:[#allocation2 + $0x30] sm:$0xff] 0.0
    %26 = vst [vmem:[#allocation2 + $0x38] sm:$0xff] 0.0
    %27 = vst [vmem:[#allocation2 + $0x40] sm:$0xff] 0.0
    %28 = vst [vmem:[#allocation2 + $0x48] sm:$0xff] 0.0
    %29 = vst [vmem:[#allocation2 + $0x50] sm:$0xff] 0.0
    %30 = vst [vmem:[#allocation2 + $0x58] sm:$0xff] 0.0
    %31 = vst [vmem:[#allocation2 + $0x60] sm:$0xff] 0.0
    %32 = vst [vmem:[#allocation2 + $0x68] sm:$0xff] 0.0
    %33 = vst [vmem:[#allocation2 + $0x70] sm:$0xff] 0.0
    %34 = vst [vmem:[#allocation2 + $0x78] sm:$0xff] 0.0
    %35 = vst [vmem:[#allocation2 + $0x80] sm:$0xff] 0.0
    %36 = vst [vmem:[#allocation2 + $0x88] sm:$0xff] 0.0
    %37 = vst [vmem:[#allocation2 + $0x90] sm:$0xff] 0.0
    %38 = vst [vmem:[#allocation2 + $0x98] sm:$0xff] 0.0
    %39 = vst [vmem:[#allocation2 + $0xa0] sm:$0xff] 0.0
    %40 = vst [vmem:[#allocation2 + $0xa8] sm:$0xff] 0.0
    %41 = vst [vmem:[#allocation2 + $0xb0] sm:$0xff] 0.0
    %42 = vst [vmem:[#allocation2 + $0xb8] sm:$0xff] 0.0
    %43 = vst [vmem:[#allocation2 + $0xc0] sm:$0xff] 0.0
    %44 = vst [vmem:[#allocation2 + $0xc8] sm:$0xff] 0.0
    %45 = vst [vmem:[#allocation2 + $0xd0] sm:$0xff] 0.0
    %46 = vst [vmem:[#allocation2 + $0xd8] sm:$0xff] 0.0
    %47 = vst [vmem:[#allocation2 + $0xe0] sm:$0xff] 0.0
    %48 = vst [vmem:[#allocation2 + $0xe8] sm:$0xff] 0.0
    %49 = vst [vmem:[#allocation2 + $0xf0] sm:$0xff] 0.0
    %50 = vst [vmem:[#allocation2 + $0xf8] sm:$0xff] 0.0
    %51 = vst [vmem:[#allocation2 + $0x100] sm:$0xff] 0.0
    %52 = vst [vmem:[#allocation2 + $0x108] sm:$0xff] 0.0
    %53 = vst [vmem:[#allocation2 + $0x110] sm:$0xff] 0.0
    %54 = vst [vmem:[#allocation2 + $0x118] sm:$0xff] 0.0
    %55 = vst [vmem:[#allocation2 + $0x120] sm:$0xff] 0.0
    %56 = vst [vmem:[#allocation2 + $0x128] sm:$0xff] 0.0
    %57 = vst [vmem:[#allocation2 + $0x130] sm:$0xff] 0.0
    %58 = vst [vmem:[#allocation2 + $0x138] sm:$0xff] 0.0
    %59 = vst [vmem:[#allocation2 + $0x140] sm:$0xff] 0.0
    %60 = vst [vmem:[#allocation2 + $0x148] sm:$0xff] 0.0
    %61 = vst [vmem:[#allocation2 + $0x150] sm:$0xff] 0.0
    %62 = vst [vmem:[#allocation2 + $0x158] sm:$0xff] 0.0
    %63 = vst [vmem:[#allocation2 + $0x160] sm:$0xff] 0.0
    %64 = vst [vmem:[#allocation2 + $0x168] sm:$0xff] 0.0
    %65 = vst [vmem:[#allocation2 + $0x170] sm:$0xff] 0.0
    %66 = vst [vmem:[#allocation2 + $0x178] sm:$0xff] 0.0
    %67 = vst [vmem:[#allocation2 + $0x180] sm:$0xff] 0.0
    %68 = vst [vmem:[#allocation2 + $0x188] sm:$0xff] 0.0
    %69 = vst [vmem:[#allocation2 + $0x190] sm:$0xff] 0.0
    %70 = vst [vmem:[#allocation2 + $0x198] sm:$0xff] 0.0
    %71 = vst [vmem:[#allocation2 + $0x1a0] sm:$0xff] 0.0
    %72 = vst [vmem:[#allocation2 + $0x1a8] sm:$0xff] 0.0
    %73 = vst [vmem:[#allocation2 + $0x1b0] sm:$0xff] 0.0
    %74 = vst [vmem:[#allocation2 + $0x1b8] sm:$0xff] 0.0
    %75 = vst [vmem:[#allocation2 + $0x1c0] sm:$0xff] 0.0
    %76 = vst [vmem:[#allocation2 + $0x1c8] sm:$0xff] 0.0
    %77 = vst [vmem:[#allocation2 + $0x1d0] sm:$0xff] 0.0
    %78 = vst [vmem:[#allocation2 + $0x1d8] sm:$0xff] 0.0
    %79 = vst [vmem:[#allocation2 + $0x1e0] sm:$0xff] 0.0
    %80 = vst [vmem:[#allocation2 + $0x1e8] sm:$0xff] 0.0
    %81 = vst [vmem:[#allocation2 + $0x1f0] sm:$0xff] 0.0
    %82 = vst [vmem:[#allocation2 + $0x1f8] sm:$0xff] 0.0
  $region17: #{forward.18} parent=0 // pred_fallthru
    _
  %v83 = vld [vmem:[#allocation2] sm:$0xff]
  %v84 = vld [vmem:[#allocation2 + $0x8] sm:$0xff]
  %v85 = vld [vmem:[#allocation2 + $0x10] sm:$0xff]
  %v86 = vld [vmem:[#allocation2 + $0x18] sm:$0xff]
  %v87 = vld [vmem:[#allocation2 + $0x20] sm:$0xff]
  %v88 = vld [vmem:[#allocation2 + $0x28] sm:$0xff]
  %v89 = vld [vmem:[#allocation2 + $0x30] sm:$0xff]
  %v90 = vld [vmem:[#allocation2 + $0x38] sm:$0xff]
  %v91 = vld [vmem:[#allocation2 + $0x40] sm:$0xff]
  %v92 = vld [vmem:[#allocation2 + $0x48] sm:$0xff]
  %v93 = vld [vmem:[#allocation2 + $0x50] sm:$0xff]
  %v94 = vld [vmem:[#allocation2 + $0x58] sm:$0xff]
  %v95 = vld [vmem:[#allocation2 + $0x60] sm:$0xff]
  %v96 = vld [vmem:[#allocation2 + $0x68] sm:$0xff]
  %v97 = vld [vmem:[#allocation2 + $0x70] sm:$0xff]
  %v98 = vld [vmem:[#allocation2 + $0x78] sm:$0xff]
  %v99 = vld [vmem:[#allocation2 + $0x80] sm:$0xff]
  %v100 = vld [vmem:[#allocation2 + $0x88] sm:$0xff]
  %v101 = vld [vmem:[#allocation2 + $0x90] sm:$0xff]
  %v102 = vld [vmem:[#allocation2 + $0x98] sm:$0xff]
  %v103 = vld [vmem:[#allocation2 + $0xa0] sm:$0xff]
  %v104 = vld [vmem:[#allocation2 + $0xa8] sm:$0xff]
  %v105 = vld [vmem:[#allocation2 + $0xb0] sm:$0xff]
  %v106 = vld [vmem:[#allocation2 + $0xb8] sm:$0xff]
  %v107 = vld [vmem:[#allocation2 + $0xc0] sm:$0xff]
  %v108 = vld [vmem:[#allocation2 + $0xc8] sm:$0xff]
  %v109 = vld [vmem:[#allocation2 + $0xd0] sm:$0xff]
  %v110 = vld [vmem:[#allocation2 + $0xd8] sm:$0xff]
  %v111 = vld [vmem:[#allocation2 + $0xe0] sm:$0xff]
  %v112 = vld [vmem:[#allocation2 + $0xe8] sm:$0xff]
  %v113 = vld [vmem:[#allocation2 + $0xf0] sm:$0xff]
  %v114 = vld [vmem:[#allocation2 + $0xf8] sm:$0xff]
  %v115 = vld [vmem:[#allocation2 + $0x100] sm:$0xff]
  %v116 = vld [vmem:[#allocation2 + $0x108] sm:$0xff]
  %v117 = vld [vmem:[#allocation2 + $0x110] sm:$0xff]
  %v118 = vld [vmem:[#allocation2 + $0x118] sm:$0xff]
  %v119 = vld [vmem:[#allocation2 + $0x120] sm:$0xff]
  %v120 = vld [vmem:[#allocation2 + $0x128] sm:$0xff]
  %v121 = vld [vmem:[#allocation2 + $0x130] sm:$0xff]
  %v122 = vld [vmem:[#allocation2 + $0x138] sm:$0xff]
  %v123 = vld [vmem:[#allocation2 + $0x140] sm:$0xff]
  %v124 = vld [vmem:[#allocation2 + $0x148] sm:$0xff]
  %v125 = vld [vmem:[#allocation2 + $0x150] sm:$0xff]
  %v126 = vld [vmem:[#allocation2 + $0x158] sm:$0xff]
  %v127 = vld [vmem:[#allocation2 + $0x160] sm:$0xff]
  %v128 = vld [vmem:[#allocation2 + $0x168] sm:$0xff]
  %v129 = vld [vmem:[#allocation2 + $0x170] sm:$0xff]
  %v130 = vld [vmem:[#allocation2 + $0x178] sm:$0xff]
  %v131 = vld [vmem:[#allocation2 + $0x180] sm:$0xff]
  %v132 = vld [vmem:[#allocation2 + $0x188] sm:$0xff]
  %v133 = vld [vmem:[#allocation2 + $0x190] sm:$0xff]
  %v134 = vld [vmem:[#allocation2 + $0x198] sm:$0xff]
  %v135 = vld [vmem:[#allocation2 + $0x1a0] sm:$0xff]
  %v136 = vld [vmem:[#allocation2 + $0x1a8] sm:$0xff]
  %v137 = vld [vmem:[#allocation2 + $0x1b0] sm:$0xff]
  %v138 = vld [vmem:[#allocation2 + $0x1b8] sm:$0xff]
  %v139 = vld [vmem:[#allocation2 + $0x1c0] sm:$0xff]
  %v140 = vld [vmem:[#allocation2 + $0x1c8] sm:$0xff]
  %v141 = vld [vmem:[#allocation2 + $0x1d0] sm:$0xff]
  %v142 = vld [vmem:[#allocation2 + $0x1d8] sm:$0xff]
  %v143 = vld [vmem:[#allocation2 + $0x1e0] sm:$0xff]
  %v144 = vld [vmem:[#allocation2 + $0x1e8] sm:$0xff]
  %v145 = vld [vmem:[#allocation2 + $0x1f0] sm:$0xff]
  %v146 = vld [vmem:[#allocation2 + $0x1f8] sm:$0xff]
  %v147 = vld [vmem:[%s0] sm:$0xf]
  %v148 = vld [vmem:[%s0 + $0x4] sm:$0xf]
  %v149 = vld [vmem:[%s0 + $0x8] sm:$0xf]
  %v150 = vld [vmem:[%s0 + $0xc] sm:$0xf]
  %v151 = vld [vmem:[%s0 + $0x10] sm:$0xf]
  %v152 = vld [vmem:[%s0 + $0x14] sm:$0xf]
  %v153 = vld [vmem:[%s0 + $0x18] sm:$0xf]
  %v154 = vld [vmem:[%s0 + $0x1c] sm:$0xf]
  %v155 = vld [vmem:[%s0 + $0x20] sm:$0xf]
  %v156 = vld [vmem:[%s0 + $0x24] sm:$0xf]
  %v157 = vld [vmem:[%s0 + $0x28] sm:$0xf]
  %v158 = vld [vmem:[%s0 + $0x2c] sm:$0xf]
  %v159 = vld [vmem:[%s0 + $0x30] sm:$0xf]
  %v160 = vld [vmem:[%s0 + $0x34] sm:$0xf]
  %v161 = vld [vmem:[%s0 + $0x38] sm:$0xf]
  %v162 = vld [vmem:[%s0 + $0x3c] sm:$0xf]
  %v163 = vld [vmem:[%s0 + $0x40] sm:$0xf]
  %v164 = vld [vmem:[%s0 + $0x44] sm:$0xf]
  %v165 = vld [vmem:[%s0 + $0x48] sm:$0xf]
  %v166 = vld [vmem:[%s0 + $0x4c] sm:$0xf]
  %v167 = vld [vmem:[%s0 + $0x50] sm:$0xf]
  %v168 = vld [vmem:[%s0 + $0x54] sm:$0xf]
  %v169 = vld [vmem:[%s0 + $0x58] sm:$0xf]
  %v170 = vld [vmem:[%s0 + $0x5c] sm:$0xf]
  %v171 = vld [vmem:[%s0 + $0x60] sm:$0xf]
  %v172 = vld [vmem:[%s0 + $0x64] sm:$0xf]
  %v173 = vld [vmem:[%s0 + $0x68] sm:$0xf]
  %v174 = vld [vmem:[%s0 + $0x6c] sm:$0xf]
  %v175 = vld [vmem:[%s0 + $0x70] sm:$0xf]
  %v176 = vld [vmem:[%s0 + $0x74] sm:$0xf]
  %v177 = vld [vmem:[%s0 + $0x78] sm:$0xf]
  %v178 = vld [vmem:[%s0 + $0x7c] sm:$0xf]
  %v179 = vld [vmem:[%s0 + $0x80] sm:$0xf]
  %v180 = vld [vmem:[%s0 + $0x84] sm:$0xf]
  %v181 = vld [vmem:[%s0 + $0x88] sm:$0xf]
  %v182 = vld [vmem:[%s0 + $0x8c] sm:$0xf]
  %v183 = vld [vmem:[%s0 + $0x90] sm:$0xf]
  %v184 = vld [vmem:[%s0 + $0x94] sm:$0xf]
  %v185 = vld [vmem:[%s0 + $0x98] sm:$0xf]
  %v186 = vld [vmem:[%s0 + $0x9c] sm:$0xf]
  %v187 = vld [vmem:[%s0 + $0xa0] sm:$0xf]
  %v188 = vld [vmem:[%s0 + $0xa4] sm:$0xf]
  %v189 = vld [vmem:[%s0 + $0xa8] sm:$0xf]
  %v190 = vld [vmem:[%s0 + $0xac] sm:$0xf]
  %v191 = vld [vmem:[%s0 + $0xb0] sm:$0xf]
  %v192 = vld [vmem:[%s0 + $0xb4] sm:$0xf]
  %v193 = vld [vmem:[%s0 + $0xb8] sm:$0xf]
  %v194 = vld [vmem:[%s0 + $0xbc] sm:$0xf]
  %v195 = vld [vmem:[%s0 + $0xc0] sm:$0xf]
  %v196 = vld [vmem:[%s0 + $0xc4] sm:$0xf]
  %v197 = vld [vmem:[%s0 + $0xc8] sm:$0xf]
  %v198 = vld [vmem:[%s0 + $0xcc] sm:$0xf]
  %v199 = vld [vmem:[%s0 + $0xd0] sm:$0xf]
  %v200 = vld [vmem:[%s0 + $0xd4] sm:$0xf]
  %v201 = vld [vmem:[%s0 + $0xd8] sm:$0xf]
  %v202 = vld [vmem:[%s0 + $0xdc] sm:$0xf]
  %v203 = vld [vmem:[%s0 + $0xe0] sm:$0xf]
  %v204 = vld [vmem:[%s0 + $0xe4] sm:$0xf]
  %v205 = vld [vmem:[%s0 + $0xe8] sm:$0xf]
  %v206 = vld [vmem:[%s0 + $0xec] sm:$0xf]
  %v207 = vld [vmem:[%s0 + $0xf0] sm:$0xf]
  %v208 = vld [vmem:[%s0 + $0xf4] sm:$0xf]
  %v209 = vld [vmem:[%s0 + $0xf8] sm:$0xf]
  %v210 = vld [vmem:[%s0 + $0xfc] sm:$0xf]
  %v211 = vld [vmem:[%s1] sm:$0xf]
  %v212 = vld [vmem:[%s1 + $0x4] sm:$0xf]
  %v213 = vld [vmem:[%s1 + $0x8] sm:$0xf]
  %v214 = vld [vmem:[%s1 + $0xc] sm:$0xf]
  %v279 = vunpack.c.l.b16 %v147
  %v280 = vunpack.c.l.b16 %v148
  %v281 = vunpack.c.l.b16 %v149
  %v282 = vunpack.c.l.b16 %v150
  %v283 = vunpack.c.l.b16 %v151
  %v284 = vunpack.c.l.b16 %v152
  %v285 = vunpack.c.l.b16 %v153
  %v286 = vunpack.c.l.b16 %v154
  %v287 = vunpack.c.l.b16 %v155
  %v288 = vunpack.c.l.b16 %v156
  %v289 = vunpack.c.l.b16 %v157
  %v290 = vunpack.c.l.b16 %v158
  %v291 = vunpack.c.l.b16 %v159
  %v292 = vunpack.c.l.b16 %v160
  %v293 = vunpack.c.l.b16 %v161
  %v294 = vunpack.c.l.b16 %v162
  %v295 = vunpack.c.l.b16 %v163
  %v296 = vunpack.c.l.b16 %v164
  %v297 = vunpack.c.l.b16 %v165
  %v298 = vunpack.c.l.b16 %v166
  %v299 = vunpack.c.l.b16 %v167
  %v300 = vunpack.c.l.b16 %v168
  %v301 = vunpack.c.l.b16 %v169
  %v302 = vunpack.c.l.b16 %v170
  %v303 = vunpack.c.l.b16 %v171
  %v304 = vunpack.c.l.b16 %v172
  %v305 = vunpack.c.l.b16 %v173
  %v306 = vunpack.c.l.b16 %v174
  %v307 = vunpack.c.l.b16 %v175
  %v308 = vunpack.c.l.b16 %v176
  %v309 = vunpack.c.l.b16 %v177
  %v310 = vunpack.c.l.b16 %v178
  %v311 = vunpack.c.l.b16 %v179
  %v312 = vunpack.c.l.b16 %v180
  %v313 = vunpack.c.l.b16 %v181
  %v314 = vunpack.c.l.b16 %v182
  %v315 = vunpack.c.l.b16 %v183
  %v316 = vunpack.c.l.b16 %v184
  %v317 = vunpack.c.l.b16 %v185
  %v318 = vunpack.c.l.b16 %v186
  %v319 = vunpack.c.l.b16 %v187
  %v320 = vunpack.c.l.b16 %v188
  %v321 = vunpack.c.l.b16 %v189
  %v322 = vunpack.c.l.b16 %v190
  %v323 = vunpack.c.l.b16 %v191
  %v324 = vunpack.c.l.b16 %v192
  %v325 = vunpack.c.l.b16 %v193
  %v326 = vunpack.c.l.b16 %v194
  %v327 = vunpack.c.l.b16 %v195
  %v328 = vunpack.c.l.b16 %v196
  %v329 = vunpack.c.l.b16 %v197
  %v330 = vunpack.c.l.b16 %v198
  %v331 = vunpack.c.l.b16 %v199
  %v332 = vunpack.c.l.b16 %v200
  %v333 = vunpack.c.l.b16 %v201
  %v334 = vunpack.c.l.b16 %v202
  %v335 = vunpack.c.l.b16 %v203
  %v336 = vunpack.c.l.b16 %v204
  %v337 = vunpack.c.l.b16 %v205
  %v338 = vunpack.c.l.b16 %v206
  %v339 = vunpack.c.l.b16 %v207
  %v340 = vunpack.c.l.b16 %v208
  %v341 = vunpack.c.l.b16 %v209
  %v342 = vunpack.c.l.b16 %v210
  %v343 = vpack.c.b16 %v280, %v279
  %v344 = vpack.c.b16 %v282, %v281
  %v345 = vpack.c.b16 %v284, %v283
  %v346 = vpack.c.b16 %v286, %v285
  %v347 = vpack.c.b16 %v288, %v287
  %v348 = vpack.c.b16 %v290, %v289
  %v349 = vpack.c.b16 %v292, %v291
  %v350 = vpack.c.b16 %v294, %v293
  %v351 = vpack.c.b16 %v296, %v295
  %v352 = vpack.c.b16 %v298, %v297
  %v353 = vpack.c.b16 %v300, %v299
  %v354 = vpack.c.b16 %v302, %v301
  %v355 = vpack.c.b16 %v304, %v303
  %v356 = vpack.c.b16 %v306, %v305
  %v357 = vpack.c.b16 %v308, %v307
  %v358 = vpack.c.b16 %v310, %v309
  %v359 = vpack.c.b16 %v312, %v311
  %v360 = vpack.c.b16 %v314, %v313
  %v361 = vpack.c.b16 %v316, %v315
  %v362 = vpack.c.b16 %v318, %v317
  %v363 = vpack.c.b16 %v320, %v319
  %v364 = vpack.c.b16 %v322, %v321
  %v365 = vpack.c.b16 %v324, %v323
  %v366 = vpack.c.b16 %v326, %v325
  %v367 = vpack.c.b16 %v328, %v327
  %v368 = vpack.c.b16 %v330, %v329
  %v369 = vpack.c.b16 %v332, %v331
  %v370 = vpack.c.b16 %v334, %v333
  %v371 = vpack.c.b16 %v336, %v335
  %v372 = vpack.c.b16 %v338, %v337
  %v373 = vpack.c.b16 %v340, %v339
  %v374 = vpack.c.b16 %v342, %v341
  %v379 = vunpack.c.l.b16 %v211
  %v380 = vunpack.c.l.b16 %v212
  %v381 = vunpack.c.l.b16 %v213
  %v382 = vunpack.c.l.b16 %v214
  %v383 = vpack.c.b16 %v380, %v379
  %v384 = vpack.c.b16 %v382, %v381
  %vm387 = vcmask 261120
  %v389 = vsel %vm387, %v343, 0
  %v392 = vsel %vm387, %v344, 0
  %v395 = vsel %vm387, %v345, 0
  %v398 = vsel %vm387, %v346, 0
  %v401 = vsel %vm387, %v347, 0
  %v404 = vsel %vm387, %v348, 0
  %v407 = vsel %vm387, %v349, 0
  %v410 = vsel %vm387, %v350, 0
  %v413 = vsel %vm387, %v351, 0
  %v416 = vsel %vm387, %v352, 0
  %v419 = vsel %vm387, %v353, 0
  %v422 = vsel %vm387, %v354, 0
  %v425 = vsel %vm387, %v355, 0
  %v428 = vsel %vm387, %v356, 0
  %v431 = vsel %vm387, %v357, 0
  %v434 = vsel %vm387, %v358, 0
  %v437 = vsel %vm387, %v359, 0
  %v440 = vsel %vm387, %v360, 0
  %v443 = vsel %vm387, %v361, 0
  %v446 = vsel %vm387, %v362, 0
  %v449 = vsel %vm387, %v363, 0
  %v452 = vsel %vm387, %v364, 0
  %v455 = vsel %vm387, %v365, 0
  %v458 = vsel %vm387, %v366, 0
  %v461 = vsel %vm387, %v367, 0
  %v464 = vsel %vm387, %v368, 0
  %v467 = vsel %vm387, %v369, 0
  %v470 = vsel %vm387, %v370, 0
  %v473 = vsel %vm387, %v371, 0
  %v476 = vsel %vm387, %v372, 0
  %v479 = vsel %vm387, %v373, 0
  %v482 = vsel %vm387, %v374, 0
  %484 = vmatprep.subr.bf16.mxu0 0
  %485 = vmatpush1.bf16.msra.mxu0 0
  %486 = vmatprep.subr.bf16.mxu0 0
  %487 = vmatpush1.bf16.msra.mxu0 0
  %488 = vmatprep.subr.bf16.mxu0 0
  %489 = vmatpush1.bf16.msra.mxu0 0
  %490 = vmatprep.subr.bf16.mxu0 0
  %491 = vmatpush1.bf16.msra.mxu0 0
  %492 = vmatprep.subr.bf16.mxu0 0
  %493 = vmatpush1.bf16.msra.mxu0 0
  %494 = vmatprep.subr.bf16.mxu0 0
  %495 = vmatpush1.bf16.msra.mxu0 0
  %496 = vmatprep.subr.bf16.mxu0 0
  %497 = vmatpush1.bf16.msra.mxu0 %v384
  %498 = vmatprep.subr.bf16.mxu0 0
  %499 = vmatpush1.bf16.msra.mxu0 %v383
  %500 = vmatprep.subr.bf16.mxu0 0
  %501 = vmatpush2.bf16.msra.mxu0 0
  %502 = vmatprep.subr.bf16.mxu0 0
  %503 = vmatpush2.bf16.msra.mxu0 0
  %504 = vmatprep.subr.bf16.mxu0 0
  %505 = vmatpush2.bf16.msra.mxu0 0
  %506 = vmatprep.subr.bf16.mxu0 0
  %507 = vmatpush2.bf16.msra.mxu0 0
  %508 = vmatprep.subr.bf16.mxu0 0
  %509 = vmatpush2.bf16.msra.mxu0 0
  %510 = vmatprep.subr.bf16.mxu0 0
  %511 = vmatpush2.bf16.msra.mxu0 0
  %512 = vmatprep.subr.bf16.mxu0 0
  %513 = vmatpush2.bf16.msra.mxu0 0
  %514 = vmatprep.subr.bf16.mxu0 0
  %515 = vmatpush2.bf16.msra.mxu0 0
  %516 = vmatprep.mubr.bf16.mxu0 0
  %517 = vmatmul.mubr.bf16.gmra.mxu0 %v389
  %v518 = vpop.f32.mrf.mxu0
  %v519 = vadd.f32 0.0, %v518
  %v520 = vpop.f32.mrf.mxu0
  %v521 = vpop.f32.mrf.mxu0
  %v522 = vadd.f32 0.0, %v521
  %v523 = vpop.f32.mrf.mxu0
  %524 = vmatprep.mubr.bf16.mxu0 0
  %525 = vmatmul.mubr.bf16.gmra.mxu0 %v392
  %v526 = vpop.f32.mrf.mxu0
  %v527 = vadd.f32 0.0, %v526
  %v528 = vpop.f32.mrf.mxu0
  %v529 = vpop.f32.mrf.mxu0
  %v530 = vadd.f32 0.0, %v529
  %v531 = vpop.f32.mrf.mxu0
  %532 = vmatprep.mubr.bf16.mxu0 0
  %533 = vmatmul.mubr.bf16.gmra.mxu0 %v395
  %v534 = vpop.f32.mrf.mxu0
  %v535 = vadd.f32 0.0, %v534
  %v536 = vpop.f32.mrf.mxu0
  %v537 = vpop.f32.mrf.mxu0
  %v538 = vadd.f32 0.0, %v537
  %v539 = vpop.f32.mrf.mxu0
  %540 = vmatprep.mubr.bf16.mxu0 0
  %541 = vmatmul.mubr.bf16.gmra.mxu0 %v398
  %v542 = vpop.f32.mrf.mxu0
  %v543 = vadd.f32 0.0, %v542
  %v544 = vpop.f32.mrf.mxu0
  %v545 = vpop.f32.mrf.mxu0
  %v546 = vadd.f32 0.0, %v545
  %v547 = vpop.f32.mrf.mxu0
  %548 = vmatprep.mubr.bf16.mxu0 0
  %549 = vmatmul.mubr.bf16.gmra.mxu0 %v401
  %v550 = vpop.f32.mrf.mxu0
  %v551 = vadd.f32 0.0, %v550
  %v552 = vpop.f32.mrf.mxu0
  %v553 = vpop.f32.mrf.mxu0
  %v554 = vadd.f32 0.0, %v553
  %v555 = vpop.f32.mrf.mxu0
  %556 = vmatprep.mubr.bf16.mxu0 0
  %557 = vmatmul.mubr.bf16.gmra.mxu0 %v404
  %v558 = vpop.f32.mrf.mxu0
  %v559 = vadd.f32 0.0, %v558
  %v560 = vpop.f32.mrf.mxu0
  %v561 = vpop.f32.mrf.mxu0
  %v562 = vadd.f32 0.0, %v561
  %v563 = vpop.f32.mrf.mxu0
  %564 = vmatprep.mubr.bf16.mxu0 0
  %565 = vmatmul.mubr.bf16.gmra.mxu0 %v407
  %v566 = vpop.f32.mrf.mxu0
  %v567 = vadd.f32 0.0, %v566
  %v568 = vpop.f32.mrf.mxu0
  %v569 = vpop.f32.mrf.mxu0
  %v570 = vadd.f32 0.0, %v569
  %v571 = vpop.f32.mrf.mxu0
  %572 = vmatprep.mubr.bf16.mxu0 0
  %573 = vmatmul.mubr.bf16.gmra.mxu0 %v410
  %v574 = vpop.f32.mrf.mxu0
  %v575 = vadd.f32 0.0, %v574
  %v576 = vpop.f32.mrf.mxu0
  %v577 = vpop.f32.mrf.mxu0
  %v578 = vadd.f32 0.0, %v577
  %v579 = vpop.f32.mrf.mxu0
  %580 = vmatprep.mubr.bf16.mxu0 0
  %581 = vmatmul.mubr.bf16.gmra.mxu0 %v413
  %v582 = vpop.f32.mrf.mxu0
  %v583 = vadd.f32 0.0, %v582
  %v584 = vpop.f32.mrf.mxu0
  %v585 = vpop.f32.mrf.mxu0
  %v586 = vadd.f32 0.0, %v585
  %v587 = vpop.f32.mrf.mxu0
  %588 = vmatprep.mubr.bf16.mxu0 0
  %589 = vmatmul.mubr.bf16.gmra.mxu0 %v416
  %v590 = vpop.f32.mrf.mxu0
  %v591 = vadd.f32 0.0, %v590
  %v592 = vpop.f32.mrf.mxu0
  %v593 = vpop.f32.mrf.mxu0
  %v594 = vadd.f32 0.0, %v593
  %v595 = vpop.f32.mrf.mxu0
  %596 = vmatprep.mubr.bf16.mxu0 0
  %597 = vmatmul.mubr.bf16.gmra.mxu0 %v419
  %v598 = vpop.f32.mrf.mxu0
  %v599 = vadd.f32 0.0, %v598
  %v600 = vpop.f32.mrf.mxu0
  %v601 = vpop.f32.mrf.mxu0
  %v602 = vadd.f32 0.0, %v601
  %v603 = vpop.f32.mrf.mxu0
  %604 = vmatprep.mubr.bf16.mxu0 0
  %605 = vmatmul.mubr.bf16.gmra.mxu0 %v422
  %v606 = vpop.f32.mrf.mxu0
  %v607 = vadd.f32 0.0, %v606
  %v608 = vpop.f32.mrf.mxu0
  %v609 = vpop.f32.mrf.mxu0
  %v610 = vadd.f32 0.0, %v609
  %v611 = vpop.f32.mrf.mxu0
  %612 = vmatprep.mubr.bf16.mxu0 0
  %613 = vmatmul.mubr.bf16.gmra.mxu0 %v425
  %v614 = vpop.f32.mrf.mxu0
  %v615 = vadd.f32 0.0, %v614
  %v616 = vpop.f32.mrf.mxu0
  %v617 = vpop.f32.mrf.mxu0
  %v618 = vadd.f32 0.0, %v617
  %v619 = vpop.f32.mrf.mxu0
  %620 = vmatprep.mubr.bf16.mxu0 0
  %621 = vmatmul.mubr.bf16.gmra.mxu0 %v428
  %v622 = vpop.f32.mrf.mxu0
  %v623 = vadd.f32 0.0, %v622
  %v624 = vpop.f32.mrf.mxu0
  %v625 = vpop.f32.mrf.mxu0
  %v626 = vadd.f32 0.0, %v625
  %v627 = vpop.f32.mrf.mxu0
  %628 = vmatprep.mubr.bf16.mxu0 0
  %629 = vmatmul.mubr.bf16.gmra.mxu0 %v431
  %v630 = vpop.f32.mrf.mxu0
  %v631 = vadd.f32 0.0, %v630
  %v632 = vpop.f32.mrf.mxu0
  %v633 = vpop.f32.mrf.mxu0
  %v634 = vadd.f32 0.0, %v633
  %v635 = vpop.f32.mrf.mxu0
  %636 = vmatprep.mubr.bf16.mxu0 0
  %637 = vmatmul.mubr.bf16.gmra.mxu0 %v434
  %v638 = vpop.f32.mrf.mxu0
  %v639 = vadd.f32 0.0, %v638
  %v640 = vpop.f32.mrf.mxu0
  %v641 = vpop.f32.mrf.mxu0
  %v642 = vadd.f32 0.0, %v641
  %v643 = vpop.f32.mrf.mxu0
  %644 = vmatprep.mubr.bf16.mxu0 0
  %645 = vmatmul.mubr.bf16.gmra.mxu0 %v437
  %v646 = vpop.f32.mrf.mxu0
  %v647 = vadd.f32 0.0, %v646
  %v648 = vpop.f32.mrf.mxu0
  %v649 = vpop.f32.mrf.mxu0
  %v650 = vadd.f32 0.0, %v649
  %v651 = vpop.f32.mrf.mxu0
  %652 = vmatprep.mubr.bf16.mxu0 0
  %653 = vmatmul.mubr.bf16.gmra.mxu0 %v440
  %v654 = vpop.f32.mrf.mxu0
  %v655 = vadd.f32 0.0, %v654
  %v656 = vpop.f32.mrf.mxu0
  %v657 = vpop.f32.mrf.mxu0
  %v658 = vadd.f32 0.0, %v657
  %v659 = vpop.f32.mrf.mxu0
  %660 = vmatprep.mubr.bf16.mxu0 0
  %661 = vmatmul.mubr.bf16.gmra.mxu0 %v443
  %v662 = vpop.f32.mrf.mxu0
  %v663 = vadd.f32 0.0, %v662
  %v664 = vpop.f32.mrf.mxu0
  %v665 = vpop.f32.mrf.mxu0
  %v666 = vadd.f32 0.0, %v665
  %v667 = vpop.f32.mrf.mxu0
  %668 = vmatprep.mubr.bf16.mxu0 0
  %669 = vmatmul.mubr.bf16.gmra.mxu0 %v446
  %v670 = vpop.f32.mrf.mxu0
  %v671 = vadd.f32 0.0, %v670
  %v672 = vpop.f32.mrf.mxu0
  %v673 = vpop.f32.mrf.mxu0
  %v674 = vadd.f32 0.0, %v673
  %v675 = vpop.f32.mrf.mxu0
  %676 = vmatprep.mubr.bf16.mxu0 0
  %677 = vmatmul.mubr.bf16.gmra.mxu0 %v449
  %v678 = vpop.f32.mrf.mxu0
  %v679 = vadd.f32 0.0, %v678
  %v680 = vpop.f32.mrf.mxu0
  %v681 = vpop.f32.mrf.mxu0
  %v682 = vadd.f32 0.0, %v681
  %v683 = vpop.f32.mrf.mxu0
  %684 = vmatprep.mubr.bf16.mxu0 0
  %685 = vmatmul.mubr.bf16.gmra.mxu0 %v452
  %v686 = vpop.f32.mrf.mxu0
  %v687 = vadd.f32 0.0, %v686
  %v688 = vpop.f32.mrf.mxu0
  %v689 = vpop.f32.mrf.mxu0
  %v690 = vadd.f32 0.0, %v689
  %v691 = vpop.f32.mrf.mxu0
  %692 = vmatprep.mubr.bf16.mxu0 0
  %693 = vmatmul.mubr.bf16.gmra.mxu0 %v455
  %v694 = vpop.f32.mrf.mxu0
  %v695 = vadd.f32 0.0, %v694
  %v696 = vpop.f32.mrf.mxu0
  %v697 = vpop.f32.mrf.mxu0
  %v698 = vadd.f32 0.0, %v697
  %v699 = vpop.f32.mrf.mxu0
  %700 = vmatprep.mubr.bf16.mxu0 0
  %701 = vmatmul.mubr.bf16.gmra.mxu0 %v458
  %v702 = vpop.f32.mrf.mxu0
  %v703 = vadd.f32 0.0, %v702
  %v704 = vpop.f32.mrf.mxu0
  %v705 = vpop.f32.mrf.mxu0
  %v706 = vadd.f32 0.0, %v705
  %v707 = vpop.f32.mrf.mxu0
  %708 = vmatprep.mubr.bf16.mxu0 0
  %709 = vmatmul.mubr.bf16.gmra.mxu0 %v461
  %v710 = vpop.f32.mrf.mxu0
  %v711 = vadd.f32 0.0, %v710
  %v712 = vpop.f32.mrf.mxu0
  %v713 = vpop.f32.mrf.mxu0
  %v714 = vadd.f32 0.0, %v713
  %v715 = vpop.f32.mrf.mxu0
  %716 = vmatprep.mubr.bf16.mxu0 0
  %717 = vmatmul.mubr.bf16.gmra.mxu0 %v464
  %v718 = vpop.f32.mrf.mxu0
  %v719 = vadd.f32 0.0, %v718
  %v720 = vpop.f32.mrf.mxu0
  %v721 = vpop.f32.mrf.mxu0
  %v722 = vadd.f32 0.0, %v721
  %v723 = vpop.f32.mrf.mxu0
  %724 = vmatprep.mubr.bf16.mxu0 0
  %725 = vmatmul.mubr.bf16.gmra.mxu0 %v467
  %v726 = vpop.f32.mrf.mxu0
  %v727 = vadd.f32 0.0, %v726
  %v728 = vpop.f32.mrf.mxu0
  %v729 = vpop.f32.mrf.mxu0
  %v730 = vadd.f32 0.0, %v729
  %v731 = vpop.f32.mrf.mxu0
  %732 = vmatprep.mubr.bf16.mxu0 0
  %733 = vmatmul.mubr.bf16.gmra.mxu0 %v470
  %v734 = vpop.f32.mrf.mxu0
  %v735 = vadd.f32 0.0, %v734
  %v736 = vpop.f32.mrf.mxu0
  %v737 = vpop.f32.mrf.mxu0
  %v738 = vadd.f32 0.0, %v737
  %v739 = vpop.f32.mrf.mxu0
  %740 = vmatprep.mubr.bf16.mxu0 0
  %741 = vmatmul.mubr.bf16.gmra.mxu0 %v473
  %v742 = vpop.f32.mrf.mxu0
  %v743 = vadd.f32 0.0, %v742
  %v744 = vpop.f32.mrf.mxu0
  %v745 = vpop.f32.mrf.mxu0
  %v746 = vadd.f32 0.0, %v745
  %v747 = vpop.f32.mrf.mxu0
  %748 = vmatprep.mubr.bf16.mxu0 0
  %749 = vmatmul.mubr.bf16.gmra.mxu0 %v476
  %v750 = vpop.f32.mrf.mxu0
  %v751 = vadd.f32 0.0, %v750
  %v752 = vpop.f32.mrf.mxu0
  %v753 = vpop.f32.mrf.mxu0
  %v754 = vadd.f32 0.0, %v753
  %v755 = vpop.f32.mrf.mxu0
  %756 = vmatprep.mubr.bf16.mxu0 0
  %757 = vmatmul.mubr.bf16.gmra.mxu0 %v479
  %v758 = vpop.f32.mrf.mxu0
  %v759 = vadd.f32 0.0, %v758
  %v760 = vpop.f32.mrf.mxu0
  %v761 = vpop.f32.mrf.mxu0
  %v762 = vadd.f32 0.0, %v761
  %v763 = vpop.f32.mrf.mxu0
  %764 = vmatprep.mubr.bf16.mxu0 0
  %765 = vmatmul.mubr.bf16.gmra.mxu0 %v482
  %v766 = vpop.f32.mrf.mxu0
  %v767 = vadd.f32 0.0, %v766
  %v768 = vpop.f32.mrf.mxu0
  %v769 = vpop.f32.mrf.mxu0
  %v770 = vadd.f32 0.0, %v769
  %v771 = vpop.f32.mrf.mxu0
  %772 = vdwg.mxu0
  %v773 = vadd.f32 %v83, %v519
  %v774 = vadd.f32 %v84, %v522
  %v775 = vadd.f32 %v85, %v527
  %v776 = vadd.f32 %v86, %v530
  %v777 = vadd.f32 %v87, %v535
  %v778 = vadd.f32 %v88, %v538
  %v779 = vadd.f32 %v89, %v543
  %v780 = vadd.f32 %v90, %v546
  %v781 = vadd.f32 %v91, %v551
  %v782 = vadd.f32 %v92, %v554
  %v783 = vadd.f32 %v93, %v559
  %v784 = vadd.f32 %v94, %v562
  %v785 = vadd.f32 %v95, %v567
  %v786 = vadd.f32 %v96, %v570
  %v787 = vadd.f32 %v97, %v575
  %v788 = vadd.f32 %v98, %v578
  %v789 = vadd.f32 %v99, %v583
  %v790 = vadd.f32 %v100, %v586
  %v791 = vadd.f32 %v101, %v591
  %v792 = vadd.f32 %v102, %v594
  %v793 = vadd.f32 %v103, %v599
  %v794 = vadd.f32 %v104, %v602
  %v795 = vadd.f32 %v105, %v607
  %v796 = vadd.f32 %v106, %v610
  %v797 = vadd.f32 %v107, %v615
  %v798 = vadd.f32 %v108, %v618
  %v799 = vadd.f32 %v109, %v623
  %v800 = vadd.f32 %v110, %v626
  %v801 = vadd.f32 %v111, %v631
  %v802 = vadd.f32 %v112, %v634
  %v803 = vadd.f32 %v113, %v639
  %v804 = vadd.f32 %v114, %v642
  %v805 = vadd.f32 %v115, %v647
  %v806 = vadd.f32 %v116, %v650
  %v807 = vadd.f32 %v117, %v655
  %v808 = vadd.f32 %v118, %v658
  %v809 = vadd.f32 %v119, %v663
  %v810 = vadd.f32 %v120, %v666
  %v811 = vadd.f32 %v121, %v671
  %v812 = vadd.f32 %v122, %v674
  %v813 = vadd.f32 %v123, %v679
  %v814 = vadd.f32 %v124, %v682
  %v815 = vadd.f32 %v125, %v687
  %v816 = vadd.f32 %v126, %v690
  %v817 = vadd.f32 %v127, %v695
  %v818 = vadd.f32 %v128, %v698
  %v819 = vadd.f32 %v129, %v703
  %v820 = vadd.f32 %v130, %v706
  %v821 = vadd.f32 %v131, %v711
  %v822 = vadd.f32 %v132, %v714
  %v823 = vadd.f32 %v133, %v719
  %v824 = vadd.f32 %v134, %v722
  %v825 = vadd.f32 %v135, %v727
  %v826 = vadd.f32 %v136, %v730
  %v827 = vadd.f32 %v137, %v735
  %v828 = vadd.f32 %v138, %v738
  %v829 = vadd.f32 %v139, %v743
  %v830 = vadd.f32 %v140, %v746
  %v831 = vadd.f32 %v141, %v751
  %v832 = vadd.f32 %v142, %v754
  %v833 = vadd.f32 %v143, %v759
  %v834 = vadd.f32 %v144, %v762
  %v835 = vadd.f32 %v145, %v767
  %v836 = vadd.f32 %v146, %v770
  %837 = vst [vmem:[#allocation2] sm:$0xff] %v773
  %838 = vst [vmem:[#allocation2 + $0x8] sm:$0xff] %v774
  %839 = vst [vmem:[#allocation2 + $0x10] sm:$0xff] %v775
  %840 = vst [vmem:[#allocation2 + $0x18] sm:$0xff] %v776
  %841 = vst [vmem:[#allocation2 + $0x20] sm:$0xff] %v777
  %842 = vst [vmem:[#allocation2 + $0x28] sm:$0xff] %v778
  %843 = vst [vmem:[#allocation2 + $0x30] sm:$0xff] %v779
  %844 = vst [vmem:[#allocation2 + $0x38] sm:$0xff] %v780
  %845 = vst [vmem:[#allocation2 + $0x40] sm:$0xff] %v781
  %846 = vst [vmem:[#allocation2 + $0x48] sm:$0xff] %v782
  %847 = vst [vmem:[#allocation2 + $0x50] sm:$0xff] %v783
  %848 = vst [vmem:[#allocation2 + $0x58] sm:$0xff] %v784
  %849 = vst [vmem:[#allocation2 + $0x60] sm:$0xff] %v785
  %850 = vst [vmem:[#allocation2 + $0x68] sm:$0xff] %v786
  %851 = vst [vmem:[#allocation2 + $0x70] sm:$0xff] %v787
  %852 = vst [vmem:[#allocation2 + $0x78] sm:$0xff] %v788
  %853 = vst [vmem:[#allocation2 + $0x80] sm:$0xff] %v789
  %854 = vst [vmem:[#allocation2 + $0x88] sm:$0xff] %v790
  %855 = vst [vmem:[#allocation2 + $0x90] sm:$0xff] %v791
  %856 = vst [vmem:[#allocation2 + $0x98] sm:$0xff] %v792
  %857 = vst [vmem:[#allocation2 + $0xa0] sm:$0xff] %v793
  %858 = vst [vmem:[#allocation2 + $0xa8] sm:$0xff] %v794
  %859 = vst [vmem:[#allocation2 + $0xb0] sm:$0xff] %v795
  %860 = vst [vmem:[#allocation2 + $0xb8] sm:$0xff] %v796
  %861 = vst [vmem:[#allocation2 + $0xc0] sm:$0xff] %v797
  %862 = vst [vmem:[#allocation2 + $0xc8] sm:$0xff] %v798
  %863 = vst [vmem:[#allocation2 + $0xd0] sm:$0xff] %v799
  %864 = vst [vmem:[#allocation2 + $0xd8] sm:$0xff] %v800
  %865 = vst [vmem:[#allocation2 + $0xe0] sm:$0xff] %v801
  %866 = vst [vmem:[#allocation2 + $0xe8] sm:$0xff] %v802
  %867 = vst [vmem:[#allocation2 + $0xf0] sm:$0xff] %v803
  %868 = vst [vmem:[#allocation2 + $0xf8] sm:$0xff] %v804
  %869 = vst [vmem:[#allocation2 + $0x100] sm:$0xff] %v805
  %870 = vst [vmem:[#allocation2 + $0x108] sm:$0xff] %v806
  %871 = vst [vmem:[#allocation2 + $0x110] sm:$0xff] %v807
  %872 = vst [vmem:[#allocation2 + $0x118] sm:$0xff] %v808
  %873 = vst [vmem:[#allocation2 + $0x120] sm:$0xff] %v809
  %874 = vst [vmem:[#allocation2 + $0x128] sm:$0xff] %v810
  %875 = vst [vmem:[#allocation2 + $0x130] sm:$0xff] %v811
  %876 = vst [vmem:[#allocation2 + $0x138] sm:$0xff] %v812
  %877 = vst [vmem:[#allocation2 + $0x140] sm:$0xff] %v813
  %878 = vst [vmem:[#allocation2 + $0x148] sm:$0xff] %v814
  %879 = vst [vmem:[#allocation2 + $0x150] sm:$0xff] %v815
  %880 = vst [vmem:[#allocation2 + $0x158] sm:$0xff] %v816
  %881 = vst [vmem:[#allocation2 + $0x160] sm:$0xff] %v817
  %882 = vst [vmem:[#allocation2 + $0x168] sm:$0xff] %v818
  %883 = vst [vmem:[#allocation2 + $0x170] sm:$0xff] %v819
  %884 = vst [vmem:[#allocation2 + $0x178] sm:$0xff] %v820
  %885 = vst [vmem:[#allocation2 + $0x180] sm:$0xff] %v821
  %886 = vst [vmem:[#allocation2 + $0x188] sm:$0xff] %v822
  %887 = vst [vmem:[#allocation2 + $0x190] sm:$0xff] %v823
  %888 = vst [vmem:[#allocation2 + $0x198] sm:$0xff] %v824
  %889 = vst [vmem:[#allocation2 + $0x1a0] sm:$0xff] %v825
  %890 = vst [vmem:[#allocation2 + $0x1a8] sm:$0xff] %v826
  %891 = vst [vmem:[#allocation2 + $0x1b0] sm:$0xff] %v827
  %892 = vst [vmem:[#allocation2 + $0x1b8] sm:$0xff] %v828
  %893 = vst [vmem:[#allocation2 + $0x1c0] sm:$0xff] %v829
  %894 = vst [vmem:[#allocation2 + $0x1c8] sm:$0xff] %v830
  %895 = vst [vmem:[#allocation2 + $0x1d0] sm:$0xff] %v831
  %896 = vst [vmem:[#allocation2 + $0x1d8] sm:$0xff] %v832
  %897 = vst [vmem:[#allocation2 + $0x1e0] sm:$0xff] %v833
  %898 = vst [vmem:[#allocation2 + $0x1e8] sm:$0xff] %v834
  %899 = vst [vmem:[#allocation2 + $0x1f0] sm:$0xff] %v835
  %900 = vst [vmem:[#allocation2 + $0x1f8] sm:$0xff] %v836
  // Predicated region
  $region18: #{forward.18} parent=0 // pred_check
    %p901 = pneg %p15
  $region19: #{forward.18} parent=0 // pred_check_branch
    %903 = sbr.rel (%p901) target = $region21
  $region20: #{forward.18} parent=0 // pred_region
    %v904 = vld [vmem:[#allocation2] sm:$0xff]
    %v905 = vld [vmem:[#allocation2 + $0x8] sm:$0xff]
    %v906 = vld [vmem:[#allocation2 + $0x10] sm:$0xff]
    %v907 = vld [vmem:[#allocation2 + $0x18] sm:$0xff]
    %v908 = vld [vmem:[#allocation2 + $0x20] sm:$0xff]
    %v909 = vld [vmem:[#allocation2 + $0x28] sm:$0xff]
    %v910 = vld [vmem:[#allocation2 + $0x30] sm:$0xff]
    %v911 = vld [vmem:[#allocation2 + $0x38] sm:$0xff]
    %v912 = vld [vmem:[#allocation2 + $0x40] sm:$0xff]
    %v913 = vld [vmem:[#allocation2 + $0x48] sm:$0xff]
    %v914 = vld [vmem:[#allocation2 + $0x50] sm:$0xff]
    %v915 = vld [vmem:[#allocation2 + $0x58] sm:$0xff]
    %v916 = vld [vmem:[#allocation2 + $0x60] sm:$0xff]
    %v917 = vld [vmem:[#allocation2 + $0x68] sm:$0xff]
    %v918 = vld [vmem:[#allocation2 + $0x70] sm:$0xff]
    %v919 = vld [vmem:[#allocation2 + $0x78] sm:$0xff]
    %v920 = vld [vmem:[#allocation2 + $0x80] sm:$0xff]
    %v921 = vld [vmem:[#allocation2 + $0x88] sm:$0xff]
    %v922 = vld [vmem:[#allocation2 + $0x90] sm:$0xff]
    %v923 = vld [vmem:[#allocation2 + $0x98] sm:$0xff]
    %v924 = vld [vmem:[#allocation2 + $0xa0] sm:$0xff]
    %v925 = vld [vmem:[#allocation2 + $0xa8] sm:$0xff]
    %v926 = vld [vmem:[#allocation2 + $0xb0] sm:$0xff]
    %v927 = vld [vmem:[#allocation2 + $0xb8] sm:$0xff]
    %v928 = vld [vmem:[#allocation2 + $0xc0] sm:$0xff]
    %v929 = vld [vmem:[#allocation2 + $0xc8] sm:$0xff]
    %v930 = vld [vmem:[#allocation2 + $0xd0] sm:$0xff]
    %v931 = vld [vmem:[#allocation2 + $0xd8] sm:$0xff]
    %v932 = vld [vmem:[#allocation2 + $0xe0] sm:$0xff]
    %v933 = vld [vmem:[#allocation2 + $0xe8] sm:$0xff]
    %v934 = vld [vmem:[#allocation2 + $0xf0] sm:$0xff]
    %v935 = vld [vmem:[#allocation2 + $0xf8] sm:$0xff]
    %v936 = vld [vmem:[#allocation2 + $0x100] sm:$0xff]
    %v937 = vld [vmem:[#allocation2 + $0x108] sm:$0xff]
    %v938 = vld [vmem:[#allocation2 + $0x110] sm:$0xff]
    %v939 = vld [vmem:[#allocation2 + $0x118] sm:$0xff]
    %v940 = vld [vmem:[#allocation2 + $0x120] sm:$0xff]
    %v941 = vld [vmem:[#allocation2 + $0x128] sm:$0xff]
    %v942 = vld [vmem:[#allocation2 + $0x130] sm:$0xff]
    %v943 = vld [vmem:[#allocation2 + $0x138] sm:$0xff]
    %v944 = vld [vmem:[#allocation2 + $0x140] sm:$0xff]
    %v945 = vld [vmem:[#allocation2 + $0x148] sm:$0xff]
    %v946 = vld [vmem:[#allocation2 + $0x150] sm:$0xff]
    %v947 = vld [vmem:[#allocation2 + $0x158] sm:$0xff]
    %v948 = vld [vmem:[#allocation2 + $0x160] sm:$0xff]
    %v949 = vld [vmem:[#allocation2 + $0x168] sm:$0xff]
    %v950 = vld [vmem:[#allocation2 + $0x170] sm:$0xff]
    %v951 = vld [vmem:[#allocation2 + $0x178] sm:$0xff]
    %v952 = vld [vmem:[#allocation2 + $0x180] sm:$0xff]
    %v953 = vld [vmem:[#allocation2 + $0x188] sm:$0xff]
    %v954 = vld [vmem:[#allocation2 + $0x190] sm:$0xff]
    %v955 = vld [vmem:[#allocation2 + $0x198] sm:$0xff]
    %v956 = vld [vmem:[#allocation2 + $0x1a0] sm:$0xff]
    %v957 = vld [vmem:[#allocation2 + $0x1a8] sm:$0xff]
    %v958 = vld [vmem:[#allocation2 + $0x1b0] sm:$0xff]
    %v959 = vld [vmem:[#allocation2 + $0x1b8] sm:$0xff]
    %v960 = vld [vmem:[#allocation2 + $0x1c0] sm:$0xff]
    %v961 = vld [vmem:[#allocation2 + $0x1c8] sm:$0xff]
    %v962 = vld [vmem:[#allocation2 + $0x1d0] sm:$0xff]
    %v963 = vld [vmem:[#allocation2 + $0x1d8] sm:$0xff]
    %v964 = vld [vmem:[#allocation2 + $0x1e0] sm:$0xff]
    %v965 = vld [vmem:[#allocation2 + $0x1e8] sm:$0xff]
    %v966 = vld [vmem:[#allocation2 + $0x1f0] sm:$0xff]
    %v967 = vld [vmem:[#allocation2 + $0x1f8] sm:$0xff]
    %v968 = vld [vmem:[%s2] sm:$0x1]
    %v970 = vlaneseq
    %v971 = vshrl.u32 %v970, 7
    %v972 = vsub.s32 0, %v971
    %v973 = vrot.slane %v968, %v972
    %v975 = vadd.f32 %v904, %v973
    %v976 = vadd.f32 %v905, %v973
    %v977 = vadd.f32 %v906, %v973
    %v978 = vadd.f32 %v907, %v973
    %v979 = vadd.f32 %v908, %v973
    %v980 = vadd.f32 %v909, %v973
    %v981 = vadd.f32 %v910, %v973
    %v982 = vadd.f32 %v911, %v973
    %v983 = vadd.f32 %v912, %v973
    %v984 = vadd.f32 %v913, %v973
    %v985 = vadd.f32 %v914, %v973
    %v986 = vadd.f32 %v915, %v973
    %v987 = vadd.f32 %v916, %v973
    %v988 = vadd.f32 %v917, %v973
    %v989 = vadd.f32 %v918, %v973
    %v990 = vadd.f32 %v919, %v973
    %v991 = vadd.f32 %v920, %v973
    %v992 = vadd.f32 %v921, %v973
    %v993 = vadd.f32 %v922, %v973
    %v994 = vadd.f32 %v923, %v973
    %v995 = vadd.f32 %v924, %v973
    %v996 = vadd.f32 %v925, %v973
    %v997 = vadd.f32 %v926, %v973
    %v998 = vadd.f32 %v927, %v973
    %v999 = vadd.f32 %v928, %v973
    %v1000 = vadd.f32 %v929, %v973
    %v1001 = vadd.f32 %v930, %v973
    %v1002 = vadd.f32 %v931, %v973
    %v1003 = vadd.f32 %v932, %v973
    %v1004 = vadd.f32 %v933, %v973
    %v1005 = vadd.f32 %v934, %v973
    %v1006 = vadd.f32 %v935, %v973
    %v1007 = vadd.f32 %v936, %v973
    %v1008 = vadd.f32 %v937, %v973
    %v1009 = vadd.f32 %v938, %v973
    %v1010 = vadd.f32 %v939, %v973
    %v1011 = vadd.f32 %v940, %v973
    %v1012 = vadd.f32 %v941, %v973
    %v1013 = vadd.f32 %v942, %v973
    %v1014 = vadd.f32 %v943, %v973
    %v1015 = vadd.f32 %v944, %v973
    %v1016 = vadd.f32 %v945, %v973
    %v1017 = vadd.f32 %v946, %v973
    %v1018 = vadd.f32 %v947, %v973
    %v1019 = vadd.f32 %v948, %v973
    %v1020 = vadd.f32 %v949, %v973
    %v1021 = vadd.f32 %v950, %v973
    %v1022 = vadd.f32 %v951, %v973
    %v1023 = vadd.f32 %v952, %v973
    %v1024 = vadd.f32 %v953, %v973
    %v1025 = vadd.f32 %v954, %v973
    %v1026 = vadd.f32 %v955, %v973
    %v1027 = vadd.f32 %v956, %v973
    %v1028 = vadd.f32 %v957, %v973
    %v1029 = vadd.f32 %v958, %v973
    %v1030 = vadd.f32 %v959, %v973
    %v1031 = vadd.f32 %v960, %v973
    %v1032 = vadd.f32 %v961, %v973
    %v1033 = vadd.f32 %v962, %v973
    %v1034 = vadd.f32 %v963, %v973
    %v1035 = vadd.f32 %v964, %v973
    %v1036 = vadd.f32 %v965, %v973
    %v1037 = vadd.f32 %v966, %v973
    %v1038 = vadd.f32 %v967, %v973
    %1039 = vst [vmem:[%s3] sm:$0xff] %v975
    %1040 = vst [vmem:[%s3 + $0x8] sm:$0xff] %v976
    %1041 = vst [vmem:[%s3 + $0x10] sm:$0xff] %v977
    %1042 = vst [vmem:[%s3 + $0x18] sm:$0xff] %v978
    %1043 = vst [vmem:[%s3 + $0x20] sm:$0xff] %v979
    %1044 = vst [vmem:[%s3 + $0x28] sm:$0xff] %v980
    %1045 = vst [vmem:[%s3 + $0x30] sm:$0xff] %v981
    %1046 = vst [vmem:[%s3 + $0x38] sm:$0xff] %v982
    %1047 = vst [vmem:[%s3 + $0x40] sm:$0xff] %v983
    %1048 = vst [vmem:[%s3 + $0x48] sm:$0xff] %v984
    %1049 = vst [vmem:[%s3 + $0x50] sm:$0xff] %v985
    %1050 = vst [vmem:[%s3 + $0x58] sm:$0xff] %v986
    %1051 = vst [vmem:[%s3 + $0x60] sm:$0xff] %v987
    %1052 = vst [vmem:[%s3 + $0x68] sm:$0xff] %v988
    %1053 = vst [vmem:[%s3 + $0x70] sm:$0xff] %v989
    %1054 = vst [vmem:[%s3 + $0x78] sm:$0xff] %v990
    %1055 = vst [vmem:[%s3 + $0x80] sm:$0xff] %v991
    %1056 = vst [vmem:[%s3 + $0x88] sm:$0xff] %v992
    %1057 = vst [vmem:[%s3 + $0x90] sm:$0xff] %v993
    %1058 = vst [vmem:[%s3 + $0x98] sm:$0xff] %v994
    %1059 = vst [vmem:[%s3 + $0xa0] sm:$0xff] %v995
    %1060 = vst [vmem:[%s3 + $0xa8] sm:$0xff] %v996
    %1061 = vst [vmem:[%s3 + $0xb0] sm:$0xff] %v997
    %1062 = vst [vmem:[%s3 + $0xb8] sm:$0xff] %v998
    %1063 = vst [vmem:[%s3 + $0xc0] sm:$0xff] %v999
    %1064 = vst [vmem:[%s3 + $0xc8] sm:$0xff] %v1000
    %1065 = vst [vmem:[%s3 + $0xd0] sm:$0xff] %v1001
    %1066 = vst [vmem:[%s3 + $0xd8] sm:$0xff] %v1002
    %1067 = vst [vmem:[%s3 + $0xe0] sm:$0xff] %v1003
    %1068 = vst [vmem:[%s3 + $0xe8] sm:$0xff] %v1004
    %1069 = vst [vmem:[%s3 + $0xf0] sm:$0xff] %v1005
    %1070 = vst [vmem:[%s3 + $0xf8] sm:$0xff] %v1006
    %1071 = vst [vmem:[%s3 + $0x100] sm:$0xff] %v1007
    %1072 = vst [vmem:[%s3 + $0x108] sm:$0xff] %v1008
    %1073 = vst [vmem:[%s3 + $0x110] sm:$0xff] %v1009
    %1074 = vst [vmem:[%s3 + $0x118] sm:$0xff] %v1010
    %1075 = vst [vmem:[%s3 + $0x120] sm:$0xff] %v1011
    %1076 = vst [vmem:[%s3 + $0x128] sm:$0xff] %v1012
    %1077 = vst [vmem:[%s3 + $0x130] sm:$0xff] %v1013
    %1078 = vst [vmem:[%s3 + $0x138] sm:$0xff] %v1014
    %1079 = vst [vmem:[%s3 + $0x140] sm:$0xff] %v1015
    %1080 = vst [vmem:[%s3 + $0x148] sm:$0xff] %v1016
    %1081 = vst [vmem:[%s3 + $0x150] sm:$0xff] %v1017
    %1082 = vst [vmem:[%s3 + $0x158] sm:$0xff] %v1018
    %1083 = vst [vmem:[%s3 + $0x160] sm:$0xff] %v1019
    %1084 = vst [vmem:[%s3 + $0x168] sm:$0xff] %v1020
    %1085 = vst [vmem:[%s3 + $0x170] sm:$0xff] %v1021
    %1086 = vst [vmem:[%s3 + $0x178] sm:$0xff] %v1022
    %1087 = vst [vmem:[%s3 + $0x180] sm:$0xff] %v1023
    %1088 = vst [vmem:[%s3 + $0x188] sm:$0xff] %v1024
    %1089 = vst [vmem:[%s3 + $0x190] sm:$0xff] %v1025
    %1090 = vst [vmem:[%s3 + $0x198] sm:$0xff] %v1026
    %1091 = vst [vmem:[%s3 + $0x1a0] sm:$0xff] %v1027
    %1092 = vst [vmem:[%s3 + $0x1a8] sm:$0xff] %v1028
    %1093 = vst [vmem:[%s3 + $0x1b0] sm:$0xff] %v1029
    %1094 = vst [vmem:[%s3 + $0x1b8] sm:$0xff] %v1030
    %1095 = vst [vmem:[%s3 + $0x1c0] sm:$0xff] %v1031
    %1096 = vst [vmem:[%s3 + $0x1c8] sm:$0xff] %v1032
    %1097 = vst [vmem:[%s3 + $0x1d0] sm:$0xff] %v1033
    %1098 = vst [vmem:[%s3 + $0x1d8] sm:$0xff] %v1034
    %1099 = vst [vmem:[%s3 + $0x1e0] sm:$0xff] %v1035
    %1100 = vst [vmem:[%s3 + $0x1e8] sm:$0xff] %v1036
    %1101 = vst [vmem:[%s3 + $0x1f0] sm:$0xff] %v1037
    %1102 = vst [vmem:[%s3 + $0x1f8] sm:$0xff] %v1038
  $region21: #{forward.18} parent=0 // pred_fallthru
    _
  // Predicated region
  $region22: #{forward.18} parent=0 // pred_check
    _
  $region23: #{forward.18} parent=0 // pred_check_branch
    %1104 = sbr.rel (0) target = $region25
  $region24: #{forward.18} parent=0 // pred_region
    _
  $region25: #{forward.18} parent=0 // pred_fallthru
    _
  // Predicated region
  $region26: #{forward.18} parent=0 // pred_check
    _
  $region27: #{forward.18} parent=0 // pred_check_branch
    %1106 = sbr.rel (0) target = $region29
  $region28: #{forward.18} parent=0 // pred_region
    _
  $region29: #{forward.18} parent=0 // pred_fallthru
    _

// kernel: forward.16
$region0: #{forward.16}
  #allocation0 [shape = 'u32[]', space=smem, size = 0x4, offset = 0x4, fixed_abs, tag = 'smem constant byte address 0x4 - core index']
  #allocation1 [shape = 'u32[144,128]{1,0:T(1,128)}', space=vmem, size = 0x12000, scoped, tag = 'internal scratch']
  #allocation2 [shape = 'f32[512,128]{1,0:T(8,128)}', space=vmem, size = 0x40000, scoped, tag = 'scratch operand']
  %s0 = inlined_call_operand.vmem [shape: bf16[512,27], index: 0, kind: input, shape index: {}]
  %s1 = inlined_call_operand.vmem [shape: bf16[27,128], index: 1, kind: input, shape index: {}]
  %s2 = inlined_call_operand.vmem [shape: f32[1,128], index: 2, kind: input, shape index: {}]
  %s3 = inlined_call_operand.vmem [shape: f32[512,128], index: 3, kind: output, shape index: {}]
  %s4 = sld [smem:[#allocation0]]
  $region30: #{forward.16} parent=0
    _
  %s6 = ssub.s32 1, %s4
  %s7 = scalar_select 0, %s6, %s4
  // Predicated region
  $region2: #{forward.16} parent=0 // pred_check
    _
  $region3: #{forward.16} parent=0 // pred_check_branch
    %9 = sbr.rel (0) target = $region5
  $region4: #{forward.16} parent=0 // pred_region
    _
  $region5: #{forward.16} parent=0 // pred_fallthru
    _
  // Predicated region
  $region6: #{forward.16} parent=0 // pred_check
    _
  $region7: #{forward.16} parent=0 // pred_check_branch
    %11 = sbr.rel (0) target = $region9
  $region8: #{forward.16} parent=0 // pred_region
    _
  $region9: #{forward.16} parent=0 // pred_fallthru
    _
  // Predicated region
  $region10: #{forward.16} parent=0 // pred_check
    _
  $region11: #{forward.16} parent=0 // pred_check_branch
    %13 = sbr.rel (0) target = $region13
  $region12: #{forward.16} parent=0 // pred_region
    _
  $region13: #{forward.16} parent=0 // pred_fallthru
    _
  %p15 = scmp.eq.s32.totalorder 0, 0
  // Predicated region
  $region14: #{forward.16} parent=0 // pred_check
    %p16 = pneg %p15
  $region15: #{forward.16} parent=0 // pred_check_branch
    %18 = sbr.rel (%p16) target = $region17
  $region16: #{forward.16} parent=0 // pred_region
    %19 = vst [vmem:[#allocation2] sm:$0xff] 0.0
    %20 = vst [vmem:[#allocation2 + $0x8] sm:$0xff] 0.0
    %21 = vst [vmem:[#allocation2 + $0x10] sm:$0xff] 0.0
    %22 = vst [vmem:[#allocation2 + $0x18] sm:$0xff] 0.0
    %23 = vst [vmem:[#allocation2 + $0x20] sm:$0xff] 0.0
    %24 = vst [vmem:[#allocation2 + $0x28] sm:$0xff] 0.0
    %25 = vst [vmem:[#allocation2 + $0x30] sm:$0xff] 0.0
    %26 = vst [vmem:[#allocation2 + $0x38] sm:$0xff] 0.0
    %27 = vst [vmem:[#allocation2 + $0x40] sm:$0xff] 0.0
    %28 = vst [vmem:[#allocation2 + $0x48] sm:$0xff] 0.0
    %29 = vst [vmem:[#allocation2 + $0x50] sm:$0xff] 0.0
    %30 = vst [vmem:[#allocation2 + $0x58] sm:$0xff] 0.0
    %31 = vst [vmem:[#allocation2 + $0x60] sm:$0xff] 0.0
    %32 = vst [vmem:[#allocation2 + $0x68] sm:$0xff] 0.0
    %33 = vst [vmem:[#allocation2 + $0x70] sm:$0xff] 0.0
    %34 = vst [vmem:[#allocation2 + $0x78] sm:$0xff] 0.0
    %35 = vst [vmem:[#allocation2 + $0x80] sm:$0xff] 0.0
    %36 = vst [vmem:[#allocation2 + $0x88] sm:$0xff] 0.0
    %37 = vst [vmem:[#allocation2 + $0x90] sm:$0xff] 0.0
    %38 = vst [vmem:[#allocation2 + $0x98] sm:$0xff] 0.0
    %39 = vst [vmem:[#allocation2 + $0xa0] sm:$0xff] 0.0
    %40 = vst [vmem:[#allocation2 + $0xa8] sm:$0xff] 0.0
    %41 = vst [vmem:[#allocation2 + $0xb0] sm:$0xff] 0.0
    %42 = vst [vmem:[#allocation2 + $0xb8] sm:$0xff] 0.0
    %43 = vst [vmem:[#allocation2 + $0xc0] sm:$0xff] 0.0
    %44 = vst [vmem:[#allocation2 + $0xc8] sm:$0xff] 0.0
    %45 = vst [vmem:[#allocation2 + $0xd0] sm:$0xff] 0.0
    %46 = vst [vmem:[#allocation2 + $0xd8] sm:$0xff] 0.0
    %47 = vst [vmem:[#allocation2 + $0xe0] sm:$0xff] 0.0
    %48 = vst [vmem:[#allocation2 + $0xe8] sm:$0xff] 0.0
    %49 = vst [vmem:[#allocation2 + $0xf0] sm:$0xff] 0.0
    %50 = vst [vmem:[#allocation2 + $0xf8] sm:$0xff] 0.0
    %51 = vst [vmem:[#allocation2 + $0x100] sm:$0xff] 0.0
    %52 = vst [vmem:[#allocation2 + $0x108] sm:$0xff] 0.0
    %53 = vst [vmem:[#allocation2 + $0x110] sm:$0xff] 0.0
    %54 = vst [vmem:[#allocation2 + $0x118] sm:$0xff] 0.0
    %55 = vst [vmem:[#allocation2 + $0x120] sm:$0xff] 0.0
    %56 = vst [vmem:[#allocation2 + $0x128] sm:$0xff] 0.0
    %57 = vst [vmem:[#allocation2 + $0x130] sm:$0xff] 0.0
    %58 = vst [vmem:[#allocation2 + $0x138] sm:$0xff] 0.0
    %59 = vst [vmem:[#allocation2 + $0x140] sm:$0xff] 0.0
    %60 = vst [vmem:[#allocation2 + $0x148] sm:$0xff] 0.0
    %61 = vst [vmem:[#allocation2 + $0x150] sm:$0xff] 0.0
    %62 = vst [vmem:[#allocation2 + $0x158] sm:$0xff] 0.0
    %63 = vst [vmem:[#allocation2 + $0x160] sm:$0xff] 0.0
    %64 = vst [vmem:[#allocation2 + $0x168] sm:$0xff] 0.0
    %65 = vst [vmem:[#allocation2 + $0x170] sm:$0xff] 0.0
    %66 = vst [vmem:[#allocation2 + $0x178] sm:$0xff] 0.0
    %67 = vst [vmem:[#allocation2 + $0x180] sm:$0xff] 0.0
    %68 = vst [vmem:[#allocation2 + $0x188] sm:$0xff] 0.0
    %69 = vst [vmem:[#allocation2 + $0x190] sm:$0xff] 0.0
    %70 = vst [vmem:[#allocation2 + $0x198] sm:$0xff] 0.0
    %71 = vst [vmem:[#allocation2 + $0x1a0] sm:$0xff] 0.0
    %72 = vst [vmem:[#allocation2 + $0x1a8] sm:$0xff] 0.0
    %73 = vst [vmem:[#allocation2 + $0x1b0] sm:$0xff] 0.0
    %74 = vst [vmem:[#allocation2 + $0x1b8] sm:$0xff] 0.0
    %75 = vst [vmem:[#allocation2 + $0x1c0] sm:$0xff] 0.0
    %76 = vst [vmem:[#allocation2 + $0x1c8] sm:$0xff] 0.0
    %77 = vst [vmem:[#allocation2 + $0x1d0] sm:$0xff] 0.0
    %78 = vst [vmem:[#allocation2 + $0x1d8] sm:$0xff] 0.0
    %79 = vst [vmem:[#allocation2 + $0x1e0] sm:$0xff] 0.0
    %80 = vst [vmem:[#allocation2 + $0x1e8] sm:$0xff] 0.0
    %81 = vst [vmem:[#allocation2 + $0x1f0] sm:$0xff] 0.0
    %82 = vst [vmem:[#allocation2 + $0x1f8] sm:$0xff] 0.0
  $region17: #{forward.16} parent=0 // pred_fallthru
    _
  %v83 = vld [vmem:[#allocation2] sm:$0xff]
  %v84 = vld [vmem:[#allocation2 + $0x8] sm:$0xff]
  %v85 = vld [vmem:[#allocation2 + $0x10] sm:$0xff]
  %v86 = vld [vmem:[#allocation2 + $0x18] sm:$0xff]
  %v87 = vld [vmem:[#allocation2 + $0x20] sm:$0xff]
  %v88 = vld [vmem:[#allocation2 + $0x28] sm:$0xff]
  %v89 = vld [vmem:[#allocation2 + $0x30] sm:$0xff]
  %v90 = vld [vmem:[#allocation2 + $0x38] sm:$0xff]
  %v91 = vld [vmem:[#allocation2 + $0x40] sm:$0xff]
  %v92 = vld [vmem:[#allocation2 + $0x48] sm:$0xff]
  %v93 = vld [vmem:[#allocation2 + $0x50] sm:$0xff]
  %v94 = vld [vmem:[#allocation2 + $0x58] sm:$0xff]
  %v95 = vld [vmem:[#allocation2 + $0x60] sm:$0xff]
  %v96 = vld [vmem:[#allocation2 + $0x68] sm:$0xff]
  %v97 = vld [vmem:[#allocation2 + $0x70] sm:$0xff]
  %v98 = vld [vmem:[#allocation2 + $0x78] sm:$0xff]
  %v99 = vld [vmem:[#allocation2 + $0x80] sm:$0xff]
  %v100 = vld [vmem:[#allocation2 + $0x88] sm:$0xff]
  %v101 = vld [vmem:[#allocation2 + $0x90] sm:$0xff]
  %v102 = vld [vmem:[#allocation2 + $0x98] sm:$0xff]
  %v103 = vld [vmem:[#allocation2 + $0xa0] sm:$0xff]
  %v104 = vld [vmem:[#allocation2 + $0xa8] sm:$0xff]
  %v105 = vld [vmem:[#allocation2 + $0xb0] sm:$0xff]
  %v106 = vld [vmem:[#allocation2 + $0xb8] sm:$0xff]
  %v107 = vld [vmem:[#allocation2 + $0xc0] sm:$0xff]
  %v108 = vld [vmem:[#allocation2 + $0xc8] sm:$0xff]
  %v109 = vld [vmem:[#allocation2 + $0xd0] sm:$0xff]
  %v110 = vld [vmem:[#allocation2 + $0xd8] sm:$0xff]
  %v111 = vld [vmem:[#allocation2 + $0xe0] sm:$0xff]
  %v112 = vld [vmem:[#allocation2 + $0xe8] sm:$0xff]
  %v113 = vld [vmem:[#allocation2 + $0xf0] sm:$0xff]
  %v114 = vld [vmem:[#allocation2 + $0xf8] sm:$0xff]
  %v115 = vld [vmem:[#allocation2 + $0x100] sm:$0xff]
  %v116 = vld [vmem:[#allocation2 + $0x108] sm:$0xff]
  %v117 = vld [vmem:[#allocation2 + $0x110] sm:$0xff]
  %v118 = vld [vmem:[#allocation2 + $0x118] sm:$0xff]
  %v119 = vld [vmem:[#allocation2 + $0x120] sm:$0xff]
  %v120 = vld [vmem:[#allocation2 + $0x128] sm:$0xff]
  %v121 = vld [vmem:[#allocation2 + $0x130] sm:$0xff]
  %v122 = vld [vmem:[#allocation2 + $0x138] sm:$0xff]
  %v123 = vld [vmem:[#allocation2 + $0x140] sm:$0xff]
  %v124 = vld [vmem:[#allocation2 + $0x148] sm:$0xff]
  %v125 = vld [vmem:[#allocation2 + $0x150] sm:$0xff]
  %v126 = vld [vmem:[#allocation2 + $0x158] sm:$0xff]
  %v127 = vld [vmem:[#allocation2 + $0x160] sm:$0xff]
  %v128 = vld [vmem:[#allocation2 + $0x168] sm:$0xff]
  %v129 = vld [vmem:[#allocation2 + $0x170] sm:$0xff]
  %v130 = vld [vmem:[#allocation2 + $0x178] sm:$0xff]
  %v131 = vld [vmem:[#allocation2 + $0x180] sm:$0xff]
  %v132 = vld [vmem:[#allocation2 + $0x188] sm:$0xff]
  %v133 = vld [vmem:[#allocation2 + $0x190] sm:$0xff]
  %v134 = vld [vmem:[#allocation2 + $0x198] sm:$0xff]
  %v135 = vld [vmem:[#allocation2 + $0x1a0] sm:$0xff]
  %v136 = vld [vmem:[#allocation2 + $0x1a8] sm:$0xff]
  %v137 = vld [vmem:[#allocation2 + $0x1b0] sm:$0xff]
  %v138 = vld [vmem:[#allocation2 + $0x1b8] sm:$0xff]
  %v139 = vld [vmem:[#allocation2 + $0x1c0] sm:$0xff]
  %v140 = vld [vmem:[#allocation2 + $0x1c8] sm:$0xff]
  %v141 = vld [vmem:[#allocation2 + $0x1d0] sm:$0xff]
  %v142 = vld [vmem:[#allocation2 + $0x1d8] sm:$0xff]
  %v143 = vld [vmem:[#allocation2 + $0x1e0] sm:$0xff]
  %v144 = vld [vmem:[#allocation2 + $0x1e8] sm:$0xff]
  %v145 = vld [vmem:[#allocation2 + $0x1f0] sm:$0xff]
  %v146 = vld [vmem:[#allocation2 + $0x1f8] sm:$0xff]
  %v147 = vld [vmem:[%s0] sm:$0xf]
  %v148 = vld [vmem:[%s0 + $0x4] sm:$0xf]
  %v149 = vld [vmem:[%s0 + $0x8] sm:$0xf]
  %v150 = vld [vmem:[%s0 + $0xc] sm:$0xf]
  %v151 = vld [vmem:[%s0 + $0x10] sm:$0xf]
  %v152 = vld [vmem:[%s0 + $0x14] sm:$0xf]
  %v153 = vld [vmem:[%s0 + $0x18] sm:$0xf]
  %v154 = vld [vmem:[%s0 + $0x1c] sm:$0xf]
  %v155 = vld [vmem:[%s0 + $0x20] sm:$0xf]
  %v156 = vld [vmem:[%s0 + $0x24] sm:$0xf]
  %v157 = vld [vmem:[%s0 + $0x28] sm:$0xf]
  %v158 = vld [vmem:[%s0 + $0x2c] sm:$0xf]
  %v159 = vld [vmem:[%s0 + $0x30] sm:$0xf]
  %v160 = vld [vmem:[%s0 + $0x34] sm:$0xf]
  %v161 = vld [vmem:[%s0 + $0x38] sm:$0xf]
  %v162 = vld [vmem:[%s0 + $0x3c] sm:$0xf]
  %v163 = vld [vmem:[%s0 + $0x40] sm:$0xf]
  %v164 = vld [vmem:[%s0 + $0x44] sm:$0xf]
  %v165 = vld [vmem:[%s0 + $0x48] sm:$0xf]
  %v166 = vld [vmem:[%s0 + $0x4c] sm:$0xf]
  %v167 = vld [vmem:[%s0 + $0x50] sm:$0xf]
  %v168 = vld [vmem:[%s0 + $0x54] sm:$0xf]
  %v169 = vld [vmem:[%s0 + $0x58] sm:$0xf]
  %v170 = vld [vmem:[%s0 + $0x5c] sm:$0xf]
  %v171 = vld [vmem:[%s0 + $0x60] sm:$0xf]
  %v172 = vld [vmem:[%s0 + $0x64] sm:$0xf]
  %v173 = vld [vmem:[%s0 + $0x68] sm:$0xf]
  %v174 = vld [vmem:[%s0 + $0x6c] sm:$0xf]
  %v175 = vld [vmem:[%s0 + $0x70] sm:$0xf]
  %v176 = vld [vmem:[%s0 + $0x74] sm:$0xf]
  %v177 = vld [vmem:[%s0 + $0x78] sm:$0xf]
  %v178 = vld [vmem:[%s0 + $0x7c] sm:$0xf]
  %v179 = vld [vmem:[%s0 + $0x80] sm:$0xf]
  %v180 = vld [vmem:[%s0 + $0x84] sm:$0xf]
  %v181 = vld [vmem:[%s0 + $0x88] sm:$0xf]
  %v182 = vld [vmem:[%s0 + $0x8c] sm:$0xf]
  %v183 = vld [vmem:[%s0 + $0x90] sm:$0xf]
  %v184 = vld [vmem:[%s0 + $0x94] sm:$0xf]
  %v185 = vld [vmem:[%s0 + $0x98] sm:$0xf]
  %v186 = vld [vmem:[%s0 + $0x9c] sm:$0xf]
  %v187 = vld [vmem:[%s0 + $0xa0] sm:$0xf]
  %v188 = vld [vmem:[%s0 + $0xa4] sm:$0xf]
  %v189 = vld [vmem:[%s0 + $0xa8] sm:$0xf]
  %v190 = vld [vmem:[%s0 + $0xac] sm:$0xf]
  %v191 = vld [vmem:[%s0 + $0xb0] sm:$0xf]
  %v192 = vld [vmem:[%s0 + $0xb4] sm:$0xf]
  %v193 = vld [vmem:[%s0 + $0xb8] sm:$0xf]
  %v194 = vld [vmem:[%s0 + $0xbc] sm:$0xf]
  %v195 = vld [vmem:[%s0 + $0xc0] sm:$0xf]
  %v196 = vld [vmem:[%s0 + $0xc4] sm:$0xf]
  %v197 = vld [vmem:[%s0 + $0xc8] sm:$0xf]
  %v198 = vld [vmem:[%s0 + $0xcc] sm:$0xf]
  %v199 = vld [vmem:[%s0 + $0xd0] sm:$0xf]
  %v200 = vld [vmem:[%s0 + $0xd4] sm:$0xf]
  %v201 = vld [vmem:[%s0 + $0xd8] sm:$0xf]
  %v202 = vld [vmem:[%s0 + $0xdc] sm:$0xf]
  %v203 = vld [vmem:[%s0 + $0xe0] sm:$0xf]
  %v204 = vld [vmem:[%s0 + $0xe4] sm:$0xf]
  %v205 = vld [vmem:[%s0 + $0xe8] sm:$0xf]
  %v206 = vld [vmem:[%s0 + $0xec] sm:$0xf]
  %v207 = vld [vmem:[%s0 + $0xf0] sm:$0xf]
  %v208 = vld [vmem:[%s0 + $0xf4] sm:$0xf]
  %v209 = vld [vmem:[%s0 + $0xf8] sm:$0xf]
  %v210 = vld [vmem:[%s0 + $0xfc] sm:$0xf]
  %v211 = vld [vmem:[%s1] sm:$0xf]
  %v212 = vld [vmem:[%s1 + $0x4] sm:$0xf]
  %v213 = vld [vmem:[%s1 + $0x8] sm:$0xf]
  %v214 = vld [vmem:[%s1 + $0xc] sm:$0x3]
  %v279 = vunpack.c.l.b16 %v147
  %v280 = vunpack.c.l.b16 %v148
  %v281 = vunpack.c.l.b16 %v149
  %v282 = vunpack.c.l.b16 %v150
  %v283 = vunpack.c.l.b16 %v151
  %v284 = vunpack.c.l.b16 %v152
  %v285 = vunpack.c.l.b16 %v153
  %v286 = vunpack.c.l.b16 %v154
  %v287 = vunpack.c.l.b16 %v155
  %v288 = vunpack.c.l.b16 %v156
  %v289 = vunpack.c.l.b16 %v157
  %v290 = vunpack.c.l.b16 %v158
  %v291 = vunpack.c.l.b16 %v159
  %v292 = vunpack.c.l.b16 %v160
  %v293 = vunpack.c.l.b16 %v161
  %v294 = vunpack.c.l.b16 %v162
  %v295 = vunpack.c.l.b16 %v163
  %v296 = vunpack.c.l.b16 %v164
  %v297 = vunpack.c.l.b16 %v165
  %v298 = vunpack.c.l.b16 %v166
  %v299 = vunpack.c.l.b16 %v167
  %v300 = vunpack.c.l.b16 %v168
  %v301 = vunpack.c.l.b16 %v169
  %v302 = vunpack.c.l.b16 %v170
  %v303 = vunpack.c.l.b16 %v171
  %v304 = vunpack.c.l.b16 %v172
  %v305 = vunpack.c.l.b16 %v173
  %v306 = vunpack.c.l.b16 %v174
  %v307 = vunpack.c.l.b16 %v175
  %v308 = vunpack.c.l.b16 %v176
  %v309 = vunpack.c.l.b16 %v177
  %v310 = vunpack.c.l.b16 %v178
  %v311 = vunpack.c.l.b16 %v179
  %v312 = vunpack.c.l.b16 %v180
  %v313 = vunpack.c.l.b16 %v181
  %v314 = vunpack.c.l.b16 %v182
  %v315 = vunpack.c.l.b16 %v183
  %v316 = vunpack.c.l.b16 %v184
  %v317 = vunpack.c.l.b16 %v185
  %v318 = vunpack.c.l.b16 %v186
  %v319 = vunpack.c.l.b16 %v187
  %v320 = vunpack.c.l.b16 %v188
  %v321 = vunpack.c.l.b16 %v189
  %v322 = vunpack.c.l.b16 %v190
  %v323 = vunpack.c.l.b16 %v191
  %v324 = vunpack.c.l.b16 %v192
  %v325 = vunpack.c.l.b16 %v193
  %v326 = vunpack.c.l.b16 %v194
  %v327 = vunpack.c.l.b16 %v195
  %v328 = vunpack.c.l.b16 %v196
  %v329 = vunpack.c.l.b16 %v197
  %v330 = vunpack.c.l.b16 %v198
  %v331 = vunpack.c.l.b16 %v199
  %v332 = vunpack.c.l.b16 %v200
  %v333 = vunpack.c.l.b16 %v201
  %v334 = vunpack.c.l.b16 %v202
  %v335 = vunpack.c.l.b16 %v203
  %v336 = vunpack.c.l.b16 %v204
  %v337 = vunpack.c.l.b16 %v205
  %v338 = vunpack.c.l.b16 %v206
  %v339 = vunpack.c.l.b16 %v207
  %v340 = vunpack.c.l.b16 %v208
  %v341 = vunpack.c.l.b16 %v209
  %v342 = vunpack.c.l.b16 %v210
  %v343 = vpack.c.b16 %v280, %v279
  %v344 = vpack.c.b16 %v282, %v281
  %v345 = vpack.c.b16 %v284, %v283
  %v346 = vpack.c.b16 %v286, %v285
  %v347 = vpack.c.b16 %v288, %v287
  %v348 = vpack.c.b16 %v290, %v289
  %v349 = vpack.c.b16 %v292, %v291
  %v350 = vpack.c.b16 %v294, %v293
  %v351 = vpack.c.b16 %v296, %v295
  %v352 = vpack.c.b16 %v298, %v297
  %v353 = vpack.c.b16 %v300, %v299
  %v354 = vpack.c.b16 %v302, %v301
  %v355 = vpack.c.b16 %v304, %v303
  %v356 = vpack.c.b16 %v306, %v305
  %v357 = vpack.c.b16 %v308, %v307
  %v358 = vpack.c.b16 %v310, %v309
  %v359 = vpack.c.b16 %v312, %v311
  %v360 = vpack.c.b16 %v314, %v313
  %v361 = vpack.c.b16 %v316, %v315
  %v362 = vpack.c.b16 %v318, %v317
  %v363 = vpack.c.b16 %v320, %v319
  %v364 = vpack.c.b16 %v322, %v321
  %v365 = vpack.c.b16 %v324, %v323
  %v366 = vpack.c.b16 %v326, %v325
  %v367 = vpack.c.b16 %v328, %v327
  %v368 = vpack.c.b16 %v330, %v329
  %v369 = vpack.c.b16 %v332, %v331
  %v370 = vpack.c.b16 %v334, %v333
  %v371 = vpack.c.b16 %v336, %v335
  %v372 = vpack.c.b16 %v338, %v337
  %v373 = vpack.c.b16 %v340, %v339
  %v374 = vpack.c.b16 %v342, %v341
  %v379 = vunpack.c.l.b16 %v211
  %v380 = vunpack.c.l.b16 %v212
  %v381 = vunpack.c.l.b16 %v213
  %v382 = vunpack.c.l.b16 %v214
  %v383 = vpack.c.b16 %v380, %v379
  %v384 = vpack.c.b16 %v382, %v381
  %vm386 = vcmask 220160
  %v388 = vsel %vm386, %v343, 0
  %v391 = vsel %vm386, %v344, 0
  %v394 = vsel %vm386, %v345, 0
  %v397 = vsel %vm386, %v346, 0
  %v400 = vsel %vm386, %v347, 0
  %v403 = vsel %vm386, %v348, 0
  %v406 = vsel %vm386, %v349, 0
  %v409 = vsel %vm386, %v350, 0
  %v412 = vsel %vm386, %v351, 0
  %v415 = vsel %vm386, %v352, 0
  %v418 = vsel %vm386, %v353, 0
  %v421 = vsel %vm386, %v354, 0
  %v424 = vsel %vm386, %v355, 0
  %v427 = vsel %vm386, %v356, 0
  %v430 = vsel %vm386, %v357, 0
  %v433 = vsel %vm386, %v358, 0
  %v436 = vsel %vm386, %v359, 0
  %v439 = vsel %vm386, %v360, 0
  %v442 = vsel %vm386, %v361, 0
  %v445 = vsel %vm386, %v362, 0
  %v448 = vsel %vm386, %v363, 0
  %v451 = vsel %vm386, %v364, 0
  %v454 = vsel %vm386, %v365, 0
  %v457 = vsel %vm386, %v366, 0
  %v460 = vsel %vm386, %v367, 0
  %v463 = vsel %vm386, %v368, 0
  %v466 = vsel %vm386, %v369, 0
  %v469 = vsel %vm386, %v370, 0
  %v472 = vsel %vm386, %v371, 0
  %v475 = vsel %vm386, %v372, 0
  %v478 = vsel %vm386, %v373, 0
  %v481 = vsel %vm386, %v374, 0
  %vm483 = vcmask 1044480
  %vm484 = vcmask 1045504
  %v485 = vsel %vm483, 4294967295, 65535
  %v486 = vsel %vm484, %v485, 0
  %v488 = vand.u32 %v384, %v486
  %490 = vmatprep.subr.bf16.mxu0 0
  %491 = vmatpush1.bf16.msra.mxu0 0
  %492 = vmatprep.subr.bf16.mxu0 0
  %493 = vmatpush1.bf16.msra.mxu0 0
  %494 = vmatprep.subr.bf16.mxu0 0
  %495 = vmatpush1.bf16.msra.mxu0 0
  %496 = vmatprep.subr.bf16.mxu0 0
  %497 = vmatpush1.bf16.msra.mxu0 0
  %498 = vmatprep.subr.bf16.mxu0 0
  %499 = vmatpush1.bf16.msra.mxu0 0
  %500 = vmatprep.subr.bf16.mxu0 0
  %501 = vmatpush1.bf16.msra.mxu0 0
  %502 = vmatprep.subr.bf16.mxu0 0
  %503 = vmatpush1.bf16.msra.mxu0 %v488
  %504 = vmatprep.subr.bf16.mxu0 0
  %505 = vmatpush1.bf16.msra.mxu0 %v383
  %506 = vmatprep.subr.bf16.mxu0 0
  %507 = vmatpush2.bf16.msra.mxu0 0
  %508 = vmatprep.subr.bf16.mxu0 0
  %509 = vmatpush2.bf16.msra.mxu0 0
  %510 = vmatprep.subr.bf16.mxu0 0
  %511 = vmatpush2.bf16.msra.mxu0 0
  %512 = vmatprep.subr.bf16.mxu0 0
  %513 = vmatpush2.bf16.msra.mxu0 0
  %514 = vmatprep.subr.bf16.mxu0 0
  %515 = vmatpush2.bf16.msra.mxu0 0
  %516 = vmatprep.subr.bf16.mxu0 0
  %517 = vmatpush2.bf16.msra.mxu0 0
  %518 = vmatprep.subr.bf16.mxu0 0
  %519 = vmatpush2.bf16.msra.mxu0 0
  %520 = vmatprep.subr.bf16.mxu0 0
  %521 = vmatpush2.bf16.msra.mxu0 0
  %522 = vmatprep.mubr.bf16.mxu0 0
  %523 = vmatmul.mubr.bf16.gmra.mxu0 %v388
  %v524 = vpop.f32.mrf.mxu0
  %v525 = vadd.f32 0.0, %v524
  %v526 = vpop.f32.mrf.mxu0
  %v527 = vpop.f32.mrf.mxu0
  %v528 = vadd.f32 0.0, %v527
  %v529 = vpop.f32.mrf.mxu0
  %530 = vmatprep.mubr.bf16.mxu0 0
  %531 = vmatmul.mubr.bf16.gmra.mxu0 %v391
  %v532 = vpop.f32.mrf.mxu0
  %v533 = vadd.f32 0.0, %v532
  %v534 = vpop.f32.mrf.mxu0
  %v535 = vpop.f32.mrf.mxu0
  %v536 = vadd.f32 0.0, %v535
  %v537 = vpop.f32.mrf.mxu0
  %538 = vmatprep.mubr.bf16.mxu0 0
  %539 = vmatmul.mubr.bf16.gmra.mxu0 %v394
  %v540 = vpop.f32.mrf.mxu0
  %v541 = vadd.f32 0.0, %v540
  %v542 = vpop.f32.mrf.mxu0
  %v543 = vpop.f32.mrf.mxu0
  %v544 = vadd.f32 0.0, %v543
  %v545 = vpop.f32.mrf.mxu0
  %546 = vmatprep.mubr.bf16.mxu0 0
  %547 = vmatmul.mubr.bf16.gmra.mxu0 %v397
  %v548 = vpop.f32.mrf.mxu0
  %v549 = vadd.f32 0.0, %v548
  %v550 = vpop.f32.mrf.mxu0
  %v551 = vpop.f32.mrf.mxu0
  %v552 = vadd.f32 0.0, %v551
  %v553 = vpop.f32.mrf.mxu0
  %554 = vmatprep.mubr.bf16.mxu0 0
  %555 = vmatmul.mubr.bf16.gmra.mxu0 %v400
  %v556 = vpop.f32.mrf.mxu0
  %v557 = vadd.f32 0.0, %v556
  %v558 = vpop.f32.mrf.mxu0
  %v559 = vpop.f32.mrf.mxu0
  %v560 = vadd.f32 0.0, %v559
  %v561 = vpop.f32.mrf.mxu0
  %562 = vmatprep.mubr.bf16.mxu0 0
  %563 = vmatmul.mubr.bf16.gmra.mxu0 %v403
  %v564 = vpop.f32.mrf.mxu0
  %v565 = vadd.f32 0.0, %v564
  %v566 = vpop.f32.mrf.mxu0
  %v567 = vpop.f32.mrf.mxu0
  %v568 = vadd.f32 0.0, %v567
  %v569 = vpop.f32.mrf.mxu0
  %570 = vmatprep.mubr.bf16.mxu0 0
  %571 = vmatmul.mubr.bf16.gmra.mxu0 %v406
  %v572 = vpop.f32.mrf.mxu0
  %v573 = vadd.f32 0.0, %v572
  %v574 = vpop.f32.mrf.mxu0
  %v575 = vpop.f32.mrf.mxu0
  %v576 = vadd.f32 0.0, %v575
  %v577 = vpop.f32.mrf.mxu0
  %578 = vmatprep.mubr.bf16.mxu0 0
  %579 = vmatmul.mubr.bf16.gmra.mxu0 %v409
  %v580 = vpop.f32.mrf.mxu0
  %v581 = vadd.f32 0.0, %v580
  %v582 = vpop.f32.mrf.mxu0
  %v583 = vpop.f32.mrf.mxu0
  %v584 = vadd.f32 0.0, %v583
  %v585 = vpop.f32.mrf.mxu0
  %586 = vmatprep.mubr.bf16.mxu0 0
  %587 = vmatmul.mubr.bf16.gmra.mxu0 %v412
  %v588 = vpop.f32.mrf.mxu0
  %v589 = vadd.f32 0.0, %v588
  %v590 = vpop.f32.mrf.mxu0
  %v591 = vpop.f32.mrf.mxu0
  %v592 = vadd.f32 0.0, %v591
  %v593 = vpop.f32.mrf.mxu0
  %594 = vmatprep.mubr.bf16.mxu0 0
  %595 = vmatmul.mubr.bf16.gmra.mxu0 %v415
  %v596 = vpop.f32.mrf.mxu0
  %v597 = vadd.f32 0.0, %v596
  %v598 = vpop.f32.mrf.mxu0
  %v599 = vpop.f32.mrf.mxu0
  %v600 = vadd.f32 0.0, %v599
  %v601 = vpop.f32.mrf.mxu0
  %602 = vmatprep.mubr.bf16.mxu0 0
  %603 = vmatmul.mubr.bf16.gmra.mxu0 %v418
  %v604 = vpop.f32.mrf.mxu0
  %v605 = vadd.f32 0.0, %v604
  %v606 = vpop.f32.mrf.mxu0
  %v607 = vpop.f32.mrf.mxu0
  %v608 = vadd.f32 0.0, %v607
  %v609 = vpop.f32.mrf.mxu0
  %610 = vmatprep.mubr.bf16.mxu0 0
  %611 = vmatmul.mubr.bf16.gmra.mxu0 %v421
  %v612 = vpop.f32.mrf.mxu0
  %v613 = vadd.f32 0.0, %v612
  %v614 = vpop.f32.mrf.mxu0
  %v615 = vpop.f32.mrf.mxu0
  %v616 = vadd.f32 0.0, %v615
  %v617 = vpop.f32.mrf.mxu0
  %618 = vmatprep.mubr.bf16.mxu0 0
  %619 = vmatmul.mubr.bf16.gmra.mxu0 %v424
  %v620 = vpop.f32.mrf.mxu0
  %v621 = vadd.f32 0.0, %v620
  %v622 = vpop.f32.mrf.mxu0
  %v623 = vpop.f32.mrf.mxu0
  %v624 = vadd.f32 0.0, %v623
  %v625 = vpop.f32.mrf.mxu0
  %626 = vmatprep.mubr.bf16.mxu0 0
  %627 = vmatmul.mubr.bf16.gmra.mxu0 %v427
  %v628 = vpop.f32.mrf.mxu0
  %v629 = vadd.f32 0.0, %v628
  %v630 = vpop.f32.mrf.mxu0
  %v631 = vpop.f32.mrf.mxu0
  %v632 = vadd.f32 0.0, %v631
  %v633 = vpop.f32.mrf.mxu0
  %634 = vmatprep.mubr.bf16.mxu0 0
  %635 = vmatmul.mubr.bf16.gmra.mxu0 %v430
  %v636 = vpop.f32.mrf.mxu0
  %v637 = vadd.f32 0.0, %v636
  %v638 = vpop.f32.mrf.mxu0
  %v639 = vpop.f32.mrf.mxu0
  %v640 = vadd.f32 0.0, %v639
  %v641 = vpop.f32.mrf.mxu0
  %642 = vmatprep.mubr.bf16.mxu0 0
  %643 = vmatmul.mubr.bf16.gmra.mxu0 %v433
  %v644 = vpop.f32.mrf.mxu0
  %v645 = vadd.f32 0.0, %v644
  %v646 = vpop.f32.mrf.mxu0
  %v647 = vpop.f32.mrf.mxu0
  %v648 = vadd.f32 0.0, %v647
  %v649 = vpop.f32.mrf.mxu0
  %650 = vmatprep.mubr.bf16.mxu0 0
  %651 = vmatmul.mubr.bf16.gmra.mxu0 %v436
  %v652 = vpop.f32.mrf.mxu0
  %v653 = vadd.f32 0.0, %v652
  %v654 = vpop.f32.mrf.mxu0
  %v655 = vpop.f32.mrf.mxu0
  %v656 = vadd.f32 0.0, %v655
  %v657 = vpop.f32.mrf.mxu0
  %658 = vmatprep.mubr.bf16.mxu0 0
  %659 = vmatmul.mubr.bf16.gmra.mxu0 %v439
  %v660 = vpop.f32.mrf.mxu0
  %v661 = vadd.f32 0.0, %v660
  %v662 = vpop.f32.mrf.mxu0
  %v663 = vpop.f32.mrf.mxu0
  %v664 = vadd.f32 0.0, %v663
  %v665 = vpop.f32.mrf.mxu0
  %666 = vmatprep.mubr.bf16.mxu0 0
  %667 = vmatmul.mubr.bf16.gmra.mxu0 %v442
  %v668 = vpop.f32.mrf.mxu0
  %v669 = vadd.f32 0.0, %v668
  %v670 = vpop.f32.mrf.mxu0
  %v671 = vpop.f32.mrf.mxu0
  %v672 = vadd.f32 0.0, %v671
  %v673 = vpop.f32.mrf.mxu0
  %674 = vmatprep.mubr.bf16.mxu0 0
  %675 = vmatmul.mubr.bf16.gmra.mxu0 %v445
  %v676 = vpop.f32.mrf.mxu0
  %v677 = vadd.f32 0.0, %v676
  %v678 = vpop.f32.mrf.mxu0
  %v679 = vpop.f32.mrf.mxu0
  %v680 = vadd.f32 0.0, %v679
  %v681 = vpop.f32.mrf.mxu0
  %682 = vmatprep.mubr.bf16.mxu0 0
  %683 = vmatmul.mubr.bf16.gmra.mxu0 %v448
  %v684 = vpop.f32.mrf.mxu0
  %v685 = vadd.f32 0.0, %v684
  %v686 = vpop.f32.mrf.mxu0
  %v687 = vpop.f32.mrf.mxu0
  %v688 = vadd.f32 0.0, %v687
  %v689 = vpop.f32.mrf.mxu0
  %690 = vmatprep.mubr.bf16.mxu0 0
  %691 = vmatmul.mubr.bf16.gmra.mxu0 %v451
  %v692 = vpop.f32.mrf.mxu0
  %v693 = vadd.f32 0.0, %v692
  %v694 = vpop.f32.mrf.mxu0
  %v695 = vpop.f32.mrf.mxu0
  %v696 = vadd.f32 0.0, %v695
  %v697 = vpop.f32.mrf.mxu0
  %698 = vmatprep.mubr.bf16.mxu0 0
  %699 = vmatmul.mubr.bf16.gmra.mxu0 %v454
  %v700 = vpop.f32.mrf.mxu0
  %v701 = vadd.f32 0.0, %v700
  %v702 = vpop.f32.mrf.mxu0
  %v703 = vpop.f32.mrf.mxu0
  %v704 = vadd.f32 0.0, %v703
  %v705 = vpop.f32.mrf.mxu0
  %706 = vmatprep.mubr.bf16.mxu0 0
  %707 = vmatmul.mubr.bf16.gmra.mxu0 %v457
  %v708 = vpop.f32.mrf.mxu0
  %v709 = vadd.f32 0.0, %v708
  %v710 = vpop.f32.mrf.mxu0
  %v711 = vpop.f32.mrf.mxu0
  %v712 = vadd.f32 0.0, %v711
  %v713 = vpop.f32.mrf.mxu0
  %714 = vmatprep.mubr.bf16.mxu0 0
  %715 = vmatmul.mubr.bf16.gmra.mxu0 %v460
  %v716 = vpop.f32.mrf.mxu0
  %v717 = vadd.f32 0.0, %v716
  %v718 = vpop.f32.mrf.mxu0
  %v719 = vpop.f32.mrf.mxu0
  %v720 = vadd.f32 0.0, %v719
  %v721 = vpop.f32.mrf.mxu0
  %722 = vmatprep.mubr.bf16.mxu0 0
  %723 = vmatmul.mubr.bf16.gmra.mxu0 %v463
  %v724 = vpop.f32.mrf.mxu0
  %v725 = vadd.f32 0.0, %v724
  %v726 = vpop.f32.mrf.mxu0
  %v727 = vpop.f32.mrf.mxu0
  %v728 = vadd.f32 0.0, %v727
  %v729 = vpop.f32.mrf.mxu0
  %730 = vmatprep.mubr.bf16.mxu0 0
  %731 = vmatmul.mubr.bf16.gmra.mxu0 %v466
  %v732 = vpop.f32.mrf.mxu0
  %v733 = vadd.f32 0.0, %v732
  %v734 = vpop.f32.mrf.mxu0
  %v735 = vpop.f32.mrf.mxu0
  %v736 = vadd.f32 0.0, %v735
  %v737 = vpop.f32.mrf.mxu0
  %738 = vmatprep.mubr.bf16.mxu0 0
  %739 = vmatmul.mubr.bf16.gmra.mxu0 %v469
  %v740 = vpop.f32.mrf.mxu0
  %v741 = vadd.f32 0.0, %v740
  %v742 = vpop.f32.mrf.mxu0
  %v743 = vpop.f32.mrf.mxu0
  %v744 = vadd.f32 0.0, %v743
  %v745 = vpop.f32.mrf.mxu0
  %746 = vmatprep.mubr.bf16.mxu0 0
  %747 = vmatmul.mubr.bf16.gmra.mxu0 %v472
  %v748 = vpop.f32.mrf.mxu0
  %v749 = vadd.f32 0.0, %v748
  %v750 = vpop.f32.mrf.mxu0
  %v751 = vpop.f32.mrf.mxu0
  %v752 = vadd.f32 0.0, %v751
  %v753 = vpop.f32.mrf.mxu0
  %754 = vmatprep.mubr.bf16.mxu0 0
  %755 = vmatmul.mubr.bf16.gmra.mxu0 %v475
  %v756 = vpop.f32.mrf.mxu0
  %v757 = vadd.f32 0.0, %v756
  %v758 = vpop.f32.mrf.mxu0
  %v759 = vpop.f32.mrf.mxu0
  %v760 = vadd.f32 0.0, %v759
  %v761 = vpop.f32.mrf.mxu0
  %762 = vmatprep.mubr.bf16.mxu0 0
  %763 = vmatmul.mubr.bf16.gmra.mxu0 %v478
  %v764 = vpop.f32.mrf.mxu0
  %v765 = vadd.f32 0.0, %v764
  %v766 = vpop.f32.mrf.mxu0
  %v767 = vpop.f32.mrf.mxu0
  %v768 = vadd.f32 0.0, %v767
  %v769 = vpop.f32.mrf.mxu0
  %770 = vmatprep.mubr.bf16.mxu0 0
  %771 = vmatmul.mubr.bf16.gmra.mxu0 %v481
  %v772 = vpop.f32.mrf.mxu0
  %v773 = vadd.f32 0.0, %v772
  %v774 = vpop.f32.mrf.mxu0
  %v775 = vpop.f32.mrf.mxu0
  %v776 = vadd.f32 0.0, %v775
  %v777 = vpop.f32.mrf.mxu0
  %778 = vdwg.mxu0
  %v779 = vadd.f32 %v83, %v525
  %v780 = vadd.f32 %v84, %v528
  %v781 = vadd.f32 %v85, %v533
  %v782 = vadd.f32 %v86, %v536
  %v783 = vadd.f32 %v87, %v541
  %v784 = vadd.f32 %v88, %v544
  %v785 = vadd.f32 %v89, %v549
  %v786 = vadd.f32 %v90, %v552
  %v787 = vadd.f32 %v91, %v557
  %v788 = vadd.f32 %v92, %v560
  %v789 = vadd.f32 %v93, %v565
  %v790 = vadd.f32 %v94, %v568
  %v791 = vadd.f32 %v95, %v573
  %v792 = vadd.f32 %v96, %v576
  %v793 = vadd.f32 %v97, %v581
  %v794 = vadd.f32 %v98, %v584
  %v795 = vadd.f32 %v99, %v589
  %v796 = vadd.f32 %v100, %v592
  %v797 = vadd.f32 %v101, %v597
  %v798 = vadd.f32 %v102, %v600
  %v799 = vadd.f32 %v103, %v605
  %v800 = vadd.f32 %v104, %v608
  %v801 = vadd.f32 %v105, %v613
  %v802 = vadd.f32 %v106, %v616
  %v803 = vadd.f32 %v107, %v621
  %v804 = vadd.f32 %v108, %v624
  %v805 = vadd.f32 %v109, %v629
  %v806 = vadd.f32 %v110, %v632
  %v807 = vadd.f32 %v111, %v637
  %v808 = vadd.f32 %v112, %v640
  %v809 = vadd.f32 %v113, %v645
  %v810 = vadd.f32 %v114, %v648
  %v811 = vadd.f32 %v115, %v653
  %v812 = vadd.f32 %v116, %v656
  %v813 = vadd.f32 %v117, %v661
  %v814 = vadd.f32 %v118, %v664
  %v815 = vadd.f32 %v119, %v669
  %v816 = vadd.f32 %v120, %v672
  %v817 = vadd.f32 %v121, %v677
  %v818 = vadd.f32 %v122, %v680
  %v819 = vadd.f32 %v123, %v685
  %v820 = vadd.f32 %v124, %v688
  %v821 = vadd.f32 %v125, %v693
  %v822 = vadd.f32 %v126, %v696
  %v823 = vadd.f32 %v127, %v701
  %v824 = vadd.f32 %v128, %v704
  %v825 = vadd.f32 %v129, %v709
  %v826 = vadd.f32 %v130, %v712
  %v827 = vadd.f32 %v131, %v717
  %v828 = vadd.f32 %v132, %v720
  %v829 = vadd.f32 %v133, %v725
  %v830 = vadd.f32 %v134, %v728
  %v831 = vadd.f32 %v135, %v733
  %v832 = vadd.f32 %v136, %v736
  %v833 = vadd.f32 %v137, %v741
  %v834 = vadd.f32 %v138, %v744
  %v835 = vadd.f32 %v139, %v749
  %v836 = vadd.f32 %v140, %v752
  %v837 = vadd.f32 %v141, %v757
  %v838 = vadd.f32 %v142, %v760
  %v839 = vadd.f32 %v143, %v765
  %v840 = vadd.f32 %v144, %v768
  %v841 = vadd.f32 %v145, %v773
  %v842 = vadd.f32 %v146, %v776
  %843 = vst [vmem:[#allocation2] sm:$0xff] %v779
  %844 = vst [vmem:[#allocation2 + $0x8] sm:$0xff] %v780
  %845 = vst [vmem:[#allocation2 + $0x10] sm:$0xff] %v781
  %846 = vst [vmem:[#allocation2 + $0x18] sm:$0xff] %v782
  %847 = vst [vmem:[#allocation2 + $0x20] sm:$0xff] %v783
  %848 = vst [vmem:[#allocation2 + $0x28] sm:$0xff] %v784
  %849 = vst [vmem:[#allocation2 + $0x30] sm:$0xff] %v785
  %850 = vst [vmem:[#allocation2 + $0x38] sm:$0xff] %v786
  %851 = vst [vmem:[#allocation2 + $0x40] sm:$0xff] %v787
  %852 = vst [vmem:[#allocation2 + $0x48] sm:$0xff] %v788
  %853 = vst [vmem:[#allocation2 + $0x50] sm:$0xff] %v789
  %854 = vst [vmem:[#allocation2 + $0x58] sm:$0xff] %v790
  %855 = vst [vmem:[#allocation2 + $0x60] sm:$0xff] %v791
  %856 = vst [vmem:[#allocation2 + $0x68] sm:$0xff] %v792
  %857 = vst [vmem:[#allocation2 + $0x70] sm:$0xff] %v793
  %858 = vst [vmem:[#allocation2 + $0x78] sm:$0xff] %v794
  %859 = vst [vmem:[#allocation2 + $0x80] sm:$0xff] %v795
  %860 = vst [vmem:[#allocation2 + $0x88] sm:$0xff] %v796
  %861 = vst [vmem:[#allocation2 + $0x90] sm:$0xff] %v797
  %862 = vst [vmem:[#allocation2 + $0x98] sm:$0xff] %v798
  %863 = vst [vmem:[#allocation2 + $0xa0] sm:$0xff] %v799
  %864 = vst [vmem:[#allocation2 + $0xa8] sm:$0xff] %v800
  %865 = vst [vmem:[#allocation2 + $0xb0] sm:$0xff] %v801
  %866 = vst [vmem:[#allocation2 + $0xb8] sm:$0xff] %v802
  %867 = vst [vmem:[#allocation2 + $0xc0] sm:$0xff] %v803
  %868 = vst [vmem:[#allocation2 + $0xc8] sm:$0xff] %v804
  %869 = vst [vmem:[#allocation2 + $0xd0] sm:$0xff] %v805
  %870 = vst [vmem:[#allocation2 + $0xd8] sm:$0xff] %v806
  %871 = vst [vmem:[#allocation2 + $0xe0] sm:$0xff] %v807
  %872 = vst [vmem:[#allocation2 + $0xe8] sm:$0xff] %v808
  %873 = vst [vmem:[#allocation2 + $0xf0] sm:$0xff] %v809
  %874 = vst [vmem:[#allocation2 + $0xf8] sm:$0xff] %v810
  %875 = vst [vmem:[#allocation2 + $0x100] sm:$0xff] %v811
  %876 = vst [vmem:[#allocation2 + $0x108] sm:$0xff] %v812
  %877 = vst [vmem:[#allocation2 + $0x110] sm:$0xff] %v813
  %878 = vst [vmem:[#allocation2 + $0x118] sm:$0xff] %v814
  %879 = vst [vmem:[#allocation2 + $0x120] sm:$0xff] %v815
  %880 = vst [vmem:[#allocation2 + $0x128] sm:$0xff] %v816
  %881 = vst [vmem:[#allocation2 + $0x130] sm:$0xff] %v817
  %882 = vst [vmem:[#allocation2 + $0x138] sm:$0xff] %v818
  %883 = vst [vmem:[#allocation2 + $0x140] sm:$0xff] %v819
  %884 = vst [vmem:[#allocation2 + $0x148] sm:$0xff] %v820
  %885 = vst [vmem:[#allocation2 + $0x150] sm:$0xff] %v821
  %886 = vst [vmem:[#allocation2 + $0x158] sm:$0xff] %v822
  %887 = vst [vmem:[#allocation2 + $0x160] sm:$0xff] %v823
  %888 = vst [vmem:[#allocation2 + $0x168] sm:$0xff] %v824
  %889 = vst [vmem:[#allocation2 + $0x170] sm:$0xff] %v825
  %890 = vst [vmem:[#allocation2 + $0x178] sm:$0xff] %v826
  %891 = vst [vmem:[#allocation2 + $0x180] sm:$0xff] %v827
  %892 = vst [vmem:[#allocation2 + $0x188] sm:$0xff] %v828
  %893 = vst [vmem:[#allocation2 + $0x190] sm:$0xff] %v829
  %894 = vst [vmem:[#allocation2 + $0x198] sm:$0xff] %v830
  %895 = vst [vmem:[#allocation2 + $0x1a0] sm:$0xff] %v831
  %896 = vst [vmem:[#allocation2 + $0x1a8] sm:$0xff] %v832
  %897 = vst [vmem:[#allocation2 + $0x1b0] sm:$0xff] %v833
  %898 = vst [vmem:[#allocation2 + $0x1b8] sm:$0xff] %v834
  %899 = vst [vmem:[#allocation2 + $0x1c0] sm:$0xff] %v835
  %900 = vst [vmem:[#allocation2 + $0x1c8] sm:$0xff] %v836
  %901 = vst [vmem:[#allocation2 + $0x1d0] sm:$0xff] %v837
  %902 = vst [vmem:[#allocation2 + $0x1d8] sm:$0xff] %v838
  %903 = vst [vmem:[#allocation2 + $0x1e0] sm:$0xff] %v839
  %904 = vst [vmem:[#allocation2 + $0x1e8] sm:$0xff] %v840
  %905 = vst [vmem:[#allocation2 + $0x1f0] sm:$0xff] %v841
  %906 = vst [vmem:[#allocation2 + $0x1f8] sm:$0xff] %v842
  // Predicated region
  $region18: #{forward.16} parent=0 // pred_check
    %p907 = pneg %p15
  $region19: #{forward.16} parent=0 // pred_check_branch
    %909 = sbr.rel (%p907) target = $region21
  $region20: #{forward.16} parent=0 // pred_region
    %v910 = vld [vmem:[#allocation2] sm:$0xff]
    %v911 = vld [vmem:[#allocation2 + $0x8] sm:$0xff]
    %v912 = vld [vmem:[#allocation2 + $0x10] sm:$0xff]
    %v913 = vld [vmem:[#allocation2 + $0x18] sm:$0xff]
    %v914 = vld [vmem:[#allocation2 + $0x20] sm:$0xff]
    %v915 = vld [vmem:[#allocation2 + $0x28] sm:$0xff]
    %v916 = vld [vmem:[#allocation2 + $0x30] sm:$0xff]
    %v917 = vld [vmem:[#allocation2 + $0x38] sm:$0xff]
    %v918 = vld [vmem:[#allocation2 + $0x40] sm:$0xff]
    %v919 = vld [vmem:[#allocation2 + $0x48] sm:$0xff]
    %v920 = vld [vmem:[#allocation2 + $0x50] sm:$0xff]
    %v921 = vld [vmem:[#allocation2 + $0x58] sm:$0xff]
    %v922 = vld [vmem:[#allocation2 + $0x60] sm:$0xff]
    %v923 = vld [vmem:[#allocation2 + $0x68] sm:$0xff]
    %v924 = vld [vmem:[#allocation2 + $0x70] sm:$0xff]
    %v925 = vld [vmem:[#allocation2 + $0x78] sm:$0xff]
    %v926 = vld [vmem:[#allocation2 + $0x80] sm:$0xff]
    %v927 = vld [vmem:[#allocation2 + $0x88] sm:$0xff]
    %v928 = vld [vmem:[#allocation2 + $0x90] sm:$0xff]
    %v929 = vld [vmem:[#allocation2 + $0x98] sm:$0xff]
    %v930 = vld [vmem:[#allocation2 + $0xa0] sm:$0xff]
    %v931 = vld [vmem:[#allocation2 + $0xa8] sm:$0xff]
    %v932 = vld [vmem:[#allocation2 + $0xb0] sm:$0xff]
    %v933 = vld [vmem:[#allocation2 + $0xb8] sm:$0xff]
    %v934 = vld [vmem:[#allocation2 + $0xc0] sm:$0xff]
    %v935 = vld [vmem:[#allocation2 + $0xc8] sm:$0xff]
    %v936 = vld [vmem:[#allocation2 + $0xd0] sm:$0xff]
    %v937 = vld [vmem:[#allocation2 + $0xd8] sm:$0xff]
    %v938 = vld [vmem:[#allocation2 + $0xe0] sm:$0xff]
    %v939 = vld [vmem:[#allocation2 + $0xe8] sm:$0xff]
    %v940 = vld [vmem:[#allocation2 + $0xf0] sm:$0xff]
    %v941 = vld [vmem:[#allocation2 + $0xf8] sm:$0xff]
    %v942 = vld [vmem:[#allocation2 + $0x100] sm:$0xff]
    %v943 = vld [vmem:[#allocation2 + $0x108] sm:$0xff]
    %v944 = vld [vmem:[#allocation2 + $0x110] sm:$0xff]
    %v945 = vld [vmem:[#allocation2 + $0x118] sm:$0xff]
    %v946 = vld [vmem:[#allocation2 + $0x120] sm:$0xff]
    %v947 = vld [vmem:[#allocation2 + $0x128] sm:$0xff]
    %v948 = vld [vmem:[#allocation2 + $0x130] sm:$0xff]
    %v949 = vld [vmem:[#allocation2 + $0x138] sm:$0xff]
    %v950 = vld [vmem:[#allocation2 + $0x140] sm:$0xff]
    %v951 = vld [vmem:[#allocation2 + $0x148] sm:$0xff]
    %v952 = vld [vmem:[#allocation2 + $0x150] sm:$0xff]
    %v953 = vld [vmem:[#allocation2 + $0x158] sm:$0xff]
    %v954 = vld [vmem:[#allocation2 + $0x160] sm:$0xff]
    %v955 = vld [vmem:[#allocation2 + $0x168] sm:$0xff]
    %v956 = vld [vmem:[#allocation2 + $0x170] sm:$0xff]
    %v957 = vld [vmem:[#allocation2 + $0x178] sm:$0xff]
    %v958 = vld [vmem:[#allocation2 + $0x180] sm:$0xff]
    %v959 = vld [vmem:[#allocation2 + $0x188] sm:$0xff]
    %v960 = vld [vmem:[#allocation2 + $0x190] sm:$0xff]
    %v961 = vld [vmem:[#allocation2 + $0x198] sm:$0xff]
    %v962 = vld [vmem:[#allocation2 + $0x1a0] sm:$0xff]
    %v963 = vld [vmem:[#allocation2 + $0x1a8] sm:$0xff]
    %v964 = vld [vmem:[#allocation2 + $0x1b0] sm:$0xff]
    %v965 = vld [vmem:[#allocation2 + $0x1b8] sm:$0xff]
    %v966 = vld [vmem:[#allocation2 + $0x1c0] sm:$0xff]
    %v967 = vld [vmem:[#allocation2 + $0x1c8] sm:$0xff]
    %v968 = vld [vmem:[#allocation2 + $0x1d0] sm:$0xff]
    %v969 = vld [vmem:[#allocation2 + $0x1d8] sm:$0xff]
    %v970 = vld [vmem:[#allocation2 + $0x1e0] sm:$0xff]
    %v971 = vld [vmem:[#allocation2 + $0x1e8] sm:$0xff]
    %v972 = vld [vmem:[#allocation2 + $0x1f0] sm:$0xff]
    %v973 = vld [vmem:[#allocation2 + $0x1f8] sm:$0xff]
    %v974 = vld [vmem:[%s2] sm:$0x1]
    %v976 = vlaneseq
    %v977 = vshrl.u32 %v976, 7
    %v978 = vsub.s32 0, %v977
    %v979 = vrot.slane %v974, %v978
    %v981 = vadd.f32 %v910, %v979
    %v982 = vadd.f32 %v911, %v979
    %v983 = vadd.f32 %v912, %v979
    %v984 = vadd.f32 %v913, %v979
    %v985 = vadd.f32 %v914, %v979
    %v986 = vadd.f32 %v915, %v979
    %v987 = vadd.f32 %v916, %v979
    %v988 = vadd.f32 %v917, %v979
    %v989 = vadd.f32 %v918, %v979
    %v990 = vadd.f32 %v919, %v979
    %v991 = vadd.f32 %v920, %v979
    %v992 = vadd.f32 %v921, %v979
    %v993 = vadd.f32 %v922, %v979
    %v994 = vadd.f32 %v923, %v979
    %v995 = vadd.f32 %v924, %v979
    %v996 = vadd.f32 %v925, %v979
    %v997 = vadd.f32 %v926, %v979
    %v998 = vadd.f32 %v927, %v979
    %v999 = vadd.f32 %v928, %v979
    %v1000 = vadd.f32 %v929, %v979
    %v1001 = vadd.f32 %v930, %v979
    %v1002 = vadd.f32 %v931, %v979
    %v1003 = vadd.f32 %v932, %v979
    %v1004 = vadd.f32 %v933, %v979
    %v1005 = vadd.f32 %v934, %v979
    %v1006 = vadd.f32 %v935, %v979
    %v1007 = vadd.f32 %v936, %v979
    %v1008 = vadd.f32 %v937, %v979
    %v1009 = vadd.f32 %v938, %v979
    %v1010 = vadd.f32 %v939, %v979
    %v1011 = vadd.f32 %v940, %v979
    %v1012 = vadd.f32 %v941, %v979
    %v1013 = vadd.f32 %v942, %v979
    %v1014 = vadd.f32 %v943, %v979
    %v1015 = vadd.f32 %v944, %v979
    %v1016 = vadd.f32 %v945, %v979
    %v1017 = vadd.f32 %v946, %v979
    %v1018 = vadd.f32 %v947, %v979
    %v1019 = vadd.f32 %v948, %v979
    %v1020 = vadd.f32 %v949, %v979
    %v1021 = vadd.f32 %v950, %v979
    %v1022 = vadd.f32 %v951, %v979
    %v1023 = vadd.f32 %v952, %v979
    %v1024 = vadd.f32 %v953, %v979
    %v1025 = vadd.f32 %v954, %v979
    %v1026 = vadd.f32 %v955, %v979
    %v1027 = vadd.f32 %v956, %v979
    %v1028 = vadd.f32 %v957, %v979
    %v1029 = vadd.f32 %v958, %v979
    %v1030 = vadd.f32 %v959, %v979
    %v1031 = vadd.f32 %v960, %v979
    %v1032 = vadd.f32 %v961, %v979
    %v1033 = vadd.f32 %v962, %v979
    %v1034 = vadd.f32 %v963, %v979
    %v1035 = vadd.f32 %v964, %v979
    %v1036 = vadd.f32 %v965, %v979
    %v1037 = vadd.f32 %v966, %v979
    %v1038 = vadd.f32 %v967, %v979
    %v1039 = vadd.f32 %v968, %v979
    %v1040 = vadd.f32 %v969, %v979
    %v1041 = vadd.f32 %v970, %v979
    %v1042 = vadd.f32 %v971, %v979
    %v1043 = vadd.f32 %v972, %v979
    %v1044 = vadd.f32 %v973, %v979
    %v1045 = vmax.f32 %v981, 0.0
    %v1046 = vmax.f32 %v982, 0.0
    %v1047 = vmax.f32 %v983, 0.0
    %v1048 = vmax.f32 %v984, 0.0
    %v1049 = vmax.f32 %v985, 0.0
    %v1050 = vmax.f32 %v986, 0.0
    %v1051 = vmax.f32 %v987, 0.0
    %v1052 = vmax.f32 %v988, 0.0
    %v1053 = vmax.f32 %v989, 0.0
    %v1054 = vmax.f32 %v990, 0.0
    %v1055 = vmax.f32 %v991, 0.0
    %v1056 = vmax.f32 %v992, 0.0
    %v1057 = vmax.f32 %v993, 0.0
    %v1058 = vmax.f32 %v994, 0.0
    %v1059 = vmax.f32 %v995, 0.0
    %v1060 = vmax.f32 %v996, 0.0
    %v1061 = vmax.f32 %v997, 0.0
    %v1062 = vmax.f32 %v998, 0.0
    %v1063 = vmax.f32 %v999, 0.0
    %v1064 = vmax.f32 %v1000, 0.0
    %v1065 = vmax.f32 %v1001, 0.0
    %v1066 = vmax.f32 %v1002, 0.0
    %v1067 = vmax.f32 %v1003, 0.0
    %v1068 = vmax.f32 %v1004, 0.0
    %v1069 = vmax.f32 %v1005, 0.0
    %v1070 = vmax.f32 %v1006, 0.0
    %v1071 = vmax.f32 %v1007, 0.0
    %v1072 = vmax.f32 %v1008, 0.0
    %v1073 = vmax.f32 %v1009, 0.0
    %v1074 = vmax.f32 %v1010, 0.0
    %v1075 = vmax.f32 %v1011, 0.0
    %v1076 = vmax.f32 %v1012, 0.0
    %v1077 = vmax.f32 %v1013, 0.0
    %v1078 = vmax.f32 %v1014, 0.0
    %v1079 = vmax.f32 %v1015, 0.0
    %v1080 = vmax.f32 %v1016, 0.0
    %v1081 = vmax.f32 %v1017, 0.0
    %v1082 = vmax.f32 %v1018, 0.0
    %v1083 = vmax.f32 %v1019, 0.0
    %v1084 = vmax.f32 %v1020, 0.0
    %v1085 = vmax.f32 %v1021, 0.0
    %v1086 = vmax.f32 %v1022, 0.0
    %v1087 = vmax.f32 %v1023, 0.0
    %v1088 = vmax.f32 %v1024, 0.0
    %v1089 = vmax.f32 %v1025, 0.0
    %v1090 = vmax.f32 %v1026, 0.0
    %v1091 = vmax.f32 %v1027, 0.0
    %v1092 = vmax.f32 %v1028, 0.0
    %v1093 = vmax.f32 %v1029, 0.0
    %v1094 = vmax.f32 %v1030, 0.0
    %v1095 = vmax.f32 %v1031, 0.0
    %v1096 = vmax.f32 %v1032, 0.0
    %v1097 = vmax.f32 %v1033, 0.0
    %v1098 = vmax.f32 %v1034, 0.0
    %v1099 = vmax.f32 %v1035, 0.0
    %v1100 = vmax.f32 %v1036, 0.0
    %v1101 = vmax.f32 %v1037, 0.0
    %v1102 = vmax.f32 %v1038, 0.0
    %v1103 = vmax.f32 %v1039, 0.0
    %v1104 = vmax.f32 %v1040, 0.0
    %v1105 = vmax.f32 %v1041, 0.0
    %v1106 = vmax.f32 %v1042, 0.0
    %v1107 = vmax.f32 %v1043, 0.0
    %v1108 = vmax.f32 %v1044, 0.0
    %1109 = vst [vmem:[%s3] sm:$0xff] %v1045
    %1110 = vst [vmem:[%s3 + $0x8] sm:$0xff] %v1046
    %1111 = vst [vmem:[%s3 + $0x10] sm:$0xff] %v1047
    %1112 = vst [vmem:[%s3 + $0x18] sm:$0xff] %v1048
    %1113 = vst [vmem:[%s3 + $0x20] sm:$0xff] %v1049
    %1114 = vst [vmem:[%s3 + $0x28] sm:$0xff] %v1050
    %1115 = vst [vmem:[%s3 + $0x30] sm:$0xff] %v1051
    %1116 = vst [vmem:[%s3 + $0x38] sm:$0xff] %v1052
    %1117 = vst [vmem:[%s3 + $0x40] sm:$0xff] %v1053
    %1118 = vst [vmem:[%s3 + $0x48] sm:$0xff] %v1054
    %1119 = vst [vmem:[%s3 + $0x50] sm:$0xff] %v1055
    %1120 = vst [vmem:[%s3 + $0x58] sm:$0xff] %v1056
    %1121 = vst [vmem:[%s3 + $0x60] sm:$0xff] %v1057
    %1122 = vst [vmem:[%s3 + $0x68] sm:$0xff] %v1058
    %1123 = vst [vmem:[%s3 + $0x70] sm:$0xff] %v1059
    %1124 = vst [vmem:[%s3 + $0x78] sm:$0xff] %v1060
    %1125 = vst [vmem:[%s3 + $0x80] sm:$0xff] %v1061
    %1126 = vst [vmem:[%s3 + $0x88] sm:$0xff] %v1062
    %1127 = vst [vmem:[%s3 + $0x90] sm:$0xff] %v1063
    %1128 = vst [vmem:[%s3 + $0x98] sm:$0xff] %v1064
    %1129 = vst [vmem:[%s3 + $0xa0] sm:$0xff] %v1065
    %1130 = vst [vmem:[%s3 + $0xa8] sm:$0xff] %v1066
    %1131 = vst [vmem:[%s3 + $0xb0] sm:$0xff] %v1067
    %1132 = vst [vmem:[%s3 + $0xb8] sm:$0xff] %v1068
    %1133 = vst [vmem:[%s3 + $0xc0] sm:$0xff] %v1069
    %1134 = vst [vmem:[%s3 + $0xc8] sm:$0xff] %v1070
    %1135 = vst [vmem:[%s3 + $0xd0] sm:$0xff] %v1071
    %1136 = vst [vmem:[%s3 + $0xd8] sm:$0xff] %v1072
    %1137 = vst [vmem:[%s3 + $0xe0] sm:$0xff] %v1073
    %1138 = vst [vmem:[%s3 + $0xe8] sm:$0xff] %v1074
    %1139 = vst [vmem:[%s3 + $0xf0] sm:$0xff] %v1075
    %1140 = vst [vmem:[%s3 + $0xf8] sm:$0xff] %v1076
    %1141 = vst [vmem:[%s3 + $0x100] sm:$0xff] %v1077
    %1142 = vst [vmem:[%s3 + $0x108] sm:$0xff] %v1078
    %1143 = vst [vmem:[%s3 + $0x110] sm:$0xff] %v1079
    %1144 = vst [vmem:[%s3 + $0x118] sm:$0xff] %v1080
    %1145 = vst [vmem:[%s3 + $0x120] sm:$0xff] %v1081
    %1146 = vst [vmem:[%s3 + $0x128] sm:$0xff] %v1082
    %1147 = vst [vmem:[%s3 + $0x130] sm:$0xff] %v1083
    %1148 = vst [vmem:[%s3 + $0x138] sm:$0xff] %v1084
    %1149 = vst [vmem:[%s3 + $0x140] sm:$0xff] %v1085
    %1150 = vst [vmem:[%s3 + $0x148] sm:$0xff] %v1086
    %1151 = vst [vmem:[%s3 + $0x150] sm:$0xff] %v1087
    %1152 = vst [vmem:[%s3 + $0x158] sm:$0xff] %v1088
    %1153 = vst [vmem:[%s3 + $0x160] sm:$0xff] %v1089
    %1154 = vst [vmem:[%s3 + $0x168] sm:$0xff] %v1090
    %1155 = vst [vmem:[%s3 + $0x170] sm:$0xff] %v1091
    %1156 = vst [vmem:[%s3 + $0x178] sm:$0xff] %v1092
    %1157 = vst [vmem:[%s3 + $0x180] sm:$0xff] %v1093
    %1158 = vst [vmem:[%s3 + $0x188] sm:$0xff] %v1094
    %1159 = vst [vmem:[%s3 + $0x190] sm:$0xff] %v1095
    %1160 = vst [vmem:[%s3 + $0x198] sm:$0xff] %v1096
    %1161 = vst [vmem:[%s3 + $0x1a0] sm:$0xff] %v1097
    %1162 = vst [vmem:[%s3 + $0x1a8] sm:$0xff] %v1098
    %1163 = vst [vmem:[%s3 + $0x1b0] sm:$0xff] %v1099
    %1164 = vst [vmem:[%s3 + $0x1b8] sm:$0xff] %v1100
    %1165 = vst [vmem:[%s3 + $0x1c0] sm:$0xff] %v1101
    %1166 = vst [vmem:[%s3 + $0x1c8] sm:$0xff] %v1102
    %1167 = vst [vmem:[%s3 + $0x1d0] sm:$0xff] %v1103
    %1168 = vst [vmem:[%s3 + $0x1d8] sm:$0xff] %v1104
    %1169 = vst [vmem:[%s3 + $0x1e0] sm:$0xff] %v1105
    %1170 = vst [vmem:[%s3 + $0x1e8] sm:$0xff] %v1106
    %1171 = vst [vmem:[%s3 + $0x1f0] sm:$0xff] %v1107
    %1172 = vst [vmem:[%s3 + $0x1f8] sm:$0xff] %v1108
  $region21: #{forward.16} parent=0 // pred_fallthru
    _
  // Predicated region
  $region22: #{forward.16} parent=0 // pred_check
    _
  $region23: #{forward.16} parent=0 // pred_check_branch
    %1174 = sbr.rel (0) target = $region25
  $region24: #{forward.16} parent=0 // pred_region
    _
  $region25: #{forward.16} parent=0 // pred_fallthru
    _
  // Predicated region
  $region26: #{forward.16} parent=0 // pred_check
    _
  $region27: #{forward.16} parent=0 // pred_check_branch
    %1176 = sbr.rel (0) target = $region29
  $region28: #{forward.16} parent=0 // pred_region
    _
  $region29: #{forward.16} parent=0 // pred_fallthru
    _

// kernel: forward.20
$region0: #{forward.20}
  #allocation0 [shape = 'u32[]', space=smem, size = 0x4, offset = 0x4, fixed_abs, tag = 'smem constant byte address 0x4 - core index']
  #allocation1 [shape = 'u32[144,128]{1,0:T(1,128)}', space=vmem, size = 0x12000, scoped, tag = 'internal scratch']
  #allocation2 [shape = 'f32[128,1]{1,0:T(8,128)}', space=vmem, size = 0x10000, scoped, tag = 'scratch operand']
  #allocation3 [shape = 'f32[128,1]{1,0:T(8,128)}', space=vmem, size = 0x10000, scoped, tag = 'scratch operand']
  #allocation4 [shape = 'f32[128,32]{1,0:T(8,128)}', space=vmem, size = 0x10000, scoped, tag = 'scratch operand']
  #allocation5 [shape = 'f32[1,1]{1,0:T(1,128)S(1)}', space=vmem, size = 0x200, scoped, tag = 'scoped memory for forward.20']
  %s0 = inlined_call_operand.vmem [shape: bf16[2,256,4], index: 0, kind: input, shape index: {}]
  %s1 = inlined_call_operand.vmem [shape: bf16[2,256,4], index: 1, kind: input, shape index: {}]
  %s2 = inlined_call_operand.vmem [shape: bf16[2,256,32], index: 2, kind: input, shape index: {}]
  %s3 = inlined_call_operand.vmem [shape: f32[2,256,32], index: 3, kind: input, shape index: {}]
  %s4 = inlined_call_operand.<no memory space> [shape: f32[1,1], index: 4, kind: input, shape index: {}]
  %s5 = inlined_call_operand.vmem [shape: f32[2,256,32], index: 5, kind: output, shape index: {}]
  %s6 = sld [smem:[#allocation0]]
  $region61: #{forward.20} parent=0
    _
  %s8 = ssub.s32 1, %s6
  %s9 = scalar_select 0, %s8, %s6
  %v10 = vstv %s4
  %11 = vst [vmem:[#allocation5] sm:$0x1] %v10
  loop: start=0, step=1, limit=10
  $region2: #{forward.20} parent=0 // loop_pre_header
    _
  $region3: #{forward.20} parent=0 // loop_header
    %s13 = sphi 0, %s17
    %p14 = scmp.ge.s32.totalorder %s13, 10
    %s20 = sphi 0, %s39
    %s21 = sphi 0, %s35
    %s22 = sphi 0, %s31
    %s23 = sphi 0, %s20
    %s24 = sphi 0, %s21
    %s25 = sphi 0, %s22
    %s26 = sphi 0, %s23
    %s27 = sphi 0, %s24
    %s28 = sphi 0, %s25
    %s44 = sphi 0, %s46
    %s47 = sphi 0, %s44
    %s48 = sphi 0, %s47
    %s64 = sphi 0, %s48
    %s72 = sphi 0, %s74
    %s75 = sphi 0, %s72
    %s76 = sphi 0, %s75
    %s92 = sphi 0, %s76
    %s100 = sphi 0, %s102
    %s103 = sphi 0, %s100
    %s104 = sphi 0, %s103
    %s120 = sphi 0, %s104
    %s128 = sphi 0, %s130
    %s131 = sphi 0, %s128
    %s132 = sphi 0, %s131
    %s148 = sphi 0, %s132
    %s152 = sphi 0, %s152
    %s154 = sphi 0, %s152
    %s155 = sphi 0, %s154
    %s169 = sphi 0, %s155
    %s177 = sphi 0, %s179
    %s180 = sphi 0, %s177
    %s181 = sphi 0, %s180
    %s197 = sphi 0, %s181
  $region4: #{forward.20} parent=0 // loop_header_branch
    %16 = sbr.rel (%p14) target = $region8
  $region5: #{forward.20} parent=0 // loop_body
    %s18 = ssub.s32 %s13, 1
    %s19 = ssub.s32 %s13, 2
    %s29 = sadd.s32 1, %s22
    %p30 = scmp.ge.s32.totalorder %s29, 2
    %s31 = scalar_select %p30, 0, %s29
    %s32 = sadd.s32 1, %s21
    %s33 = scalar_select %p30, %s32, %s21
    %p34 = scmp.ge.s32.totalorder %s33, 2
    %s35 = scalar_select %p34, 0, %s33
    %s36 = sadd.s32 1, %s20
    %s37 = scalar_select %p34, %s36, %s20
    %p38 = scmp.ge.s32.totalorder %s37, 2
    %s39 = scalar_select %p38, 0, %s37
    %s40 = ssub.s32 %s20, %s39
    %s41 = ssub.s32 %s21, %s35
    %s42 = sor.u32 %s40, %s41
    %p43 = scmp.eq.s32.totalorder %s42, 0
    %s45 = sadd.s32 %s44, 1
    %s46 = scalar_select %p43, %s44, %s45
    %p49 = pneg %p43
    %p50 = scmp.eq.s32.totalorder %s13, 7
    %p51 = por %p49, %p50
    %p52 = scmp.ne.s32.totalorder %s44, %s47
    %p53 = scmp.eq.s32.totalorder %s13, 0
    %p54 = por %p52, %p53
    %p55 = scmp.ne.s32.totalorder %s44, %s47
    %p56 = scmp.eq.s32.totalorder %s18, 7
    %p57 = por %p55, %p56
    %p58 = scmp.ne.s32.totalorder %s47, %s48
    %p59 = scmp.eq.s32.totalorder %s18, 0
    %p60 = por %p58, %p59
    %p61 = scmp.ne.s32.totalorder %s47, %s48
    %p62 = scmp.eq.s32.totalorder %s19, 7
    %p63 = por %p61, %p62
    %p65 = scmp.ne.s32.totalorder %s48, %s64
    %p66 = scmp.eq.s32.totalorder %s19, 0
    %p67 = por %p65, %p66
    %s68 = ssub.s32 %s20, %s39
    %s69 = ssub.s32 %s22, %s31
    %s70 = sor.u32 %s68, %s69
    %p71 = scmp.eq.s32.totalorder %s70, 0
    %s73 = sadd.s32 %s72, 1
    %s74 = scalar_select %p71, %s72, %s73
    %p77 = pneg %p71
    %p78 = scmp.eq.s32.totalorder %s13, 7
    %p79 = por %p77, %p78
    %p80 = scmp.ne.s32.totalorder %s72, %s75
    %p81 = scmp.eq.s32.totalorder %s13, 0
    %p82 = por %p80, %p81
    %p83 = scmp.ne.s32.totalorder %s72, %s75
    %p84 = scmp.eq.s32.totalorder %s18, 7
    %p85 = por %p83, %p84
    %p86 = scmp.ne.s32.totalorder %s75, %s76
    %p87 = scmp.eq.s32.totalorder %s18, 0
    %p88 = por %p86, %p87
    %p89 = scmp.ne.s32.totalorder %s75, %s76
    %p90 = scmp.eq.s32.totalorder %s19, 7
    %p91 = por %p89, %p90
    %p93 = scmp.ne.s32.totalorder %s76, %s92
    %p94 = scmp.eq.s32.totalorder %s19, 0
    %p95 = por %p93, %p94
    %s96 = ssub.s32 %s20, %s39
    %s97 = ssub.s32 %s22, %s31
    %s98 = sor.u32 %s96, %s97
    %p99 = scmp.eq.s32.totalorder %s98, 0
    %s101 = sadd.s32 %s100, 1
    %s102 = scalar_select %p99, %s100, %s101
    %p105 = pneg %p99
    %p106 = scmp.eq.s32.totalorder %s13, 7
    %p107 = por %p105, %p106
    %p108 = scmp.ne.s32.totalorder %s100, %s103
    %p109 = scmp.eq.s32.totalorder %s13, 0
    %p110 = por %p108, %p109
    %p111 = scmp.ne.s32.totalorder %s100, %s103
    %p112 = scmp.eq.s32.totalorder %s18, 7
    %p113 = por %p111, %p112
    %p114 = scmp.ne.s32.totalorder %s103, %s104
    %p115 = scmp.eq.s32.totalorder %s18, 0
    %p116 = por %p114, %p115
    %p117 = scmp.ne.s32.totalorder %s103, %s104
    %p118 = scmp.eq.s32.totalorder %s19, 7
    %p119 = por %p117, %p118
    %p121 = scmp.ne.s32.totalorder %s104, %s120
    %p122 = scmp.eq.s32.totalorder %s19, 0
    %p123 = por %p121, %p122
    %s124 = ssub.s32 %s20, %s39
    %s125 = ssub.s32 %s21, %s35
    %s126 = sor.u32 %s124, %s125
    %p127 = scmp.eq.s32.totalorder %s126, 0
    %s129 = sadd.s32 %s128, 1
    %s130 = scalar_select %p127, %s128, %s129
    %p133 = pneg %p127
    %p134 = scmp.eq.s32.totalorder %s13, 7
    %p135 = por %p133, %p134
    %p136 = scmp.ne.s32.totalorder %s128, %s131
    %p137 = scmp.eq.s32.totalorder %s13, 0
    %p138 = por %p136, %p137
    %p139 = scmp.ne.s32.totalorder %s128, %s131
    %p140 = scmp.eq.s32.totalorder %s18, 7
    %p141 = por %p139, %p140
    %p142 = scmp.ne.s32.totalorder %s131, %s132
    %p143 = scmp.eq.s32.totalorder %s18, 0
    %p144 = por %p142, %p143
    %p145 = scmp.ne.s32.totalorder %s131, %s132
    %p146 = scmp.eq.s32.totalorder %s19, 7
    %p147 = por %p145, %p146
    %p149 = scmp.ne.s32.totalorder %s132, %s148
    %p150 = scmp.eq.s32.totalorder %s19, 0
    %p151 = por %p149, %p150
    %s153 = sadd.s32 %s152, 1
    %p156 = scmp.eq.s32.totalorder %s13, 7
    %p157 = scmp.ne.s32.totalorder %s152, %s154
    %p158 = scmp.eq.s32.totalorder %s13, 0
    %p159 = por %p157, %p158
    %p160 = scmp.ne.s32.totalorder %s152, %s154
    %p161 = scmp.eq.s32.totalorder %s18, 7
    %p162 = por %p160, %p161
    %p163 = scmp.ne.s32.totalorder %s154, %s155
    %p164 = scmp.eq.s32.totalorder %s18, 0
    %p165 = por %p163, %p164
    %p166 = scmp.ne.s32.totalorder %s154, %s155
    %p167 = scmp.eq.s32.totalorder %s19, 7
    %p168 = por %p166, %p167
    %p170 = scmp.ne.s32.totalorder %s155, %s169
    %p171 = scmp.eq.s32.totalorder %s19, 0
    %p172 = por %p170, %p171
    %s173 = ssub.s32 %s20, %s39
    %s174 = ssub.s32 %s21, %s35
    %s175 = sor.u32 %s173, %s174
    %p176 = scmp.eq.s32.totalorder %s175, 0
    %s178 = sadd.s32 %s177, 1
    %s179 = scalar_select %p176, %s177, %s178
    %p182 = pneg %p176
    %p183 = scmp.eq.s32.totalorder %s13, 7
    %p184 = por %p182, %p183
    %p185 = scmp.ne.s32.totalorder %s177, %s180
    %p186 = scmp.eq.s32.totalorder %s13, 0
    %p187 = por %p185, %p186
    %p188 = scmp.ne.s32.totalorder %s177, %s180
    %p189 = scmp.eq.s32.totalorder %s18, 7
    %p190 = por %p188, %p189
    %p191 = scmp.ne.s32.totalorder %s180, %s181
    %p192 = scmp.eq.s32.totalorder %s18, 0
    %p193 = por %p191, %p192
    %p194 = scmp.ne.s32.totalorder %s180, %s181
    %p195 = scmp.eq.s32.totalorder %s19, 7
    %p196 = por %p194, %p195
    %p198 = scmp.ne.s32.totalorder %s181, %s197
    %p199 = scmp.eq.s32.totalorder %s19, 0
    %p200 = por %p198, %p199
    %p201 = scmp.le.s32.totalorder 1, %s13
    %p202 = scmp.lt.s32.totalorder %s13, 9
    %p203 = pnand %p201, %p202
    %p204 = pneg %p203
    // Predicated region
    $region9: #{forward.20} parent=5 // pred_check
      _
    $region10: #{forward.20} parent=5 // pred_check_branch
      %206 = sbr.rel (%p203) target = $region12
    $region11: #{forward.20} parent=5 // pred_region
      %s207 = ssub.s32 %s13, 1
      // Predicated region
      $region13: #{forward.20} parent=11 // pred_check
        %p208 = pneg %p165
      $region14: #{forward.20} parent=11 // pred_check_branch
        %210 = sbr.rel (%p208) target = $region16
      $region15: #{forward.20} parent=11 // pred_region
        _
      $region16: #{forward.20} parent=11 // pred_fallthru
        _
    $region12: #{forward.20} parent=5 // pred_fallthru
      _
    %p211 = scmp.lt.s32.totalorder %s13, 8
    // Predicated region
    $region17: #{forward.20} parent=5 // pred_check
      %p212 = pneg %p211
    $region18: #{forward.20} parent=5 // pred_check_branch
      %214 = sbr.rel (%p212) target = $region20
    $region19: #{forward.20} parent=5 // pred_region
      // Predicated region
      $region21: #{forward.20} parent=19 // pred_check
        %p215 = pneg %p54
      $region22: #{forward.20} parent=19 // pred_check_branch
        %217 = sbr.rel (%p215) target = $region24
      $region23: #{forward.20} parent=19 // pred_region
        %s218 = smul.u32 16, %s21
        %p219 = scmp.lt.s32.totalorder %s20, 1
        %s220 = scalar_select %p219, %s20, 1
        %p221 = scmp.lt.s32.totalorder %s218, 31
        %s222 = scalar_select %p221, %s218, 31
        %s223 = smul.addr %s220, 32
        %s224 = sadd.s32 %s222, %s223
        %s225 = smul.addr %s224, 4
        %s226 = scalar_lea.vmem %s0, %s225
        %s227 = smul.u32 16, %s21
      $region24: #{forward.20} parent=19 // pred_fallthru
        _
      // Predicated region
      $region25: #{forward.20} parent=19 // pred_check
        %p228 = pneg %p82
      $region26: #{forward.20} parent=19 // pred_check_branch
        %230 = sbr.rel (%p228) target = $region28
      $region27: #{forward.20} parent=19 // pred_region
        %s231 = smul.u32 16, %s22
        %p232 = scmp.lt.s32.totalorder %s20, 1
        %s233 = scalar_select %p232, %s20, 1
        %p234 = scmp.lt.s32.totalorder %s231, 31
        %s235 = scalar_select %p234, %s231, 31
        %s236 = smul.addr %s233, 32
        %s237 = sadd.s32 %s235, %s236
        %s238 = smul.addr %s237, 4
        %s239 = scalar_lea.vmem %s1, %s238
        %s240 = smul.u32 16, %s22
      $region28: #{forward.20} parent=19 // pred_fallthru
        _
      // Predicated region
      $region29: #{forward.20} parent=19 // pred_check
        %p241 = pneg %p110
      $region30: #{forward.20} parent=19 // pred_check_branch
        %243 = sbr.rel (%p241) target = $region32
      $region31: #{forward.20} parent=19 // pred_region
        %s244 = smul.u32 16, %s22
        %p245 = scmp.lt.s32.totalorder %s20, 1
        %s246 = scalar_select %p245, %s20, 1
        %p247 = scmp.lt.s32.totalorder %s244, 31
        %s248 = scalar_select %p247, %s244, 31
        %s249 = smul.addr %s246, 32
        %s250 = sadd.s32 %s248, %s249
        %s251 = smul.addr %s250, 4
        %s252 = scalar_lea.vmem %s2, %s251
        %s253 = smul.u32 16, %s22
      $region32: #{forward.20} parent=19 // pred_fallthru
        _
      // Predicated region
      $region33: #{forward.20} parent=19 // pred_check
        %p254 = pneg %p138
      $region34: #{forward.20} parent=19 // pred_check_branch
        %256 = sbr.rel (%p254) target = $region36
      $region35: #{forward.20} parent=19 // pred_region
        %s257 = smul.u32 16, %s21
        %p258 = scmp.lt.s32.totalorder %s20, 1
        %s259 = scalar_select %p258, %s20, 1
        %p260 = scmp.lt.s32.totalorder %s257, 31
        %s261 = scalar_select %p260, %s257, 31
        %s262 = smul.addr %s259, 32
        %s263 = sadd.s32 %s261, %s262
        %s264 = smul.addr %s263, 8
        %s265 = scalar_lea.vmem %s3, %s264
        %s266 = smul.u32 16, %s21
      $region36: #{forward.20} parent=19 // pred_fallthru
        _
    $region20: #{forward.20} parent=5 // pred_fallthru
      _
    %p267 = scmp.le.s32.totalorder 1, %s13
    %p268 = scmp.lt.s32.totalorder %s13, 9
    %p269 = pnand %p267, %p268
    %p270 = pneg %p269
    // Predicated region
    $region37: #{forward.20} parent=5 // pred_check
      _
    $region38: #{forward.20} parent=5 // pred_check_branch
      %272 = sbr.rel (%p269) target = $region40
    $region39: #{forward.20} parent=5 // pred_region
      %s273 = ssub.s32 %s13, 1
      %s274 = smul.u32 16, %s24
      %p275 = scmp.lt.s32.totalorder %s23, 1
      %s276 = scalar_select %p275, %s23, 1
      %p277 = scmp.lt.s32.totalorder %s274, 31
      %s278 = scalar_select %p277, %s274, 31
      %s279 = smul.addr %s276, 32
      %s280 = sadd.s32 %s278, %s279
      %s281 = smul.addr %s280, 4
      %s282 = scalar_lea.vmem %s0, %s281
      %p283 = pneg %p60
      %p284 = pneg %p57
      %s285 = smul.u32 16, %s25
      %p286 = scmp.lt.s32.totalorder %s23, 1
      %s287 = scalar_select %p286, %s23, 1
      %p288 = scmp.lt.s32.totalorder %s285, 31
      %s289 = scalar_select %p288, %s285, 31
      %s290 = smul.addr %s287, 32
      %s291 = sadd.s32 %s289, %s290
      %s292 = smul.addr %s291, 4
      %s293 = scalar_lea.vmem %s1, %s292
      %p294 = pneg %p88
      %p295 = pneg %p85
      %s296 = smul.u32 16, %s25
      %p297 = scmp.lt.s32.totalorder %s23, 1
      %s298 = scalar_select %p297, %s23, 1
      %p299 = scmp.lt.s32.totalorder %s296, 31
      %s300 = scalar_select %p299, %s296, 31
      %s301 = smul.addr %s298, 32
      %s302 = sadd.s32 %s300, %s301
      %s303 = smul.addr %s302, 4
      %s304 = scalar_lea.vmem %s2, %s303
      %p305 = pneg %p116
      %p306 = pneg %p113
      %s307 = smul.u32 16, %s24
      %p308 = scmp.lt.s32.totalorder %s23, 1
      %s309 = scalar_select %p308, %s23, 1
      %p310 = scmp.lt.s32.totalorder %s307, 31
      %s311 = scalar_select %p310, %s307, 31
      %s312 = smul.addr %s309, 32
      %s313 = sadd.s32 %s311, %s312
      %s314 = smul.addr %s313, 8
      %s315 = scalar_lea.vmem %s3, %s314
      %p316 = pneg %p144
      %p317 = pneg %p141
      %p318 = pneg %p165
      %p319 = pneg %p162
      %p320 = pneg %p193
      %p321 = pneg %p190
      %s322 = smul.u32 16, %s24
      %p323 = scmp.lt.s32.totalorder %s23, 1
      %s324 = scalar_select %p323, %s23, 1
      %p325 = scmp.lt.s32.totalorder %s322, 31
      %s326 = scalar_select %p325, %s322, 31
      %s327 = smul.addr %s324, 32
      %s328 = sadd.s32 %s326, %s327
      %s329 = smul.addr %s328, 8
      %s330 = scalar_lea.vmem %s5, %s329
      %s331 = smul.u32 16, %s24
      %p332 = scmp.lt.s32.totalorder %s23, 1
      %s333 = scalar_select %p332, %s23, 1
      %p334 = scmp.lt.s32.totalorder %s331, 31
      %s335 = scalar_select %p334, %s331, 31
      %s336 = smul.addr %s333, 32
      %s337 = sadd.s32 %s335, %s336
      %s338 = smul.addr %s337, 4
      %s339 = scalar_lea.vmem %s0, %s338
      %s340 = smul.u32 16, %s24
      %s341 = smul.u32 16, %s25
      %p342 = scmp.lt.s32.totalorder %s23, 1
      %s343 = scalar_select %p342, %s23, 1
      %p344 = scmp.lt.s32.totalorder %s341, 31
      %s345 = scalar_select %p344, %s341, 31
      %s346 = smul.addr %s343, 32
      %s347 = sadd.s32 %s345, %s346
      %s348 = smul.addr %s347, 4
      %s349 = scalar_lea.vmem %s1, %s348
      %s350 = smul.u32 16, %s25
      %s351 = smul.u32 16, %s25
      %p352 = scmp.lt.s32.totalorder %s23, 1
      %s353 = scalar_select %p352, %s23, 1
      %p354 = scmp.lt.s32.totalorder %s351, 31
      %s355 = scalar_select %p354, %s351, 31
      %s356 = smul.addr %s353, 32
      %s357 = sadd.s32 %s355, %s356
      %s358 = smul.addr %s357, 4
      %s359 = scalar_lea.vmem %s2, %s358
      %s360 = smul.u32 16, %s25
      %s361 = smul.u32 16, %s24
      %p362 = scmp.lt.s32.totalorder %s23, 1
      %s363 = scalar_select %p362, %s23, 1
      %p364 = scmp.lt.s32.totalorder %s361, 31
      %s365 = scalar_select %p364, %s361, 31
      %s366 = smul.addr %s363, 32
      %s367 = sadd.s32 %s365, %s366
      %s368 = smul.addr %s367, 8
      %s369 = scalar_lea.vmem %s3, %s368
      %s370 = smul.u32 16, %s24
      %s371 = smul.u32 16, %s24
      %p372 = scmp.lt.s32.totalorder %s23, 1
      %s373 = scalar_select %p372, %s23, 1
      %p374 = scmp.lt.s32.totalorder %s371, 31
      %s375 = scalar_select %p374, %s371, 31
      %s376 = smul.addr %s373, 32
      %s377 = sadd.s32 %s375, %s376
      %s378 = smul.addr %s377, 8
      %s379 = scalar_lea.vmem %s5, %s378
      %s380 = smul.u32 16, %s24
      %p382 = scmp.eq.s32.totalorder %s25, 0
      // Predicated region
      $region41: #{forward.20} parent=39 // pred_check
        %p383 = pneg %p382
      $region42: #{forward.20} parent=39 // pred_check_branch
        %385 = sbr.rel (%p383) target = $region44
      $region43: #{forward.20} parent=39 // pred_region
        %vm386 = vcmask 7168
        %387 = vst.msk [vmem:[#allocation2] sm:$0xff] %vm386, -inf
        %388 = vst.msk [vmem:[#allocation2 + $0x8] sm:$0xff] %vm386, -inf
        %389 = vst.msk [vmem:[#allocation2 + $0x10] sm:$0xff] %vm386, -inf
        %390 = vst.msk [vmem:[#allocation2 + $0x18] sm:$0xff] %vm386, -inf
        %391 = vst.msk [vmem:[#allocation2 + $0x20] sm:$0xff] %vm386, -inf
        %392 = vst.msk [vmem:[#allocation2 + $0x28] sm:$0xff] %vm386, -inf
        %393 = vst.msk [vmem:[#allocation2 + $0x30] sm:$0xff] %vm386, -inf
        %394 = vst.msk [vmem:[#allocation2 + $0x38] sm:$0xff] %vm386, -inf
        %395 = vst.msk [vmem:[#allocation2 + $0x40] sm:$0xff] %vm386, -inf
        %396 = vst.msk [vmem:[#allocation2 + $0x48] sm:$0xff] %vm386, -inf
        %397 = vst.msk [vmem:[#allocation2 + $0x50] sm:$0xff] %vm386, -inf
        %398 = vst.msk [vmem:[#allocation2 + $0x58] sm:$0xff] %vm386, -inf
        %399 = vst.msk [vmem:[#allocation2 + $0x60] sm:$0xff] %vm386, -inf
        %400 = vst.msk [vmem:[#allocation2 + $0x68] sm:$0xff] %vm386, -inf
        %401 = vst.msk [vmem:[#allocation2 + $0x70] sm:$0xff] %vm386, -inf
        %402 = vst.msk [vmem:[#allocation2 + $0x78] sm:$0xff] %vm386, -inf
        %403 = vst.msk [vmem:[#allocation3] sm:$0xff] %vm386, 0.0
        %404 = vst.msk [vmem:[#allocation3 + $0x8] sm:$0xff] %vm386, 0.0
        %405 = vst.msk [vmem:[#allocation3 + $0x10] sm:$0xff] %vm386, 0.0
        %406 = vst.msk [vmem:[#allocation3 + $0x18] sm:$0xff] %vm386, 0.0
        %407 = vst.msk [vmem:[#allocation3 + $0x20] sm:$0xff] %vm386, 0.0
        %408 = vst.msk [vmem:[#allocation3 + $0x28] sm:$0xff] %vm386, 0.0
        %409 = vst.msk [vmem:[#allocation3 + $0x30] sm:$0xff] %vm386, 0.0
        %410 = vst.msk [vmem:[#allocation3 + $0x38] sm:$0xff] %vm386, 0.0
        %411 = vst.msk [vmem:[#allocation3 + $0x40] sm:$0xff] %vm386, 0.0
        %412 = vst.msk [vmem:[#allocation3 + $0x48] sm:$0xff] %vm386, 0.0
        %413 = vst.msk [vmem:[#allocation3 + $0x50] sm:$0xff] %vm386, 0.0
        %414 = vst.msk [vmem:[#allocation3 + $0x58] sm:$0xff] %vm386, 0.0
        %415 = vst.msk [vmem:[#allocation3 + $0x60] sm:$0xff] %vm386, 0.0
        %416 = vst.msk [vmem:[#allocation3 + $0x68] sm:$0xff] %vm386, 0.0
        %417 = vst.msk [vmem:[#allocation3 + $0x70] sm:$0xff] %vm386, 0.0
        %418 = vst.msk [vmem:[#allocation3 + $0x78] sm:$0xff] %vm386, 0.0
        %vm419 = vcmask 261120
        %420 = vst.msk [vmem:[#allocation4] sm:$0xff] %vm419, 0.0
        %421 = vst.msk [vmem:[#allocation4 + $0x8] sm:$0xff] %vm419, 0.0
        %422 = vst.msk [vmem:[#allocation4 + $0x10] sm:$0xff] %vm419, 0.0
        %423 = vst.msk [vmem:[#allocation4 + $0x18] sm:$0xff] %vm419, 0.0
        %424 = vst.msk [vmem:[#allocation4 + $0x20] sm:$0xff] %vm419, 0.0
        %425 = vst.msk [vmem:[#allocation4 + $0x28] sm:$0xff] %vm419, 0.0
        %426 = vst.msk [vmem:[#allocation4 + $0x30] sm:$0xff] %vm419, 0.0
        %427 = vst.msk [vmem:[#allocation4 + $0x38] sm:$0xff] %vm419, 0.0
        %428 = vst.msk [vmem:[#allocation4 + $0x40] sm:$0xff] %vm419, 0.0
        %429 = vst.msk [vmem:[#allocation4 + $0x48] sm:$0xff] %vm419, 0.0
        %430 = vst.msk [vmem:[#allocation4 + $0x50] sm:$0xff] %vm419, 0.0
        %431 = vst.msk [vmem:[#allocation4 + $0x58] sm:$0xff] %vm419, 0.0
        %432 = vst.msk [vmem:[#allocation4 + $0x60] sm:$0xff] %vm419, 0.0
        %433 = vst.msk [vmem:[#allocation4 + $0x68] sm:$0xff] %vm419, 0.0
        %434 = vst.msk [vmem:[#allocation4 + $0x70] sm:$0xff] %vm419, 0.0
        %435 = vst.msk [vmem:[#allocation4 + $0x78] sm:$0xff] %vm419, 0.0
      $region44: #{forward.20} parent=39 // pred_fallthru
        _
      %v436 = vld [vmem:[%s339] sm:$0xf]
      %v437 = vld [vmem:[%s339 + $0x4] sm:$0xf]
      %v438 = vld [vmem:[%s339 + $0x8] sm:$0xf]
      %v439 = vld [vmem:[%s339 + $0xc] sm:$0xf]
      %v440 = vld [vmem:[%s339 + $0x10] sm:$0xf]
      %v441 = vld [vmem:[%s339 + $0x14] sm:$0xf]
      %v442 = vld [vmem:[%s339 + $0x18] sm:$0xf]
      %v443 = vld [vmem:[%s339 + $0x1c] sm:$0xf]
      %v444 = vld [vmem:[%s339 + $0x20] sm:$0xf]
      %v445 = vld [vmem:[%s339 + $0x24] sm:$0xf]
      %v446 = vld [vmem:[%s339 + $0x28] sm:$0xf]
      %v447 = vld [vmem:[%s339 + $0x2c] sm:$0xf]
      %v448 = vld [vmem:[%s339 + $0x30] sm:$0xf]
      %v449 = vld [vmem:[%s339 + $0x34] sm:$0xf]
      %v450 = vld [vmem:[%s339 + $0x38] sm:$0xf]
      %v451 = vld [vmem:[%s339 + $0x3c] sm:$0xf]
      %v452 = vld [vmem:[%s349] sm:$0xf]
      %v453 = vld [vmem:[%s349 + $0x4] sm:$0xf]
      %v454 = vld [vmem:[%s349 + $0x8] sm:$0xf]
      %v455 = vld [vmem:[%s349 + $0xc] sm:$0xf]
      %v456 = vld [vmem:[%s349 + $0x10] sm:$0xf]
      %v457 = vld [vmem:[%s349 + $0x14] sm:$0xf]
      %v458 = vld [vmem:[%s349 + $0x18] sm:$0xf]
      %v459 = vld [vmem:[%s349 + $0x1c] sm:$0xf]
      %v460 = vld [vmem:[%s349 + $0x20] sm:$0xf]
      %v461 = vld [vmem:[%s349 + $0x24] sm:$0xf]
      %v462 = vld [vmem:[%s349 + $0x28] sm:$0xf]
      %v463 = vld [vmem:[%s349 + $0x2c] sm:$0xf]
      %v464 = vld [vmem:[%s349 + $0x30] sm:$0xf]
      %v465 = vld [vmem:[%s349 + $0x34] sm:$0xf]
      %v466 = vld [vmem:[%s349 + $0x38] sm:$0xf]
      %v467 = vld [vmem:[%s349 + $0x3c] sm:$0xf]
      %v468 = vld [vmem:[%s359] sm:$0xf]
      %v469 = vld [vmem:[%s359 + $0x4] sm:$0xf]
      %v470 = vld [vmem:[%s359 + $0x8] sm:$0xf]
      %v471 = vld [vmem:[%s359 + $0xc] sm:$0xf]
      %v472 = vld [vmem:[%s359 + $0x10] sm:$0xf]
      %v473 = vld [vmem:[%s359 + $0x14] sm:$0xf]
      %v474 = vld [vmem:[%s359 + $0x18] sm:$0xf]
      %v475 = vld [vmem:[%s359 + $0x1c] sm:$0xf]
      %v476 = vld [vmem:[%s359 + $0x20] sm:$0xf]
      %v477 = vld [vmem:[%s359 + $0x24] sm:$0xf]
      %v478 = vld [vmem:[%s359 + $0x28] sm:$0xf]
      %v479 = vld [vmem:[%s359 + $0x2c] sm:$0xf]
      %v480 = vld [vmem:[%s359 + $0x30] sm:$0xf]
      %v481 = vld [vmem:[%s359 + $0x34] sm:$0xf]
      %v482 = vld [vmem:[%s359 + $0x38] sm:$0xf]
      %v483 = vld [vmem:[%s359 + $0x3c] sm:$0xf]
      %v500 = vunpack.c.l.b16 %v436
      %v501 = vunpack.c.l.b16 %v437
      %v502 = vunpack.c.l.b16 %v438
      %v503 = vunpack.c.l.b16 %v439
      %v504 = vunpack.c.l.b16 %v440
      %v505 = vunpack.c.l.b16 %v441
      %v506 = vunpack.c.l.b16 %v442
      %v507 = vunpack.c.l.b16 %v443
      %v508 = vunpack.c.l.b16 %v444
      %v509 = vunpack.c.l.b16 %v445
      %v510 = vunpack.c.l.b16 %v446
      %v511 = vunpack.c.l.b16 %v447
      %v512 = vunpack.c.l.b16 %v448
      %v513 = vunpack.c.l.b16 %v449
      %v514 = vunpack.c.l.b16 %v450
      %v515 = vunpack.c.l.b16 %v451
      %v516 = vpack.c.b16 %v501, %v500
      %v517 = vpack.c.b16 %v503, %v502
      %v518 = vpack.c.b16 %v505, %v504
      %v519 = vpack.c.b16 %v507, %v506
      %v520 = vpack.c.b16 %v509, %v508
      %v521 = vpack.c.b16 %v511, %v510
      %v522 = vpack.c.b16 %v513, %v512
      %v523 = vpack.c.b16 %v515, %v514
      %v540 = vunpack.c.l.b16 %v452
      %v541 = vunpack.c.l.b16 %v453
      %v542 = vunpack.c.l.b16 %v454
      %v543 = vunpack.c.l.b16 %v455
      %v544 = vunpack.c.l.b16 %v456
      %v545 = vunpack.c.l.b16 %v457
      %v546 = vunpack.c.l.b16 %v458
      %v547 = vunpack.c.l.b16 %v459
      %v548 = vunpack.c.l.b16 %v460
      %v549 = vunpack.c.l.b16 %v461
      %v550 = vunpack.c.l.b16 %v462
      %v551 = vunpack.c.l.b16 %v463
      %v552 = vunpack.c.l.b16 %v464
      %v553 = vunpack.c.l.b16 %v465
      %v554 = vunpack.c.l.b16 %v466
      %v555 = vunpack.c.l.b16 %v467
      %v556 = vpack.c.b16 %v541, %v540
      %v557 = vpack.c.b16 %v543, %v542
      %v558 = vpack.c.b16 %v545, %v544
      %v559 = vpack.c.b16 %v547, %v546
      %v560 = vpack.c.b16 %v549, %v548
      %v561 = vpack.c.b16 %v551, %v550
      %v562 = vpack.c.b16 %v553, %v552
      %v563 = vpack.c.b16 %v555, %v554
      %vm564 = vcmask 31744
      %v566 = vsel %vm564, %v516, 0
      %v569 = vsel %vm564, %v517, 0
      %v572 = vsel %vm564, %v518, 0
      %v575 = vsel %vm564, %v519, 0
      %v578 = vsel %vm564, %v520, 0
      %v581 = vsel %vm564, %v521, 0
      %v584 = vsel %vm564, %v522, 0
      %v587 = vsel %vm564, %v523, 0
      %v590 = vsel %vm564, %v556, 0
      %v593 = vsel %vm564, %v557, 0
      %v596 = vsel %vm564, %v558, 0
      %v599 = vsel %vm564, %v559, 0
      %v602 = vsel %vm564, %v560, 0
      %v605 = vsel %vm564, %v561, 0
      %v608 = vsel %vm564, %v562, 0
      %v611 = vsel %vm564, %v563, 0
      %613 = vmatprep.subr.bf16.mxu0 0
      %614 = vmatpush1.bf16.xpose.msra.mxu0 %v611
      %615 = vmatprep.subr.bf16.mxu0 0
      %616 = vmatpush1.bf16.xpose.msra.mxu0 %v608
      %617 = vmatprep.subr.bf16.mxu0 0
      %618 = vmatpush1.bf16.xpose.msra.mxu0 %v605
      %619 = vmatprep.subr.bf16.mxu0 0
      %620 = vmatpush1.bf16.xpose.msra.mxu0 %v602
      %621 = vmatprep.subr.bf16.mxu0 0
      %622 = vmatpush1.bf16.xpose.msra.mxu0 %v599
      %623 = vmatprep.subr.bf16.mxu0 0
      %624 = vmatpush1.bf16.xpose.msra.mxu0 %v596
      %625 = vmatprep.subr.bf16.mxu0 0
      %626 = vmatpush1.bf16.xpose.msra.mxu0 %v593
      %627 = vmatprep.subr.bf16.mxu0 0
      %628 = vmatpush1.bf16.xpose.msra.mxu0 %v590
      %629 = vmatprep.subr.bf16.mxu0 0
      %630 = vmatpush2.bf16.xpose.msra.mxu0 0
      %631 = vmatprep.subr.bf16.mxu0 0
      %632 = vmatpush2.bf16.xpose.msra.mxu0 0
      %633 = vmatprep.subr.bf16.mxu0 0
      %634 = vmatpush2.bf16.xpose.msra.mxu0 0
      %635 = vmatprep.subr.bf16.mxu0 0
      %636 = vmatpush2.bf16.xpose.msra.mxu0 0
      %637 = vmatprep.subr.bf16.mxu0 0
      %638 = vmatpush2.bf16.xpose.msra.mxu0 0
      %639 = vmatprep.subr.bf16.mxu0 0
      %640 = vmatpush2.bf16.xpose.msra.mxu0 0
      %641 = vmatprep.subr.bf16.mxu0 0
      %642 = vmatpush2.bf16.xpose.msra.mxu0 0
      %643 = vmatprep.subr.bf16.mxu0 0
      %644 = vmatpush2.bf16.xpose.msra.mxu0 0
      %645 = vmatprep.mubr.bf16.mxu0 0
      %646 = vmatmul.mubr.bf16.gmra.mxu0 %v566
      %v647 = vpop.f32.mrf.mxu0
      %v648 = vadd.f32 0.0, %v647
      %v649 = vpop.f32.mrf.mxu0
      %v650 = vpop.f32.mrf.mxu0
      %v651 = vadd.f32 0.0, %v650
      %v652 = vpop.f32.mrf.mxu0
      %653 = vmatprep.mubr.bf16.mxu0 0
      %654 = vmatmul.mubr.bf16.gmra.mxu0 %v569
      %v655 = vpop.f32.mrf.mxu0
      %v656 = vadd.f32 0.0, %v655
      %v657 = vpop.f32.mrf.mxu0
      %v658 = vpop.f32.mrf.mxu0
      %v659 = vadd.f32 0.0, %v658
      %v660 = vpop.f32.mrf.mxu0
      %661 = vmatprep.mubr.bf16.mxu0 0
      %662 = vmatmul.mubr.bf16.gmra.mxu0 %v572
      %v663 = vpop.f32.mrf.mxu0
      %v664 = vadd.f32 0.0, %v663
      %v665 = vpop.f32.mrf.mxu0
      %v666 = vpop.f32.mrf.mxu0
      %v667 = vadd.f32 0.0, %v666
      %v668 = vpop.f32.mrf.mxu0
      %669 = vmatprep.mubr.bf16.mxu0 0
      %670 = vmatmul.mubr.bf16.gmra.mxu0 %v575
      %v671 = vpop.f32.mrf.mxu0
      %v672 = vadd.f32 0.0, %v671
      %v673 = vpop.f32.mrf.mxu0
      %v674 = vpop.f32.mrf.mxu0
      %v675 = vadd.f32 0.0, %v674
      %v676 = vpop.f32.mrf.mxu0
      %677 = vmatprep.mubr.bf16.mxu0 0
      %678 = vmatmul.mubr.bf16.gmra.mxu0 %v578
      %v679 = vpop.f32.mrf.mxu0
      %v680 = vadd.f32 0.0, %v679
      %v681 = vpop.f32.mrf.mxu0
      %v682 = vpop.f32.mrf.mxu0
      %v683 = vadd.f32 0.0, %v682
      %v684 = vpop.f32.mrf.mxu0
      %685 = vmatprep.mubr.bf16.mxu0 0
      %686 = vmatmul.mubr.bf16.gmra.mxu0 %v581
      %v687 = vpop.f32.mrf.mxu0
      %v688 = vadd.f32 0.0, %v687
      %v689 = vpop.f32.mrf.mxu0
      %v690 = vpop.f32.mrf.mxu0
      %v691 = vadd.f32 0.0, %v690
      %v692 = vpop.f32.mrf.mxu0
      %693 = vmatprep.mubr.bf16.mxu0 0
      %694 = vmatmul.mubr.bf16.gmra.mxu0 %v584
      %v695 = vpop.f32.mrf.mxu0
      %v696 = vadd.f32 0.0, %v695
      %v697 = vpop.f32.mrf.mxu0
      %v698 = vpop.f32.mrf.mxu0
      %v699 = vadd.f32 0.0, %v698
      %v700 = vpop.f32.mrf.mxu0
      %701 = vmatprep.mubr.bf16.mxu0 0
      %702 = vmatmul.mubr.bf16.gmra.mxu0 %v587
      %v703 = vpop.f32.mrf.mxu0
      %v704 = vadd.f32 0.0, %v703
      %v705 = vpop.f32.mrf.mxu0
      %v706 = vpop.f32.mrf.mxu0
      %v707 = vadd.f32 0.0, %v706
      %v708 = vpop.f32.mrf.mxu0
      %709 = vdwg.mxu0
      %v710 = vld [vmem:[#allocation2] sm:$0xff]
      %v711 = vld [vmem:[#allocation2 + $0x8] sm:$0xff]
      %v712 = vld [vmem:[#allocation2 + $0x10] sm:$0xff]
      %v713 = vld [vmem:[#allocation2 + $0x18] sm:$0xff]
      %v714 = vld [vmem:[#allocation2 + $0x20] sm:$0xff]
      %v715 = vld [vmem:[#allocation2 + $0x28] sm:$0xff]
      %v716 = vld [vmem:[#allocation2 + $0x30] sm:$0xff]
      %v717 = vld [vmem:[#allocation2 + $0x38] sm:$0xff]
      %v718 = vld [vmem:[#allocation2 + $0x40] sm:$0xff]
      %v719 = vld [vmem:[#allocation2 + $0x48] sm:$0xff]
      %v720 = vld [vmem:[#allocation2 + $0x50] sm:$0xff]
      %v721 = vld [vmem:[#allocation2 + $0x58] sm:$0xff]
      %v722 = vld [vmem:[#allocation2 + $0x60] sm:$0xff]
      %v723 = vld [vmem:[#allocation2 + $0x68] sm:$0xff]
      %v724 = vld [vmem:[#allocation2 + $0x70] sm:$0xff]
      %v725 = vld [vmem:[#allocation2 + $0x78] sm:$0xff]
      %726 = vmax.xlane.f32.xlu0 %v648
      %v727 = vpop.xlane.xlu0 %726
      %728 = vmax.xlane.f32.xlu0 %v651
      %v729 = vpop.xlane.xlu0 %728
      %730 = vmax.xlane.f32.xlu0 %v656
      %v731 = vpop.xlane.xlu0 %730
      %732 = vmax.xlane.f32.xlu0 %v659
      %v733 = vpop.xlane.xlu0 %732
      %734 = vmax.xlane.f32.xlu0 %v664
      %v735 = vpop.xlane.xlu0 %734
      %736 = vmax.xlane.f32.xlu0 %v667
      %v737 = vpop.xlane.xlu0 %736
      %738 = vmax.xlane.f32.xlu0 %v672
      %v739 = vpop.xlane.xlu0 %738
      %740 = vmax.xlane.f32.xlu0 %v675
      %v741 = vpop.xlane.xlu0 %740
      %742 = vmax.xlane.f32.xlu0 %v680
      %v743 = vpop.xlane.xlu0 %742
      %744 = vmax.xlane.f32.xlu0 %v683
      %v745 = vpop.xlane.xlu0 %744
      %746 = vmax.xlane.f32.xlu0 %v688
      %v747 = vpop.xlane.xlu0 %746
      %748 = vmax.xlane.f32.xlu0 %v691
      %v749 = vpop.xlane.xlu0 %748
      %750 = vmax.xlane.f32.xlu0 %v696
      %v751 = vpop.xlane.xlu0 %750
      %752 = vmax.xlane.f32.xlu0 %v699
      %v753 = vpop.xlane.xlu0 %752
      %754 = vmax.xlane.f32.xlu0 %v704
      %v755 = vpop.xlane.xlu0 %754
      %756 = vmax.xlane.f32.xlu0 %v707
      %v757 = vpop.xlane.xlu0 %756
      %v758 = vmax.f32 %v710, %v727
      %v759 = vmax.f32 %v711, %v729
      %v760 = vmax.f32 %v712, %v731
      %v761 = vmax.f32 %v713, %v733
      %v762 = vmax.f32 %v714, %v735
      %v763 = vmax.f32 %v715, %v737
      %v764 = vmax.f32 %v716, %v739
      %v765 = vmax.f32 %v717, %v741
      %v766 = vmax.f32 %v718, %v743
      %v767 = vmax.f32 %v719, %v745
      %v768 = vmax.f32 %v720, %v747
      %v769 = vmax.f32 %v721, %v749
      %v770 = vmax.f32 %v722, %v751
      %v771 = vmax.f32 %v723, %v753
      %v772 = vmax.f32 %v724, %v755
      %v773 = vmax.f32 %v725, %v757
      %v774 = vsub.f32 %v710, %v758
      %v775 = vsub.f32 %v711, %v759
      %v776 = vsub.f32 %v712, %v760
      %v777 = vsub.f32 %v713, %v761
      %v778 = vsub.f32 %v714, %v762
      %v779 = vsub.f32 %v715, %v763
      %v780 = vsub.f32 %v716, %v764
      %v781 = vsub.f32 %v717, %v765
      %v782 = vsub.f32 %v718, %v766
      %v783 = vsub.f32 %v719, %v767
      %v784 = vsub.f32 %v720, %v768
      %v785 = vsub.f32 %v721, %v769
      %v786 = vsub.f32 %v722, %v770
      %v787 = vsub.f32 %v723, %v771
      %v788 = vsub.f32 %v724, %v772
      %v789 = vsub.f32 %v725, %v773
      %v790 = vmul.f32 %v774, 1.442695
      %v791 = vpow.pop %v790
      %v792 = vmul.f32 %v775, 1.442695
      %v793 = vpow.pop %v792
      %v794 = vmul.f32 %v776, 1.442695
      %v795 = vpow.pop %v794
      %v796 = vmul.f32 %v777, 1.442695
      %v797 = vpow.pop %v796
      %v798 = vmul.f32 %v778, 1.442695
      %v799 = vpow.pop %v798
      %v800 = vmul.f32 %v779, 1.442695
      %v801 = vpow.pop %v800
      %v802 = vmul.f32 %v780, 1.442695
      %v803 = vpow.pop %v802
      %v804 = vmul.f32 %v781, 1.442695
      %v805 = vpow.pop %v804
      %v806 = vmul.f32 %v782, 1.442695
      %v807 = vpow.pop %v806
      %v808 = vmul.f32 %v783, 1.442695
      %v809 = vpow.pop %v808
      %v810 = vmul.f32 %v784, 1.442695
      %v811 = vpow.pop %v810
      %v812 = vmul.f32 %v785, 1.442695
      %v813 = vpow.pop %v812
      %v814 = vmul.f32 %v786, 1.442695
      %v815 = vpow.pop %v814
      %v816 = vmul.f32 %v787, 1.442695
      %v817 = vpow.pop %v816
      %v818 = vmul.f32 %v788, 1.442695
      %v819 = vpow.pop %v818
      %v820 = vmul.f32 %v789, 1.442695
      %v821 = vpow.pop %v820
      %823 = vset.pattern.permute.xlu0 0
      %824 = vperm.xlu0 %823, %v758
      %v825 = vpop.permute.xlu0 %824
      %828 = vset.pattern.permute.xlu0 0
      %829 = vperm.xlu0 %828, %v759
      %v830 = vpop.permute.xlu0 %829
      %833 = vset.pattern.permute.xlu0 0
      %834 = vperm.xlu0 %833, %v760
      %v835 = vpop.permute.xlu0 %834
      %838 = vset.pattern.permute.xlu0 0
      %839 = vperm.xlu0 %838, %v761
      %v840 = vpop.permute.xlu0 %839
      %843 = vset.pattern.permute.xlu0 0
      %844 = vperm.xlu0 %843, %v762
      %v845 = vpop.permute.xlu0 %844
      %848 = vset.pattern.permute.xlu0 0
      %849 = vperm.xlu0 %848, %v763
      %v850 = vpop.permute.xlu0 %849
      %853 = vset.pattern.permute.xlu0 0
      %854 = vperm.xlu0 %853, %v764
      %v855 = vpop.permute.xlu0 %854
      %858 = vset.pattern.permute.xlu0 0
      %859 = vperm.xlu0 %858, %v765
      %v860 = vpop.permute.xlu0 %859
      %863 = vset.pattern.permute.xlu0 0
      %864 = vperm.xlu0 %863, %v766
      %v865 = vpop.permute.xlu0 %864
      %868 = vset.pattern.permute.xlu0 0
      %869 = vperm.xlu0 %868, %v767
      %v870 = vpop.permute.xlu0 %869
      %873 = vset.pattern.permute.xlu0 0
      %874 = vperm.xlu0 %873, %v768
      %v875 = vpop.permute.xlu0 %874
      %878 = vset.pattern.permute.xlu0 0
      %879 = vperm.xlu0 %878, %v769
      %v880 = vpop.permute.xlu0 %879
      %883 = vset.pattern.permute.xlu0 0
      %884 = vperm.xlu0 %883, %v770
      %v885 = vpop.permute.xlu0 %884
      %888 = vset.pattern.permute.xlu0 0
      %889 = vperm.xlu0 %888, %v771
      %v890 = vpop.permute.xlu0 %889
      %893 = vset.pattern.permute.xlu0 0
      %894 = vperm.xlu0 %893, %v772
      %v895 = vpop.permute.xlu0 %894
      %898 = vset.pattern.permute.xlu0 0
      %899 = vperm.xlu0 %898, %v773
      %v900 = vpop.permute.xlu0 %899
      %v902 = vsub.f32 %v648, %v825
      %v903 = vsub.f32 %v651, %v830
      %v904 = vsub.f32 %v656, %v835
      %v905 = vsub.f32 %v659, %v840
      %v906 = vsub.f32 %v664, %v845
      %v907 = vsub.f32 %v667, %v850
      %v908 = vsub.f32 %v672, %v855
      %v909 = vsub.f32 %v675, %v860
      %v910 = vsub.f32 %v680, %v865
      %v911 = vsub.f32 %v683, %v870
      %v912 = vsub.f32 %v688, %v875
      %v913 = vsub.f32 %v691, %v880
      %v914 = vsub.f32 %v696, %v885
      %v915 = vsub.f32 %v699, %v890
      %v916 = vsub.f32 %v704, %v895
      %v917 = vsub.f32 %v707, %v900
      %v918 = vmul.f32 %v902, 1.442695
      %v919 = vpow.pop %v918
      %v920 = vmul.f32 %v903, 1.442695
      %v921 = vpow.pop %v920
      %v922 = vmul.f32 %v904, 1.442695
      %v923 = vpow.pop %v922
      %v924 = vmul.f32 %v905, 1.442695
      %v925 = vpow.pop %v924
      %v926 = vmul.f32 %v906, 1.442695
      %v927 = vpow.pop %v926
      %v928 = vmul.f32 %v907, 1.442695
      %v929 = vpow.pop %v928
      %v930 = vmul.f32 %v908, 1.442695
      %v931 = vpow.pop %v930
      %v932 = vmul.f32 %v909, 1.442695
      %v933 = vpow.pop %v932
      %v934 = vmul.f32 %v910, 1.442695
      %v935 = vpow.pop %v934
      %v936 = vmul.f32 %v911, 1.442695
      %v937 = vpow.pop %v936
      %v938 = vmul.f32 %v912, 1.442695
      %v939 = vpow.pop %v938
      %v940 = vmul.f32 %v913, 1.442695
      %v941 = vpow.pop %v940
      %v942 = vmul.f32 %v914, 1.442695
      %v943 = vpow.pop %v942
      %v944 = vmul.f32 %v915, 1.442695
      %v945 = vpow.pop %v944
      %v946 = vmul.f32 %v916, 1.442695
      %v947 = vpow.pop %v946
      %v948 = vmul.f32 %v917, 1.442695
      %v949 = vpow.pop %v948
      %v950 = vld [vmem:[#allocation3] sm:$0xff]
      %v951 = vld [vmem:[#allocation3 + $0x8] sm:$0xff]
      %v952 = vld [vmem:[#allocation3 + $0x10] sm:$0xff]
      %v953 = vld [vmem:[#allocation3 + $0x18] sm:$0xff]
      %v954 = vld [vmem:[#allocation3 + $0x20] sm:$0xff]
      %v955 = vld [vmem:[#allocation3 + $0x28] sm:$0xff]
      %v956 = vld [vmem:[#allocation3 + $0x30] sm:$0xff]
      %v957 = vld [vmem:[#allocation3 + $0x38] sm:$0xff]
      %v958 = vld [vmem:[#allocation3 + $0x40] sm:$0xff]
      %v959 = vld [vmem:[#allocation3 + $0x48] sm:$0xff]
      %v960 = vld [vmem:[#allocation3 + $0x50] sm:$0xff]
      %v961 = vld [vmem:[#allocation3 + $0x58] sm:$0xff]
      %v962 = vld [vmem:[#allocation3 + $0x60] sm:$0xff]
      %v963 = vld [vmem:[#allocation3 + $0x68] sm:$0xff]
      %v964 = vld [vmem:[#allocation3 + $0x70] sm:$0xff]
      %v965 = vld [vmem:[#allocation3 + $0x78] sm:$0xff]
      %v966 = vmul.f32 %v791, %v950
      %v967 = vmul.f32 %v793, %v951
      %v968 = vmul.f32 %v795, %v952
      %v969 = vmul.f32 %v797, %v953
      %v970 = vmul.f32 %v799, %v954
      %v971 = vmul.f32 %v801, %v955
      %v972 = vmul.f32 %v803, %v956
      %v973 = vmul.f32 %v805, %v957
      %v974 = vmul.f32 %v807, %v958
      %v975 = vmul.f32 %v809, %v959
      %v976 = vmul.f32 %v811, %v960
      %v977 = vmul.f32 %v813, %v961
      %v978 = vmul.f32 %v815, %v962
      %v979 = vmul.f32 %v817, %v963
      %v980 = vmul.f32 %v819, %v964
      %v981 = vmul.f32 %v821, %v965
      %982 = vadd.xlane.f32.xlu0 %v919
      %v983 = vpop.xlane.xlu0 %982
      %984 = vadd.xlane.f32.xlu0 %v921
      %v985 = vpop.xlane.xlu0 %984
      %986 = vadd.xlane.f32.xlu0 %v923
      %v987 = vpop.xlane.xlu0 %986
      %988 = vadd.xlane.f32.xlu0 %v925
      %v989 = vpop.xlane.xlu0 %988
      %990 = vadd.xlane.f32.xlu0 %v927
      %v991 = vpop.xlane.xlu0 %990
      %992 = vadd.xlane.f32.xlu0 %v929
      %v993 = vpop.xlane.xlu0 %992
      %994 = vadd.xlane.f32.xlu0 %v931
      %v995 = vpop.xlane.xlu0 %994
      %996 = vadd.xlane.f32.xlu0 %v933
      %v997 = vpop.xlane.xlu0 %996
      %998 = vadd.xlane.f32.xlu0 %v935
      %v999 = vpop.xlane.xlu0 %998
      %1000 = vadd.xlane.f32.xlu0 %v937
      %v1001 = vpop.xlane.xlu0 %1000
      %1002 = vadd.xlane.f32.xlu0 %v939
      %v1003 = vpop.xlane.xlu0 %1002
      %1004 = vadd.xlane.f32.xlu0 %v941
      %v1005 = vpop.xlane.xlu0 %1004
      %1006 = vadd.xlane.f32.xlu0 %v943
      %v1007 = vpop.xlane.xlu0 %1006
      %1008 = vadd.xlane.f32.xlu0 %v945
      %v1009 = vpop.xlane.xlu0 %1008
      %1010 = vadd.xlane.f32.xlu0 %v947
      %v1011 = vpop.xlane.xlu0 %1010
      %1012 = vadd.xlane.f32.xlu0 %v949
      %v1013 = vpop.xlane.xlu0 %1012
      %v1014 = vadd.f32 %v966, %v983
      %v1015 = vadd.f32 %v967, %v985
      %v1016 = vadd.f32 %v968, %v987
      %v1017 = vadd.f32 %v969, %v989
      %v1018 = vadd.f32 %v970, %v991
      %v1019 = vadd.f32 %v971, %v993
      %v1020 = vadd.f32 %v972, %v995
      %v1021 = vadd.f32 %v973, %v997
      %v1022 = vadd.f32 %v974, %v999
      %v1023 = vadd.f32 %v975, %v1001
      %v1024 = vadd.f32 %v976, %v1003
      %v1025 = vadd.f32 %v977, %v1005
      %v1026 = vadd.f32 %v978, %v1007
      %v1027 = vadd.f32 %v979, %v1009
      %v1028 = vadd.f32 %v980, %v1011
      %v1029 = vadd.f32 %v981, %v1013
      %vm1030 = vcmask 7168
      %1031 = vst.msk [vmem:[#allocation3] sm:$0xff] %vm1030, %v1014
      %1032 = vst.msk [vmem:[#allocation3 + $0x8] sm:$0xff] %vm1030, %v1015
      %1033 = vst.msk [vmem:[#allocation3 + $0x10] sm:$0xff] %vm1030, %v1016
      %1034 = vst.msk [vmem:[#allocation3 + $0x18] sm:$0xff] %vm1030, %v1017
      %1035 = vst.msk [vmem:[#allocation3 + $0x20] sm:$0xff] %vm1030, %v1018
      %1036 = vst.msk [vmem:[#allocation3 + $0x28] sm:$0xff] %vm1030, %v1019
      %1037 = vst.msk [vmem:[#allocation3 + $0x30] sm:$0xff] %vm1030, %v1020
      %1038 = vst.msk [vmem:[#allocation3 + $0x38] sm:$0xff] %vm1030, %v1021
      %1039 = vst.msk [vmem:[#allocation3 + $0x40] sm:$0xff] %vm1030, %v1022
      %1040 = vst.msk [vmem:[#allocation3 + $0x48] sm:$0xff] %vm1030, %v1023
      %1041 = vst.msk [vmem:[#allocation3 + $0x50] sm:$0xff] %vm1030, %v1024
      %1042 = vst.msk [vmem:[#allocation3 + $0x58] sm:$0xff] %vm1030, %v1025
      %1043 = vst.msk [vmem:[#allocation3 + $0x60] sm:$0xff] %vm1030, %v1026
      %1044 = vst.msk [vmem:[#allocation3 + $0x68] sm:$0xff] %vm1030, %v1027
      %1045 = vst.msk [vmem:[#allocation3 + $0x70] sm:$0xff] %vm1030, %v1028
      %1046 = vst.msk [vmem:[#allocation3 + $0x78] sm:$0xff] %vm1030, %v1029
      %v1047 = vld [vmem:[#allocation4] sm:$0xff]
      %v1048 = vld [vmem:[#allocation4 + $0x8] sm:$0xff]
      %v1049 = vld [vmem:[#allocation4 + $0x10] sm:$0xff]
      %v1050 = vld [vmem:[#allocation4 + $0x18] sm:$0xff]
      %v1051 = vld [vmem:[#allocation4 + $0x20] sm:$0xff]
      %v1052 = vld [vmem:[#allocation4 + $0x28] sm:$0xff]
      %v1053 = vld [vmem:[#allocation4 + $0x30] sm:$0xff]
      %v1054 = vld [vmem:[#allocation4 + $0x38] sm:$0xff]
      %v1055 = vld [vmem:[#allocation4 + $0x40] sm:$0xff]
      %v1056 = vld [vmem:[#allocation4 + $0x48] sm:$0xff]
      %v1057 = vld [vmem:[#allocation4 + $0x50] sm:$0xff]
      %v1058 = vld [vmem:[#allocation4 + $0x58] sm:$0xff]
      %v1059 = vld [vmem:[#allocation4 + $0x60] sm:$0xff]
      %v1060 = vld [vmem:[#allocation4 + $0x68] sm:$0xff]
      %v1061 = vld [vmem:[#allocation4 + $0x70] sm:$0xff]
      %v1062 = vld [vmem:[#allocation4 + $0x78] sm:$0xff]
      %1064 = vset.pattern.permute.xlu0 0
      %1065 = vperm.xlu0 %1064, %v791
      %v1066 = vpop.permute.xlu0 %1065
      %1069 = vset.pattern.permute.xlu0 0
      %1070 = vperm.xlu0 %1069, %v793
      %v1071 = vpop.permute.xlu0 %1070
      %1074 = vset.pattern.permute.xlu0 0
      %1075 = vperm.xlu0 %1074, %v795
      %v1076 = vpop.permute.xlu0 %1075
      %1079 = vset.pattern.permute.xlu0 0
      %1080 = vperm.xlu0 %1079, %v797
      %v1081 = vpop.permute.xlu0 %1080
      %1084 = vset.pattern.permute.xlu0 0
      %1085 = vperm.xlu0 %1084, %v799
      %v1086 = vpop.permute.xlu0 %1085
      %1089 = vset.pattern.permute.xlu0 0
      %1090 = vperm.xlu0 %1089, %v801
      %v1091 = vpop.permute.xlu0 %1090
      %1094 = vset.pattern.permute.xlu0 0
      %1095 = vperm.xlu0 %1094, %v803
      %v1096 = vpop.permute.xlu0 %1095
      %1099 = vset.pattern.permute.xlu0 0
      %1100 = vperm.xlu0 %1099, %v805
      %v1101 = vpop.permute.xlu0 %1100
      %1104 = vset.pattern.permute.xlu0 0
      %1105 = vperm.xlu0 %1104, %v807
      %v1106 = vpop.permute.xlu0 %1105
      %1109 = vset.pattern.permute.xlu0 0
      %1110 = vperm.xlu0 %1109, %v809
      %v1111 = vpop.permute.xlu0 %1110
      %1114 = vset.pattern.permute.xlu0 0
      %1115 = vperm.xlu0 %1114, %v811
      %v1116 = vpop.permute.xlu0 %1115
      %1119 = vset.pattern.permute.xlu0 0
      %1120 = vperm.xlu0 %1119, %v813
      %v1121 = vpop.permute.xlu0 %1120
      %1124 = vset.pattern.permute.xlu0 0
      %1125 = vperm.xlu0 %1124, %v815
      %v1126 = vpop.permute.xlu0 %1125
      %1129 = vset.pattern.permute.xlu0 0
      %1130 = vperm.xlu0 %1129, %v817
      %v1131 = vpop.permute.xlu0 %1130
      %1134 = vset.pattern.permute.xlu0 0
      %1135 = vperm.xlu0 %1134, %v819
      %v1136 = vpop.permute.xlu0 %1135
      %1139 = vset.pattern.permute.xlu0 0
      %1140 = vperm.xlu0 %1139, %v821
      %v1141 = vpop.permute.xlu0 %1140
      %v1143 = vmul.f32 %v1066, %v1047
      %v1144 = vmul.f32 %v1071, %v1048
      %v1145 = vmul.f32 %v1076, %v1049
      %v1146 = vmul.f32 %v1081, %v1050
      %v1147 = vmul.f32 %v1086, %v1051
      %v1148 = vmul.f32 %v1091, %v1052
      %v1149 = vmul.f32 %v1096, %v1053
      %v1150 = vmul.f32 %v1101, %v1054
      %v1151 = vmul.f32 %v1106, %v1055
      %v1152 = vmul.f32 %v1111, %v1056
      %v1153 = vmul.f32 %v1116, %v1057
      %v1154 = vmul.f32 %v1121, %v1058
      %v1155 = vmul.f32 %v1126, %v1059
      %v1156 = vmul.f32 %v1131, %v1060
      %v1157 = vmul.f32 %v1136, %v1061
      %v1158 = vmul.f32 %v1141, %v1062
      %v1159 = vpack.c.bf16 %v921, %v919
      %v1160 = vpack.c.bf16 %v925, %v923
      %v1161 = vpack.c.bf16 %v929, %v927
      %v1162 = vpack.c.bf16 %v933, %v931
      %v1163 = vpack.c.bf16 %v937, %v935
      %v1164 = vpack.c.bf16 %v941, %v939
      %v1165 = vpack.c.bf16 %v945, %v943
      %v1166 = vpack.c.bf16 %v949, %v947
      %v1183 = vunpack.c.l.b16 %v468
      %v1184 = vunpack.c.l.b16 %v469
      %v1185 = vunpack.c.l.b16 %v470
      %v1186 = vunpack.c.l.b16 %v471
      %v1187 = vunpack.c.l.b16 %v472
      %v1188 = vunpack.c.l.b16 %v473
      %v1189 = vunpack.c.l.b16 %v474
      %v1190 = vunpack.c.l.b16 %v475
      %v1191 = vunpack.c.l.b16 %v476
      %v1192 = vunpack.c.l.b16 %v477
      %v1193 = vunpack.c.l.b16 %v478
      %v1194 = vunpack.c.l.b16 %v479
      %v1195 = vunpack.c.l.b16 %v480
      %v1196 = vunpack.c.l.b16 %v481
      %v1197 = vunpack.c.l.b16 %v482
      %v1198 = vunpack.c.l.b16 %v483
      %v1199 = vpack.c.b16 %v1184, %v1183
      %v1200 = vpack.c.b16 %v1186, %v1185
      %v1201 = vpack.c.b16 %v1188, %v1187
      %v1202 = vpack.c.b16 %v1190, %v1189
      %v1203 = vpack.c.b16 %v1192, %v1191
      %v1204 = vpack.c.b16 %v1194, %v1193
      %v1205 = vpack.c.b16 %v1196, %v1195
      %v1206 = vpack.c.b16 %v1198, %v1197
      %1215 = vmatprep.subr.bf16.mxu0 0
      %1216 = vmatpush1.bf16.msra.mxu0 %v1206
      %1217 = vmatprep.subr.bf16.mxu0 0
      %1218 = vmatpush1.bf16.msra.mxu0 %v1205
      %1219 = vmatprep.subr.bf16.mxu0 0
      %1220 = vmatpush1.bf16.msra.mxu0 %v1204
      %1221 = vmatprep.subr.bf16.mxu0 0
      %1222 = vmatpush1.bf16.msra.mxu0 %v1203
      %1223 = vmatprep.subr.bf16.mxu0 0
      %1224 = vmatpush1.bf16.msra.mxu0 %v1202
      %1225 = vmatprep.subr.bf16.mxu0 0
      %1226 = vmatpush1.bf16.msra.mxu0 %v1201
      %1227 = vmatprep.subr.bf16.mxu0 0
      %1228 = vmatpush1.bf16.msra.mxu0 %v1200
      %1229 = vmatprep.subr.bf16.mxu0 0
      %1230 = vmatpush1.bf16.msra.mxu0 %v1199
      %1231 = vmatprep.subr.bf16.mxu0 0
      %1232 = vmatpush2.bf16.msra.mxu0 0
      %1233 = vmatprep.subr.bf16.mxu0 0
      %1234 = vmatpush2.bf16.msra.mxu0 0
      %1235 = vmatprep.subr.bf16.mxu0 0
      %1236 = vmatpush2.bf16.msra.mxu0 0
      %1237 = vmatprep.subr.bf16.mxu0 0
      %1238 = vmatpush2.bf16.msra.mxu0 0
      %1239 = vmatprep.subr.bf16.mxu0 0
      %1240 = vmatpush2.bf16.msra.mxu0 0
      %1241 = vmatprep.subr.bf16.mxu0 0
      %1242 = vmatpush2.bf16.msra.mxu0 0
      %1243 = vmatprep.subr.bf16.mxu0 0
      %1244 = vmatpush2.bf16.msra.mxu0 0
      %1245 = vmatprep.subr.bf16.mxu0 0
      %1246 = vmatpush2.bf16.msra.mxu0 0
      %1247 = vmatprep.mubr.bf16.mxu0 0
      %1248 = vmatmul.mubr.bf16.gmra.mxu0 %v1159
      %v1249 = vpop.f32.mrf.mxu0
      %v1250 = vadd.f32 0.0, %v1249
      %v1251 = vpop.f32.mrf.mxu0
      %v1252 = vpop.f32.mrf.mxu0
      %v1253 = vadd.f32 0.0, %v1252
      %v1254 = vpop.f32.mrf.mxu0
      %1255 = vmatprep.mubr.bf16.mxu0 0
      %1256 = vmatmul.mubr.bf16.gmra.mxu0 %v1160
      %v1257 = vpop.f32.mrf.mxu0
      %v1258 = vadd.f32 0.0, %v1257
      %v1259 = vpop.f32.mrf.mxu0
      %v1260 = vpop.f32.mrf.mxu0
      %v1261 = vadd.f32 0.0, %v1260
      %v1262 = vpop.f32.mrf.mxu0
      %1263 = vmatprep.mubr.bf16.mxu0 0
      %1264 = vmatmul.mubr.bf16.gmra.mxu0 %v1161
      %v1265 = vpop.f32.mrf.mxu0
      %v1266 = vadd.f32 0.0, %v1265
      %v1267 = vpop.f32.mrf.mxu0
      %v1268 = vpop.f32.mrf.mxu0
      %v1269 = vadd.f32 0.0, %v1268
      %v1270 = vpop.f32.mrf.mxu0
      %1271 = vmatprep.mubr.bf16.mxu0 0
      %1272 = vmatmul.mubr.bf16.gmra.mxu0 %v1162
      %v1273 = vpop.f32.mrf.mxu0
      %v1274 = vadd.f32 0.0, %v1273
      %v1275 = vpop.f32.mrf.mxu0
      %v1276 = vpop.f32.mrf.mxu0
      %v1277 = vadd.f32 0.0, %v1276
      %v1278 = vpop.f32.mrf.mxu0
      %1279 = vmatprep.mubr.bf16.mxu0 0
      %1280 = vmatmul.mubr.bf16.gmra.mxu0 %v1163
      %v1281 = vpop.f32.mrf.mxu0
      %v1282 = vadd.f32 0.0, %v1281
      %v1283 = vpop.f32.mrf.mxu0
      %v1284 = vpop.f32.mrf.mxu0
      %v1285 = vadd.f32 0.0, %v1284
      %v1286 = vpop.f32.mrf.mxu0
      %1287 = vmatprep.mubr.bf16.mxu0 0
      %1288 = vmatmul.mubr.bf16.gmra.mxu0 %v1164
      %v1289 = vpop.f32.mrf.mxu0
      %v1290 = vadd.f32 0.0, %v1289
      %v1291 = vpop.f32.mrf.mxu0
      %v1292 = vpop.f32.mrf.mxu0
      %v1293 = vadd.f32 0.0, %v1292
      %v1294 = vpop.f32.mrf.mxu0
      %1295 = vmatprep.mubr.bf16.mxu0 0
      %1296 = vmatmul.mubr.bf16.gmra.mxu0 %v1165
      %v1297 = vpop.f32.mrf.mxu0
      %v1298 = vadd.f32 0.0, %v1297
      %v1299 = vpop.f32.mrf.mxu0
      %v1300 = vpop.f32.mrf.mxu0
      %v1301 = vadd.f32 0.0, %v1300
      %v1302 = vpop.f32.mrf.mxu0
      %1303 = vmatprep.mubr.bf16.mxu0 0
      %1304 = vmatmul.mubr.bf16.gmra.mxu0 %v1166
      %v1305 = vpop.f32.mrf.mxu0
      %v1306 = vadd.f32 0.0, %v1305
      %v1307 = vpop.f32.mrf.mxu0
      %v1308 = vpop.f32.mrf.mxu0
      %v1309 = vadd.f32 0.0, %v1308
      %v1310 = vpop.f32.mrf.mxu0
      %1311 = vdwg.mxu0
      %v1312 = vadd.f32 %v1143, %v1250
      %v1313 = vadd.f32 %v1144, %v1253
      %v1314 = vadd.f32 %v1145, %v1258
      %v1315 = vadd.f32 %v1146, %v1261
      %v1316 = vadd.f32 %v1147, %v1266
      %v1317 = vadd.f32 %v1148, %v1269
      %v1318 = vadd.f32 %v1149, %v1274
      %v1319 = vadd.f32 %v1150, %v1277
      %v1320 = vadd.f32 %v1151, %v1282
      %v1321 = vadd.f32 %v1152, %v1285
      %v1322 = vadd.f32 %v1153, %v1290
      %v1323 = vadd.f32 %v1154, %v1293
      %v1324 = vadd.f32 %v1155, %v1298
      %v1325 = vadd.f32 %v1156, %v1301
      %v1326 = vadd.f32 %v1157, %v1306
      %v1327 = vadd.f32 %v1158, %v1309
      %vm1328 = vcmask 261120
      %1329 = vst.msk [vmem:[#allocation4] sm:$0xff] %vm1328, %v1312
      %1330 = vst.msk [vmem:[#allocation4 + $0x8] sm:$0xff] %vm1328, %v1313
      %1331 = vst.msk [vmem:[#allocation4 + $0x10] sm:$0xff] %vm1328, %v1314
      %1332 = vst.msk [vmem:[#allocation4 + $0x18] sm:$0xff] %vm1328, %v1315
      %1333 = vst.msk [vmem:[#allocation4 + $0x20] sm:$0xff] %vm1328, %v1316
      %1334 = vst.msk [vmem:[#allocation4 + $0x28] sm:$0xff] %vm1328, %v1317
      %1335 = vst.msk [vmem:[#allocation4 + $0x30] sm:$0xff] %vm1328, %v1318
      %1336 = vst.msk [vmem:[#allocation4 + $0x38] sm:$0xff] %vm1328, %v1319
      %1337 = vst.msk [vmem:[#allocation4 + $0x40] sm:$0xff] %vm1328, %v1320
      %1338 = vst.msk [vmem:[#allocation4 + $0x48] sm:$0xff] %vm1328, %v1321
      %1339 = vst.msk [vmem:[#allocation4 + $0x50] sm:$0xff] %vm1328, %v1322
      %1340 = vst.msk [vmem:[#allocation4 + $0x58] sm:$0xff] %vm1328, %v1323
      %1341 = vst.msk [vmem:[#allocation4 + $0x60] sm:$0xff] %vm1328, %v1324
      %1342 = vst.msk [vmem:[#allocation4 + $0x68] sm:$0xff] %vm1328, %v1325
      %1343 = vst.msk [vmem:[#allocation4 + $0x70] sm:$0xff] %vm1328, %v1326
      %1344 = vst.msk [vmem:[#allocation4 + $0x78] sm:$0xff] %vm1328, %v1327
      %1345 = vst.msk [vmem:[#allocation2] sm:$0xff] %vm1030, %v758
      %1346 = vst.msk [vmem:[#allocation2 + $0x8] sm:$0xff] %vm1030, %v759
      %1347 = vst.msk [vmem:[#allocation2 + $0x10] sm:$0xff] %vm1030, %v760
      %1348 = vst.msk [vmem:[#allocation2 + $0x18] sm:$0xff] %vm1030, %v761
      %1349 = vst.msk [vmem:[#allocation2 + $0x20] sm:$0xff] %vm1030, %v762
      %1350 = vst.msk [vmem:[#allocation2 + $0x28] sm:$0xff] %vm1030, %v763
      %1351 = vst.msk [vmem:[#allocation2 + $0x30] sm:$0xff] %vm1030, %v764
      %1352 = vst.msk [vmem:[#allocation2 + $0x38] sm:$0xff] %vm1030, %v765
      %1353 = vst.msk [vmem:[#allocation2 + $0x40] sm:$0xff] %vm1030, %v766
      %1354 = vst.msk [vmem:[#allocation2 + $0x48] sm:$0xff] %vm1030, %v767
      %1355 = vst.msk [vmem:[#allocation2 + $0x50] sm:$0xff] %vm1030, %v768
      %1356 = vst.msk [vmem:[#allocation2 + $0x58] sm:$0xff] %vm1030, %v769
      %1357 = vst.msk [vmem:[#allocation2 + $0x60] sm:$0xff] %vm1030, %v770
      %1358 = vst.msk [vmem:[#allocation2 + $0x68] sm:$0xff] %vm1030, %v771
      %1359 = vst.msk [vmem:[#allocation2 + $0x70] sm:$0xff] %vm1030, %v772
      %1360 = vst.msk [vmem:[#allocation2 + $0x78] sm:$0xff] %vm1030, %v773
      %p1361 = scmp.eq.s32.totalorder %s25, 1
      // Predicated region
      $region45: #{forward.20} parent=39 // pred_check
        %p1362 = pneg %p1361
      $region46: #{forward.20} parent=39 // pred_check_branch
        %1364 = sbr.rel (%p1362) target = $region48
      $region47: #{forward.20} parent=39 // pred_region
        %v1365 = vld [vmem:[#allocation4] sm:$0xff]
        %v1366 = vld [vmem:[#allocation4 + $0x8] sm:$0xff]
        %v1367 = vld [vmem:[#allocation4 + $0x10] sm:$0xff]
        %v1368 = vld [vmem:[#allocation4 + $0x18] sm:$0xff]
        %v1369 = vld [vmem:[#allocation4 + $0x20] sm:$0xff]
        %v1370 = vld [vmem:[#allocation4 + $0x28] sm:$0xff]
        %v1371 = vld [vmem:[#allocation4 + $0x30] sm:$0xff]
        %v1372 = vld [vmem:[#allocation4 + $0x38] sm:$0xff]
        %v1373 = vld [vmem:[#allocation4 + $0x40] sm:$0xff]
        %v1374 = vld [vmem:[#allocation4 + $0x48] sm:$0xff]
        %v1375 = vld [vmem:[#allocation4 + $0x50] sm:$0xff]
        %v1376 = vld [vmem:[#allocation4 + $0x58] sm:$0xff]
        %v1377 = vld [vmem:[#allocation4 + $0x60] sm:$0xff]
        %v1378 = vld [vmem:[#allocation4 + $0x68] sm:$0xff]
        %v1379 = vld [vmem:[#allocation4 + $0x70] sm:$0xff]
        %v1380 = vld [vmem:[#allocation4 + $0x78] sm:$0xff]
        %v1381 = vld [vmem:[#allocation3] sm:$0xff]
        %v1382 = vld [vmem:[#allocation3 + $0x8] sm:$0xff]
        %v1383 = vld [vmem:[#allocation3 + $0x10] sm:$0xff]
        %v1384 = vld [vmem:[#allocation3 + $0x18] sm:$0xff]
        %v1385 = vld [vmem:[#allocation3 + $0x20] sm:$0xff]
        %v1386 = vld [vmem:[#allocation3 + $0x28] sm:$0xff]
        %v1387 = vld [vmem:[#allocation3 + $0x30] sm:$0xff]
        %v1388 = vld [vmem:[#allocation3 + $0x38] sm:$0xff]
        %v1389 = vld [vmem:[#allocation3 + $0x40] sm:$0xff]
        %v1390 = vld [vmem:[#allocation3 + $0x48] sm:$0xff]
        %v1391 = vld [vmem:[#allocation3 + $0x50] sm:$0xff]
        %v1392 = vld [vmem:[#allocation3 + $0x58] sm:$0xff]
        %v1393 = vld [vmem:[#allocation3 + $0x60] sm:$0xff]
        %v1394 = vld [vmem:[#allocation3 + $0x68] sm:$0xff]
        %v1395 = vld [vmem:[#allocation3 + $0x70] sm:$0xff]
        %v1396 = vld [vmem:[#allocation3 + $0x78] sm:$0xff]
        %v1397 = vrcp.pop %v1381
        %v1398 = vrcp.pop %v1382
        %v1399 = vrcp.pop %v1383
        %v1400 = vrcp.pop %v1384
        %v1401 = vrcp.pop %v1385
        %v1402 = vrcp.pop %v1386
        %v1403 = vrcp.pop %v1387
        %v1404 = vrcp.pop %v1388
        %v1405 = vrcp.pop %v1389
        %v1406 = vrcp.pop %v1390
        %v1407 = vrcp.pop %v1391
        %v1408 = vrcp.pop %v1392
        %v1409 = vrcp.pop %v1393
        %v1410 = vrcp.pop %v1394
        %v1411 = vrcp.pop %v1395
        %v1412 = vrcp.pop %v1396
        %1414 = vset.pattern.permute.xlu0 0
        %1415 = vperm.xlu0 %1414, %v1397
        %v1416 = vpop.permute.xlu0 %1415
        %1419 = vset.pattern.permute.xlu0 0
        %1420 = vperm.xlu0 %1419, %v1398
        %v1421 = vpop.permute.xlu0 %1420
        %1424 = vset.pattern.permute.xlu0 0
        %1425 = vperm.xlu0 %1424, %v1399
        %v1426 = vpop.permute.xlu0 %1425
        %1429 = vset.pattern.permute.xlu0 0
        %1430 = vperm.xlu0 %1429, %v1400
        %v1431 = vpop.permute.xlu0 %1430
        %1434 = vset.pattern.permute.xlu0 0
        %1435 = vperm.xlu0 %1434, %v1401
        %v1436 = vpop.permute.xlu0 %1435
        %1439 = vset.pattern.permute.xlu0 0
        %1440 = vperm.xlu0 %1439, %v1402
        %v1441 = vpop.permute.xlu0 %1440
        %1444 = vset.pattern.permute.xlu0 0
        %1445 = vperm.xlu0 %1444, %v1403
        %v1446 = vpop.permute.xlu0 %1445
        %1449 = vset.pattern.permute.xlu0 0
        %1450 = vperm.xlu0 %1449, %v1404
        %v1451 = vpop.permute.xlu0 %1450
        %1454 = vset.pattern.permute.xlu0 0
        %1455 = vperm.xlu0 %1454, %v1405
        %v1456 = vpop.permute.xlu0 %1455
        %1459 = vset.pattern.permute.xlu0 0
        %1460 = vperm.xlu0 %1459, %v1406
        %v1461 = vpop.permute.xlu0 %1460
        %1464 = vset.pattern.permute.xlu0 0
        %1465 = vperm.xlu0 %1464, %v1407
        %v1466 = vpop.permute.xlu0 %1465
        %1469 = vset.pattern.permute.xlu0 0
        %1470 = vperm.xlu0 %1469, %v1408
        %v1471 = vpop.permute.xlu0 %1470
        %1474 = vset.pattern.permute.xlu0 0
        %1475 = vperm.xlu0 %1474, %v1409
        %v1476 = vpop.permute.xlu0 %1475
        %1479 = vset.pattern.permute.xlu0 0
        %1480 = vperm.xlu0 %1479, %v1410
        %v1481 = vpop.permute.xlu0 %1480
        %1484 = vset.pattern.permute.xlu0 0
        %1485 = vperm.xlu0 %1484, %v1411
        %v1486 = vpop.permute.xlu0 %1485
        %1489 = vset.pattern.permute.xlu0 0
        %1490 = vperm.xlu0 %1489, %v1412
        %v1491 = vpop.permute.xlu0 %1490
        %v1493 = vmul.f32 %v1365, %v1416
        %v1494 = vmul.f32 %v1366, %v1421
        %v1495 = vmul.f32 %v1367, %v1426
        %v1496 = vmul.f32 %v1368, %v1431
        %v1497 = vmul.f32 %v1369, %v1436
        %v1498 = vmul.f32 %v1370, %v1441
        %v1499 = vmul.f32 %v1371, %v1446
        %v1500 = vmul.f32 %v1372, %v1451
        %v1501 = vmul.f32 %v1373, %v1456
        %v1502 = vmul.f32 %v1374, %v1461
        %v1503 = vmul.f32 %v1375, %v1466
        %v1504 = vmul.f32 %v1376, %v1471
        %v1505 = vmul.f32 %v1377, %v1476
        %v1506 = vmul.f32 %v1378, %v1481
        %v1507 = vmul.f32 %v1379, %v1486
        %v1508 = vmul.f32 %v1380, %v1491
        %v1509 = vld [vmem:[#allocation5] sm:$0x1]
        %s1510 = vtos %v1509
        %v1511 = vstv %s1510
        %v1512 = vmul.f32 %v1511, %v1493
        %v1513 = vmul.f32 %v1511, %v1494
        %v1514 = vmul.f32 %v1511, %v1495
        %v1515 = vmul.f32 %v1511, %v1496
        %v1516 = vmul.f32 %v1511, %v1497
        %v1517 = vmul.f32 %v1511, %v1498
        %v1518 = vmul.f32 %v1511, %v1499
        %v1519 = vmul.f32 %v1511, %v1500
        %v1520 = vmul.f32 %v1511, %v1501
        %v1521 = vmul.f32 %v1511, %v1502
        %v1522 = vmul.f32 %v1511, %v1503
        %v1523 = vmul.f32 %v1511, %v1504
        %v1524 = vmul.f32 %v1511, %v1505
        %v1525 = vmul.f32 %v1511, %v1506
        %v1526 = vmul.f32 %v1511, %v1507
        %v1527 = vmul.f32 %v1511, %v1508
        %v1528 = vld [vmem:[%s369] sm:$0xff]
        %v1529 = vld [vmem:[%s369 + $0x8] sm:$0xff]
        %v1530 = vld [vmem:[%s369 + $0x10] sm:$0xff]
        %v1531 = vld [vmem:[%s369 + $0x18] sm:$0xff]
        %v1532 = vld [vmem:[%s369 + $0x20] sm:$0xff]
        %v1533 = vld [vmem:[%s369 + $0x28] sm:$0xff]
        %v1534 = vld [vmem:[%s369 + $0x30] sm:$0xff]
        %v1535 = vld [vmem:[%s369 + $0x38] sm:$0xff]
        %v1536 = vld [vmem:[%s369 + $0x40] sm:$0xff]
        %v1537 = vld [vmem:[%s369 + $0x48] sm:$0xff]
        %v1538 = vld [vmem:[%s369 + $0x50] sm:$0xff]
        %v1539 = vld [vmem:[%s369 + $0x58] sm:$0xff]
        %v1540 = vld [vmem:[%s369 + $0x60] sm:$0xff]
        %v1541 = vld [vmem:[%s369 + $0x68] sm:$0xff]
        %v1542 = vld [vmem:[%s369 + $0x70] sm:$0xff]
        %v1543 = vld [vmem:[%s369 + $0x78] sm:$0xff]
        %v1544 = vadd.f32 %v1512, %v1528
        %v1545 = vadd.f32 %v1513, %v1529
        %v1546 = vadd.f32 %v1514, %v1530
        %v1547 = vadd.f32 %v1515, %v1531
        %v1548 = vadd.f32 %v1516, %v1532
        %v1549 = vadd.f32 %v1517, %v1533
        %v1550 = vadd.f32 %v1518, %v1534
        %v1551 = vadd.f32 %v1519, %v1535
        %v1552 = vadd.f32 %v1520, %v1536
        %v1553 = vadd.f32 %v1521, %v1537
        %v1554 = vadd.f32 %v1522, %v1538
        %v1555 = vadd.f32 %v1523, %v1539
        %v1556 = vadd.f32 %v1524, %v1540
        %v1557 = vadd.f32 %v1525, %v1541
        %v1558 = vadd.f32 %v1526, %v1542
        %v1559 = vadd.f32 %v1527, %v1543
        %1560 = vst.msk [vmem:[%s379] sm:$0xff] %vm1328, %v1544
        %1561 = vst.msk [vmem:[%s379 + $0x8] sm:$0xff] %vm1328, %v1545
        %1562 = vst.msk [vmem:[%s379 + $0x10] sm:$0xff] %vm1328, %v1546
        %1563 = vst.msk [vmem:[%s379 + $0x18] sm:$0xff] %vm1328, %v1547
        %1564 = vst.msk [vmem:[%s379 + $0x20] sm:$0xff] %vm1328, %v1548
        %1565 = vst.msk [vmem:[%s379 + $0x28] sm:$0xff] %vm1328, %v1549
        %1566 = vst.msk [vmem:[%s379 + $0x30] sm:$0xff] %vm1328, %v1550
        %1567 = vst.msk [vmem:[%s379 + $0x38] sm:$0xff] %vm1328, %v1551
        %1568 = vst.msk [vmem:[%s379 + $0x40] sm:$0xff] %vm1328, %v1552
        %1569 = vst.msk [vmem:[%s379 + $0x48] sm:$0xff] %vm1328, %v1553
        %1570 = vst.msk [vmem:[%s379 + $0x50] sm:$0xff] %vm1328, %v1554
        %1571 = vst.msk [vmem:[%s379 + $0x58] sm:$0xff] %vm1328, %v1555
        %1572 = vst.msk [vmem:[%s379 + $0x60] sm:$0xff] %vm1328, %v1556
        %1573 = vst.msk [vmem:[%s379 + $0x68] sm:$0xff] %vm1328, %v1557
        %1574 = vst.msk [vmem:[%s379 + $0x70] sm:$0xff] %vm1328, %v1558
        %1575 = vst.msk [vmem:[%s379 + $0x78] sm:$0xff] %vm1328, %v1559
      $region48: #{forward.20} parent=39 // pred_fallthru
        _
      %s1576 = smul.u32 16, %s24
      %p1577 = scmp.lt.s32.totalorder %s23, 1
      %s1578 = scalar_select %p1577, %s23, 1
      %p1579 = scmp.lt.s32.totalorder %s1576, 31
      %s1580 = scalar_select %p1579, %s1576, 31
      %s1581 = smul.addr %s1578, 32
      %s1582 = sadd.s32 %s1580, %s1581
      %s1583 = smul.addr %s1582, 8
      %s1584 = scalar_lea.vmem %s5, %s1583
      // Predicated region
      $region49: #{forward.20} parent=39 // pred_check
        %p1585 = pneg %p190
      $region50: #{forward.20} parent=39 // pred_check_branch
        %1587 = sbr.rel (%p1585) target = $region52
      $region51: #{forward.20} parent=39 // pred_region
        %s1588 = smul.u32 16, %s24
      $region52: #{forward.20} parent=39 // pred_fallthru
        _
    $region40: #{forward.20} parent=5 // pred_fallthru
      _
    %p1589 = scmp.le.s32.totalorder 2, %s13
    // Predicated region
    $region53: #{forward.20} parent=5 // pred_check
      %p1590 = pneg %p1589
    $region54: #{forward.20} parent=5 // pred_check_branch
      %1592 = sbr.rel (%p1590) target = $region56
    $region55: #{forward.20} parent=5 // pred_region
      %s1593 = ssub.s32 %s13, 2
      // Predicated region
      $region57: #{forward.20} parent=55 // pred_check
        %p1594 = pneg %p196
      $region58: #{forward.20} parent=55 // pred_check_branch
        %1596 = sbr.rel (%p1594) target = $region60
      $region59: #{forward.20} parent=55 // pred_region
        %s1597 = smul.u32 16, %s27
        %p1598 = scmp.lt.s32.totalorder %s26, 1
        %s1599 = scalar_select %p1598, %s26, 1
        %p1600 = scmp.lt.s32.totalorder %s1597, 31
        %s1601 = scalar_select %p1600, %s1597, 31
        %s1602 = smul.addr %s1599, 32
        %s1603 = sadd.s32 %s1601, %s1602
        %s1604 = smul.addr %s1603, 8
        %s1605 = scalar_lea.vmem %s5, %s1604
      $region60: #{forward.20} parent=55 // pred_fallthru
        _
    $region56: #{forward.20} parent=5 // pred_fallthru
      _
  $region6: #{forward.20} parent=0 // loop_footer
    %s17 = sadd.s32 1, %s13
  $region7: #{forward.20} parent=0 // loop_footer_branch
    %12 = sbr.rel target = $region3
  $region8: #{forward.20} parent=0 // loop_exit
    _

// kernel: forward.22
$region0: #{forward.22}
  #allocation0 [shape = 'u32[]', space=smem, size = 0x4, offset = 0x4, fixed_abs, tag = 'smem constant byte address 0x4 - core index']
  #allocation1 [shape = 'u32[144,128]{1,0:T(1,128)}', space=vmem, size = 0x12000, scoped, tag = 'internal scratch']
  #allocation2 [shape = 'f32[128,128]{1,0:T(8,128)}', space=vmem, size = 0x10000, scoped, tag = 'scratch operand']
  %s0 = inlined_call_operand.vmem [shape: bf16[128,64], index: 0, kind: input, shape index: {}]
  %s1 = inlined_call_operand.vmem [shape: bf16[64,128], index: 1, kind: input, shape index: {}]
  %s2 = inlined_call_operand.vmem [shape: f32[1,128], index: 2, kind: input, shape index: {}]
  %s3 = inlined_call_operand.vmem [shape: f32[128,128], index: 3, kind: output, shape index: {}]
  %s4 = sld [smem:[#allocation0]]
  $region30: #{forward.22} parent=0
    _
  %s6 = ssub.s32 1, %s4
  %s7 = scalar_select 0, %s6, %s4
  // Predicated region
  $region2: #{forward.22} parent=0 // pred_check
    _
  $region3: #{forward.22} parent=0 // pred_check_branch
    %9 = sbr.rel (0) target = $region5
  $region4: #{forward.22} parent=0 // pred_region
    _
  $region5: #{forward.22} parent=0 // pred_fallthru
    _
  // Predicated region
  $region6: #{forward.22} parent=0 // pred_check
    _
  $region7: #{forward.22} parent=0 // pred_check_branch
    %11 = sbr.rel (0) target = $region9
  $region8: #{forward.22} parent=0 // pred_region
    _
  $region9: #{forward.22} parent=0 // pred_fallthru
    _
  // Predicated region
  $region10: #{forward.22} parent=0 // pred_check
    _
  $region11: #{forward.22} parent=0 // pred_check_branch
    %13 = sbr.rel (0) target = $region13
  $region12: #{forward.22} parent=0 // pred_region
    _
  $region13: #{forward.22} parent=0 // pred_fallthru
    _
  %p15 = scmp.eq.s32.totalorder 0, 0
  // Predicated region
  $region14: #{forward.22} parent=0 // pred_check
    %p16 = pneg %p15
  $region15: #{forward.22} parent=0 // pred_check_branch
    %18 = sbr.rel (%p16) target = $region17
  $region16: #{forward.22} parent=0 // pred_region
    %19 = vst [vmem:[#allocation2] sm:$0xff] 0.0
    %20 = vst [vmem:[#allocation2 + $0x8] sm:$0xff] 0.0
    %21 = vst [vmem:[#allocation2 + $0x10] sm:$0xff] 0.0
    %22 = vst [vmem:[#allocation2 + $0x18] sm:$0xff] 0.0
    %23 = vst [vmem:[#allocation2 + $0x20] sm:$0xff] 0.0
    %24 = vst [vmem:[#allocation2 + $0x28] sm:$0xff] 0.0
    %25 = vst [vmem:[#allocation2 + $0x30] sm:$0xff] 0.0
    %26 = vst [vmem:[#allocation2 + $0x38] sm:$0xff] 0.0
    %27 = vst [vmem:[#allocation2 + $0x40] sm:$0xff] 0.0
    %28 = vst [vmem:[#allocation2 + $0x48] sm:$0xff] 0.0
    %29 = vst [vmem:[#allocation2 + $0x50] sm:$0xff] 0.0
    %30 = vst [vmem:[#allocation2 + $0x58] sm:$0xff] 0.0
    %31 = vst [vmem:[#allocation2 + $0x60] sm:$0xff] 0.0
    %32 = vst [vmem:[#allocation2 + $0x68] sm:$0xff] 0.0
    %33 = vst [vmem:[#allocation2 + $0x70] sm:$0xff] 0.0
    %34 = vst [vmem:[#allocation2 + $0x78] sm:$0xff] 0.0
  $region17: #{forward.22} parent=0 // pred_fallthru
    _
  %v35 = vld [vmem:[#allocation2] sm:$0xff]
  %v36 = vld [vmem:[#allocation2 + $0x8] sm:$0xff]
  %v37 = vld [vmem:[#allocation2 + $0x10] sm:$0xff]
  %v38 = vld [vmem:[#allocation2 + $0x18] sm:$0xff]
  %v39 = vld [vmem:[#allocation2 + $0x20] sm:$0xff]
  %v40 = vld [vmem:[#allocation2 + $0x28] sm:$0xff]
  %v41 = vld [vmem:[#allocation2 + $0x30] sm:$0xff]
  %v42 = vld [vmem:[#allocation2 + $0x38] sm:$0xff]
  %v43 = vld [vmem:[#allocation2 + $0x40] sm:$0xff]
  %v44 = vld [vmem:[#allocation2 + $0x48] sm:$0xff]
  %v45 = vld [vmem:[#allocation2 + $0x50] sm:$0xff]
  %v46 = vld [vmem:[#allocation2 + $0x58] sm:$0xff]
  %v47 = vld [vmem:[#allocation2 + $0x60] sm:$0xff]
  %v48 = vld [vmem:[#allocation2 + $0x68] sm:$0xff]
  %v49 = vld [vmem:[#allocation2 + $0x70] sm:$0xff]
  %v50 = vld [vmem:[#allocation2 + $0x78] sm:$0xff]
  %v51 = vld [vmem:[%s0] sm:$0xf]
  %v52 = vld [vmem:[%s0 + $0x4] sm:$0xf]
  %v53 = vld [vmem:[%s0 + $0x8] sm:$0xf]
  %v54 = vld [vmem:[%s0 + $0xc] sm:$0xf]
  %v55 = vld [vmem:[%s0 + $0x10] sm:$0xf]
  %v56 = vld [vmem:[%s0 + $0x14] sm:$0xf]
  %v57 = vld [vmem:[%s0 + $0x18] sm:$0xf]
  %v58 = vld [vmem:[%s0 + $0x1c] sm:$0xf]
  %v59 = vld [vmem:[%s0 + $0x20] sm:$0xf]
  %v60 = vld [vmem:[%s0 + $0x24] sm:$0xf]
  %v61 = vld [vmem:[%s0 + $0x28] sm:$0xf]
  %v62 = vld [vmem:[%s0 + $0x2c] sm:$0xf]
  %v63 = vld [vmem:[%s0 + $0x30] sm:$0xf]
  %v64 = vld [vmem:[%s0 + $0x34] sm:$0xf]
  %v65 = vld [vmem:[%s0 + $0x38] sm:$0xf]
  %v66 = vld [vmem:[%s0 + $0x3c] sm:$0xf]
  %v67 = vld [vmem:[%s1] sm:$0xf]
  %v68 = vld [vmem:[%s1 + $0x4] sm:$0xf]
  %v69 = vld [vmem:[%s1 + $0x8] sm:$0xf]
  %v70 = vld [vmem:[%s1 + $0xc] sm:$0xf]
  %v71 = vld [vmem:[%s1 + $0x10] sm:$0xf]
  %v72 = vld [vmem:[%s1 + $0x14] sm:$0xf]
  %v73 = vld [vmem:[%s1 + $0x18] sm:$0xf]
  %v74 = vld [vmem:[%s1 + $0x1c] sm:$0xf]
  %v91 = vunpack.c.l.b16 %v51
  %v92 = vunpack.c.l.b16 %v52
  %v93 = vunpack.c.l.b16 %v53
  %v94 = vunpack.c.l.b16 %v54
  %v95 = vunpack.c.l.b16 %v55
  %v96 = vunpack.c.l.b16 %v56
  %v97 = vunpack.c.l.b16 %v57
  %v98 = vunpack.c.l.b16 %v58
  %v99 = vunpack.c.l.b16 %v59
  %v100 = vunpack.c.l.b16 %v60
  %v101 = vunpack.c.l.b16 %v61
  %v102 = vunpack.c.l.b16 %v62
  %v103 = vunpack.c.l.b16 %v63
  %v104 = vunpack.c.l.b16 %v64
  %v105 = vunpack.c.l.b16 %v65
  %v106 = vunpack.c.l.b16 %v66
  %v107 = vpack.c.b16 %v92, %v91
  %v108 = vpack.c.b16 %v94, %v93
  %v109 = vpack.c.b16 %v96, %v95
  %v110 = vpack.c.b16 %v98, %v97
  %v111 = vpack.c.b16 %v100, %v99
  %v112 = vpack.c.b16 %v102, %v101
  %v113 = vpack.c.b16 %v104, %v103
  %v114 = vpack.c.b16 %v106, %v105
  %v123 = vunpack.c.l.b16 %v67
  %v124 = vunpack.c.l.b16 %v68
  %v125 = vunpack.c.l.b16 %v69
  %v126 = vunpack.c.l.b16 %v70
  %v127 = vunpack.c.l.b16 %v71
  %v128 = vunpack.c.l.b16 %v72
  %v129 = vunpack.c.l.b16 %v73
  %v130 = vunpack.c.l.b16 %v74
  %v131 = vpack.c.b16 %v124, %v123
  %v132 = vpack.c.b16 %v126, %v125
  %v133 = vpack.c.b16 %v128, %v127
  %v134 = vpack.c.b16 %v130, %v129
  %vm139 = vcmask 523264
  %v141 = vsel %vm139, %v107, 0
  %v144 = vsel %vm139, %v108, 0
  %v147 = vsel %vm139, %v109, 0
  %v150 = vsel %vm139, %v110, 0
  %v153 = vsel %vm139, %v111, 0
  %v156 = vsel %vm139, %v112, 0
  %v159 = vsel %vm139, %v113, 0
  %v162 = vsel %vm139, %v114, 0
  %164 = vmatprep.subr.bf16.mxu0 0
  %165 = vmatpush1.bf16.msra.mxu0 0
  %166 = vmatprep.subr.bf16.mxu0 0
  %167 = vmatpush1.bf16.msra.mxu0 0
  %168 = vmatprep.subr.bf16.mxu0 0
  %169 = vmatpush1.bf16.msra.mxu0 0
  %170 = vmatprep.subr.bf16.mxu0 0
  %171 = vmatpush1.bf16.msra.mxu0 0
  %172 = vmatprep.subr.bf16.mxu0 0
  %173 = vmatpush1.bf16.msra.mxu0 %v134
  %174 = vmatprep.subr.bf16.mxu0 0
  %175 = vmatpush1.bf16.msra.mxu0 %v133
  %176 = vmatprep.subr.bf16.mxu0 0
  %177 = vmatpush1.bf16.msra.mxu0 %v132
  %178 = vmatprep.subr.bf16.mxu0 0
  %179 = vmatpush1.bf16.msra.mxu0 %v131
  %180 = vmatprep.subr.bf16.mxu0 0
  %181 = vmatpush2.bf16.msra.mxu0 0
  %182 = vmatprep.subr.bf16.mxu0 0
  %183 = vmatpush2.bf16.msra.mxu0 0
  %184 = vmatprep.subr.bf16.mxu0 0
  %185 = vmatpush2.bf16.msra.mxu0 0
  %186 = vmatprep.subr.bf16.mxu0 0
  %187 = vmatpush2.bf16.msra.mxu0 0
  %188 = vmatprep.subr.bf16.mxu0 0
  %189 = vmatpush2.bf16.msra.mxu0 0
  %190 = vmatprep.subr.bf16.mxu0 0
  %191 = vmatpush2.bf16.msra.mxu0 0
  %192 = vmatprep.subr.bf16.mxu0 0
  %193 = vmatpush2.bf16.msra.mxu0 0
  %194 = vmatprep.subr.bf16.mxu0 0
  %195 = vmatpush2.bf16.msra.mxu0 0
  %196 = vmatprep.mubr.bf16.mxu0 0
  %197 = vmatmul.mubr.bf16.gmra.mxu0 %v141
  %v198 = vpop.f32.mrf.mxu0
  %v199 = vadd.f32 0.0, %v198
  %v200 = vpop.f32.mrf.mxu0
  %v201 = vpop.f32.mrf.mxu0
  %v202 = vadd.f32 0.0, %v201
  %v203 = vpop.f32.mrf.mxu0
  %204 = vmatprep.mubr.bf16.mxu0 0
  %205 = vmatmul.mubr.bf16.gmra.mxu0 %v144
  %v206 = vpop.f32.mrf.mxu0
  %v207 = vadd.f32 0.0, %v206
  %v208 = vpop.f32.mrf.mxu0
  %v209 = vpop.f32.mrf.mxu0
  %v210 = vadd.f32 0.0, %v209
  %v211 = vpop.f32.mrf.mxu0
  %212 = vmatprep.mubr.bf16.mxu0 0
  %213 = vmatmul.mubr.bf16.gmra.mxu0 %v147
  %v214 = vpop.f32.mrf.mxu0
  %v215 = vadd.f32 0.0, %v214
  %v216 = vpop.f32.mrf.mxu0
  %v217 = vpop.f32.mrf.mxu0
  %v218 = vadd.f32 0.0, %v217
  %v219 = vpop.f32.mrf.mxu0
  %220 = vmatprep.mubr.bf16.mxu0 0
  %221 = vmatmul.mubr.bf16.gmra.mxu0 %v150
  %v222 = vpop.f32.mrf.mxu0
  %v223 = vadd.f32 0.0, %v222
  %v224 = vpop.f32.mrf.mxu0
  %v225 = vpop.f32.mrf.mxu0
  %v226 = vadd.f32 0.0, %v225
  %v227 = vpop.f32.mrf.mxu0
  %228 = vmatprep.mubr.bf16.mxu0 0
  %229 = vmatmul.mubr.bf16.gmra.mxu0 %v153
  %v230 = vpop.f32.mrf.mxu0
  %v231 = vadd.f32 0.0, %v230
  %v232 = vpop.f32.mrf.mxu0
  %v233 = vpop.f32.mrf.mxu0
  %v234 = vadd.f32 0.0, %v233
  %v235 = vpop.f32.mrf.mxu0
  %236 = vmatprep.mubr.bf16.mxu0 0
  %237 = vmatmul.mubr.bf16.gmra.mxu0 %v156
  %v238 = vpop.f32.mrf.mxu0
  %v239 = vadd.f32 0.0, %v238
  %v240 = vpop.f32.mrf.mxu0
  %v241 = vpop.f32.mrf.mxu0
  %v242 = vadd.f32 0.0, %v241
  %v243 = vpop.f32.mrf.mxu0
  %244 = vmatprep.mubr.bf16.mxu0 0
  %245 = vmatmul.mubr.bf16.gmra.mxu0 %v159
  %v246 = vpop.f32.mrf.mxu0
  %v247 = vadd.f32 0.0, %v246
  %v248 = vpop.f32.mrf.mxu0
  %v249 = vpop.f32.mrf.mxu0
  %v250 = vadd.f32 0.0, %v249
  %v251 = vpop.f32.mrf.mxu0
  %252 = vmatprep.mubr.bf16.mxu0 0
  %253 = vmatmul.mubr.bf16.gmra.mxu0 %v162
  %v254 = vpop.f32.mrf.mxu0
  %v255 = vadd.f32 0.0, %v254
  %v256 = vpop.f32.mrf.mxu0
  %v257 = vpop.f32.mrf.mxu0
  %v258 = vadd.f32 0.0, %v257
  %v259 = vpop.f32.mrf.mxu0
  %260 = vdwg.mxu0
  %v261 = vadd.f32 %v35, %v199
  %v262 = vadd.f32 %v36, %v202
  %v263 = vadd.f32 %v37, %v207
  %v264 = vadd.f32 %v38, %v210
  %v265 = vadd.f32 %v39, %v215
  %v266 = vadd.f32 %v40, %v218
  %v267 = vadd.f32 %v41, %v223
  %v268 = vadd.f32 %v42, %v226
  %v269 = vadd.f32 %v43, %v231
  %v270 = vadd.f32 %v44, %v234
  %v271 = vadd.f32 %v45, %v239
  %v272 = vadd.f32 %v46, %v242
  %v273 = vadd.f32 %v47, %v247
  %v274 = vadd.f32 %v48, %v250
  %v275 = vadd.f32 %v49, %v255
  %v276 = vadd.f32 %v50, %v258
  %277 = vst [vmem:[#allocation2] sm:$0xff] %v261
  %278 = vst [vmem:[#allocation2 + $0x8] sm:$0xff] %v262
  %279 = vst [vmem:[#allocation2 + $0x10] sm:$0xff] %v263
  %280 = vst [vmem:[#allocation2 + $0x18] sm:$0xff] %v264
  %281 = vst [vmem:[#allocation2 + $0x20] sm:$0xff] %v265
  %282 = vst [vmem:[#allocation2 + $0x28] sm:$0xff] %v266
  %283 = vst [vmem:[#allocation2 + $0x30] sm:$0xff] %v267
  %284 = vst [vmem:[#allocation2 + $0x38] sm:$0xff] %v268
  %285 = vst [vmem:[#allocation2 + $0x40] sm:$0xff] %v269
  %286 = vst [vmem:[#allocation2 + $0x48] sm:$0xff] %v270
  %287 = vst [vmem:[#allocation2 + $0x50] sm:$0xff] %v271
  %288 = vst [vmem:[#allocation2 + $0x58] sm:$0xff] %v272
  %289 = vst [vmem:[#allocation2 + $0x60] sm:$0xff] %v273
  %290 = vst [vmem:[#allocation2 + $0x68] sm:$0xff] %v274
  %291 = vst [vmem:[#allocation2 + $0x70] sm:$0xff] %v275
  %292 = vst [vmem:[#allocation2 + $0x78] sm:$0xff] %v276
  // Predicated region
  $region18: #{forward.22} parent=0 // pred_check
    %p293 = pneg %p15
  $region19: #{forward.22} parent=0 // pred_check_branch
    %295 = sbr.rel (%p293) target = $region21
  $region20: #{forward.22} parent=0 // pred_region
    %v296 = vld [vmem:[#allocation2] sm:$0xff]
    %v297 = vld [vmem:[#allocation2 + $0x8] sm:$0xff]
    %v298 = vld [vmem:[#allocation2 + $0x10] sm:$0xff]
    %v299 = vld [vmem:[#allocation2 + $0x18] sm:$0xff]
    %v300 = vld [vmem:[#allocation2 + $0x20] sm:$0xff]
    %v301 = vld [vmem:[#allocation2 + $0x28] sm:$0xff]
    %v302 = vld [vmem:[#allocation2 + $0x30] sm:$0xff]
    %v303 = vld [vmem:[#allocation2 + $0x38] sm:$0xff]
    %v304 = vld [vmem:[#allocation2 + $0x40] sm:$0xff]
    %v305 = vld [vmem:[#allocation2 + $0x48] sm:$0xff]
    %v306 = vld [vmem:[#allocation2 + $0x50] sm:$0xff]
    %v307 = vld [vmem:[#allocation2 + $0x58] sm:$0xff]
    %v308 = vld [vmem:[#allocation2 + $0x60] sm:$0xff]
    %v309 = vld [vmem:[#allocation2 + $0x68] sm:$0xff]
    %v310 = vld [vmem:[#allocation2 + $0x70] sm:$0xff]
    %v311 = vld [vmem:[#allocation2 + $0x78] sm:$0xff]
    %v312 = vld [vmem:[%s2] sm:$0x1]
    %v314 = vlaneseq
    %v315 = vshrl.u32 %v314, 7
    %v316 = vsub.s32 0, %v315
    %v317 = vrot.slane %v312, %v316
    %v319 = vadd.f32 %v296, %v317
    %v320 = vadd.f32 %v297, %v317
    %v321 = vadd.f32 %v298, %v317
    %v322 = vadd.f32 %v299, %v317
    %v323 = vadd.f32 %v300, %v317
    %v324 = vadd.f32 %v301, %v317
    %v325 = vadd.f32 %v302, %v317
    %v326 = vadd.f32 %v303, %v317
    %v327 = vadd.f32 %v304, %v317
    %v328 = vadd.f32 %v305, %v317
    %v329 = vadd.f32 %v306, %v317
    %v330 = vadd.f32 %v307, %v317
    %v331 = vadd.f32 %v308, %v317
    %v332 = vadd.f32 %v309, %v317
    %v333 = vadd.f32 %v310, %v317
    %v334 = vadd.f32 %v311, %v317
    %335 = vst [vmem:[%s3] sm:$0xff] %v319
    %336 = vst [vmem:[%s3 + $0x8] sm:$0xff] %v320
    %337 = vst [vmem:[%s3 + $0x10] sm:$0xff] %v321
    %338 = vst [vmem:[%s3 + $0x18] sm:$0xff] %v322
    %339 = vst [vmem:[%s3 + $0x20] sm:$0xff] %v323
    %340 = vst [vmem:[%s3 + $0x28] sm:$0xff] %v324
    %341 = vst [vmem:[%s3 + $0x30] sm:$0xff] %v325
    %342 = vst [vmem:[%s3 + $0x38] sm:$0xff] %v326
    %343 = vst [vmem:[%s3 + $0x40] sm:$0xff] %v327
    %344 = vst [vmem:[%s3 + $0x48] sm:$0xff] %v328
    %345 = vst [vmem:[%s3 + $0x50] sm:$0xff] %v329
    %346 = vst [vmem:[%s3 + $0x58] sm:$0xff] %v330
    %347 = vst [vmem:[%s3 + $0x60] sm:$0xff] %v331
    %348 = vst [vmem:[%s3 + $0x68] sm:$0xff] %v332
    %349 = vst [vmem:[%s3 + $0x70] sm:$0xff] %v333
    %350 = vst [vmem:[%s3 + $0x78] sm:$0xff] %v334
  $region21: #{forward.22} parent=0 // pred_fallthru
    _
  // Predicated region
  $region22: #{forward.22} parent=0 // pred_check
    _
  $region23: #{forward.22} parent=0 // pred_check_branch
    %352 = sbr.rel (0) target = $region25
  $region24: #{forward.22} parent=0 // pred_region
    _
  $region25: #{forward.22} parent=0 // pred_fallthru
    _
  // Predicated region
  $region26: #{forward.22} parent=0 // pred_check
    _
  $region27: #{forward.22} parent=0 // pred_check_branch
    %354 = sbr.rel (0) target = $region29
  $region28: #{forward.22} parent=0 // pred_region
    _
  $region29: #{forward.22} parent=0 // pred_fallthru
    _

// kernel: forward.21
$region0: #{forward.21}
  #allocation0 [shape = 'u32[]', space=smem, size = 0x4, offset = 0x4, fixed_abs, tag = 'smem constant byte address 0x4 - core index']
  #allocation1 [shape = 'u32[144,128]{1,0:T(1,128)}', space=vmem, size = 0x12000, scoped, tag = 'internal scratch']
  #allocation2 [shape = 'f32[128,128]{1,0:T(8,128)}', space=vmem, size = 0x10000, scoped, tag = 'scratch operand']
  %s0 = inlined_call_operand.vmem [shape: bf16[128,288], index: 0, kind: input, shape index: {}]
  %s1 = inlined_call_operand.vmem [shape: bf16[288,128], index: 1, kind: input, shape index: {}]
  %s2 = inlined_call_operand.vmem [shape: f32[1,128], index: 2, kind: input, shape index: {}]
  %s3 = inlined_call_operand.vmem [shape: f32[128,128], index: 3, kind: output, shape index: {}]
  %s4 = sld [smem:[#allocation0]]
  $region30: #{forward.21} parent=0
    _
  %s6 = ssub.s32 1, %s4
  %s7 = scalar_select 0, %s6, %s4
  // Predicated region
  $region2: #{forward.21} parent=0 // pred_check
    _
  $region3: #{forward.21} parent=0 // pred_check_branch
    %9 = sbr.rel (0) target = $region5
  $region4: #{forward.21} parent=0 // pred_region
    _
  $region5: #{forward.21} parent=0 // pred_fallthru
    _
  // Predicated region
  $region6: #{forward.21} parent=0 // pred_check
    _
  $region7: #{forward.21} parent=0 // pred_check_branch
    %11 = sbr.rel (0) target = $region9
  $region8: #{forward.21} parent=0 // pred_region
    _
  $region9: #{forward.21} parent=0 // pred_fallthru
    _
  // Predicated region
  $region10: #{forward.21} parent=0 // pred_check
    _
  $region11: #{forward.21} parent=0 // pred_check_branch
    %13 = sbr.rel (0) target = $region13
  $region12: #{forward.21} parent=0 // pred_region
    _
  $region13: #{forward.21} parent=0 // pred_fallthru
    _
  %p15 = scmp.eq.s32.totalorder 0, 0
  // Predicated region
  $region14: #{forward.21} parent=0 // pred_check
    %p16 = pneg %p15
  $region15: #{forward.21} parent=0 // pred_check_branch
    %18 = sbr.rel (%p16) target = $region17
  $region16: #{forward.21} parent=0 // pred_region
    %19 = vst [vmem:[#allocation2] sm:$0xff] 0.0
    %20 = vst [vmem:[#allocation2 + $0x8] sm:$0xff] 0.0
    %21 = vst [vmem:[#allocation2 + $0x10] sm:$0xff] 0.0
    %22 = vst [vmem:[#allocation2 + $0x18] sm:$0xff] 0.0
    %23 = vst [vmem:[#allocation2 + $0x20] sm:$0xff] 0.0
    %24 = vst [vmem:[#allocation2 + $0x28] sm:$0xff] 0.0
    %25 = vst [vmem:[#allocation2 + $0x30] sm:$0xff] 0.0
    %26 = vst [vmem:[#allocation2 + $0x38] sm:$0xff] 0.0
    %27 = vst [vmem:[#allocation2 + $0x40] sm:$0xff] 0.0
    %28 = vst [vmem:[#allocation2 + $0x48] sm:$0xff] 0.0
    %29 = vst [vmem:[#allocation2 + $0x50] sm:$0xff] 0.0
    %30 = vst [vmem:[#allocation2 + $0x58] sm:$0xff] 0.0
    %31 = vst [vmem:[#allocation2 + $0x60] sm:$0xff] 0.0
    %32 = vst [vmem:[#allocation2 + $0x68] sm:$0xff] 0.0
    %33 = vst [vmem:[#allocation2 + $0x70] sm:$0xff] 0.0
    %34 = vst [vmem:[#allocation2 + $0x78] sm:$0xff] 0.0
  $region17: #{forward.21} parent=0 // pred_fallthru
    _
  %v35 = vld [vmem:[#allocation2] sm:$0xff]
  %v36 = vld [vmem:[#allocation2 + $0x8] sm:$0xff]
  %v37 = vld [vmem:[#allocation2 + $0x10] sm:$0xff]
  %v38 = vld [vmem:[#allocation2 + $0x18] sm:$0xff]
  %v39 = vld [vmem:[#allocation2 + $0x20] sm:$0xff]
  %v40 = vld [vmem:[#allocation2 + $0x28] sm:$0xff]
  %v41 = vld [vmem:[#allocation2 + $0x30] sm:$0xff]
  %v42 = vld [vmem:[#allocation2 + $0x38] sm:$0xff]
  %v43 = vld [vmem:[#allocation2 + $0x40] sm:$0xff]
  %v44 = vld [vmem:[#allocation2 + $0x48] sm:$0xff]
  %v45 = vld [vmem:[#allocation2 + $0x50] sm:$0xff]
  %v46 = vld [vmem:[#allocation2 + $0x58] sm:$0xff]
  %v47 = vld [vmem:[#allocation2 + $0x60] sm:$0xff]
  %v48 = vld [vmem:[#allocation2 + $0x68] sm:$0xff]
  %v49 = vld [vmem:[#allocation2 + $0x70] sm:$0xff]
  %v50 = vld [vmem:[#allocation2 + $0x78] sm:$0xff]
  %v51 = vld [vmem:[%s0] sm:$0xff]
  %v52 = vld [vmem:[%s0 + $0x8] sm:$0xf]
  %v53 = vld [vmem:[%s0 + $0xc] sm:$0xff]
  %v54 = vld [vmem:[%s0 + $0x14] sm:$0xf]
  %v55 = vld [vmem:[%s0 + $0x18] sm:$0xff]
  %v56 = vld [vmem:[%s0 + $0x20] sm:$0xf]
  %v57 = vld [vmem:[%s0 + $0x24] sm:$0xff]
  %v58 = vld [vmem:[%s0 + $0x2c] sm:$0xf]
  %v59 = vld [vmem:[%s0 + $0x30] sm:$0xff]
  %v60 = vld [vmem:[%s0 + $0x38] sm:$0xf]
  %v61 = vld [vmem:[%s0 + $0x3c] sm:$0xff]
  %v62 = vld [vmem:[%s0 + $0x44] sm:$0xf]
  %v63 = vld [vmem:[%s0 + $0x48] sm:$0xff]
  %v64 = vld [vmem:[%s0 + $0x50] sm:$0xf]
  %v65 = vld [vmem:[%s0 + $0x54] sm:$0xff]
  %v66 = vld [vmem:[%s0 + $0x5c] sm:$0xf]
  %v67 = vld [vmem:[%s0 + $0x60] sm:$0xff]
  %v68 = vld [vmem:[%s0 + $0x68] sm:$0xf]
  %v69 = vld [vmem:[%s0 + $0x6c] sm:$0xff]
  %v70 = vld [vmem:[%s0 + $0x74] sm:$0xf]
  %v71 = vld [vmem:[%s0 + $0x78] sm:$0xff]
  %v72 = vld [vmem:[%s0 + $0x80] sm:$0xf]
  %v73 = vld [vmem:[%s0 + $0x84] sm:$0xff]
  %v74 = vld [vmem:[%s0 + $0x8c] sm:$0xf]
  %v75 = vld [vmem:[%s0 + $0x90] sm:$0xff]
  %v76 = vld [vmem:[%s0 + $0x98] sm:$0xf]
  %v77 = vld [vmem:[%s0 + $0x9c] sm:$0xff]
  %v78 = vld [vmem:[%s0 + $0xa4] sm:$0xf]
  %v79 = vld [vmem:[%s0 + $0xa8] sm:$0xff]
  %v80 = vld [vmem:[%s0 + $0xb0] sm:$0xf]
  %v81 = vld [vmem:[%s0 + $0xb4] sm:$0xff]
  %v82 = vld [vmem:[%s0 + $0xbc] sm:$0xf]
  %v83 = vld [vmem:[%s1] sm:$0xf]
  %v84 = vld [vmem:[%s1 + $0x4] sm:$0xf]
  %v85 = vld [vmem:[%s1 + $0x8] sm:$0xf]
  %v86 = vld [vmem:[%s1 + $0xc] sm:$0xf]
  %v87 = vld [vmem:[%s1 + $0x10] sm:$0xf]
  %v88 = vld [vmem:[%s1 + $0x14] sm:$0xf]
  %v89 = vld [vmem:[%s1 + $0x18] sm:$0xf]
  %v90 = vld [vmem:[%s1 + $0x1c] sm:$0xf]
  %v91 = vld [vmem:[%s1 + $0x20] sm:$0xf]
  %v92 = vld [vmem:[%s1 + $0x24] sm:$0xf]
  %v93 = vld [vmem:[%s1 + $0x28] sm:$0xf]
  %v94 = vld [vmem:[%s1 + $0x2c] sm:$0xf]
  %v95 = vld [vmem:[%s1 + $0x30] sm:$0xf]
  %v96 = vld [vmem:[%s1 + $0x34] sm:$0xf]
  %v97 = vld [vmem:[%s1 + $0x38] sm:$0xf]
  %v98 = vld [vmem:[%s1 + $0x3c] sm:$0xf]
  %v99 = vld [vmem:[%s1 + $0x40] sm:$0xf]
  %v100 = vld [vmem:[%s1 + $0x44] sm:$0xf]
  %v101 = vld [vmem:[%s1 + $0x48] sm:$0xf]
  %v102 = vld [vmem:[%s1 + $0x4c] sm:$0xf]
  %v103 = vld [vmem:[%s1 + $0x50] sm:$0xf]
  %v104 = vld [vmem:[%s1 + $0x54] sm:$0xf]
  %v105 = vld [vmem:[%s1 + $0x58] sm:$0xf]
  %v106 = vld [vmem:[%s1 + $0x5c] sm:$0xf]
  %v107 = vld [vmem:[%s1 + $0x60] sm:$0xf]
  %v108 = vld [vmem:[%s1 + $0x64] sm:$0xf]
  %v109 = vld [vmem:[%s1 + $0x68] sm:$0xf]
  %v110 = vld [vmem:[%s1 + $0x6c] sm:$0xf]
  %v111 = vld [vmem:[%s1 + $0x70] sm:$0xf]
  %v112 = vld [vmem:[%s1 + $0x74] sm:$0xf]
  %v113 = vld [vmem:[%s1 + $0x78] sm:$0xf]
  %v114 = vld [vmem:[%s1 + $0x7c] sm:$0xf]
  %v115 = vld [vmem:[%s1 + $0x80] sm:$0xf]
  %v116 = vld [vmem:[%s1 + $0x84] sm:$0xf]
  %v117 = vld [vmem:[%s1 + $0x88] sm:$0xf]
  %v118 = vld [vmem:[%s1 + $0x8c] sm:$0xf]
  %v151 = vunpack.c.l.b16 %v51
  %v152 = vunpack.c.h.b16 %v51
  %v153 = vunpack.c.l.b16 %v52
  %v154 = vunpack.c.l.b16 %v53
  %v155 = vunpack.c.h.b16 %v53
  %v156 = vunpack.c.l.b16 %v54
  %v157 = vunpack.c.l.b16 %v55
  %v158 = vunpack.c.h.b16 %v55
  %v159 = vunpack.c.l.b16 %v56
  %v160 = vunpack.c.l.b16 %v57
  %v161 = vunpack.c.h.b16 %v57
  %v162 = vunpack.c.l.b16 %v58
  %v163 = vunpack.c.l.b16 %v59
  %v164 = vunpack.c.h.b16 %v59
  %v165 = vunpack.c.l.b16 %v60
  %v166 = vunpack.c.l.b16 %v61
  %v167 = vunpack.c.h.b16 %v61
  %v168 = vunpack.c.l.b16 %v62
  %v169 = vunpack.c.l.b16 %v63
  %v170 = vunpack.c.h.b16 %v63
  %v171 = vunpack.c.l.b16 %v64
  %v172 = vunpack.c.l.b16 %v65
  %v173 = vunpack.c.h.b16 %v65
  %v174 = vunpack.c.l.b16 %v66
  %v175 = vunpack.c.l.b16 %v67
  %v176 = vunpack.c.h.b16 %v67
  %v177 = vunpack.c.l.b16 %v68
  %v178 = vunpack.c.l.b16 %v69
  %v179 = vunpack.c.h.b16 %v69
  %v180 = vunpack.c.l.b16 %v70
  %v181 = vunpack.c.l.b16 %v71
  %v182 = vunpack.c.h.b16 %v71
  %v183 = vunpack.c.l.b16 %v72
  %v184 = vunpack.c.l.b16 %v73
  %v185 = vunpack.c.h.b16 %v73
  %v186 = vunpack.c.l.b16 %v74
  %v187 = vunpack.c.l.b16 %v75
  %v188 = vunpack.c.h.b16 %v75
  %v189 = vunpack.c.l.b16 %v76
  %v190 = vunpack.c.l.b16 %v77
  %v191 = vunpack.c.h.b16 %v77
  %v192 = vunpack.c.l.b16 %v78
  %v193 = vunpack.c.l.b16 %v79
  %v194 = vunpack.c.h.b16 %v79
  %v195 = vunpack.c.l.b16 %v80
  %v196 = vunpack.c.l.b16 %v81
  %v197 = vunpack.c.h.b16 %v81
  %v198 = vunpack.c.l.b16 %v82
  %v199 = vpack.c.b16 %v154, %v151
  %v200 = vpack.c.b16 %v155, %v152
  %v201 = vpack.c.b16 %v156, %v153
  %v202 = vpack.c.b16 %v160, %v157
  %v203 = vpack.c.b16 %v161, %v158
  %v204 = vpack.c.b16 %v162, %v159
  %v205 = vpack.c.b16 %v166, %v163
  %v206 = vpack.c.b16 %v167, %v164
  %v207 = vpack.c.b16 %v168, %v165
  %v208 = vpack.c.b16 %v172, %v169
  %v209 = vpack.c.b16 %v173, %v170
  %v210 = vpack.c.b16 %v174, %v171
  %v211 = vpack.c.b16 %v178, %v175
  %v212 = vpack.c.b16 %v179, %v176
  %v213 = vpack.c.b16 %v180, %v177
  %v214 = vpack.c.b16 %v184, %v181
  %v215 = vpack.c.b16 %v185, %v182
  %v216 = vpack.c.b16 %v186, %v183
  %v217 = vpack.c.b16 %v190, %v187
  %v218 = vpack.c.b16 %v191, %v188
  %v219 = vpack.c.b16 %v192, %v189
  %v220 = vpack.c.b16 %v196, %v193
  %v221 = vpack.c.b16 %v197, %v194
  %v222 = vpack.c.b16 %v198, %v195
  %v275 = vunpack.c.l.b16 %v83
  %v276 = vunpack.c.l.b16 %v84
  %v277 = vunpack.c.l.b16 %v85
  %v278 = vunpack.c.l.b16 %v86
  %v279 = vunpack.c.l.b16 %v87
  %v280 = vunpack.c.l.b16 %v88
  %v281 = vunpack.c.l.b16 %v89
  %v282 = vunpack.c.l.b16 %v90
  %v283 = vunpack.c.l.b16 %v91
  %v284 = vunpack.c.l.b16 %v92
  %v285 = vunpack.c.l.b16 %v93
  %v286 = vunpack.c.l.b16 %v94
  %v287 = vunpack.c.l.b16 %v95
  %v288 = vunpack.c.l.b16 %v96
  %v289 = vunpack.c.l.b16 %v97
  %v290 = vunpack.c.l.b16 %v98
  %v291 = vunpack.c.l.b16 %v99
  %v292 = vunpack.c.l.b16 %v100
  %v293 = vunpack.c.l.b16 %v101
  %v294 = vunpack.c.l.b16 %v102
  %v295 = vunpack.c.l.b16 %v103
  %v296 = vunpack.c.l.b16 %v104
  %v297 = vunpack.c.l.b16 %v105
  %v298 = vunpack.c.l.b16 %v106
  %v299 = vunpack.c.l.b16 %v107
  %v300 = vunpack.c.l.b16 %v108
  %v301 = vunpack.c.l.b16 %v109
  %v302 = vunpack.c.l.b16 %v110
  %v303 = vunpack.c.l.b16 %v111
  %v304 = vunpack.c.l.b16 %v112
  %v305 = vunpack.c.l.b16 %v113
  %v306 = vunpack.c.l.b16 %v114
  %v307 = vunpack.c.l.b16 %v115
  %v308 = vunpack.c.l.b16 %v116
  %v309 = vunpack.c.l.b16 %v117
  %v310 = vunpack.c.l.b16 %v118
  %v311 = vpack.c.b16 %v276, %v275
  %v312 = vpack.c.b16 %v278, %v277
  %v313 = vpack.c.b16 %v280, %v279
  %v314 = vpack.c.b16 %v282, %v281
  %v315 = vpack.c.b16 %v284, %v283
  %v316 = vpack.c.b16 %v286, %v285
  %v317 = vpack.c.b16 %v288, %v287
  %v318 = vpack.c.b16 %v290, %v289
  %v319 = vpack.c.b16 %v292, %v291
  %v320 = vpack.c.b16 %v294, %v293
  %v321 = vpack.c.b16 %v296, %v295
  %v322 = vpack.c.b16 %v298, %v297
  %v323 = vpack.c.b16 %v300, %v299
  %v324 = vpack.c.b16 %v302, %v301
  %v325 = vpack.c.b16 %v304, %v303
  %v326 = vpack.c.b16 %v306, %v305
  %v327 = vpack.c.b16 %v308, %v307
  %v328 = vpack.c.b16 %v310, %v309
  %vm347 = vcmask 261120
  %v349 = vsel %vm347, %v201, 0
  %v352 = vsel %vm347, %v204, 0
  %v355 = vsel %vm347, %v207, 0
  %v358 = vsel %vm347, %v210, 0
  %v361 = vsel %vm347, %v213, 0
  %v364 = vsel %vm347, %v216, 0
  %v367 = vsel %vm347, %v219, 0
  %v370 = vsel %vm347, %v222, 0
  %372 = vmatprep.subr.bf16.mxu0 0
  %373 = vmatpush1.bf16.msra.mxu0 %v318
  %374 = vmatprep.subr.bf16.mxu0 0
  %375 = vmatpush1.bf16.msra.mxu0 %v317
  %376 = vmatprep.subr.bf16.mxu0 0
  %377 = vmatpush1.bf16.msra.mxu0 %v316
  %378 = vmatprep.subr.bf16.mxu0 0
  %379 = vmatpush1.bf16.msra.mxu0 %v315
  %380 = vmatprep.subr.bf16.mxu0 0
  %381 = vmatpush1.bf16.msra.mxu0 %v314
  %382 = vmatprep.subr.bf16.mxu0 0
  %383 = vmatpush1.bf16.msra.mxu0 %v313
  %384 = vmatprep.subr.bf16.mxu0 0
  %385 = vmatpush1.bf16.msra.mxu0 %v312
  %386 = vmatprep.subr.bf16.mxu0 0
  %387 = vmatpush1.bf16.msra.mxu0 %v311
  %388 = vmatprep.subr.bf16.mxu0 0
  %389 = vmatpush2.bf16.msra.mxu0 %v326
  %390 = vmatprep.subr.bf16.mxu0 0
  %391 = vmatpush2.bf16.msra.mxu0 %v325
  %392 = vmatprep.subr.bf16.mxu0 0
  %393 = vmatpush2.bf16.msra.mxu0 %v324
  %394 = vmatprep.subr.bf16.mxu0 0
  %395 = vmatpush2.bf16.msra.mxu0 %v323
  %396 = vmatprep.subr.bf16.mxu0 0
  %397 = vmatpush2.bf16.msra.mxu0 %v322
  %398 = vmatprep.subr.bf16.mxu0 0
  %399 = vmatpush2.bf16.msra.mxu0 %v321
  %400 = vmatprep.subr.bf16.mxu0 0
  %401 = vmatpush2.bf16.msra.mxu0 %v320
  %402 = vmatprep.subr.bf16.mxu0 0
  %403 = vmatpush2.bf16.msra.mxu0 %v319
  %404 = vmatprep.mubr.bf16.mxu0 %v200
  %405 = vmatmul.mubr.bf16.gmra.mxu0 %v199
  %v406 = vpop.f32.mrf.mxu0
  %v407 = vadd.f32 0.0, %v406
  %v408 = vpop.f32.mrf.mxu0
  %v409 = vpop.f32.mrf.mxu0
  %v410 = vadd.f32 0.0, %v409
  %v411 = vpop.f32.mrf.mxu0
  %412 = vmatprep.mubr.bf16.mxu0 %v203
  %413 = vmatmul.mubr.bf16.gmra.mxu0 %v202
  %v414 = vpop.f32.mrf.mxu0
  %v415 = vadd.f32 0.0, %v414
  %v416 = vpop.f32.mrf.mxu0
  %v417 = vpop.f32.mrf.mxu0
  %v418 = vadd.f32 0.0, %v417
  %v419 = vpop.f32.mrf.mxu0
  %420 = vmatprep.mubr.bf16.mxu0 %v206
  %421 = vmatmul.mubr.bf16.gmra.mxu0 %v205
  %v422 = vpop.f32.mrf.mxu0
  %v423 = vadd.f32 0.0, %v422
  %v424 = vpop.f32.mrf.mxu0
  %v425 = vpop.f32.mrf.mxu0
  %v426 = vadd.f32 0.0, %v425
  %v427 = vpop.f32.mrf.mxu0
  %428 = vmatprep.mubr.bf16.mxu0 %v209
  %429 = vmatmul.mubr.bf16.gmra.mxu0 %v208
  %v430 = vpop.f32.mrf.mxu0
  %v431 = vadd.f32 0.0, %v430
  %v432 = vpop.f32.mrf.mxu0
  %v433 = vpop.f32.mrf.mxu0
  %v434 = vadd.f32 0.0, %v433
  %v435 = vpop.f32.mrf.mxu0
  %436 = vmatprep.mubr.bf16.mxu0 %v212
  %437 = vmatmul.mubr.bf16.gmra.mxu0 %v211
  %v438 = vpop.f32.mrf.mxu0
  %v439 = vadd.f32 0.0, %v438
  %v440 = vpop.f32.mrf.mxu0
  %v441 = vpop.f32.mrf.mxu0
  %v442 = vadd.f32 0.0, %v441
  %v443 = vpop.f32.mrf.mxu0
  %444 = vmatprep.mubr.bf16.mxu0 %v215
  %445 = vmatmul.mubr.bf16.gmra.mxu0 %v214
  %v446 = vpop.f32.mrf.mxu0
  %v447 = vadd.f32 0.0, %v446
  %v448 = vpop.f32.mrf.mxu0
  %v449 = vpop.f32.mrf.mxu0
  %v450 = vadd.f32 0.0, %v449
  %v451 = vpop.f32.mrf.mxu0
  %452 = vmatprep.mubr.bf16.mxu0 %v218
  %453 = vmatmul.mubr.bf16.gmra.mxu0 %v217
  %v454 = vpop.f32.mrf.mxu0
  %v455 = vadd.f32 0.0, %v454
  %v456 = vpop.f32.mrf.mxu0
  %v457 = vpop.f32.mrf.mxu0
  %v458 = vadd.f32 0.0, %v457
  %v459 = vpop.f32.mrf.mxu0
  %460 = vmatprep.mubr.bf16.mxu0 %v221
  %461 = vmatmul.mubr.bf16.gmra.mxu0 %v220
  %v462 = vpop.f32.mrf.mxu0
  %v463 = vadd.f32 0.0, %v462
  %v464 = vpop.f32.mrf.mxu0
  %v465 = vpop.f32.mrf.mxu0
  %v466 = vadd.f32 0.0, %v465
  %v467 = vpop.f32.mrf.mxu0
  %468 = vdwg.mxu0
  %469 = vmatprep.subr.bf16.mxu0 0
  %470 = vmatpush1.bf16.msra.mxu0 0
  %471 = vmatprep.subr.bf16.mxu0 0
  %472 = vmatpush1.bf16.msra.mxu0 0
  %473 = vmatprep.subr.bf16.mxu0 0
  %474 = vmatpush1.bf16.msra.mxu0 0
  %475 = vmatprep.subr.bf16.mxu0 0
  %476 = vmatpush1.bf16.msra.mxu0 0
  %477 = vmatprep.subr.bf16.mxu0 0
  %478 = vmatpush1.bf16.msra.mxu0 0
  %479 = vmatprep.subr.bf16.mxu0 0
  %480 = vmatpush1.bf16.msra.mxu0 0
  %481 = vmatprep.subr.bf16.mxu0 0
  %482 = vmatpush1.bf16.msra.mxu0 %v328
  %483 = vmatprep.subr.bf16.mxu0 0
  %484 = vmatpush1.bf16.msra.mxu0 %v327
  %485 = vmatprep.subr.bf16.mxu0 0
  %486 = vmatpush2.bf16.msra.mxu0 0
  %487 = vmatprep.subr.bf16.mxu0 0
  %488 = vmatpush2.bf16.msra.mxu0 0
  %489 = vmatprep.subr.bf16.mxu0 0
  %490 = vmatpush2.bf16.msra.mxu0 0
  %491 = vmatprep.subr.bf16.mxu0 0
  %492 = vmatpush2.bf16.msra.mxu0 0
  %493 = vmatprep.subr.bf16.mxu0 0
  %494 = vmatpush2.bf16.msra.mxu0 0
  %495 = vmatprep.subr.bf16.mxu0 0
  %496 = vmatpush2.bf16.msra.mxu0 0
  %497 = vmatprep.subr.bf16.mxu0 0
  %498 = vmatpush2.bf16.msra.mxu0 0
  %499 = vmatprep.subr.bf16.mxu0 0
  %500 = vmatpush2.bf16.msra.mxu0 0
  %501 = vmatprep.mubr.bf16.mxu0 0
  %502 = vmatmul.mubr.bf16.gmra.mxu0 %v349
  %v503 = vpop.f32.mrf.mxu0
  %v504 = vadd.f32 %v407, %v503
  %v505 = vpop.f32.mrf.mxu0
  %v506 = vpop.f32.mrf.mxu0
  %v507 = vadd.f32 %v410, %v506
  %v508 = vpop.f32.mrf.mxu0
  %509 = vmatprep.mubr.bf16.mxu0 0
  %510 = vmatmul.mubr.bf16.gmra.mxu0 %v352
  %v511 = vpop.f32.mrf.mxu0
  %v512 = vadd.f32 %v415, %v511
  %v513 = vpop.f32.mrf.mxu0
  %v514 = vpop.f32.mrf.mxu0
  %v515 = vadd.f32 %v418, %v514
  %v516 = vpop.f32.mrf.mxu0
  %517 = vmatprep.mubr.bf16.mxu0 0
  %518 = vmatmul.mubr.bf16.gmra.mxu0 %v355
  %v519 = vpop.f32.mrf.mxu0
  %v520 = vadd.f32 %v423, %v519
  %v521 = vpop.f32.mrf.mxu0
  %v522 = vpop.f32.mrf.mxu0
  %v523 = vadd.f32 %v426, %v522
  %v524 = vpop.f32.mrf.mxu0
  %525 = vmatprep.mubr.bf16.mxu0 0
  %526 = vmatmul.mubr.bf16.gmra.mxu0 %v358
  %v527 = vpop.f32.mrf.mxu0
  %v528 = vadd.f32 %v431, %v527
  %v529 = vpop.f32.mrf.mxu0
  %v530 = vpop.f32.mrf.mxu0
  %v531 = vadd.f32 %v434, %v530
  %v532 = vpop.f32.mrf.mxu0
  %533 = vmatprep.mubr.bf16.mxu0 0
  %534 = vmatmul.mubr.bf16.gmra.mxu0 %v361
  %v535 = vpop.f32.mrf.mxu0
  %v536 = vadd.f32 %v439, %v535
  %v537 = vpop.f32.mrf.mxu0
  %v538 = vpop.f32.mrf.mxu0
  %v539 = vadd.f32 %v442, %v538
  %v540 = vpop.f32.mrf.mxu0
  %541 = vmatprep.mubr.bf16.mxu0 0
  %542 = vmatmul.mubr.bf16.gmra.mxu0 %v364
  %v543 = vpop.f32.mrf.mxu0
  %v544 = vadd.f32 %v447, %v543
  %v545 = vpop.f32.mrf.mxu0
  %v546 = vpop.f32.mrf.mxu0
  %v547 = vadd.f32 %v450, %v546
  %v548 = vpop.f32.mrf.mxu0
  %549 = vmatprep.mubr.bf16.mxu0 0
  %550 = vmatmul.mubr.bf16.gmra.mxu0 %v367
  %v551 = vpop.f32.mrf.mxu0
  %v552 = vadd.f32 %v455, %v551
  %v553 = vpop.f32.mrf.mxu0
  %v554 = vpop.f32.mrf.mxu0
  %v555 = vadd.f32 %v458, %v554
  %v556 = vpop.f32.mrf.mxu0
  %557 = vmatprep.mubr.bf16.mxu0 0
  %558 = vmatmul.mubr.bf16.gmra.mxu0 %v370
  %v559 = vpop.f32.mrf.mxu0
  %v560 = vadd.f32 %v463, %v559
  %v561 = vpop.f32.mrf.mxu0
  %v562 = vpop.f32.mrf.mxu0
  %v563 = vadd.f32 %v466, %v562
  %v564 = vpop.f32.mrf.mxu0
  %565 = vdwg.mxu0
  %v566 = vadd.f32 %v35, %v504
  %v567 = vadd.f32 %v36, %v507
  %v568 = vadd.f32 %v37, %v512
  %v569 = vadd.f32 %v38, %v515
  %v570 = vadd.f32 %v39, %v520
  %v571 = vadd.f32 %v40, %v523
  %v572 = vadd.f32 %v41, %v528
  %v573 = vadd.f32 %v42, %v531
  %v574 = vadd.f32 %v43, %v536
  %v575 = vadd.f32 %v44, %v539
  %v576 = vadd.f32 %v45, %v544
  %v577 = vadd.f32 %v46, %v547
  %v578 = vadd.f32 %v47, %v552
  %v579 = vadd.f32 %v48, %v555
  %v580 = vadd.f32 %v49, %v560
  %v581 = vadd.f32 %v50, %v563
  %582 = vst [vmem:[#allocation2] sm:$0xff] %v566
  %583 = vst [vmem:[#allocation2 + $0x8] sm:$0xff] %v567
  %584 = vst [vmem:[#allocation2 + $0x10] sm:$0xff] %v568
  %585 = vst [vmem:[#allocation2 + $0x18] sm:$0xff] %v569
  %586 = vst [vmem:[#allocation2 + $0x20] sm:$0xff] %v570
  %587 = vst [vmem:[#allocation2 + $0x28] sm:$0xff] %v571
  %588 = vst [vmem:[#allocation2 + $0x30] sm:$0xff] %v572
  %589 = vst [vmem:[#allocation2 + $0x38] sm:$0xff] %v573
  %590 = vst [vmem:[#allocation2 + $0x40] sm:$0xff] %v574
  %591 = vst [vmem:[#allocation2 + $0x48] sm:$0xff] %v575
  %592 = vst [vmem:[#allocation2 + $0x50] sm:$0xff] %v576
  %593 = vst [vmem:[#allocation2 + $0x58] sm:$0xff] %v577
  %594 = vst [vmem:[#allocation2 + $0x60] sm:$0xff] %v578
  %595 = vst [vmem:[#allocation2 + $0x68] sm:$0xff] %v579
  %596 = vst [vmem:[#allocation2 + $0x70] sm:$0xff] %v580
  %597 = vst [vmem:[#allocation2 + $0x78] sm:$0xff] %v581
  // Predicated region
  $region18: #{forward.21} parent=0 // pred_check
    %p598 = pneg %p15
  $region19: #{forward.21} parent=0 // pred_check_branch
    %600 = sbr.rel (%p598) target = $region21
  $region20: #{forward.21} parent=0 // pred_region
    %v601 = vld [vmem:[#allocation2] sm:$0xff]
    %v602 = vld [vmem:[#allocation2 + $0x8] sm:$0xff]
    %v603 = vld [vmem:[#allocation2 + $0x10] sm:$0xff]
    %v604 = vld [vmem:[#allocation2 + $0x18] sm:$0xff]
    %v605 = vld [vmem:[#allocation2 + $0x20] sm:$0xff]
    %v606 = vld [vmem:[#allocation2 + $0x28] sm:$0xff]
    %v607 = vld [vmem:[#allocation2 + $0x30] sm:$0xff]
    %v608 = vld [vmem:[#allocation2 + $0x38] sm:$0xff]
    %v609 = vld [vmem:[#allocation2 + $0x40] sm:$0xff]
    %v610 = vld [vmem:[#allocation2 + $0x48] sm:$0xff]
    %v611 = vld [vmem:[#allocation2 + $0x50] sm:$0xff]
    %v612 = vld [vmem:[#allocation2 + $0x58] sm:$0xff]
    %v613 = vld [vmem:[#allocation2 + $0x60] sm:$0xff]
    %v614 = vld [vmem:[#allocation2 + $0x68] sm:$0xff]
    %v615 = vld [vmem:[#allocation2 + $0x70] sm:$0xff]
    %v616 = vld [vmem:[#allocation2 + $0x78] sm:$0xff]
    %v617 = vld [vmem:[%s2] sm:$0x1]
    %v619 = vlaneseq
    %v620 = vshrl.u32 %v619, 7
    %v621 = vsub.s32 0, %v620
    %v622 = vrot.slane %v617, %v621
    %v624 = vadd.f32 %v601, %v622
    %v625 = vadd.f32 %v602, %v622
    %v626 = vadd.f32 %v603, %v622
    %v627 = vadd.f32 %v604, %v622
    %v628 = vadd.f32 %v605, %v622
    %v629 = vadd.f32 %v606, %v622
    %v630 = vadd.f32 %v607, %v622
    %v631 = vadd.f32 %v608, %v622
    %v632 = vadd.f32 %v609, %v622
    %v633 = vadd.f32 %v610, %v622
    %v634 = vadd.f32 %v611, %v622
    %v635 = vadd.f32 %v612, %v622
    %v636 = vadd.f32 %v613, %v622
    %v637 = vadd.f32 %v614, %v622
    %v638 = vadd.f32 %v615, %v622
    %v639 = vadd.f32 %v616, %v622
    %v640 = vmax.f32 %v624, 0.0
    %v641 = vmax.f32 %v625, 0.0
    %v642 = vmax.f32 %v626, 0.0
    %v643 = vmax.f32 %v627, 0.0
    %v644 = vmax.f32 %v628, 0.0
    %v645 = vmax.f32 %v629, 0.0
    %v646 = vmax.f32 %v630, 0.0
    %v647 = vmax.f32 %v631, 0.0
    %v648 = vmax.f32 %v632, 0.0
    %v649 = vmax.f32 %v633, 0.0
    %v650 = vmax.f32 %v634, 0.0
    %v651 = vmax.f32 %v635, 0.0
    %v652 = vmax.f32 %v636, 0.0
    %v653 = vmax.f32 %v637, 0.0
    %v654 = vmax.f32 %v638, 0.0
    %v655 = vmax.f32 %v639, 0.0
    %656 = vst [vmem:[%s3] sm:$0xff] %v640
    %657 = vst [vmem:[%s3 + $0x8] sm:$0xff] %v641
    %658 = vst [vmem:[%s3 + $0x10] sm:$0xff] %v642
    %659 = vst [vmem:[%s3 + $0x18] sm:$0xff] %v643
    %660 = vst [vmem:[%s3 + $0x20] sm:$0xff] %v644
    %661 = vst [vmem:[%s3 + $0x28] sm:$0xff] %v645
    %662 = vst [vmem:[%s3 + $0x30] sm:$0xff] %v646
    %663 = vst [vmem:[%s3 + $0x38] sm:$0xff] %v647
    %664 = vst [vmem:[%s3 + $0x40] sm:$0xff] %v648
    %665 = vst [vmem:[%s3 + $0x48] sm:$0xff] %v649
    %666 = vst [vmem:[%s3 + $0x50] sm:$0xff] %v650
    %667 = vst [vmem:[%s3 + $0x58] sm:$0xff] %v651
    %668 = vst [vmem:[%s3 + $0x60] sm:$0xff] %v652
    %669 = vst [vmem:[%s3 + $0x68] sm:$0xff] %v653
    %670 = vst [vmem:[%s3 + $0x70] sm:$0xff] %v654
    %671 = vst [vmem:[%s3 + $0x78] sm:$0xff] %v655
  $region21: #{forward.21} parent=0 // pred_fallthru
    _
  // Predicated region
  $region22: #{forward.21} parent=0 // pred_check
    _
  $region23: #{forward.21} parent=0 // pred_check_branch
    %673 = sbr.rel (0) target = $region25
  $region24: #{forward.21} parent=0 // pred_region
    _
  $region25: #{forward.21} parent=0 // pred_fallthru
    _
  // Predicated region
  $region26: #{forward.21} parent=0 // pred_check
    _
  $region27: #{forward.21} parent=0 // pred_check_branch
    %675 = sbr.rel (0) target = $region29
  $region28: #{forward.21} parent=0 // pred_region
    _
  $region29: #{forward.21} parent=0 // pred_fallthru
    _

// kernel: forward.25
$region0: #{forward.25}
  #allocation0 [shape = 'u32[]', space=smem, size = 0x4, offset = 0x4, fixed_abs, tag = 'smem constant byte address 0x4 - core index']
  #allocation1 [shape = 'u32[144,128]{1,0:T(1,128)}', space=vmem, size = 0x12000, scoped, tag = 'internal scratch']
  #allocation2 [shape = 'f32[64,1]{1,0:T(8,128)}', space=vmem, size = 0x8000, scoped, tag = 'scratch operand']
  #allocation3 [shape = 'f32[64,1]{1,0:T(8,128)}', space=vmem, size = 0x8000, scoped, tag = 'scratch operand']
  #allocation4 [shape = 'f32[64,64]{1,0:T(8,128)}', space=vmem, size = 0x8000, scoped, tag = 'scratch operand']
  #allocation5 [shape = 'f32[1,1]{1,0:T(1,128)S(1)}', space=vmem, size = 0x200, scoped, tag = 'scoped memory for forward.25']
  %s0 = inlined_call_operand.vmem [shape: bf16[2,64,8], index: 0, kind: input, shape index: {}]
  %s1 = inlined_call_operand.vmem [shape: bf16[2,64,8], index: 1, kind: input, shape index: {}]
  %s2 = inlined_call_operand.vmem [shape: bf16[2,64,64], index: 2, kind: input, shape index: {}]
  %s3 = inlined_call_operand.vmem [shape: f32[2,64,64], index: 3, kind: input, shape index: {}]
  %s4 = inlined_call_operand.<no memory space> [shape: f32[1,1], index: 4, kind: input, shape index: {}]
  %s5 = inlined_call_operand.vmem [shape: f32[2,64,64], index: 5, kind: output, shape index: {}]
  %s6 = sld [smem:[#allocation0]]
  $region61: #{forward.25} parent=0
    _
  %s8 = ssub.s32 1, %s6
  %s9 = scalar_select 0, %s8, %s6
  %v10 = vstv %s4
  %11 = vst [vmem:[#allocation5] sm:$0x1] %v10
  loop: start=0, step=1, limit=4
  $region2: #{forward.25} parent=0 // loop_pre_header
    _
  $region3: #{forward.25} parent=0 // loop_header
    %s13 = sphi 0, %s17
    %p14 = scmp.ge.s32.totalorder %s13, 4
    %s20 = sphi 0, %s39
    %s21 = sphi 0, %s35
    %s22 = sphi 0, %s31
    %s23 = sphi 0, %s20
    %s24 = sphi 0, %s21
    %s25 = sphi 0, %s22
    %s26 = sphi 0, %s23
    %s27 = sphi 0, %s24
    %s28 = sphi 0, %s25
    %s44 = sphi 0, %s46
    %s47 = sphi 0, %s44
    %s48 = sphi 0, %s47
    %s64 = sphi 0, %s48
    %s72 = sphi 0, %s74
    %s75 = sphi 0, %s72
    %s76 = sphi 0, %s75
    %s92 = sphi 0, %s76
    %s100 = sphi 0, %s102
    %s103 = sphi 0, %s100
    %s104 = sphi 0, %s103
    %s120 = sphi 0, %s104
    %s128 = sphi 0, %s130
    %s131 = sphi 0, %s128
    %s132 = sphi 0, %s131
    %s148 = sphi 0, %s132
    %s152 = sphi 0, %s152
    %s154 = sphi 0, %s152
    %s155 = sphi 0, %s154
    %s169 = sphi 0, %s155
    %s177 = sphi 0, %s179
    %s180 = sphi 0, %s177
    %s181 = sphi 0, %s180
    %s197 = sphi 0, %s181
  $region4: #{forward.25} parent=0 // loop_header_branch
    %16 = sbr.rel (%p14) target = $region8
  $region5: #{forward.25} parent=0 // loop_body
    %s18 = ssub.s32 %s13, 1
    %s19 = ssub.s32 %s13, 2
    %s29 = sadd.s32 1, %s22
    %p30 = scmp.ge.s32.totalorder %s29, 1
    %s31 = scalar_select %p30, 0, %s29
    %s32 = sadd.s32 1, %s21
    %s33 = scalar_select %p30, %s32, %s21
    %p34 = scmp.ge.s32.totalorder %s33, 1
    %s35 = scalar_select %p34, 0, %s33
    %s36 = sadd.s32 1, %s20
    %s37 = scalar_select %p34, %s36, %s20
    %p38 = scmp.ge.s32.totalorder %s37, 2
    %s39 = scalar_select %p38, 0, %s37
    %s40 = ssub.s32 %s20, %s39
    %s41 = ssub.s32 %s21, %s35
    %s42 = sor.u32 %s40, %s41
    %p43 = scmp.eq.s32.totalorder %s42, 0
    %s45 = sadd.s32 %s44, 1
    %s46 = scalar_select %p43, %s44, %s45
    %p49 = pneg %p43
    %p50 = scmp.eq.s32.totalorder %s13, 1
    %p51 = por %p49, %p50
    %p52 = scmp.ne.s32.totalorder %s44, %s47
    %p53 = scmp.eq.s32.totalorder %s13, 0
    %p54 = por %p52, %p53
    %p55 = scmp.ne.s32.totalorder %s44, %s47
    %p56 = scmp.eq.s32.totalorder %s18, 1
    %p57 = por %p55, %p56
    %p58 = scmp.ne.s32.totalorder %s47, %s48
    %p59 = scmp.eq.s32.totalorder %s18, 0
    %p60 = por %p58, %p59
    %p61 = scmp.ne.s32.totalorder %s47, %s48
    %p62 = scmp.eq.s32.totalorder %s19, 1
    %p63 = por %p61, %p62
    %p65 = scmp.ne.s32.totalorder %s48, %s64
    %p66 = scmp.eq.s32.totalorder %s19, 0
    %p67 = por %p65, %p66
    %s68 = ssub.s32 %s20, %s39
    %s69 = ssub.s32 %s22, %s31
    %s70 = sor.u32 %s68, %s69
    %p71 = scmp.eq.s32.totalorder %s70, 0
    %s73 = sadd.s32 %s72, 1
    %s74 = scalar_select %p71, %s72, %s73
    %p77 = pneg %p71
    %p78 = scmp.eq.s32.totalorder %s13, 1
    %p79 = por %p77, %p78
    %p80 = scmp.ne.s32.totalorder %s72, %s75
    %p81 = scmp.eq.s32.totalorder %s13, 0
    %p82 = por %p80, %p81
    %p83 = scmp.ne.s32.totalorder %s72, %s75
    %p84 = scmp.eq.s32.totalorder %s18, 1
    %p85 = por %p83, %p84
    %p86 = scmp.ne.s32.totalorder %s75, %s76
    %p87 = scmp.eq.s32.totalorder %s18, 0
    %p88 = por %p86, %p87
    %p89 = scmp.ne.s32.totalorder %s75, %s76
    %p90 = scmp.eq.s32.totalorder %s19, 1
    %p91 = por %p89, %p90
    %p93 = scmp.ne.s32.totalorder %s76, %s92
    %p94 = scmp.eq.s32.totalorder %s19, 0
    %p95 = por %p93, %p94
    %s96 = ssub.s32 %s20, %s39
    %s97 = ssub.s32 %s22, %s31
    %s98 = sor.u32 %s96, %s97
    %p99 = scmp.eq.s32.totalorder %s98, 0
    %s101 = sadd.s32 %s100, 1
    %s102 = scalar_select %p99, %s100, %s101
    %p105 = pneg %p99
    %p106 = scmp.eq.s32.totalorder %s13, 1
    %p107 = por %p105, %p106
    %p108 = scmp.ne.s32.totalorder %s100, %s103
    %p109 = scmp.eq.s32.totalorder %s13, 0
    %p110 = por %p108, %p109
    %p111 = scmp.ne.s32.totalorder %s100, %s103
    %p112 = scmp.eq.s32.totalorder %s18, 1
    %p113 = por %p111, %p112
    %p114 = scmp.ne.s32.totalorder %s103, %s104
    %p115 = scmp.eq.s32.totalorder %s18, 0
    %p116 = por %p114, %p115
    %p117 = scmp.ne.s32.totalorder %s103, %s104
    %p118 = scmp.eq.s32.totalorder %s19, 1
    %p119 = por %p117, %p118
    %p121 = scmp.ne.s32.totalorder %s104, %s120
    %p122 = scmp.eq.s32.totalorder %s19, 0
    %p123 = por %p121, %p122
    %s124 = ssub.s32 %s20, %s39
    %s125 = ssub.s32 %s21, %s35
    %s126 = sor.u32 %s124, %s125
    %p127 = scmp.eq.s32.totalorder %s126, 0
    %s129 = sadd.s32 %s128, 1
    %s130 = scalar_select %p127, %s128, %s129
    %p133 = pneg %p127
    %p134 = scmp.eq.s32.totalorder %s13, 1
    %p135 = por %p133, %p134
    %p136 = scmp.ne.s32.totalorder %s128, %s131
    %p137 = scmp.eq.s32.totalorder %s13, 0
    %p138 = por %p136, %p137
    %p139 = scmp.ne.s32.totalorder %s128, %s131
    %p140 = scmp.eq.s32.totalorder %s18, 1
    %p141 = por %p139, %p140
    %p142 = scmp.ne.s32.totalorder %s131, %s132
    %p143 = scmp.eq.s32.totalorder %s18, 0
    %p144 = por %p142, %p143
    %p145 = scmp.ne.s32.totalorder %s131, %s132
    %p146 = scmp.eq.s32.totalorder %s19, 1
    %p147 = por %p145, %p146
    %p149 = scmp.ne.s32.totalorder %s132, %s148
    %p150 = scmp.eq.s32.totalorder %s19, 0
    %p151 = por %p149, %p150
    %s153 = sadd.s32 %s152, 1
    %p156 = scmp.eq.s32.totalorder %s13, 1
    %p157 = scmp.ne.s32.totalorder %s152, %s154
    %p158 = scmp.eq.s32.totalorder %s13, 0
    %p159 = por %p157, %p158
    %p160 = scmp.ne.s32.totalorder %s152, %s154
    %p161 = scmp.eq.s32.totalorder %s18, 1
    %p162 = por %p160, %p161
    %p163 = scmp.ne.s32.totalorder %s154, %s155
    %p164 = scmp.eq.s32.totalorder %s18, 0
    %p165 = por %p163, %p164
    %p166 = scmp.ne.s32.totalorder %s154, %s155
    %p167 = scmp.eq.s32.totalorder %s19, 1
    %p168 = por %p166, %p167
    %p170 = scmp.ne.s32.totalorder %s155, %s169
    %p171 = scmp.eq.s32.totalorder %s19, 0
    %p172 = por %p170, %p171
    %s173 = ssub.s32 %s20, %s39
    %s174 = ssub.s32 %s21, %s35
    %s175 = sor.u32 %s173, %s174
    %p176 = scmp.eq.s32.totalorder %s175, 0
    %s178 = sadd.s32 %s177, 1
    %s179 = scalar_select %p176, %s177, %s178
    %p182 = pneg %p176
    %p183 = scmp.eq.s32.totalorder %s13, 1
    %p184 = por %p182, %p183
    %p185 = scmp.ne.s32.totalorder %s177, %s180
    %p186 = scmp.eq.s32.totalorder %s13, 0
    %p187 = por %p185, %p186
    %p188 = scmp.ne.s32.totalorder %s177, %s180
    %p189 = scmp.eq.s32.totalorder %s18, 1
    %p190 = por %p188, %p189
    %p191 = scmp.ne.s32.totalorder %s180, %s181
    %p192 = scmp.eq.s32.totalorder %s18, 0
    %p193 = por %p191, %p192
    %p194 = scmp.ne.s32.totalorder %s180, %s181
    %p195 = scmp.eq.s32.totalorder %s19, 1
    %p196 = por %p194, %p195
    %p198 = scmp.ne.s32.totalorder %s181, %s197
    %p199 = scmp.eq.s32.totalorder %s19, 0
    %p200 = por %p198, %p199
    %p201 = scmp.le.s32.totalorder 1, %s13
    %p202 = scmp.lt.s32.totalorder %s13, 3
    %p203 = pnand %p201, %p202
    %p204 = pneg %p203
    // Predicated region
    $region9: #{forward.25} parent=5 // pred_check
      _
    $region10: #{forward.25} parent=5 // pred_check_branch
      %206 = sbr.rel (%p203) target = $region12
    $region11: #{forward.25} parent=5 // pred_region
      %s207 = ssub.s32 %s13, 1
      // Predicated region
      $region13: #{forward.25} parent=11 // pred_check
        %p208 = pneg %p165
      $region14: #{forward.25} parent=11 // pred_check_branch
        %210 = sbr.rel (%p208) target = $region16
      $region15: #{forward.25} parent=11 // pred_region
        _
      $region16: #{forward.25} parent=11 // pred_fallthru
        _
    $region12: #{forward.25} parent=5 // pred_fallthru
      _
    %p211 = scmp.lt.s32.totalorder %s13, 2
    // Predicated region
    $region17: #{forward.25} parent=5 // pred_check
      %p212 = pneg %p211
    $region18: #{forward.25} parent=5 // pred_check_branch
      %214 = sbr.rel (%p212) target = $region20
    $region19: #{forward.25} parent=5 // pred_region
      // Predicated region
      $region21: #{forward.25} parent=19 // pred_check
        %p215 = pneg %p54
      $region22: #{forward.25} parent=19 // pred_check_branch
        %217 = sbr.rel (%p215) target = $region24
      $region23: #{forward.25} parent=19 // pred_region
        %s218 = smul.u32 8, %s21
        %p219 = scmp.lt.s32.totalorder %s20, 1
        %s220 = scalar_select %p219, %s20, 1
        %p221 = scmp.lt.s32.totalorder %s218, 7
        %s222 = scalar_select %p221, %s218, 7
        %s223 = smul.addr %s220, 8
        %s224 = sadd.s32 %s222, %s223
        %s225 = smul.addr %s224, 4
        %s226 = scalar_lea.vmem %s0, %s225
        %s227 = smul.u32 8, %s21
      $region24: #{forward.25} parent=19 // pred_fallthru
        _
      // Predicated region
      $region25: #{forward.25} parent=19 // pred_check
        %p228 = pneg %p82
      $region26: #{forward.25} parent=19 // pred_check_branch
        %230 = sbr.rel (%p228) target = $region28
      $region27: #{forward.25} parent=19 // pred_region
        %s231 = smul.u32 8, %s22
        %p232 = scmp.lt.s32.totalorder %s20, 1
        %s233 = scalar_select %p232, %s20, 1
        %p234 = scmp.lt.s32.totalorder %s231, 7
        %s235 = scalar_select %p234, %s231, 7
        %s236 = smul.addr %s233, 8
        %s237 = sadd.s32 %s235, %s236
        %s238 = smul.addr %s237, 4
        %s239 = scalar_lea.vmem %s1, %s238
        %s240 = smul.u32 8, %s22
      $region28: #{forward.25} parent=19 // pred_fallthru
        _
      // Predicated region
      $region29: #{forward.25} parent=19 // pred_check
        %p241 = pneg %p110
      $region30: #{forward.25} parent=19 // pred_check_branch
        %243 = sbr.rel (%p241) target = $region32
      $region31: #{forward.25} parent=19 // pred_region
        %s244 = smul.u32 8, %s22
        %p245 = scmp.lt.s32.totalorder %s20, 1
        %s246 = scalar_select %p245, %s20, 1
        %p247 = scmp.lt.s32.totalorder %s244, 7
        %s248 = scalar_select %p247, %s244, 7
        %s249 = smul.addr %s246, 8
        %s250 = sadd.s32 %s248, %s249
        %s251 = smul.addr %s250, 4
        %s252 = scalar_lea.vmem %s2, %s251
        %s253 = smul.u32 8, %s22
      $region32: #{forward.25} parent=19 // pred_fallthru
        _
      // Predicated region
      $region33: #{forward.25} parent=19 // pred_check
        %p254 = pneg %p138
      $region34: #{forward.25} parent=19 // pred_check_branch
        %256 = sbr.rel (%p254) target = $region36
      $region35: #{forward.25} parent=19 // pred_region
        %s257 = smul.u32 8, %s21
        %p258 = scmp.lt.s32.totalorder %s20, 1
        %s259 = scalar_select %p258, %s20, 1
        %p260 = scmp.lt.s32.totalorder %s257, 7
        %s261 = scalar_select %p260, %s257, 7
        %s262 = smul.addr %s259, 8
        %s263 = sadd.s32 %s261, %s262
        %s264 = smul.addr %s263, 8
        %s265 = scalar_lea.vmem %s3, %s264
        %s266 = smul.u32 8, %s21
      $region36: #{forward.25} parent=19 // pred_fallthru
        _
    $region20: #{forward.25} parent=5 // pred_fallthru
      _
    %p267 = scmp.le.s32.totalorder 1, %s13
    %p268 = scmp.lt.s32.totalorder %s13, 3
    %p269 = pnand %p267, %p268
    %p270 = pneg %p269
    // Predicated region
    $region37: #{forward.25} parent=5 // pred_check
      _
    $region38: #{forward.25} parent=5 // pred_check_branch
      %272 = sbr.rel (%p269) target = $region40
    $region39: #{forward.25} parent=5 // pred_region
      %s273 = ssub.s32 %s13, 1
      %s274 = smul.u32 8, %s24
      %p275 = scmp.lt.s32.totalorder %s23, 1
      %s276 = scalar_select %p275, %s23, 1
      %p277 = scmp.lt.s32.totalorder %s274, 7
      %s278 = scalar_select %p277, %s274, 7
      %s279 = smul.addr %s276, 8
      %s280 = sadd.s32 %s278, %s279
      %s281 = smul.addr %s280, 4
      %s282 = scalar_lea.vmem %s0, %s281
      %p283 = pneg %p60
      %p284 = pneg %p57
      %s285 = smul.u32 8, %s25
      %p286 = scmp.lt.s32.totalorder %s23, 1
      %s287 = scalar_select %p286, %s23, 1
      %p288 = scmp.lt.s32.totalorder %s285, 7
      %s289 = scalar_select %p288, %s285, 7
      %s290 = smul.addr %s287, 8
      %s291 = sadd.s32 %s289, %s290
      %s292 = smul.addr %s291, 4
      %s293 = scalar_lea.vmem %s1, %s292
      %p294 = pneg %p88
      %p295 = pneg %p85
      %s296 = smul.u32 8, %s25
      %p297 = scmp.lt.s32.totalorder %s23, 1
      %s298 = scalar_select %p297, %s23, 1
      %p299 = scmp.lt.s32.totalorder %s296, 7
      %s300 = scalar_select %p299, %s296, 7
      %s301 = smul.addr %s298, 8
      %s302 = sadd.s32 %s300, %s301
      %s303 = smul.addr %s302, 4
      %s304 = scalar_lea.vmem %s2, %s303
      %p305 = pneg %p116
      %p306 = pneg %p113
      %s307 = smul.u32 8, %s24
      %p308 = scmp.lt.s32.totalorder %s23, 1
      %s309 = scalar_select %p308, %s23, 1
      %p310 = scmp.lt.s32.totalorder %s307, 7
      %s311 = scalar_select %p310, %s307, 7
      %s312 = smul.addr %s309, 8
      %s313 = sadd.s32 %s311, %s312
      %s314 = smul.addr %s313, 8
      %s315 = scalar_lea.vmem %s3, %s314
      %p316 = pneg %p144
      %p317 = pneg %p141
      %p318 = pneg %p165
      %p319 = pneg %p162
      %p320 = pneg %p193
      %p321 = pneg %p190
      %s322 = smul.u32 8, %s24
      %p323 = scmp.lt.s32.totalorder %s23, 1
      %s324 = scalar_select %p323, %s23, 1
      %p325 = scmp.lt.s32.totalorder %s322, 7
      %s326 = scalar_select %p325, %s322, 7
      %s327 = smul.addr %s324, 8
      %s328 = sadd.s32 %s326, %s327
      %s329 = smul.addr %s328, 8
      %s330 = scalar_lea.vmem %s5, %s329
      %s331 = smul.u32 8, %s24
      %p332 = scmp.lt.s32.totalorder %s23, 1
      %s333 = scalar_select %p332, %s23, 1
      %p334 = scmp.lt.s32.totalorder %s331, 7
      %s335 = scalar_select %p334, %s331, 7
      %s336 = smul.addr %s333, 8
      %s337 = sadd.s32 %s335, %s336
      %s338 = smul.addr %s337, 4
      %s339 = scalar_lea.vmem %s0, %s338
      %s340 = smul.u32 8, %s24
      %s341 = smul.u32 8, %s25
      %p342 = scmp.lt.s32.totalorder %s23, 1
      %s343 = scalar_select %p342, %s23, 1
      %p344 = scmp.lt.s32.totalorder %s341, 7
      %s345 = scalar_select %p344, %s341, 7
      %s346 = smul.addr %s343, 8
      %s347 = sadd.s32 %s345, %s346
      %s348 = smul.addr %s347, 4
      %s349 = scalar_lea.vmem %s1, %s348
      %s350 = smul.u32 8, %s25
      %s351 = smul.u32 8, %s25
      %p352 = scmp.lt.s32.totalorder %s23, 1
      %s353 = scalar_select %p352, %s23, 1
      %p354 = scmp.lt.s32.totalorder %s351, 7
      %s355 = scalar_select %p354, %s351, 7
      %s356 = smul.addr %s353, 8
      %s357 = sadd.s32 %s355, %s356
      %s358 = smul.addr %s357, 4
      %s359 = scalar_lea.vmem %s2, %s358
      %s360 = smul.u32 8, %s25
      %s361 = smul.u32 8, %s24
      %p362 = scmp.lt.s32.totalorder %s23, 1
      %s363 = scalar_select %p362, %s23, 1
      %p364 = scmp.lt.s32.totalorder %s361, 7
      %s365 = scalar_select %p364, %s361, 7
      %s366 = smul.addr %s363, 8
      %s367 = sadd.s32 %s365, %s366
      %s368 = smul.addr %s367, 8
      %s369 = scalar_lea.vmem %s3, %s368
      %s370 = smul.u32 8, %s24
      %s371 = smul.u32 8, %s24
      %p372 = scmp.lt.s32.totalorder %s23, 1
      %s373 = scalar_select %p372, %s23, 1
      %p374 = scmp.lt.s32.totalorder %s371, 7
      %s375 = scalar_select %p374, %s371, 7
      %s376 = smul.addr %s373, 8
      %s377 = sadd.s32 %s375, %s376
      %s378 = smul.addr %s377, 8
      %s379 = scalar_lea.vmem %s5, %s378
      %s380 = smul.u32 8, %s24
      %p382 = scmp.eq.s32.totalorder %s25, 0
      // Predicated region
      $region41: #{forward.25} parent=39 // pred_check
        %p383 = pneg %p382
      $region42: #{forward.25} parent=39 // pred_check_branch
        %385 = sbr.rel (%p383) target = $region44
      $region43: #{forward.25} parent=39 // pred_region
        %vm386 = vcmask 7168
        %387 = vst.msk [vmem:[#allocation2] sm:$0xff] %vm386, -inf
        %388 = vst.msk [vmem:[#allocation2 + $0x8] sm:$0xff] %vm386, -inf
        %389 = vst.msk [vmem:[#allocation2 + $0x10] sm:$0xff] %vm386, -inf
        %390 = vst.msk [vmem:[#allocation2 + $0x18] sm:$0xff] %vm386, -inf
        %391 = vst.msk [vmem:[#allocation2 + $0x20] sm:$0xff] %vm386, -inf
        %392 = vst.msk [vmem:[#allocation2 + $0x28] sm:$0xff] %vm386, -inf
        %393 = vst.msk [vmem:[#allocation2 + $0x30] sm:$0xff] %vm386, -inf
        %394 = vst.msk [vmem:[#allocation2 + $0x38] sm:$0xff] %vm386, -inf
        %395 = vst.msk [vmem:[#allocation3] sm:$0xff] %vm386, 0.0
        %396 = vst.msk [vmem:[#allocation3 + $0x8] sm:$0xff] %vm386, 0.0
        %397 = vst.msk [vmem:[#allocation3 + $0x10] sm:$0xff] %vm386, 0.0
        %398 = vst.msk [vmem:[#allocation3 + $0x18] sm:$0xff] %vm386, 0.0
        %399 = vst.msk [vmem:[#allocation3 + $0x20] sm:$0xff] %vm386, 0.0
        %400 = vst.msk [vmem:[#allocation3 + $0x28] sm:$0xff] %vm386, 0.0
        %401 = vst.msk [vmem:[#allocation3 + $0x30] sm:$0xff] %vm386, 0.0
        %402 = vst.msk [vmem:[#allocation3 + $0x38] sm:$0xff] %vm386, 0.0
        %vm403 = vcmask 523264
        %404 = vst.msk [vmem:[#allocation4] sm:$0xff] %vm403, 0.0
        %405 = vst.msk [vmem:[#allocation4 + $0x8] sm:$0xff] %vm403, 0.0
        %406 = vst.msk [vmem:[#allocation4 + $0x10] sm:$0xff] %vm403, 0.0
        %407 = vst.msk [vmem:[#allocation4 + $0x18] sm:$0xff] %vm403, 0.0
        %408 = vst.msk [vmem:[#allocation4 + $0x20] sm:$0xff] %vm403, 0.0
        %409 = vst.msk [vmem:[#allocation4 + $0x28] sm:$0xff] %vm403, 0.0
        %410 = vst.msk [vmem:[#allocation4 + $0x30] sm:$0xff] %vm403, 0.0
        %411 = vst.msk [vmem:[#allocation4 + $0x38] sm:$0xff] %vm403, 0.0
      $region44: #{forward.25} parent=39 // pred_fallthru
        _
      %v412 = vld [vmem:[%s339] sm:$0xf]
      %v413 = vld [vmem:[%s339 + $0x4] sm:$0xf]
      %v414 = vld [vmem:[%s339 + $0x8] sm:$0xf]
      %v415 = vld [vmem:[%s339 + $0xc] sm:$0xf]
      %v416 = vld [vmem:[%s339 + $0x10] sm:$0xf]
      %v417 = vld [vmem:[%s339 + $0x14] sm:$0xf]
      %v418 = vld [vmem:[%s339 + $0x18] sm:$0xf]
      %v419 = vld [vmem:[%s339 + $0x1c] sm:$0xf]
      %v420 = vld [vmem:[%s349] sm:$0xf]
      %v421 = vld [vmem:[%s349 + $0x4] sm:$0xf]
      %v422 = vld [vmem:[%s349 + $0x8] sm:$0xf]
      %v423 = vld [vmem:[%s349 + $0xc] sm:$0xf]
      %v424 = vld [vmem:[%s349 + $0x10] sm:$0xf]
      %v425 = vld [vmem:[%s349 + $0x14] sm:$0xf]
      %v426 = vld [vmem:[%s349 + $0x18] sm:$0xf]
      %v427 = vld [vmem:[%s349 + $0x1c] sm:$0xf]
      %v428 = vld [vmem:[%s359] sm:$0xf]
      %v429 = vld [vmem:[%s359 + $0x4] sm:$0xf]
      %v430 = vld [vmem:[%s359 + $0x8] sm:$0xf]
      %v431 = vld [vmem:[%s359 + $0xc] sm:$0xf]
      %v432 = vld [vmem:[%s359 + $0x10] sm:$0xf]
      %v433 = vld [vmem:[%s359 + $0x14] sm:$0xf]
      %v434 = vld [vmem:[%s359 + $0x18] sm:$0xf]
      %v435 = vld [vmem:[%s359 + $0x1c] sm:$0xf]
      %v444 = vunpack.c.l.b16 %v412
      %v445 = vunpack.c.l.b16 %v413
      %v446 = vunpack.c.l.b16 %v414
      %v447 = vunpack.c.l.b16 %v415
      %v448 = vunpack.c.l.b16 %v416
      %v449 = vunpack.c.l.b16 %v417
      %v450 = vunpack.c.l.b16 %v418
      %v451 = vunpack.c.l.b16 %v419
      %v452 = vpack.c.b16 %v445, %v444
      %v453 = vpack.c.b16 %v447, %v446
      %v454 = vpack.c.b16 %v449, %v448
      %v455 = vpack.c.b16 %v451, %v450
      %v464 = vunpack.c.l.b16 %v420
      %v465 = vunpack.c.l.b16 %v421
      %v466 = vunpack.c.l.b16 %v422
      %v467 = vunpack.c.l.b16 %v423
      %v468 = vunpack.c.l.b16 %v424
      %v469 = vunpack.c.l.b16 %v425
      %v470 = vunpack.c.l.b16 %v426
      %v471 = vunpack.c.l.b16 %v427
      %v472 = vpack.c.b16 %v465, %v464
      %v473 = vpack.c.b16 %v467, %v466
      %v474 = vpack.c.b16 %v469, %v468
      %v475 = vpack.c.b16 %v471, %v470
      %vm476 = vcmask 64512
      %v478 = vsel %vm476, %v452, 0
      %v481 = vsel %vm476, %v453, 0
      %v484 = vsel %vm476, %v454, 0
      %v487 = vsel %vm476, %v455, 0
      %v490 = vsel %vm476, %v472, 0
      %v493 = vsel %vm476, %v473, 0
      %v496 = vsel %vm476, %v474, 0
      %v499 = vsel %vm476, %v475, 0
      %501 = vmatprep.subr.bf16.mxu0 0
      %502 = vmatpush1.bf16.xpose.msra.mxu0 0
      %503 = vmatprep.subr.bf16.mxu0 0
      %504 = vmatpush1.bf16.xpose.msra.mxu0 0
      %505 = vmatprep.subr.bf16.mxu0 0
      %506 = vmatpush1.bf16.xpose.msra.mxu0 0
      %507 = vmatprep.subr.bf16.mxu0 0
      %508 = vmatpush1.bf16.xpose.msra.mxu0 0
      %509 = vmatprep.subr.bf16.mxu0 0
      %510 = vmatpush1.bf16.xpose.msra.mxu0 %v499
      %511 = vmatprep.subr.bf16.mxu0 0
      %512 = vmatpush1.bf16.xpose.msra.mxu0 %v496
      %513 = vmatprep.subr.bf16.mxu0 0
      %514 = vmatpush1.bf16.xpose.msra.mxu0 %v493
      %515 = vmatprep.subr.bf16.mxu0 0
      %516 = vmatpush1.bf16.xpose.msra.mxu0 %v490
      %517 = vmatprep.subr.bf16.mxu0 0
      %518 = vmatpush2.bf16.xpose.msra.mxu0 0
      %519 = vmatprep.subr.bf16.mxu0 0
      %520 = vmatpush2.bf16.xpose.msra.mxu0 0
      %521 = vmatprep.subr.bf16.mxu0 0
      %522 = vmatpush2.bf16.xpose.msra.mxu0 0
      %523 = vmatprep.subr.bf16.mxu0 0
      %524 = vmatpush2.bf16.xpose.msra.mxu0 0
      %525 = vmatprep.subr.bf16.mxu0 0
      %526 = vmatpush2.bf16.xpose.msra.mxu0 0
      %527 = vmatprep.subr.bf16.mxu0 0
      %528 = vmatpush2.bf16.xpose.msra.mxu0 0
      %529 = vmatprep.subr.bf16.mxu0 0
      %530 = vmatpush2.bf16.xpose.msra.mxu0 0
      %531 = vmatprep.subr.bf16.mxu0 0
      %532 = vmatpush2.bf16.xpose.msra.mxu0 0
      %533 = vmatprep.mubr.bf16.mxu0 0
      %534 = vmatmul.mubr.bf16.gmra.mxu0 %v478
      %v535 = vpop.f32.mrf.mxu0
      %v536 = vadd.f32 0.0, %v535
      %v537 = vpop.f32.mrf.mxu0
      %v538 = vpop.f32.mrf.mxu0
      %v539 = vadd.f32 0.0, %v538
      %v540 = vpop.f32.mrf.mxu0
      %541 = vmatprep.mubr.bf16.mxu0 0
      %542 = vmatmul.mubr.bf16.gmra.mxu0 %v481
      %v543 = vpop.f32.mrf.mxu0
      %v544 = vadd.f32 0.0, %v543
      %v545 = vpop.f32.mrf.mxu0
      %v546 = vpop.f32.mrf.mxu0
      %v547 = vadd.f32 0.0, %v546
      %v548 = vpop.f32.mrf.mxu0
      %549 = vmatprep.mubr.bf16.mxu0 0
      %550 = vmatmul.mubr.bf16.gmra.mxu0 %v484
      %v551 = vpop.f32.mrf.mxu0
      %v552 = vadd.f32 0.0, %v551
      %v553 = vpop.f32.mrf.mxu0
      %v554 = vpop.f32.mrf.mxu0
      %v555 = vadd.f32 0.0, %v554
      %v556 = vpop.f32.mrf.mxu0
      %557 = vmatprep.mubr.bf16.mxu0 0
      %558 = vmatmul.mubr.bf16.gmra.mxu0 %v487
      %v559 = vpop.f32.mrf.mxu0
      %v560 = vadd.f32 0.0, %v559
      %v561 = vpop.f32.mrf.mxu0
      %v562 = vpop.f32.mrf.mxu0
      %v563 = vadd.f32 0.0, %v562
      %v564 = vpop.f32.mrf.mxu0
      %565 = vdwg.mxu0
      %v566 = vld [vmem:[#allocation2] sm:$0xff]
      %v567 = vld [vmem:[#allocation2 + $0x8] sm:$0xff]
      %v568 = vld [vmem:[#allocation2 + $0x10] sm:$0xff]
      %v569 = vld [vmem:[#allocation2 + $0x18] sm:$0xff]
      %v570 = vld [vmem:[#allocation2 + $0x20] sm:$0xff]
      %v571 = vld [vmem:[#allocation2 + $0x28] sm:$0xff]
      %v572 = vld [vmem:[#allocation2 + $0x30] sm:$0xff]
      %v573 = vld [vmem:[#allocation2 + $0x38] sm:$0xff]
      %vm574 = vcmask 523264
      %v575 = vsel %vm574, %v536, -inf
      %576 = vmax.xlane.f32.xlu0 %v575
      %v577 = vpop.xlane.xlu0 %576
      %v578 = vsel %vm574, %v539, -inf
      %579 = vmax.xlane.f32.xlu0 %v578
      %v580 = vpop.xlane.xlu0 %579
      %v581 = vsel %vm574, %v544, -inf
      %582 = vmax.xlane.f32.xlu0 %v581
      %v583 = vpop.xlane.xlu0 %582
      %v584 = vsel %vm574, %v547, -inf
      %585 = vmax.xlane.f32.xlu0 %v584
      %v586 = vpop.xlane.xlu0 %585
      %v587 = vsel %vm574, %v552, -inf
      %588 = vmax.xlane.f32.xlu0 %v587
      %v589 = vpop.xlane.xlu0 %588
      %v590 = vsel %vm574, %v555, -inf
      %591 = vmax.xlane.f32.xlu0 %v590
      %v592 = vpop.xlane.xlu0 %591
      %v593 = vsel %vm574, %v560, -inf
      %594 = vmax.xlane.f32.xlu0 %v593
      %v595 = vpop.xlane.xlu0 %594
      %v596 = vsel %vm574, %v563, -inf
      %597 = vmax.xlane.f32.xlu0 %v596
      %v598 = vpop.xlane.xlu0 %597
      %v599 = vmax.f32 %v566, %v577
      %v600 = vmax.f32 %v567, %v580
      %v601 = vmax.f32 %v568, %v583
      %v602 = vmax.f32 %v569, %v586
      %v603 = vmax.f32 %v570, %v589
      %v604 = vmax.f32 %v571, %v592
      %v605 = vmax.f32 %v572, %v595
      %v606 = vmax.f32 %v573, %v598
      %v607 = vsub.f32 %v566, %v599
      %v608 = vsub.f32 %v567, %v600
      %v609 = vsub.f32 %v568, %v601
      %v610 = vsub.f32 %v569, %v602
      %v611 = vsub.f32 %v570, %v603
      %v612 = vsub.f32 %v571, %v604
      %v613 = vsub.f32 %v572, %v605
      %v614 = vsub.f32 %v573, %v606
      %v615 = vmul.f32 %v607, 1.442695
      %v616 = vpow.pop %v615
      %v617 = vmul.f32 %v608, 1.442695
      %v618 = vpow.pop %v617
      %v619 = vmul.f32 %v609, 1.442695
      %v620 = vpow.pop %v619
      %v621 = vmul.f32 %v610, 1.442695
      %v622 = vpow.pop %v621
      %v623 = vmul.f32 %v611, 1.442695
      %v624 = vpow.pop %v623
      %v625 = vmul.f32 %v612, 1.442695
      %v626 = vpow.pop %v625
      %v627 = vmul.f32 %v613, 1.442695
      %v628 = vpow.pop %v627
      %v629 = vmul.f32 %v614, 1.442695
      %v630 = vpow.pop %v629
      %632 = vset.pattern.permute.xlu0 0
      %633 = vperm.xlu0 %632, %v599
      %v634 = vpop.permute.xlu0 %633
      %637 = vset.pattern.permute.xlu0 0
      %638 = vperm.xlu0 %637, %v600
      %v639 = vpop.permute.xlu0 %638
      %642 = vset.pattern.permute.xlu0 0
      %643 = vperm.xlu0 %642, %v601
      %v644 = vpop.permute.xlu0 %643
      %647 = vset.pattern.permute.xlu0 0
      %648 = vperm.xlu0 %647, %v602
      %v649 = vpop.permute.xlu0 %648
      %652 = vset.pattern.permute.xlu0 0
      %653 = vperm.xlu0 %652, %v603
      %v654 = vpop.permute.xlu0 %653
      %657 = vset.pattern.permute.xlu0 0
      %658 = vperm.xlu0 %657, %v604
      %v659 = vpop.permute.xlu0 %658
      %662 = vset.pattern.permute.xlu0 0
      %663 = vperm.xlu0 %662, %v605
      %v664 = vpop.permute.xlu0 %663
      %667 = vset.pattern.permute.xlu0 0
      %668 = vperm.xlu0 %667, %v606
      %v669 = vpop.permute.xlu0 %668
      %v671 = vsub.f32 %v536, %v634
      %v672 = vsub.f32 %v539, %v639
      %v673 = vsub.f32 %v544, %v644
      %v674 = vsub.f32 %v547, %v649
      %v675 = vsub.f32 %v552, %v654
      %v676 = vsub.f32 %v555, %v659
      %v677 = vsub.f32 %v560, %v664
      %v678 = vsub.f32 %v563, %v669
      %v679 = vmul.f32 %v671, 1.442695
      %v680 = vpow.pop %v679
      %v681 = vmul.f32 %v672, 1.442695
      %v682 = vpow.pop %v681
      %v683 = vmul.f32 %v673, 1.442695
      %v684 = vpow.pop %v683
      %v685 = vmul.f32 %v674, 1.442695
      %v686 = vpow.pop %v685
      %v687 = vmul.f32 %v675, 1.442695
      %v688 = vpow.pop %v687
      %v689 = vmul.f32 %v676, 1.442695
      %v690 = vpow.pop %v689
      %v691 = vmul.f32 %v677, 1.442695
      %v692 = vpow.pop %v691
      %v693 = vmul.f32 %v678, 1.442695
      %v694 = vpow.pop %v693
      %v695 = vld [vmem:[#allocation3] sm:$0xff]
      %v696 = vld [vmem:[#allocation3 + $0x8] sm:$0xff]
      %v697 = vld [vmem:[#allocation3 + $0x10] sm:$0xff]
      %v698 = vld [vmem:[#allocation3 + $0x18] sm:$0xff]
      %v699 = vld [vmem:[#allocation3 + $0x20] sm:$0xff]
      %v700 = vld [vmem:[#allocation3 + $0x28] sm:$0xff]
      %v701 = vld [vmem:[#allocation3 + $0x30] sm:$0xff]
      %v702 = vld [vmem:[#allocation3 + $0x38] sm:$0xff]
      %v703 = vmul.f32 %v616, %v695
      %v704 = vmul.f32 %v618, %v696
      %v705 = vmul.f32 %v620, %v697
      %v706 = vmul.f32 %v622, %v698
      %v707 = vmul.f32 %v624, %v699
      %v708 = vmul.f32 %v626, %v700
      %v709 = vmul.f32 %v628, %v701
      %v710 = vmul.f32 %v630, %v702
      %v711 = vsel %vm574, %v680, 0.0
      %712 = vadd.xlane.f32.xlu0 %v711
      %v713 = vpop.xlane.xlu0 %712
      %v714 = vsel %vm574, %v682, 0.0
      %715 = vadd.xlane.f32.xlu0 %v714
      %v716 = vpop.xlane.xlu0 %715
      %v717 = vsel %vm574, %v684, 0.0
      %718 = vadd.xlane.f32.xlu0 %v717
      %v719 = vpop.xlane.xlu0 %718
      %v720 = vsel %vm574, %v686, 0.0
      %721 = vadd.xlane.f32.xlu0 %v720
      %v722 = vpop.xlane.xlu0 %721
      %v723 = vsel %vm574, %v688, 0.0
      %724 = vadd.xlane.f32.xlu0 %v723
      %v725 = vpop.xlane.xlu0 %724
      %v726 = vsel %vm574, %v690, 0.0
      %727 = vadd.xlane.f32.xlu0 %v726
      %v728 = vpop.xlane.xlu0 %727
      %v729 = vsel %vm574, %v692, 0.0
      %730 = vadd.xlane.f32.xlu0 %v729
      %v731 = vpop.xlane.xlu0 %730
      %v732 = vsel %vm574, %v694, 0.0
      %733 = vadd.xlane.f32.xlu0 %v732
      %v734 = vpop.xlane.xlu0 %733
      %v735 = vadd.f32 %v703, %v713
      %v736 = vadd.f32 %v704, %v716
      %v737 = vadd.f32 %v705, %v719
      %v738 = vadd.f32 %v706, %v722
      %v739 = vadd.f32 %v707, %v725
      %v740 = vadd.f32 %v708, %v728
      %v741 = vadd.f32 %v709, %v731
      %v742 = vadd.f32 %v710, %v734
      %vm743 = vcmask 7168
      %744 = vst.msk [vmem:[#allocation3] sm:$0xff] %vm743, %v735
      %745 = vst.msk [vmem:[#allocation3 + $0x8] sm:$0xff] %vm743, %v736
      %746 = vst.msk [vmem:[#allocation3 + $0x10] sm:$0xff] %vm743, %v737
      %747 = vst.msk [vmem:[#allocation3 + $0x18] sm:$0xff] %vm743, %v738
      %748 = vst.msk [vmem:[#allocation3 + $0x20] sm:$0xff] %vm743, %v739
      %749 = vst.msk [vmem:[#allocation3 + $0x28] sm:$0xff] %vm743, %v740
      %750 = vst.msk [vmem:[#allocation3 + $0x30] sm:$0xff] %vm743, %v741
      %751 = vst.msk [vmem:[#allocation3 + $0x38] sm:$0xff] %vm743, %v742
      %v752 = vld [vmem:[#allocation4] sm:$0xff]
      %v753 = vld [vmem:[#allocation4 + $0x8] sm:$0xff]
      %v754 = vld [vmem:[#allocation4 + $0x10] sm:$0xff]
      %v755 = vld [vmem:[#allocation4 + $0x18] sm:$0xff]
      %v756 = vld [vmem:[#allocation4 + $0x20] sm:$0xff]
      %v757 = vld [vmem:[#allocation4 + $0x28] sm:$0xff]
      %v758 = vld [vmem:[#allocation4 + $0x30] sm:$0xff]
      %v759 = vld [vmem:[#allocation4 + $0x38] sm:$0xff]
      %761 = vset.pattern.permute.xlu0 0
      %762 = vperm.xlu0 %761, %v616
      %v763 = vpop.permute.xlu0 %762
      %766 = vset.pattern.permute.xlu0 0
      %767 = vperm.xlu0 %766, %v618
      %v768 = vpop.permute.xlu0 %767
      %771 = vset.pattern.permute.xlu0 0
      %772 = vperm.xlu0 %771, %v620
      %v773 = vpop.permute.xlu0 %772
      %776 = vset.pattern.permute.xlu0 0
      %777 = vperm.xlu0 %776, %v622
      %v778 = vpop.permute.xlu0 %777
      %781 = vset.pattern.permute.xlu0 0
      %782 = vperm.xlu0 %781, %v624
      %v783 = vpop.permute.xlu0 %782
      %786 = vset.pattern.permute.xlu0 0
      %787 = vperm.xlu0 %786, %v626
      %v788 = vpop.permute.xlu0 %787
      %791 = vset.pattern.permute.xlu0 0
      %792 = vperm.xlu0 %791, %v628
      %v793 = vpop.permute.xlu0 %792
      %796 = vset.pattern.permute.xlu0 0
      %797 = vperm.xlu0 %796, %v630
      %v798 = vpop.permute.xlu0 %797
      %v800 = vmul.f32 %v763, %v752
      %v801 = vmul.f32 %v768, %v753
      %v802 = vmul.f32 %v773, %v754
      %v803 = vmul.f32 %v778, %v755
      %v804 = vmul.f32 %v783, %v756
      %v805 = vmul.f32 %v788, %v757
      %v806 = vmul.f32 %v793, %v758
      %v807 = vmul.f32 %v798, %v759
      %v808 = vpack.c.bf16 %v682, %v680
      %v809 = vpack.c.bf16 %v686, %v684
      %v810 = vpack.c.bf16 %v690, %v688
      %v811 = vpack.c.bf16 %v694, %v692
      %v820 = vunpack.c.l.b16 %v428
      %v821 = vunpack.c.l.b16 %v429
      %v822 = vunpack.c.l.b16 %v430
      %v823 = vunpack.c.l.b16 %v431
      %v824 = vunpack.c.l.b16 %v432
      %v825 = vunpack.c.l.b16 %v433
      %v826 = vunpack.c.l.b16 %v434
      %v827 = vunpack.c.l.b16 %v435
      %v828 = vpack.c.b16 %v821, %v820
      %v829 = vpack.c.b16 %v823, %v822
      %v830 = vpack.c.b16 %v825, %v824
      %v831 = vpack.c.b16 %v827, %v826
      %v837 = vsel %vm574, %v808, 0
      %v840 = vsel %vm574, %v809, 0
      %v843 = vsel %vm574, %v810, 0
      %v846 = vsel %vm574, %v811, 0
      %848 = vmatprep.subr.bf16.mxu0 0
      %849 = vmatpush1.bf16.msra.mxu0 0
      %850 = vmatprep.subr.bf16.mxu0 0
      %851 = vmatpush1.bf16.msra.mxu0 0
      %852 = vmatprep.subr.bf16.mxu0 0
      %853 = vmatpush1.bf16.msra.mxu0 0
      %854 = vmatprep.subr.bf16.mxu0 0
      %855 = vmatpush1.bf16.msra.mxu0 0
      %856 = vmatprep.subr.bf16.mxu0 0
      %857 = vmatpush1.bf16.msra.mxu0 %v831
      %858 = vmatprep.subr.bf16.mxu0 0
      %859 = vmatpush1.bf16.msra.mxu0 %v830
      %860 = vmatprep.subr.bf16.mxu0 0
      %861 = vmatpush1.bf16.msra.mxu0 %v829
      %862 = vmatprep.subr.bf16.mxu0 0
      %863 = vmatpush1.bf16.msra.mxu0 %v828
      %864 = vmatprep.subr.bf16.mxu0 0
      %865 = vmatpush2.bf16.msra.mxu0 0
      %866 = vmatprep.subr.bf16.mxu0 0
      %867 = vmatpush2.bf16.msra.mxu0 0
      %868 = vmatprep.subr.bf16.mxu0 0
      %869 = vmatpush2.bf16.msra.mxu0 0
      %870 = vmatprep.subr.bf16.mxu0 0
      %871 = vmatpush2.bf16.msra.mxu0 0
      %872 = vmatprep.subr.bf16.mxu0 0
      %873 = vmatpush2.bf16.msra.mxu0 0
      %874 = vmatprep.subr.bf16.mxu0 0
      %875 = vmatpush2.bf16.msra.mxu0 0
      %876 = vmatprep.subr.bf16.mxu0 0
      %877 = vmatpush2.bf16.msra.mxu0 0
      %878 = vmatprep.subr.bf16.mxu0 0
      %879 = vmatpush2.bf16.msra.mxu0 0
      %880 = vmatprep.mubr.bf16.mxu0 0
      %881 = vmatmul.mubr.bf16.gmra.mxu0 %v837
      %v882 = vpop.f32.mrf.mxu0
      %v883 = vadd.f32 0.0, %v882
      %v884 = vpop.f32.mrf.mxu0
      %v885 = vpop.f32.mrf.mxu0
      %v886 = vadd.f32 0.0, %v885
      %v887 = vpop.f32.mrf.mxu0
      %888 = vmatprep.mubr.bf16.mxu0 0
      %889 = vmatmul.mubr.bf16.gmra.mxu0 %v840
      %v890 = vpop.f32.mrf.mxu0
      %v891 = vadd.f32 0.0, %v890
      %v892 = vpop.f32.mrf.mxu0
      %v893 = vpop.f32.mrf.mxu0
      %v894 = vadd.f32 0.0, %v893
      %v895 = vpop.f32.mrf.mxu0
      %896 = vmatprep.mubr.bf16.mxu0 0
      %897 = vmatmul.mubr.bf16.gmra.mxu0 %v843
      %v898 = vpop.f32.mrf.mxu0
      %v899 = vadd.f32 0.0, %v898
      %v900 = vpop.f32.mrf.mxu0
      %v901 = vpop.f32.mrf.mxu0
      %v902 = vadd.f32 0.0, %v901
      %v903 = vpop.f32.mrf.mxu0
      %904 = vmatprep.mubr.bf16.mxu0 0
      %905 = vmatmul.mubr.bf16.gmra.mxu0 %v846
      %v906 = vpop.f32.mrf.mxu0
      %v907 = vadd.f32 0.0, %v906
      %v908 = vpop.f32.mrf.mxu0
      %v909 = vpop.f32.mrf.mxu0
      %v910 = vadd.f32 0.0, %v909
      %v911 = vpop.f32.mrf.mxu0
      %912 = vdwg.mxu0
      %v913 = vadd.f32 %v800, %v883
      %v914 = vadd.f32 %v801, %v886
      %v915 = vadd.f32 %v802, %v891
      %v916 = vadd.f32 %v803, %v894
      %v917 = vadd.f32 %v804, %v899
      %v918 = vadd.f32 %v805, %v902
      %v919 = vadd.f32 %v806, %v907
      %v920 = vadd.f32 %v807, %v910
      %921 = vst.msk [vmem:[#allocation4] sm:$0xff] %vm574, %v913
      %922 = vst.msk [vmem:[#allocation4 + $0x8] sm:$0xff] %vm574, %v914
      %923 = vst.msk [vmem:[#allocation4 + $0x10] sm:$0xff] %vm574, %v915
      %924 = vst.msk [vmem:[#allocation4 + $0x18] sm:$0xff] %vm574, %v916
      %925 = vst.msk [vmem:[#allocation4 + $0x20] sm:$0xff] %vm574, %v917
      %926 = vst.msk [vmem:[#allocation4 + $0x28] sm:$0xff] %vm574, %v918
      %927 = vst.msk [vmem:[#allocation4 + $0x30] sm:$0xff] %vm574, %v919
      %928 = vst.msk [vmem:[#allocation4 + $0x38] sm:$0xff] %vm574, %v920
      %929 = vst.msk [vmem:[#allocation2] sm:$0xff] %vm743, %v599
      %930 = vst.msk [vmem:[#allocation2 + $0x8] sm:$0xff] %vm743, %v600
      %931 = vst.msk [vmem:[#allocation2 + $0x10] sm:$0xff] %vm743, %v601
      %932 = vst.msk [vmem:[#allocation2 + $0x18] sm:$0xff] %vm743, %v602
      %933 = vst.msk [vmem:[#allocation2 + $0x20] sm:$0xff] %vm743, %v603
      %934 = vst.msk [vmem:[#allocation2 + $0x28] sm:$0xff] %vm743, %v604
      %935 = vst.msk [vmem:[#allocation2 + $0x30] sm:$0xff] %vm743, %v605
      %936 = vst.msk [vmem:[#allocation2 + $0x38] sm:$0xff] %vm743, %v606
      // Predicated region
      $region45: #{forward.25} parent=39 // pred_check
        %p937 = pneg %p382
      $region46: #{forward.25} parent=39 // pred_check_branch
        %939 = sbr.rel (%p937) target = $region48
      $region47: #{forward.25} parent=39 // pred_region
        %v940 = vld [vmem:[#allocation4] sm:$0xff]
        %v941 = vld [vmem:[#allocation4 + $0x8] sm:$0xff]
        %v942 = vld [vmem:[#allocation4 + $0x10] sm:$0xff]
        %v943 = vld [vmem:[#allocation4 + $0x18] sm:$0xff]
        %v944 = vld [vmem:[#allocation4 + $0x20] sm:$0xff]
        %v945 = vld [vmem:[#allocation4 + $0x28] sm:$0xff]
        %v946 = vld [vmem:[#allocation4 + $0x30] sm:$0xff]
        %v947 = vld [vmem:[#allocation4 + $0x38] sm:$0xff]
        %v948 = vld [vmem:[#allocation3] sm:$0xff]
        %v949 = vld [vmem:[#allocation3 + $0x8] sm:$0xff]
        %v950 = vld [vmem:[#allocation3 + $0x10] sm:$0xff]
        %v951 = vld [vmem:[#allocation3 + $0x18] sm:$0xff]
        %v952 = vld [vmem:[#allocation3 + $0x20] sm:$0xff]
        %v953 = vld [vmem:[#allocation3 + $0x28] sm:$0xff]
        %v954 = vld [vmem:[#allocation3 + $0x30] sm:$0xff]
        %v955 = vld [vmem:[#allocation3 + $0x38] sm:$0xff]
        %v956 = vrcp.pop %v948
        %v957 = vrcp.pop %v949
        %v958 = vrcp.pop %v950
        %v959 = vrcp.pop %v951
        %v960 = vrcp.pop %v952
        %v961 = vrcp.pop %v953
        %v962 = vrcp.pop %v954
        %v963 = vrcp.pop %v955
        %965 = vset.pattern.permute.xlu0 0
        %966 = vperm.xlu0 %965, %v956
        %v967 = vpop.permute.xlu0 %966
        %970 = vset.pattern.permute.xlu0 0
        %971 = vperm.xlu0 %970, %v957
        %v972 = vpop.permute.xlu0 %971
        %975 = vset.pattern.permute.xlu0 0
        %976 = vperm.xlu0 %975, %v958
        %v977 = vpop.permute.xlu0 %976
        %980 = vset.pattern.permute.xlu0 0
        %981 = vperm.xlu0 %980, %v959
        %v982 = vpop.permute.xlu0 %981
        %985 = vset.pattern.permute.xlu0 0
        %986 = vperm.xlu0 %985, %v960
        %v987 = vpop.permute.xlu0 %986
        %990 = vset.pattern.permute.xlu0 0
        %991 = vperm.xlu0 %990, %v961
        %v992 = vpop.permute.xlu0 %991
        %995 = vset.pattern.permute.xlu0 0
        %996 = vperm.xlu0 %995, %v962
        %v997 = vpop.permute.xlu0 %996
        %1000 = vset.pattern.permute.xlu0 0
        %1001 = vperm.xlu0 %1000, %v963
        %v1002 = vpop.permute.xlu0 %1001
        %v1004 = vmul.f32 %v940, %v967
        %v1005 = vmul.f32 %v941, %v972
        %v1006 = vmul.f32 %v942, %v977
        %v1007 = vmul.f32 %v943, %v982
        %v1008 = vmul.f32 %v944, %v987
        %v1009 = vmul.f32 %v945, %v992
        %v1010 = vmul.f32 %v946, %v997
        %v1011 = vmul.f32 %v947, %v1002
        %v1012 = vld [vmem:[#allocation5] sm:$0x1]
        %s1013 = vtos %v1012
        %v1014 = vstv %s1013
        %v1015 = vmul.f32 %v1014, %v1004
        %v1016 = vmul.f32 %v1014, %v1005
        %v1017 = vmul.f32 %v1014, %v1006
        %v1018 = vmul.f32 %v1014, %v1007
        %v1019 = vmul.f32 %v1014, %v1008
        %v1020 = vmul.f32 %v1014, %v1009
        %v1021 = vmul.f32 %v1014, %v1010
        %v1022 = vmul.f32 %v1014, %v1011
        %v1023 = vld [vmem:[%s369] sm:$0xff]
        %v1024 = vld [vmem:[%s369 + $0x8] sm:$0xff]
        %v1025 = vld [vmem:[%s369 + $0x10] sm:$0xff]
        %v1026 = vld [vmem:[%s369 + $0x18] sm:$0xff]
        %v1027 = vld [vmem:[%s369 + $0x20] sm:$0xff]
        %v1028 = vld [vmem:[%s369 + $0x28] sm:$0xff]
        %v1029 = vld [vmem:[%s369 + $0x30] sm:$0xff]
        %v1030 = vld [vmem:[%s369 + $0x38] sm:$0xff]
        %v1031 = vadd.f32 %v1015, %v1023
        %v1032 = vadd.f32 %v1016, %v1024
        %v1033 = vadd.f32 %v1017, %v1025
        %v1034 = vadd.f32 %v1018, %v1026
        %v1035 = vadd.f32 %v1019, %v1027
        %v1036 = vadd.f32 %v1020, %v1028
        %v1037 = vadd.f32 %v1021, %v1029
        %v1038 = vadd.f32 %v1022, %v1030
        %1039 = vst.msk [vmem:[%s379] sm:$0xff] %vm574, %v1031
        %1040 = vst.msk [vmem:[%s379 + $0x8] sm:$0xff] %vm574, %v1032
        %1041 = vst.msk [vmem:[%s379 + $0x10] sm:$0xff] %vm574, %v1033
        %1042 = vst.msk [vmem:[%s379 + $0x18] sm:$0xff] %vm574, %v1034
        %1043 = vst.msk [vmem:[%s379 + $0x20] sm:$0xff] %vm574, %v1035
        %1044 = vst.msk [vmem:[%s379 + $0x28] sm:$0xff] %vm574, %v1036
        %1045 = vst.msk [vmem:[%s379 + $0x30] sm:$0xff] %vm574, %v1037
        %1046 = vst.msk [vmem:[%s379 + $0x38] sm:$0xff] %vm574, %v1038
      $region48: #{forward.25} parent=39 // pred_fallthru
        _
      %s1047 = smul.u32 8, %s24
      %p1048 = scmp.lt.s32.totalorder %s23, 1
      %s1049 = scalar_select %p1048, %s23, 1
      %p1050 = scmp.lt.s32.totalorder %s1047, 7
      %s1051 = scalar_select %p1050, %s1047, 7
      %s1052 = smul.addr %s1049, 8
      %s1053 = sadd.s32 %s1051, %s1052
      %s1054 = smul.addr %s1053, 8
      %s1055 = scalar_lea.vmem %s5, %s1054
      // Predicated region
      $region49: #{forward.25} parent=39 // pred_check
        %p1056 = pneg %p190
      $region50: #{forward.25} parent=39 // pred_check_branch
        %1058 = sbr.rel (%p1056) target = $region52
      $region51: #{forward.25} parent=39 // pred_region
        %s1059 = smul.u32 8, %s24
      $region52: #{forward.25} parent=39 // pred_fallthru
        _
    $region40: #{forward.25} parent=5 // pred_fallthru
      _
    %p1060 = scmp.le.s32.totalorder 2, %s13
    // Predicated region
    $region53: #{forward.25} parent=5 // pred_check
      %p1061 = pneg %p1060
    $region54: #{forward.25} parent=5 // pred_check_branch
      %1063 = sbr.rel (%p1061) target = $region56
    $region55: #{forward.25} parent=5 // pred_region
      %s1064 = ssub.s32 %s13, 2
      // Predicated region
      $region57: #{forward.25} parent=55 // pred_check
        %p1065 = pneg %p196
      $region58: #{forward.25} parent=55 // pred_check_branch
        %1067 = sbr.rel (%p1065) target = $region60
      $region59: #{forward.25} parent=55 // pred_region
        %s1068 = smul.u32 8, %s27
        %p1069 = scmp.lt.s32.totalorder %s26, 1
        %s1070 = scalar_select %p1069, %s26, 1
        %p1071 = scmp.lt.s32.totalorder %s1068, 7
        %s1072 = scalar_select %p1071, %s1068, 7
        %s1073 = smul.addr %s1070, 8
        %s1074 = sadd.s32 %s1072, %s1073
        %s1075 = smul.addr %s1074, 8
        %s1076 = scalar_lea.vmem %s5, %s1075
      $region60: #{forward.25} parent=55 // pred_fallthru
        _
    $region56: #{forward.25} parent=5 // pred_fallthru
      _
  $region6: #{forward.25} parent=0 // loop_footer
    %s17 = sadd.s32 1, %s13
  $region7: #{forward.25} parent=0 // loop_footer_branch
    %12 = sbr.rel target = $region3
  $region8: #{forward.25} parent=0 // loop_exit
    _

// kernel: forward.26
$region0: #{forward.26}
  #allocation0 [shape = 'u32[]', space=smem, size = 0x4, offset = 0x4, fixed_abs, tag = 'smem constant byte address 0x4 - core index']
  #allocation1 [shape = 'u32[144,128]{1,0:T(1,128)}', space=vmem, size = 0x12000, scoped, tag = 'internal scratch']
  #allocation2 [shape = 'f32[32,128]{1,0:T(8,128)}', space=vmem, size = 0x4000, scoped, tag = 'scratch operand']
  %s0 = inlined_call_operand.vmem [shape: bf16[32,640], index: 0, kind: input, shape index: {}]
  %s1 = inlined_call_operand.vmem [shape: bf16[640,128], index: 1, kind: input, shape index: {}]
  %s2 = inlined_call_operand.vmem [shape: f32[1,128], index: 2, kind: input, shape index: {}]
  %s3 = inlined_call_operand.vmem [shape: f32[32,128], index: 3, kind: output, shape index: {}]
  %s4 = sld [smem:[#allocation0]]
  $region94: #{forward.26} parent=0
    _
  %s6 = ssub.s32 1, %s4
  %s7 = scalar_select 0, %s6, %s4
  $region1: #{forward.26} parent=0
    #allocation3 [shape = 'u8[16384]{0}', space=vmem, size = 0x4000, scoped, tag = 'input window, operand 0']
    loop: start=0, step=1, limit=7
    $region2: #{forward.26} parent=1 // loop_pre_header
      _
    $region3: #{forward.26} parent=1 // loop_header
      %s9 = sphi 0, %s13
      %p10 = scmp.ge.s32.totalorder %s9, 7
      %s16 = sphi 0, %s35
      %s17 = sphi 0, %s31
      %s18 = sphi 0, %s27
      %s19 = sphi 0, %s16
      %s20 = sphi 0, %s17
      %s21 = sphi 0, %s18
      %s22 = sphi 0, %s19
      %s23 = sphi 0, %s20
      %s24 = sphi 0, %s21
      %s40 = sphi 0, %s42
      %s43 = sphi 0, %s40
      %s44 = sphi 0, %s43
      %s60 = sphi 0, %s44
      %s68 = sphi 0, %s70
      %s71 = sphi 0, %s68
      %s72 = sphi 0, %s71
      %s88 = sphi 0, %s72
      %s94 = sphi 0, %s96
      %s97 = sphi 0, %s94
      %s98 = sphi 0, %s97
      %s114 = sphi 0, %s98
      %s122 = sphi 0, %s124
      %s125 = sphi 0, %s122
      %s126 = sphi 0, %s125
      %s142 = sphi 0, %s126
    $region4: #{forward.26} parent=1 // loop_header_branch
      %12 = sbr.rel (%p10) target = $region8
    $region5: #{forward.26} parent=1 // loop_body
      %s14 = ssub.s32 %s9, 1
      %s15 = ssub.s32 %s9, 2
      %s25 = sadd.s32 1, %s18
      %p26 = scmp.ge.s32.totalorder %s25, 5
      %s27 = scalar_select %p26, 0, %s25
      %s28 = sadd.s32 1, %s17
      %s29 = scalar_select %p26, %s28, %s17
      %p30 = scmp.ge.s32.totalorder %s29, 1
      %s31 = scalar_select %p30, 0, %s29
      %s32 = sadd.s32 1, %s16
      %s33 = scalar_select %p30, %s32, %s16
      %p34 = scmp.ge.s32.totalorder %s33, 1
      %s35 = scalar_select %p34, 0, %s33
      %s36 = ssub.s32 %s16, %s35
      %s37 = ssub.s32 %s18, %s27
      %s38 = sor.u32 %s36, %s37
      %p39 = scmp.eq.s32.totalorder %s38, 0
      %s41 = sadd.s32 %s40, 1
      %s42 = scalar_select %p39, %s40, %s41
      %p45 = pneg %p39
      %p46 = scmp.eq.s32.totalorder %s9, 4
      %p47 = por %p45, %p46
      %p48 = scmp.ne.s32.totalorder %s40, %s43
      %p49 = scmp.eq.s32.totalorder %s9, 0
      %p50 = por %p48, %p49
      %p51 = scmp.ne.s32.totalorder %s40, %s43
      %p52 = scmp.eq.s32.totalorder %s14, 4
      %p53 = por %p51, %p52
      %p54 = scmp.ne.s32.totalorder %s43, %s44
      %p55 = scmp.eq.s32.totalorder %s14, 0
      %p56 = por %p54, %p55
      %p57 = scmp.ne.s32.totalorder %s43, %s44
      %p58 = scmp.eq.s32.totalorder %s15, 4
      %p59 = por %p57, %p58
      %p61 = scmp.ne.s32.totalorder %s44, %s60
      %p62 = scmp.eq.s32.totalorder %s15, 0
      %p63 = por %p61, %p62
      %s64 = ssub.s32 %s18, %s27
      %s65 = ssub.s32 %s17, %s31
      %s66 = sor.u32 %s64, %s65
      %p67 = scmp.eq.s32.totalorder %s66, 0
      %s69 = sadd.s32 %s68, 1
      %s70 = scalar_select %p67, %s68, %s69
      %p73 = pneg %p67
      %p74 = scmp.eq.s32.totalorder %s9, 4
      %p75 = por %p73, %p74
      %p76 = scmp.ne.s32.totalorder %s68, %s71
      %p77 = scmp.eq.s32.totalorder %s9, 0
      %p78 = por %p76, %p77
      %p79 = scmp.ne.s32.totalorder %s68, %s71
      %p80 = scmp.eq.s32.totalorder %s14, 4
      %p81 = por %p79, %p80
      %p82 = scmp.ne.s32.totalorder %s71, %s72
      %p83 = scmp.eq.s32.totalorder %s14, 0
      %p84 = por %p82, %p83
      %p85 = scmp.ne.s32.totalorder %s71, %s72
      %p86 = scmp.eq.s32.totalorder %s15, 4
      %p87 = por %p85, %p86
      %p89 = scmp.ne.s32.totalorder %s72, %s88
      %p90 = scmp.eq.s32.totalorder %s15, 0
      %p91 = por %p89, %p90
      %s92 = ssub.s32 %s17, %s31
      %p93 = scmp.eq.s32.totalorder %s92, 0
      %s95 = sadd.s32 %s94, 1
      %s96 = scalar_select %p93, %s94, %s95
      %p99 = pneg %p93
      %p100 = scmp.eq.s32.totalorder %s9, 4
      %p101 = por %p99, %p100
      %p102 = scmp.ne.s32.totalorder %s94, %s97
      %p103 = scmp.eq.s32.totalorder %s9, 0
      %p104 = por %p102, %p103
      %p105 = scmp.ne.s32.totalorder %s94, %s97
      %p106 = scmp.eq.s32.totalorder %s14, 4
      %p107 = por %p105, %p106
      %p108 = scmp.ne.s32.totalorder %s97, %s98
      %p109 = scmp.eq.s32.totalorder %s14, 0
      %p110 = por %p108, %p109
      %p111 = scmp.ne.s32.totalorder %s97, %s98
      %p112 = scmp.eq.s32.totalorder %s15, 4
      %p113 = por %p111, %p112
      %p115 = scmp.ne.s32.totalorder %s98, %s114
      %p116 = scmp.eq.s32.totalorder %s15, 0
      %p117 = por %p115, %p116
      %s118 = ssub.s32 %s16, %s35
      %s119 = ssub.s32 %s17, %s31
      %s120 = sor.u32 %s118, %s119
      %p121 = scmp.eq.s32.totalorder %s120, 0
      %s123 = sadd.s32 %s122, 1
      %s124 = scalar_select %p121, %s122, %s123
      %p127 = pneg %p121
      %p128 = scmp.eq.s32.totalorder %s9, 4
      %p129 = por %p127, %p128
      %p130 = scmp.ne.s32.totalorder %s122, %s125
      %p131 = scmp.eq.s32.totalorder %s9, 0
      %p132 = por %p130, %p131
      %p133 = scmp.ne.s32.totalorder %s122, %s125
      %p134 = scmp.eq.s32.totalorder %s14, 4
      %p135 = por %p133, %p134
      %p136 = scmp.ne.s32.totalorder %s125, %s126
      %p137 = scmp.eq.s32.totalorder %s14, 0
      %p138 = por %p136, %p137
      %p139 = scmp.ne.s32.totalorder %s125, %s126
      %p140 = scmp.eq.s32.totalorder %s15, 4
      %p141 = por %p139, %p140
      %p143 = scmp.ne.s32.totalorder %s126, %s142
      %p144 = scmp.eq.s32.totalorder %s15, 0
      %p145 = por %p143, %p144
      %p146 = scmp.le.s32.totalorder 1, %s9
      %p147 = scmp.lt.s32.totalorder %s9, 6
      %p148 = pnand %p146, %p147
      %p149 = pneg %p148
      // Predicated region
      $region9: #{forward.26} parent=5 // pred_check
        _
      $region10: #{forward.26} parent=5 // pred_check_branch
        %151 = sbr.rel (%p148) target = $region12
      $region11: #{forward.26} parent=5 // pred_region
        %s152 = ssub.s32 %s9, 1
        // Predicated region
        $region13: #{forward.26} parent=11 // pred_check
          %p153 = pneg %p110
        $region14: #{forward.26} parent=11 // pred_check_branch
          %155 = sbr.rel (%p153) target = $region16
        $region15: #{forward.26} parent=11 // pred_region
          %p156 = scmp.lt.s32.totalorder %s20, 0
          %s157 = scalar_select %p156, %s20, 0
          %s158 = scalar_lea.vmem %s2, %s157
        $region16: #{forward.26} parent=11 // pred_fallthru
          _
      $region12: #{forward.26} parent=5 // pred_fallthru
        _
      %p159 = scmp.lt.s32.totalorder %s9, 5
      // Predicated region
      $region17: #{forward.26} parent=5 // pred_check
        %p160 = pneg %p159
      $region18: #{forward.26} parent=5 // pred_check_branch
        %162 = sbr.rel (%p160) target = $region20
      $region19: #{forward.26} parent=5 // pred_region
        // Predicated region
        $region21: #{forward.26} parent=19 // pred_check
          %p163 = pneg %p50
        $region22: #{forward.26} parent=19 // pred_check_branch
          %165 = sbr.rel (%p163) target = $region24
        $region23: #{forward.26} parent=19 // pred_region
          %s166 = sand.u32 %s40, 1
          %s167 = sand.u32 %s40, 1
          %s168 = smul.addr %s167, 16
          %s169 = scalar_lea.vmem [#allocation3], %s168
          %s170 = smul.u32 4, %s16
          %s171 = smul.addr %s170, 5
          %s172 = sadd.s32 %s18, %s171
          %s173 = smul.addr %s172, 4
          %s174 = scalar_lea.vmem %s0, %s173
          // Predicated region
          $region25: #{forward.26} parent=23 // pred_check
            _
          $region26: #{forward.26} parent=23 // pred_check_branch
            %176 = sbr.rel (0) target = $region28
          $region27: #{forward.26} parent=23 // pred_region
            // Predicated region
            $region29: #{forward.26} parent=27 // pred_check
              _
            $region30: #{forward.26} parent=27 // pred_check_branch
              %178 = sbr.rel target = $region32
            $region31: #{forward.26} parent=27 // pred_region
              // Predicated region
              $region44: #{forward.26} parent=31 // pred_check
                _
              $region45: #{forward.26} parent=31 // pred_check_branch
                %200 = sbr.rel (0) target = $region47
              $region46: #{forward.26} parent=31 // pred_region
                loop: start=0, step=1, limit=1
                $region48: #{forward.26} parent=46 // loop_pre_header
                  _
                $region49: #{forward.26} parent=46 // loop_header
                  %s202 = sphi 0, %s206
                  %p203 = scmp.ge.s32.totalorder %s202, 1
                  %s207 = sphi %s174, %s174
                  %s208 = sphi %s169, %s169
                $region50: #{forward.26} parent=46 // loop_header_branch
                  %205 = sbr.rel (%p203) target = $region54
                $region51: #{forward.26} parent=46 // loop_body
                  _
                $region52: #{forward.26} parent=46 // loop_footer
                  %s206 = sadd.s32 1, %s202
                $region53: #{forward.26} parent=46 // loop_footer_branch
                  %201 = sbr.rel target = $region49
                $region54: #{forward.26} parent=46 // loop_exit
                  _
                %s210 = ssub.s32 16, 1
                loop: start=0, step=1, limit=1
                $region55: #{forward.26} parent=46 // loop_pre_header
                  _
                $region56: #{forward.26} parent=46 // loop_header
                  %s212 = sphi 0, %s216
                  %p213 = scmp.ge.s32.totalorder %s212, 1
                  %s217 = sphi %s174, %s174
                  %s218 = sphi %s169, %s169
                $region57: #{forward.26} parent=46 // loop_header_branch
                  %215 = sbr.rel (%p213) target = $region61
                $region58: #{forward.26} parent=46 // loop_body
                  %v219 = vld [vmem:[%s217] sm:%s210]
                  %220 = vst [vmem:[%s218] sm:%s210] %v219
                  %v221 = vld [vmem:[%s217 + $0x14] sm:%s210]
                  %222 = vst [vmem:[%s218 + $0x4] sm:%s210] %v221
                  %v223 = vld [vmem:[%s217 + $0x28] sm:%s210]
                  %224 = vst [vmem:[%s218 + $0x8] sm:%s210] %v223
                  %v225 = vld [vmem:[%s217 + $0x3c] sm:%s210]
                  %226 = vst [vmem:[%s218 + $0xc] sm:%s210] %v225
                $region59: #{forward.26} parent=46 // loop_footer
                  %s216 = sadd.s32 1, %s212
                $region60: #{forward.26} parent=46 // loop_footer_branch
                  %211 = sbr.rel target = $region56
                $region61: #{forward.26} parent=46 // loop_exit
                  _
              $region47: #{forward.26} parent=31 // pred_fallthru
                _
            $region32: #{forward.26} parent=27 // pred_fallthru
              _
            // Predicated region
            $region33: #{forward.26} parent=27 // pred_check
              _
            $region34: #{forward.26} parent=27 // pred_check_branch
              %180 = sbr.rel (0) target = $region36
            $region35: #{forward.26} parent=27 // pred_region
              %s182 = ssub.s32 16, 1
              loop: start=0, step=1, limit=1
              $region37: #{forward.26} parent=35 // loop_pre_header
                _
              $region38: #{forward.26} parent=35 // loop_header
                %s184 = sphi 0, %s188
                %p185 = scmp.ge.s32.totalorder %s184, 1
                %s189 = sphi %s174, %s174
                %s190 = sphi %s169, %s169
              $region39: #{forward.26} parent=35 // loop_header_branch
                %187 = sbr.rel (%p185) target = $region43
              $region40: #{forward.26} parent=35 // loop_body
                %v191 = vld [vmem:[%s189] sm:%s182]
                %192 = vst [vmem:[%s190] sm:%s182] %v191
                %v193 = vld [vmem:[%s189 + $0x14] sm:%s182]
                %194 = vst [vmem:[%s190 + $0x4] sm:%s182] %v193
                %v195 = vld [vmem:[%s189 + $0x28] sm:%s182]
                %196 = vst [vmem:[%s190 + $0x8] sm:%s182] %v195
                %v197 = vld [vmem:[%s189 + $0x3c] sm:%s182]
                %198 = vst [vmem:[%s190 + $0xc] sm:%s182] %v197
              $region41: #{forward.26} parent=35 // loop_footer
                %s188 = sadd.s32 1, %s184
              $region42: #{forward.26} parent=35 // loop_footer_branch
                %183 = sbr.rel target = $region38
              $region43: #{forward.26} parent=35 // loop_exit
                _
            $region36: #{forward.26} parent=27 // pred_fallthru
              _
          $region28: #{forward.26} parent=23 // pred_fallthru
            _
          %227 = vnop
        $region24: #{forward.26} parent=19 // pred_fallthru
          _
        // Predicated region
        $region62: #{forward.26} parent=19 // pred_check
          %p228 = pneg %p78
        $region63: #{forward.26} parent=19 // pred_check_branch
          %230 = sbr.rel (%p228) target = $region65
        $region64: #{forward.26} parent=19 // pred_region
          %s231 = smul.u32 16, %s18
          %p232 = scmp.lt.s32.totalorder %s231, 79
          %s233 = scalar_select %p232, %s231, 79
          %p234 = scmp.lt.s32.totalorder %s17, 0
          %s235 = scalar_select %p234, %s17, 0
          %s236 = sadd.s32 %s235, %s233
          %s237 = smul.addr %s236, 4
          %s238 = scalar_lea.vmem %s1, %s237
          %s239 = smul.u32 16, %s18
        $region65: #{forward.26} parent=19 // pred_fallthru
          _
      $region20: #{forward.26} parent=5 // pred_fallthru
        _
      %p240 = scmp.le.s32.totalorder 1, %s9
      %p241 = scmp.lt.s32.totalorder %s9, 6
      %p242 = pnand %p240, %p241
      %p243 = pneg %p242
      // Predicated region
      $region66: #{forward.26} parent=5 // pred_check
        _
      $region67: #{forward.26} parent=5 // pred_check_branch
        %245 = sbr.rel (%p242) target = $region69
      $region68: #{forward.26} parent=5 // pred_region
        %s246 = ssub.s32 %s9, 1
        %s247 = sand.u32 %s43, 1
        %s248 = sand.u32 %s43, 1
        %s249 = smul.addr %s248, 16
        %s250 = scalar_lea.vmem [#allocation3], %s249
        // Predicated region
        $region70: #{forward.26} parent=68 // pred_check
          %p251 = pneg %p56
        $region71: #{forward.26} parent=68 // pred_check_branch
          %253 = sbr.rel (%p251) target = $region73
        $region72: #{forward.26} parent=68 // pred_region
          _
        $region73: #{forward.26} parent=68 // pred_fallthru
          _
        %s254 = sand.u32 %s43, 1
        %s255 = sand.u32 %s43, 1
        %s256 = smul.addr %s255, 16
        %s257 = scalar_lea.vmem [#allocation3], %s256
        %p258 = pneg %p56
        %p259 = pneg %p53
        %s260 = smul.u32 16, %s21
        %p261 = scmp.lt.s32.totalorder %s260, 79
        %s262 = scalar_select %p261, %s260, 79
        %p263 = scmp.lt.s32.totalorder %s20, 0
        %s264 = scalar_select %p263, %s20, 0
        %s265 = sadd.s32 %s264, %s262
        %s266 = smul.addr %s265, 4
        %s267 = scalar_lea.vmem %s1, %s266
        %p268 = pneg %p84
        %p269 = pneg %p81
        %p270 = scmp.lt.s32.totalorder %s20, 0
        %s271 = scalar_select %p270, %s20, 0
        %s272 = scalar_lea.vmem %s2, %s271
        %p273 = pneg %p110
        %p274 = pneg %p107
        %p275 = pneg %p138
        %p276 = pneg %p135
        %s277 = smul.u32 4, %s19
        %p278 = scmp.lt.s32.totalorder %s277, 3
        %s279 = scalar_select %p278, %s277, 3
        %p280 = scmp.lt.s32.totalorder %s20, 0
        %s281 = scalar_select %p280, %s20, 0
        %s282 = sadd.s32 %s281, %s279
        %s283 = smul.addr %s282, 8
        %s284 = scalar_lea.vmem %s3, %s283
        %s285 = smul.u32 4, %s19
        %s286 = smul.u32 16, %s21
        %p287 = scmp.lt.s32.totalorder %s286, 79
        %s288 = scalar_select %p287, %s286, 79
        %p289 = scmp.lt.s32.totalorder %s20, 0
        %s290 = scalar_select %p289, %s20, 0
        %s291 = sadd.s32 %s290, %s288
        %s292 = smul.addr %s291, 4
        %s293 = scalar_lea.vmem %s1, %s292
        %s294 = smul.u32 16, %s21
        %p295 = scmp.lt.s32.totalorder %s20, 0
        %s296 = scalar_select %p295, %s20, 0
        %s297 = scalar_lea.vmem %s2, %s296
        %s298 = smul.u32 4, %s19
        %p299 = scmp.lt.s32.totalorder %s298, 3
        %s300 = scalar_select %p299, %s298, 3
        %p301 = scmp.lt.s32.totalorder %s20, 0
        %s302 = scalar_select %p301, %s20, 0
        %s303 = sadd.s32 %s302, %s300
        %s304 = smul.addr %s303, 8
        %s305 = scalar_lea.vmem %s3, %s304
        %s306 = smul.u32 4, %s19
        %p308 = scmp.eq.s32.totalorder %s21, 0
        // Predicated region
        $region74: #{forward.26} parent=68 // pred_check
          %p309 = pneg %p308
        $region75: #{forward.26} parent=68 // pred_check_branch
          %311 = sbr.rel (%p309) target = $region77
        $region76: #{forward.26} parent=68 // pred_region
          %312 = vst [vmem:[#allocation2] sm:$0xff] 0.0
          %313 = vst [vmem:[#allocation2 + $0x8] sm:$0xff] 0.0
          %314 = vst [vmem:[#allocation2 + $0x10] sm:$0xff] 0.0
          %315 = vst [vmem:[#allocation2 + $0x18] sm:$0xff] 0.0
        $region77: #{forward.26} parent=68 // pred_fallthru
          _
        %v316 = vld [vmem:[#allocation2] sm:$0xff]
        %v317 = vld [vmem:[#allocation2 + $0x8] sm:$0xff]
        %v318 = vld [vmem:[#allocation2 + $0x10] sm:$0xff]
        %v319 = vld [vmem:[#allocation2 + $0x18] sm:$0xff]
        %v320 = vld [vmem:[%s250] sm:$0xf]
        %v321 = vld [vmem:[%s250 + $0x4] sm:$0xf]
        %v322 = vld [vmem:[%s250 + $0x8] sm:$0xf]
        %v323 = vld [vmem:[%s250 + $0xc] sm:$0xf]
        %v324 = vld [vmem:[%s293] sm:$0xf]
        %v325 = vld [vmem:[%s293 + $0x4] sm:$0xf]
        %v326 = vld [vmem:[%s293 + $0x8] sm:$0xf]
        %v327 = vld [vmem:[%s293 + $0xc] sm:$0xf]
        %v328 = vld [vmem:[%s293 + $0x10] sm:$0xf]
        %v329 = vld [vmem:[%s293 + $0x14] sm:$0xf]
        %v330 = vld [vmem:[%s293 + $0x18] sm:$0xf]
        %v331 = vld [vmem:[%s293 + $0x1c] sm:$0xf]
        %v332 = vld [vmem:[%s293 + $0x20] sm:$0xf]
        %v333 = vld [vmem:[%s293 + $0x24] sm:$0xf]
        %v334 = vld [vmem:[%s293 + $0x28] sm:$0xf]
        %v335 = vld [vmem:[%s293 + $0x2c] sm:$0xf]
        %v336 = vld [vmem:[%s293 + $0x30] sm:$0xf]
        %v337 = vld [vmem:[%s293 + $0x34] sm:$0xf]
        %v338 = vld [vmem:[%s293 + $0x38] sm:$0xf]
        %v339 = vld [vmem:[%s293 + $0x3c] sm:$0xf]
        %v344 = vunpack.c.l.b16 %v320
        %v345 = vunpack.c.l.b16 %v321
        %v346 = vunpack.c.l.b16 %v322
        %v347 = vunpack.c.l.b16 %v323
        %v348 = vpack.c.b16 %v345, %v344
        %v349 = vpack.c.b16 %v347, %v346
        %v368 = vunpack.c.l.b16 %v324
        %v369 = vunpack.c.l.b16 %v325
        %v370 = vunpack.c.l.b16 %v326
        %v371 = vunpack.c.l.b16 %v327
        %v372 = vunpack.c.l.b16 %v328
        %v373 = vunpack.c.l.b16 %v329
        %v374 = vunpack.c.l.b16 %v330
        %v375 = vunpack.c.l.b16 %v331
        %v376 = vunpack.c.l.b16 %v332
        %v377 = vunpack.c.l.b16 %v333
        %v378 = vunpack.c.l.b16 %v334
        %v379 = vunpack.c.l.b16 %v335
        %v380 = vunpack.c.l.b16 %v336
        %v381 = vunpack.c.l.b16 %v337
        %v382 = vunpack.c.l.b16 %v338
        %v383 = vunpack.c.l.b16 %v339
        %v384 = vpack.c.b16 %v369, %v368
        %v385 = vpack.c.b16 %v371, %v370
        %v386 = vpack.c.b16 %v373, %v372
        %v387 = vpack.c.b16 %v375, %v374
        %v388 = vpack.c.b16 %v377, %v376
        %v389 = vpack.c.b16 %v379, %v378
        %v390 = vpack.c.b16 %v381, %v380
        %v391 = vpack.c.b16 %v383, %v382
        %400 = vmatprep.subr.bf16.mxu0 0
        %401 = vmatpush1.bf16.msra.mxu0 %v391
        %402 = vmatprep.subr.bf16.mxu0 0
        %403 = vmatpush1.bf16.msra.mxu0 %v390
        %404 = vmatprep.subr.bf16.mxu0 0
        %405 = vmatpush1.bf16.msra.mxu0 %v389
        %406 = vmatprep.subr.bf16.mxu0 0
        %407 = vmatpush1.bf16.msra.mxu0 %v388
        %408 = vmatprep.subr.bf16.mxu0 0
        %409 = vmatpush1.bf16.msra.mxu0 %v387
        %410 = vmatprep.subr.bf16.mxu0 0
        %411 = vmatpush1.bf16.msra.mxu0 %v386
        %412 = vmatprep.subr.bf16.mxu0 0
        %413 = vmatpush1.bf16.msra.mxu0 %v385
        %414 = vmatprep.subr.bf16.mxu0 0
        %415 = vmatpush1.bf16.msra.mxu0 %v384
        %416 = vmatprep.subr.bf16.mxu0 0
        %417 = vmatpush2.bf16.msra.mxu0 0
        %418 = vmatprep.subr.bf16.mxu0 0
        %419 = vmatpush2.bf16.msra.mxu0 0
        %420 = vmatprep.subr.bf16.mxu0 0
        %421 = vmatpush2.bf16.msra.mxu0 0
        %422 = vmatprep.subr.bf16.mxu0 0
        %423 = vmatpush2.bf16.msra.mxu0 0
        %424 = vmatprep.subr.bf16.mxu0 0
        %425 = vmatpush2.bf16.msra.mxu0 0
        %426 = vmatprep.subr.bf16.mxu0 0
        %427 = vmatpush2.bf16.msra.mxu0 0
        %428 = vmatprep.subr.bf16.mxu0 0
        %429 = vmatpush2.bf16.msra.mxu0 0
        %430 = vmatprep.subr.bf16.mxu0 0
        %431 = vmatpush2.bf16.msra.mxu0 0
        %432 = vmatprep.mubr.bf16.mxu0 0
        %433 = vmatmul.mubr.bf16.gmra.mxu0 %v348
        %v434 = vpop.f32.mrf.mxu0
        %v435 = vadd.f32 0.0, %v434
        %v436 = vpop.f32.mrf.mxu0
        %v437 = vpop.f32.mrf.mxu0
        %v438 = vadd.f32 0.0, %v437
        %v439 = vpop.f32.mrf.mxu0
        %440 = vmatprep.mubr.bf16.mxu0 0
        %441 = vmatmul.mubr.bf16.gmra.mxu0 %v349
        %v442 = vpop.f32.mrf.mxu0
        %v443 = vadd.f32 0.0, %v442
        %v444 = vpop.f32.mrf.mxu0
        %v445 = vpop.f32.mrf.mxu0
        %v446 = vadd.f32 0.0, %v445
        %v447 = vpop.f32.mrf.mxu0
        %448 = vdwg.mxu0
        %v449 = vadd.f32 %v316, %v435
        %v450 = vadd.f32 %v317, %v438
        %v451 = vadd.f32 %v318, %v443
        %v452 = vadd.f32 %v319, %v446
        %453 = vst [vmem:[#allocation2] sm:$0xff] %v449
        %454 = vst [vmem:[#allocation2 + $0x8] sm:$0xff] %v450
        %455 = vst [vmem:[#allocation2 + $0x10] sm:$0xff] %v451
        %456 = vst [vmem:[#allocation2 + $0x18] sm:$0xff] %v452
        %p457 = scmp.eq.s32.totalorder %s21, 4
        // Predicated region
        $region78: #{forward.26} parent=68 // pred_check
          %p458 = pneg %p457
        $region79: #{forward.26} parent=68 // pred_check_branch
          %460 = sbr.rel (%p458) target = $region81
        $region80: #{forward.26} parent=68 // pred_region
          %v461 = vld [vmem:[#allocation2] sm:$0xff]
          %v462 = vld [vmem:[#allocation2 + $0x8] sm:$0xff]
          %v463 = vld [vmem:[#allocation2 + $0x10] sm:$0xff]
          %v464 = vld [vmem:[#allocation2 + $0x18] sm:$0xff]
          %v465 = vld [vmem:[%s297] sm:$0x1]
          %v467 = vlaneseq
          %v468 = vshrl.u32 %v467, 7
          %v469 = vsub.s32 0, %v468
          %v470 = vrot.slane %v465, %v469
          %v472 = vadd.f32 %v461, %v470
          %v473 = vadd.f32 %v462, %v470
          %v474 = vadd.f32 %v463, %v470
          %v475 = vadd.f32 %v464, %v470
          %v476 = vmax.f32 %v472, 0.0
          %v477 = vmax.f32 %v473, 0.0
          %v478 = vmax.f32 %v474, 0.0
          %v479 = vmax.f32 %v475, 0.0
          %480 = vst [vmem:[%s305] sm:$0xff] %v476
          %481 = vst [vmem:[%s305 + $0x8] sm:$0xff] %v477
          %482 = vst [vmem:[%s305 + $0x10] sm:$0xff] %v478
          %483 = vst [vmem:[%s305 + $0x18] sm:$0xff] %v479
        $region81: #{forward.26} parent=68 // pred_fallthru
          _
        %s484 = smul.u32 4, %s19
        %p485 = scmp.lt.s32.totalorder %s484, 3
        %s486 = scalar_select %p485, %s484, 3
        %p487 = scmp.lt.s32.totalorder %s20, 0
        %s488 = scalar_select %p487, %s20, 0
        %s489 = sadd.s32 %s488, %s486
        %s490 = smul.addr %s489, 8
        %s491 = scalar_lea.vmem %s3, %s490
        // Predicated region
        $region82: #{forward.26} parent=68 // pred_check
          %p492 = pneg %p135
        $region83: #{forward.26} parent=68 // pred_check_branch
          %494 = sbr.rel (%p492) target = $region85
        $region84: #{forward.26} parent=68 // pred_region
          %s495 = smul.u32 4, %s19
        $region85: #{forward.26} parent=68 // pred_fallthru
          _
        // Predicated region
        $region86: #{forward.26} parent=68 // pred_check
          %p496 = pneg %p135
        $region87: #{forward.26} parent=68 // pred_check_branch
          %498 = sbr.rel (%p496) target = $region89
        $region88: #{forward.26} parent=68 // pred_region
          %s499 = smul.u32 4, %s19
          %p500 = scmp.lt.s32.totalorder %s499, 3
          %s501 = scalar_select %p500, %s499, 3
          %p502 = scmp.lt.s32.totalorder %s20, 0
          %s503 = scalar_select %p502, %s20, 0
          %s504 = sadd.s32 %s503, %s501
          %s505 = smul.addr %s504, 8
          %s506 = scalar_lea.vmem %s3, %s505
        $region89: #{forward.26} parent=68 // pred_fallthru
          _
      $region69: #{forward.26} parent=5 // pred_fallthru
        _
      %p507 = scmp.le.s32.totalorder 2, %s9
      // Predicated region
      $region90: #{forward.26} parent=5 // pred_check
        %p508 = pneg %p507
      $region91: #{forward.26} parent=5 // pred_check_branch
        %510 = sbr.rel (%p508) target = $region93
      $region92: #{forward.26} parent=5 // pred_region
        %s511 = ssub.s32 %s9, 2
      $region93: #{forward.26} parent=5 // pred_fallthru
        _
    $region6: #{forward.26} parent=1 // loop_footer
      %s13 = sadd.s32 1, %s9
    $region7: #{forward.26} parent=1 // loop_footer_branch
      %8 = sbr.rel target = $region3
    $region8: #{forward.26} parent=1 // loop_exit
      _

// kernel: forward.27
$region0: #{forward.27}
  #allocation0 [shape = 'u32[]', space=smem, size = 0x4, offset = 0x4, fixed_abs, tag = 'smem constant byte address 0x4 - core index']
  #allocation1 [shape = 'u32[144,128]{1,0:T(1,128)}', space=vmem, size = 0x12000, scoped, tag = 'internal scratch']
  #allocation2 [shape = 'f32[8,128]{1,0:T(8,128)}', space=vmem, size = 0x1000, scoped, tag = 'scratch operand']
  %s0 = inlined_call_operand.vmem [shape: bf16[8,2048], index: 0, kind: input, shape index: {}]
  %s1 = inlined_call_operand.vmem [shape: bf16[2048,128], index: 1, kind: input, shape index: {}]
  %s2 = inlined_call_operand.vmem [shape: f32[1,128], index: 2, kind: input, shape index: {}]
  %s3 = inlined_call_operand.vmem [shape: f32[8,128], index: 3, kind: output, shape index: {}]
  %s4 = sld [smem:[#allocation0]]
  $region53: #{forward.27} parent=0
    _
  %s6 = ssub.s32 1, %s4
  %s7 = scalar_select 0, %s6, %s4
  loop: start=0, step=1, limit=6
  $region2: #{forward.27} parent=0 // loop_pre_header
    _
  $region3: #{forward.27} parent=0 // loop_header
    %s9 = sphi 0, %s13
    %p10 = scmp.ge.s32.totalorder %s9, 6
    %s16 = sphi 0, %s35
    %s17 = sphi 0, %s31
    %s18 = sphi 0, %s27
    %s19 = sphi 0, %s16
    %s20 = sphi 0, %s17
    %s21 = sphi 0, %s18
    %s22 = sphi 0, %s19
    %s23 = sphi 0, %s20
    %s24 = sphi 0, %s21
    %s40 = sphi 0, %s42
    %s43 = sphi 0, %s40
    %s44 = sphi 0, %s43
    %s60 = sphi 0, %s44
    %s68 = sphi 0, %s70
    %s71 = sphi 0, %s68
    %s72 = sphi 0, %s71
    %s88 = sphi 0, %s72
    %s94 = sphi 0, %s96
    %s97 = sphi 0, %s94
    %s98 = sphi 0, %s97
    %s114 = sphi 0, %s98
    %s122 = sphi 0, %s124
    %s125 = sphi 0, %s122
    %s126 = sphi 0, %s125
    %s142 = sphi 0, %s126
  $region4: #{forward.27} parent=0 // loop_header_branch
    %12 = sbr.rel (%p10) target = $region8
  $region5: #{forward.27} parent=0 // loop_body
    %s14 = ssub.s32 %s9, 1
    %s15 = ssub.s32 %s9, 2
    %s25 = sadd.s32 1, %s18
    %p26 = scmp.ge.s32.totalorder %s25, 4
    %s27 = scalar_select %p26, 0, %s25
    %s28 = sadd.s32 1, %s17
    %s29 = scalar_select %p26, %s28, %s17
    %p30 = scmp.ge.s32.totalorder %s29, 1
    %s31 = scalar_select %p30, 0, %s29
    %s32 = sadd.s32 1, %s16
    %s33 = scalar_select %p30, %s32, %s16
    %p34 = scmp.ge.s32.totalorder %s33, 1
    %s35 = scalar_select %p34, 0, %s33
    %s36 = ssub.s32 %s16, %s35
    %s37 = ssub.s32 %s18, %s27
    %s38 = sor.u32 %s36, %s37
    %p39 = scmp.eq.s32.totalorder %s38, 0
    %s41 = sadd.s32 %s40, 1
    %s42 = scalar_select %p39, %s40, %s41
    %p45 = pneg %p39
    %p46 = scmp.eq.s32.totalorder %s9, 3
    %p47 = por %p45, %p46
    %p48 = scmp.ne.s32.totalorder %s40, %s43
    %p49 = scmp.eq.s32.totalorder %s9, 0
    %p50 = por %p48, %p49
    %p51 = scmp.ne.s32.totalorder %s40, %s43
    %p52 = scmp.eq.s32.totalorder %s14, 3
    %p53 = por %p51, %p52
    %p54 = scmp.ne.s32.totalorder %s43, %s44
    %p55 = scmp.eq.s32.totalorder %s14, 0
    %p56 = por %p54, %p55
    %p57 = scmp.ne.s32.totalorder %s43, %s44
    %p58 = scmp.eq.s32.totalorder %s15, 3
    %p59 = por %p57, %p58
    %p61 = scmp.ne.s32.totalorder %s44, %s60
    %p62 = scmp.eq.s32.totalorder %s15, 0
    %p63 = por %p61, %p62
    %s64 = ssub.s32 %s18, %s27
    %s65 = ssub.s32 %s17, %s31
    %s66 = sor.u32 %s64, %s65
    %p67 = scmp.eq.s32.totalorder %s66, 0
    %s69 = sadd.s32 %s68, 1
    %s70 = scalar_select %p67, %s68, %s69
    %p73 = pneg %p67
    %p74 = scmp.eq.s32.totalorder %s9, 3
    %p75 = por %p73, %p74
    %p76 = scmp.ne.s32.totalorder %s68, %s71
    %p77 = scmp.eq.s32.totalorder %s9, 0
    %p78 = por %p76, %p77
    %p79 = scmp.ne.s32.totalorder %s68, %s71
    %p80 = scmp.eq.s32.totalorder %s14, 3
    %p81 = por %p79, %p80
    %p82 = scmp.ne.s32.totalorder %s71, %s72
    %p83 = scmp.eq.s32.totalorder %s14, 0
    %p84 = por %p82, %p83
    %p85 = scmp.ne.s32.totalorder %s71, %s72
    %p86 = scmp.eq.s32.totalorder %s15, 3
    %p87 = por %p85, %p86
    %p89 = scmp.ne.s32.totalorder %s72, %s88
    %p90 = scmp.eq.s32.totalorder %s15, 0
    %p91 = por %p89, %p90
    %s92 = ssub.s32 %s17, %s31
    %p93 = scmp.eq.s32.totalorder %s92, 0
    %s95 = sadd.s32 %s94, 1
    %s96 = scalar_select %p93, %s94, %s95
    %p99 = pneg %p93
    %p100 = scmp.eq.s32.totalorder %s9, 3
    %p101 = por %p99, %p100
    %p102 = scmp.ne.s32.totalorder %s94, %s97
    %p103 = scmp.eq.s32.totalorder %s9, 0
    %p104 = por %p102, %p103
    %p105 = scmp.ne.s32.totalorder %s94, %s97
    %p106 = scmp.eq.s32.totalorder %s14, 3
    %p107 = por %p105, %p106
    %p108 = scmp.ne.s32.totalorder %s97, %s98
    %p109 = scmp.eq.s32.totalorder %s14, 0
    %p110 = por %p108, %p109
    %p111 = scmp.ne.s32.totalorder %s97, %s98
    %p112 = scmp.eq.s32.totalorder %s15, 3
    %p113 = por %p111, %p112
    %p115 = scmp.ne.s32.totalorder %s98, %s114
    %p116 = scmp.eq.s32.totalorder %s15, 0
    %p117 = por %p115, %p116
    %s118 = ssub.s32 %s16, %s35
    %s119 = ssub.s32 %s17, %s31
    %s120 = sor.u32 %s118, %s119
    %p121 = scmp.eq.s32.totalorder %s120, 0
    %s123 = sadd.s32 %s122, 1
    %s124 = scalar_select %p121, %s122, %s123
    %p127 = pneg %p121
    %p128 = scmp.eq.s32.totalorder %s9, 3
    %p129 = por %p127, %p128
    %p130 = scmp.ne.s32.totalorder %s122, %s125
    %p131 = scmp.eq.s32.totalorder %s9, 0
    %p132 = por %p130, %p131
    %p133 = scmp.ne.s32.totalorder %s122, %s125
    %p134 = scmp.eq.s32.totalorder %s14, 3
    %p135 = por %p133, %p134
    %p136 = scmp.ne.s32.totalorder %s125, %s126
    %p137 = scmp.eq.s32.totalorder %s14, 0
    %p138 = por %p136, %p137
    %p139 = scmp.ne.s32.totalorder %s125, %s126
    %p140 = scmp.eq.s32.totalorder %s15, 3
    %p141 = por %p139, %p140
    %p143 = scmp.ne.s32.totalorder %s126, %s142
    %p144 = scmp.eq.s32.totalorder %s15, 0
    %p145 = por %p143, %p144
    %p146 = scmp.le.s32.totalorder 1, %s9
    %p147 = scmp.lt.s32.totalorder %s9, 5
    %p148 = pnand %p146, %p147
    %p149 = pneg %p148
    // Predicated region
    $region9: #{forward.27} parent=5 // pred_check
      _
    $region10: #{forward.27} parent=5 // pred_check_branch
      %151 = sbr.rel (%p148) target = $region12
    $region11: #{forward.27} parent=5 // pred_region
      %s152 = ssub.s32 %s9, 1
      // Predicated region
      $region13: #{forward.27} parent=11 // pred_check
        %p153 = pneg %p110
      $region14: #{forward.27} parent=11 // pred_check_branch
        %155 = sbr.rel (%p153) target = $region16
      $region15: #{forward.27} parent=11 // pred_region
        %p156 = scmp.lt.s32.totalorder %s20, 0
        %s157 = scalar_select %p156, %s20, 0
        %s158 = scalar_lea.vmem %s2, %s157
      $region16: #{forward.27} parent=11 // pred_fallthru
        _
    $region12: #{forward.27} parent=5 // pred_fallthru
      _
    %p159 = scmp.lt.s32.totalorder %s9, 4
    // Predicated region
    $region17: #{forward.27} parent=5 // pred_check
      %p160 = pneg %p159
    $region18: #{forward.27} parent=5 // pred_check_branch
      %162 = sbr.rel (%p160) target = $region20
    $region19: #{forward.27} parent=5 // pred_region
      // Predicated region
      $region21: #{forward.27} parent=19 // pred_check
        %p163 = pneg %p50
      $region22: #{forward.27} parent=19 // pred_check_branch
        %165 = sbr.rel (%p163) target = $region24
      $region23: #{forward.27} parent=19 // pred_region
        %s166 = smul.u32 4, %s18
        %p167 = scmp.lt.s32.totalorder %s16, 0
        %s168 = scalar_select %p167, %s16, 0
        %p169 = scmp.lt.s32.totalorder %s166, 15
        %s170 = scalar_select %p169, %s166, 15
        %s171 = smul.addr %s168, 16
        %s172 = sadd.s32 %s170, %s171
        %s173 = smul.addr %s172, 4
        %s174 = scalar_lea.vmem %s0, %s173
        %s175 = smul.u32 4, %s18
      $region24: #{forward.27} parent=19 // pred_fallthru
        _
      // Predicated region
      $region25: #{forward.27} parent=19 // pred_check
        %p176 = pneg %p78
      $region26: #{forward.27} parent=19 // pred_check_branch
        %178 = sbr.rel (%p176) target = $region28
      $region27: #{forward.27} parent=19 // pred_region
        %s179 = smul.u32 64, %s18
        %p180 = scmp.lt.s32.totalorder %s179, 255
        %s181 = scalar_select %p180, %s179, 255
        %p182 = scmp.lt.s32.totalorder %s17, 0
        %s183 = scalar_select %p182, %s17, 0
        %s184 = sadd.s32 %s183, %s181
        %s185 = smul.addr %s184, 4
        %s186 = scalar_lea.vmem %s1, %s185
        %s187 = smul.u32 64, %s18
      $region28: #{forward.27} parent=19 // pred_fallthru
        _
    $region20: #{forward.27} parent=5 // pred_fallthru
      _
    %p188 = scmp.le.s32.totalorder 1, %s9
    %p189 = scmp.lt.s32.totalorder %s9, 5
    %p190 = pnand %p188, %p189
    %p191 = pneg %p190
    // Predicated region
    $region29: #{forward.27} parent=5 // pred_check
      _
    $region30: #{forward.27} parent=5 // pred_check_branch
      %193 = sbr.rel (%p190) target = $region32
    $region31: #{forward.27} parent=5 // pred_region
      %s194 = ssub.s32 %s9, 1
      %s195 = smul.u32 4, %s21
      %p196 = scmp.lt.s32.totalorder %s19, 0
      %s197 = scalar_select %p196, %s19, 0
      %p198 = scmp.lt.s32.totalorder %s195, 15
      %s199 = scalar_select %p198, %s195, 15
      %s200 = smul.addr %s197, 16
      %s201 = sadd.s32 %s199, %s200
      %s202 = smul.addr %s201, 4
      %s203 = scalar_lea.vmem %s0, %s202
      %p204 = pneg %p56
      %p205 = pneg %p53
      %s206 = smul.u32 64, %s21
      %p207 = scmp.lt.s32.totalorder %s206, 255
      %s208 = scalar_select %p207, %s206, 255
      %p209 = scmp.lt.s32.totalorder %s20, 0
      %s210 = scalar_select %p209, %s20, 0
      %s211 = sadd.s32 %s210, %s208
      %s212 = smul.addr %s211, 4
      %s213 = scalar_lea.vmem %s1, %s212
      %p214 = pneg %p84
      %p215 = pneg %p81
      %p216 = scmp.lt.s32.totalorder %s20, 0
      %s217 = scalar_select %p216, %s20, 0
      %s218 = scalar_lea.vmem %s2, %s217
      %p219 = pneg %p110
      %p220 = pneg %p107
      %p221 = pneg %p138
      %p222 = pneg %p135
      %p223 = scmp.lt.s32.totalorder %s19, 0
      %s224 = scalar_select %p223, %s19, 0
      %p225 = scmp.lt.s32.totalorder %s20, 0
      %s226 = scalar_select %p225, %s20, 0
      %s227 = sadd.s32 %s226, %s224
      %s228 = smul.addr %s227, 8
      %s229 = scalar_lea.vmem %s3, %s228
      %s230 = smul.u32 4, %s21
      %p231 = scmp.lt.s32.totalorder %s19, 0
      %s232 = scalar_select %p231, %s19, 0
      %p233 = scmp.lt.s32.totalorder %s230, 15
      %s234 = scalar_select %p233, %s230, 15
      %s235 = smul.addr %s232, 16
      %s236 = sadd.s32 %s234, %s235
      %s237 = smul.addr %s236, 4
      %s238 = scalar_lea.vmem %s0, %s237
      %s239 = smul.u32 4, %s21
      %s240 = smul.u32 64, %s21
      %p241 = scmp.lt.s32.totalorder %s240, 255
      %s242 = scalar_select %p241, %s240, 255
      %p243 = scmp.lt.s32.totalorder %s20, 0
      %s244 = scalar_select %p243, %s20, 0
      %s245 = sadd.s32 %s244, %s242
      %s246 = smul.addr %s245, 4
      %s247 = scalar_lea.vmem %s1, %s246
      %s248 = smul.u32 64, %s21
      %p249 = scmp.lt.s32.totalorder %s20, 0
      %s250 = scalar_select %p249, %s20, 0
      %s251 = scalar_lea.vmem %s2, %s250
      %p252 = scmp.lt.s32.totalorder %s19, 0
      %s253 = scalar_select %p252, %s19, 0
      %p254 = scmp.lt.s32.totalorder %s20, 0
      %s255 = scalar_select %p254, %s20, 0
      %s256 = sadd.s32 %s255, %s253
      %s257 = smul.addr %s256, 8
      %s258 = scalar_lea.vmem %s3, %s257
      %p260 = scmp.eq.s32.totalorder %s21, 0
      // Predicated region
      $region33: #{forward.27} parent=31 // pred_check
        %p261 = pneg %p260
      $region34: #{forward.27} parent=31 // pred_check_branch
        %263 = sbr.rel (%p261) target = $region36
      $region35: #{forward.27} parent=31 // pred_region
        %264 = vst [vmem:[#allocation2] sm:$0xff] 0.0
      $region36: #{forward.27} parent=31 // pred_fallthru
        _
      %v265 = vld [vmem:[#allocation2] sm:$0xff]
      %v266 = vld [vmem:[%s238] sm:$0xff]
      %v267 = vld [vmem:[%s238 + $0x8] sm:$0xff]
      %v268 = vld [vmem:[%s247] sm:$0xf]
      %v269 = vld [vmem:[%s247 + $0x4] sm:$0xf]
      %v270 = vld [vmem:[%s247 + $0x8] sm:$0xf]
      %v271 = vld [vmem:[%s247 + $0xc] sm:$0xf]
      %v272 = vld [vmem:[%s247 + $0x10] sm:$0xf]
      %v273 = vld [vmem:[%s247 + $0x14] sm:$0xf]
      %v274 = vld [vmem:[%s247 + $0x18] sm:$0xf]
      %v275 = vld [vmem:[%s247 + $0x1c] sm:$0xf]
      %v276 = vld [vmem:[%s247 + $0x20] sm:$0xf]
      %v277 = vld [vmem:[%s247 + $0x24] sm:$0xf]
      %v278 = vld [vmem:[%s247 + $0x28] sm:$0xf]
      %v279 = vld [vmem:[%s247 + $0x2c] sm:$0xf]
      %v280 = vld [vmem:[%s247 + $0x30] sm:$0xf]
      %v281 = vld [vmem:[%s247 + $0x34] sm:$0xf]
      %v282 = vld [vmem:[%s247 + $0x38] sm:$0xf]
      %v283 = vld [vmem:[%s247 + $0x3c] sm:$0xf]
      %v284 = vld [vmem:[%s247 + $0x40] sm:$0xf]
      %v285 = vld [vmem:[%s247 + $0x44] sm:$0xf]
      %v286 = vld [vmem:[%s247 + $0x48] sm:$0xf]
      %v287 = vld [vmem:[%s247 + $0x4c] sm:$0xf]
      %v288 = vld [vmem:[%s247 + $0x50] sm:$0xf]
      %v289 = vld [vmem:[%s247 + $0x54] sm:$0xf]
      %v290 = vld [vmem:[%s247 + $0x58] sm:$0xf]
      %v291 = vld [vmem:[%s247 + $0x5c] sm:$0xf]
      %v292 = vld [vmem:[%s247 + $0x60] sm:$0xf]
      %v293 = vld [vmem:[%s247 + $0x64] sm:$0xf]
      %v294 = vld [vmem:[%s247 + $0x68] sm:$0xf]
      %v295 = vld [vmem:[%s247 + $0x6c] sm:$0xf]
      %v296 = vld [vmem:[%s247 + $0x70] sm:$0xf]
      %v297 = vld [vmem:[%s247 + $0x74] sm:$0xf]
      %v298 = vld [vmem:[%s247 + $0x78] sm:$0xf]
      %v299 = vld [vmem:[%s247 + $0x7c] sm:$0xf]
      %v300 = vld [vmem:[%s247 + $0x80] sm:$0xf]
      %v301 = vld [vmem:[%s247 + $0x84] sm:$0xf]
      %v302 = vld [vmem:[%s247 + $0x88] sm:$0xf]
      %v303 = vld [vmem:[%s247 + $0x8c] sm:$0xf]
      %v304 = vld [vmem:[%s247 + $0x90] sm:$0xf]
      %v305 = vld [vmem:[%s247 + $0x94] sm:$0xf]
      %v306 = vld [vmem:[%s247 + $0x98] sm:$0xf]
      %v307 = vld [vmem:[%s247 + $0x9c] sm:$0xf]
      %v308 = vld [vmem:[%s247 + $0xa0] sm:$0xf]
      %v309 = vld [vmem:[%s247 + $0xa4] sm:$0xf]
      %v310 = vld [vmem:[%s247 + $0xa8] sm:$0xf]
      %v311 = vld [vmem:[%s247 + $0xac] sm:$0xf]
      %v312 = vld [vmem:[%s247 + $0xb0] sm:$0xf]
      %v313 = vld [vmem:[%s247 + $0xb4] sm:$0xf]
      %v314 = vld [vmem:[%s247 + $0xb8] sm:$0xf]
      %v315 = vld [vmem:[%s247 + $0xbc] sm:$0xf]
      %v316 = vld [vmem:[%s247 + $0xc0] sm:$0xf]
      %v317 = vld [vmem:[%s247 + $0xc4] sm:$0xf]
      %v318 = vld [vmem:[%s247 + $0xc8] sm:$0xf]
      %v319 = vld [vmem:[%s247 + $0xcc] sm:$0xf]
      %v320 = vld [vmem:[%s247 + $0xd0] sm:$0xf]
      %v321 = vld [vmem:[%s247 + $0xd4] sm:$0xf]
      %v322 = vld [vmem:[%s247 + $0xd8] sm:$0xf]
      %v323 = vld [vmem:[%s247 + $0xdc] sm:$0xf]
      %v324 = vld [vmem:[%s247 + $0xe0] sm:$0xf]
      %v325 = vld [vmem:[%s247 + $0xe4] sm:$0xf]
      %v326 = vld [vmem:[%s247 + $0xe8] sm:$0xf]
      %v327 = vld [vmem:[%s247 + $0xec] sm:$0xf]
      %v328 = vld [vmem:[%s247 + $0xf0] sm:$0xf]
      %v329 = vld [vmem:[%s247 + $0xf4] sm:$0xf]
      %v330 = vld [vmem:[%s247 + $0xf8] sm:$0xf]
      %v331 = vld [vmem:[%s247 + $0xfc] sm:$0xf]
      %v334 = vunpack.c.l.b16 %v266
      %v335 = vunpack.c.h.b16 %v266
      %v336 = vunpack.c.l.b16 %v267
      %v337 = vunpack.c.h.b16 %v267
      %v338 = vpack.c.b16 %v334, %v334
      %v339 = vpack.c.b16 %v335, %v335
      %v340 = vpack.c.b16 %v336, %v336
      %v341 = vpack.c.b16 %v337, %v337
      %v410 = vunpack.c.l.b16 %v268
      %v411 = vunpack.c.l.b16 %v269
      %v412 = vunpack.c.l.b16 %v270
      %v413 = vunpack.c.l.b16 %v271
      %v414 = vunpack.c.l.b16 %v272
      %v415 = vunpack.c.l.b16 %v273
      %v416 = vunpack.c.l.b16 %v274
      %v417 = vunpack.c.l.b16 %v275
      %v418 = vunpack.c.l.b16 %v276
      %v419 = vunpack.c.l.b16 %v277
      %v420 = vunpack.c.l.b16 %v278
      %v421 = vunpack.c.l.b16 %v279
      %v422 = vunpack.c.l.b16 %v280
      %v423 = vunpack.c.l.b16 %v281
      %v424 = vunpack.c.l.b16 %v282
      %v425 = vunpack.c.l.b16 %v283
      %v426 = vunpack.c.l.b16 %v284
      %v427 = vunpack.c.l.b16 %v285
      %v428 = vunpack.c.l.b16 %v286
      %v429 = vunpack.c.l.b16 %v287
      %v430 = vunpack.c.l.b16 %v288
      %v431 = vunpack.c.l.b16 %v289
      %v432 = vunpack.c.l.b16 %v290
      %v433 = vunpack.c.l.b16 %v291
      %v434 = vunpack.c.l.b16 %v292
      %v435 = vunpack.c.l.b16 %v293
      %v436 = vunpack.c.l.b16 %v294
      %v437 = vunpack.c.l.b16 %v295
      %v438 = vunpack.c.l.b16 %v296
      %v439 = vunpack.c.l.b16 %v297
      %v440 = vunpack.c.l.b16 %v298
      %v441 = vunpack.c.l.b16 %v299
      %v442 = vunpack.c.l.b16 %v300
      %v443 = vunpack.c.l.b16 %v301
      %v444 = vunpack.c.l.b16 %v302
      %v445 = vunpack.c.l.b16 %v303
      %v446 = vunpack.c.l.b16 %v304
      %v447 = vunpack.c.l.b16 %v305
      %v448 = vunpack.c.l.b16 %v306
      %v449 = vunpack.c.l.b16 %v307
      %v450 = vunpack.c.l.b16 %v308
      %v451 = vunpack.c.l.b16 %v309
      %v452 = vunpack.c.l.b16 %v310
      %v453 = vunpack.c.l.b16 %v311
      %v454 = vunpack.c.l.b16 %v312
      %v455 = vunpack.c.l.b16 %v313
      %v456 = vunpack.c.l.b16 %v314
      %v457 = vunpack.c.l.b16 %v315
      %v458 = vunpack.c.l.b16 %v316
      %v459 = vunpack.c.l.b16 %v317
      %v460 = vunpack.c.l.b16 %v318
      %v461 = vunpack.c.l.b16 %v319
      %v462 = vunpack.c.l.b16 %v320
      %v463 = vunpack.c.l.b16 %v321
      %v464 = vunpack.c.l.b16 %v322
      %v465 = vunpack.c.l.b16 %v323
      %v466 = vunpack.c.l.b16 %v324
      %v467 = vunpack.c.l.b16 %v325
      %v468 = vunpack.c.l.b16 %v326
      %v469 = vunpack.c.l.b16 %v327
      %v470 = vunpack.c.l.b16 %v328
      %v471 = vunpack.c.l.b16 %v329
      %v472 = vunpack.c.l.b16 %v330
      %v473 = vunpack.c.l.b16 %v331
      %v474 = vpack.c.b16 %v411, %v410
      %v475 = vpack.c.b16 %v413, %v412
      %v476 = vpack.c.b16 %v415, %v414
      %v477 = vpack.c.b16 %v417, %v416
      %v478 = vpack.c.b16 %v419, %v418
      %v479 = vpack.c.b16 %v421, %v420
      %v480 = vpack.c.b16 %v423, %v422
      %v481 = vpack.c.b16 %v425, %v424
      %v482 = vpack.c.b16 %v427, %v426
      %v483 = vpack.c.b16 %v429, %v428
      %v484 = vpack.c.b16 %v431, %v430
      %v485 = vpack.c.b16 %v433, %v432
      %v486 = vpack.c.b16 %v435, %v434
      %v487 = vpack.c.b16 %v437, %v436
      %v488 = vpack.c.b16 %v439, %v438
      %v489 = vpack.c.b16 %v441, %v440
      %v490 = vpack.c.b16 %v443, %v442
      %v491 = vpack.c.b16 %v445, %v444
      %v492 = vpack.c.b16 %v447, %v446
      %v493 = vpack.c.b16 %v449, %v448
      %v494 = vpack.c.b16 %v451, %v450
      %v495 = vpack.c.b16 %v453, %v452
      %v496 = vpack.c.b16 %v455, %v454
      %v497 = vpack.c.b16 %v457, %v456
      %v498 = vpack.c.b16 %v459, %v458
      %v499 = vpack.c.b16 %v461, %v460
      %v500 = vpack.c.b16 %v463, %v462
      %v501 = vpack.c.b16 %v465, %v464
      %v502 = vpack.c.b16 %v467, %v466
      %v503 = vpack.c.b16 %v469, %v468
      %v504 = vpack.c.b16 %v471, %v470
      %v505 = vpack.c.b16 %v473, %v472
      %538 = vmatprep.subr.bf16.mxu0 0
      %539 = vmatpush1.bf16.msra.mxu0 %v481
      %540 = vmatprep.subr.bf16.mxu0 0
      %541 = vmatpush1.bf16.msra.mxu0 %v480
      %542 = vmatprep.subr.bf16.mxu0 0
      %543 = vmatpush1.bf16.msra.mxu0 %v479
      %544 = vmatprep.subr.bf16.mxu0 0
      %545 = vmatpush1.bf16.msra.mxu0 %v478
      %546 = vmatprep.subr.bf16.mxu0 0
      %547 = vmatpush1.bf16.msra.mxu0 %v477
      %548 = vmatprep.subr.bf16.mxu0 0
      %549 = vmatpush1.bf16.msra.mxu0 %v476
      %550 = vmatprep.subr.bf16.mxu0 0
      %551 = vmatpush1.bf16.msra.mxu0 %v475
      %552 = vmatprep.subr.bf16.mxu0 0
      %553 = vmatpush1.bf16.msra.mxu0 %v474
      %554 = vmatprep.subr.bf16.mxu0 0
      %555 = vmatpush2.bf16.msra.mxu0 %v489
      %556 = vmatprep.subr.bf16.mxu0 0
      %557 = vmatpush2.bf16.msra.mxu0 %v488
      %558 = vmatprep.subr.bf16.mxu0 0
      %559 = vmatpush2.bf16.msra.mxu0 %v487
      %560 = vmatprep.subr.bf16.mxu0 0
      %561 = vmatpush2.bf16.msra.mxu0 %v486
      %562 = vmatprep.subr.bf16.mxu0 0
      %563 = vmatpush2.bf16.msra.mxu0 %v485
      %564 = vmatprep.subr.bf16.mxu0 0
      %565 = vmatpush2.bf16.msra.mxu0 %v484
      %566 = vmatprep.subr.bf16.mxu0 0
      %567 = vmatpush2.bf16.msra.mxu0 %v483
      %568 = vmatprep.subr.bf16.mxu0 0
      %569 = vmatpush2.bf16.msra.mxu0 %v482
      %570 = vmatprep.mubr.bf16.mxu0 %v339
      %571 = vmatmul.mubr.bf16.gmra.mxu0 %v338
      %v572 = vpop.f32.mrf.mxu0
      %v573 = vadd.f32 0.0, %v572
      %v574 = vpop.f32.mrf.mxu0
      %v575 = vpop.f32.mrf.mxu0
      %v576 = vpop.f32.mrf.mxu0
      %577 = vdwg.mxu0
      %578 = vmatprep.subr.bf16.mxu0 0
      %579 = vmatpush1.bf16.msra.mxu0 %v497
      %580 = vmatprep.subr.bf16.mxu0 0
      %581 = vmatpush1.bf16.msra.mxu0 %v496
      %582 = vmatprep.subr.bf16.mxu0 0
      %583 = vmatpush1.bf16.msra.mxu0 %v495
      %584 = vmatprep.subr.bf16.mxu0 0
      %585 = vmatpush1.bf16.msra.mxu0 %v494
      %586 = vmatprep.subr.bf16.mxu0 0
      %587 = vmatpush1.bf16.msra.mxu0 %v493
      %588 = vmatprep.subr.bf16.mxu0 0
      %589 = vmatpush1.bf16.msra.mxu0 %v492
      %590 = vmatprep.subr.bf16.mxu0 0
      %591 = vmatpush1.bf16.msra.mxu0 %v491
      %592 = vmatprep.subr.bf16.mxu0 0
      %593 = vmatpush1.bf16.msra.mxu0 %v490
      %594 = vmatprep.subr.bf16.mxu0 0
      %595 = vmatpush2.bf16.msra.mxu0 %v505
      %596 = vmatprep.subr.bf16.mxu0 0
      %597 = vmatpush2.bf16.msra.mxu0 %v504
      %598 = vmatprep.subr.bf16.mxu0 0
      %599 = vmatpush2.bf16.msra.mxu0 %v503
      %600 = vmatprep.subr.bf16.mxu0 0
      %601 = vmatpush2.bf16.msra.mxu0 %v502
      %602 = vmatprep.subr.bf16.mxu0 0
      %603 = vmatpush2.bf16.msra.mxu0 %v501
      %604 = vmatprep.subr.bf16.mxu0 0
      %605 = vmatpush2.bf16.msra.mxu0 %v500
      %606 = vmatprep.subr.bf16.mxu0 0
      %607 = vmatpush2.bf16.msra.mxu0 %v499
      %608 = vmatprep.subr.bf16.mxu0 0
      %609 = vmatpush2.bf16.msra.mxu0 %v498
      %610 = vmatprep.mubr.bf16.mxu0 %v341
      %611 = vmatmul.mubr.bf16.gmra.mxu0 %v340
      %v612 = vpop.f32.mrf.mxu0
      %v613 = vadd.f32 %v573, %v612
      %v614 = vpop.f32.mrf.mxu0
      %v615 = vpop.f32.mrf.mxu0
      %v616 = vpop.f32.mrf.mxu0
      %617 = vdwg.mxu0
      %v618 = vadd.f32 %v265, %v613
      %619 = vst [vmem:[#allocation2] sm:$0xff] %v618
      %p620 = scmp.eq.s32.totalorder %s21, 3
      // Predicated region
      $region37: #{forward.27} parent=31 // pred_check
        %p621 = pneg %p620
      $region38: #{forward.27} parent=31 // pred_check_branch
        %623 = sbr.rel (%p621) target = $region40
      $region39: #{forward.27} parent=31 // pred_region
        %v624 = vld [vmem:[#allocation2] sm:$0xff]
        %v625 = vld [vmem:[%s251] sm:$0x1]
        %v627 = vlaneseq
        %v628 = vshrl.u32 %v627, 7
        %v629 = vsub.s32 0, %v628
        %v630 = vrot.slane %v625, %v629
        %v632 = vadd.f32 %v624, %v630
        %633 = vst [vmem:[%s258] sm:$0xff] %v632
      $region40: #{forward.27} parent=31 // pred_fallthru
        _
      %p634 = scmp.lt.s32.totalorder %s19, 0
      %s635 = scalar_select %p634, %s19, 0
      %p636 = scmp.lt.s32.totalorder %s20, 0
      %s637 = scalar_select %p636, %s20, 0
      %s638 = sadd.s32 %s637, %s635
      %s639 = smul.addr %s638, 8
      %s640 = scalar_lea.vmem %s3, %s639
      // Predicated region
      $region41: #{forward.27} parent=31 // pred_check
        %p641 = pneg %p135
      $region42: #{forward.27} parent=31 // pred_check_branch
        %643 = sbr.rel (%p641) target = $region44
      $region43: #{forward.27} parent=31 // pred_region
        _
      $region44: #{forward.27} parent=31 // pred_fallthru
        _
      // Predicated region
      $region45: #{forward.27} parent=31 // pred_check
        %p644 = pneg %p135
      $region46: #{forward.27} parent=31 // pred_check_branch
        %646 = sbr.rel (%p644) target = $region48
      $region47: #{forward.27} parent=31 // pred_region
        %p647 = scmp.lt.s32.totalorder %s19, 0
        %s648 = scalar_select %p647, %s19, 0
        %p649 = scmp.lt.s32.totalorder %s20, 0
        %s650 = scalar_select %p649, %s20, 0
        %s651 = sadd.s32 %s650, %s648
        %s652 = smul.addr %s651, 8
        %s653 = scalar_lea.vmem %s3, %s652
      $region48: #{forward.27} parent=31 // pred_fallthru
        _
    $region32: #{forward.27} parent=5 // pred_fallthru
      _
    %p654 = scmp.le.s32.totalorder 2, %s9
    // Predicated region
    $region49: #{forward.27} parent=5 // pred_check
      %p655 = pneg %p654
    $region50: #{forward.27} parent=5 // pred_check_branch
      %657 = sbr.rel (%p655) target = $region52
    $region51: #{forward.27} parent=5 // pred_region
      %s658 = ssub.s32 %s9, 2
    $region52: #{forward.27} parent=5 // pred_fallthru
      _
  $region6: #{forward.27} parent=0 // loop_footer
    %s13 = sadd.s32 1, %s9
  $region7: #{forward.27} parent=0 // loop_footer_branch
    %8 = sbr.rel target = $region3
  $region8: #{forward.27} parent=0 // loop_exit
    _

// kernel: forward.28
$region0: #{forward.28}
  #allocation0 [shape = 'u32[]', space=smem, size = 0x4, offset = 0x4, fixed_abs, tag = 'smem constant byte address 0x4 - core index']
  #allocation1 [shape = 'u32[144,128]{1,0:T(1,128)}', space=vmem, size = 0x12000, scoped, tag = 'internal scratch']
  #allocation2 [shape = 'f32[8,512]{1,0:T(8,128)}', space=vmem, size = 0x4000, scoped, tag = 'scratch operand']
  %s0 = inlined_call_operand.vmem [shape: bf16[8,32], index: 0, kind: input, shape index: {}]
  %s1 = inlined_call_operand.vmem [shape: bf16[32,2048], index: 1, kind: input, shape index: {}]
  %s2 = inlined_call_operand.vmem [shape: f32[1,2048], index: 2, kind: input, shape index: {}]
  %s3 = inlined_call_operand.vmem [shape: f32[8,2048], index: 3, kind: output, shape index: {}]
  %s4 = sld [smem:[#allocation0]]
  $region76: #{forward.28} parent=0
    _
  %s6 = ssub.s32 1, %s4
  %s7 = scalar_select 0, %s6, %s4
  $region1: #{forward.28} parent=0
    #allocation3 [shape = 'u8[65536]{0}', space=vmem, size = 0x10000, scoped, tag = 'input window, operand 1']
    loop: start=0, step=1, limit=6
    $region2: #{forward.28} parent=1 // loop_pre_header
      _
    $region3: #{forward.28} parent=1 // loop_header
      %s9 = sphi 0, %s13
      %p10 = scmp.ge.s32.totalorder %s9, 6
      %s16 = sphi 0, %s35
      %s17 = sphi 0, %s31
      %s18 = sphi 0, %s27
      %s19 = sphi 0, %s16
      %s20 = sphi 0, %s17
      %s21 = sphi 0, %s18
      %s22 = sphi 0, %s19
      %s23 = sphi 0, %s20
      %s24 = sphi 0, %s21
      %s40 = sphi 0, %s42
      %s43 = sphi 0, %s40
      %s44 = sphi 0, %s43
      %s60 = sphi 0, %s44
      %s68 = sphi 0, %s70
      %s71 = sphi 0, %s68
      %s72 = sphi 0, %s71
      %s88 = sphi 0, %s72
      %s94 = sphi 0, %s96
      %s97 = sphi 0, %s94
      %s98 = sphi 0, %s97
      %s114 = sphi 0, %s98
      %s122 = sphi 0, %s124
      %s125 = sphi 0, %s122
      %s126 = sphi 0, %s125
      %s142 = sphi 0, %s126
    $region4: #{forward.28} parent=1 // loop_header_branch
      %12 = sbr.rel (%p10) target = $region8
    $region5: #{forward.28} parent=1 // loop_body
      %s14 = ssub.s32 %s9, 1
      %s15 = ssub.s32 %s9, 2
      %s25 = sadd.s32 1, %s18
      %p26 = scmp.ge.s32.totalorder %s25, 1
      %s27 = scalar_select %p26, 0, %s25
      %s28 = sadd.s32 1, %s17
      %s29 = scalar_select %p26, %s28, %s17
      %p30 = scmp.ge.s32.totalorder %s29, 4
      %s31 = scalar_select %p30, 0, %s29
      %s32 = sadd.s32 1, %s16
      %s33 = scalar_select %p30, %s32, %s16
      %p34 = scmp.ge.s32.totalorder %s33, 1
      %s35 = scalar_select %p34, 0, %s33
      %s36 = ssub.s32 %s16, %s35
      %s37 = ssub.s32 %s18, %s27
      %s38 = sor.u32 %s36, %s37
      %p39 = scmp.eq.s32.totalorder %s38, 0
      %s41 = sadd.s32 %s40, 1
      %s42 = scalar_select %p39, %s40, %s41
      %p45 = pneg %p39
      %p46 = scmp.eq.s32.totalorder %s9, 3
      %p47 = por %p45, %p46
      %p48 = scmp.ne.s32.totalorder %s40, %s43
      %p49 = scmp.eq.s32.totalorder %s9, 0
      %p50 = por %p48, %p49
      %p51 = scmp.ne.s32.totalorder %s40, %s43
      %p52 = scmp.eq.s32.totalorder %s14, 3
      %p53 = por %p51, %p52
      %p54 = scmp.ne.s32.totalorder %s43, %s44
      %p55 = scmp.eq.s32.totalorder %s14, 0
      %p56 = por %p54, %p55
      %p57 = scmp.ne.s32.totalorder %s43, %s44
      %p58 = scmp.eq.s32.totalorder %s15, 3
      %p59 = por %p57, %p58
      %p61 = scmp.ne.s32.totalorder %s44, %s60
      %p62 = scmp.eq.s32.totalorder %s15, 0
      %p63 = por %p61, %p62
      %s64 = ssub.s32 %s18, %s27
      %s65 = ssub.s32 %s17, %s31
      %s66 = sor.u32 %s64, %s65
      %p67 = scmp.eq.s32.totalorder %s66, 0
      %s69 = sadd.s32 %s68, 1
      %s70 = scalar_select %p67, %s68, %s69
      %p73 = pneg %p67
      %p74 = scmp.eq.s32.totalorder %s9, 3
      %p75 = por %p73, %p74
      %p76 = scmp.ne.s32.totalorder %s68, %s71
      %p77 = scmp.eq.s32.totalorder %s9, 0
      %p78 = por %p76, %p77
      %p79 = scmp.ne.s32.totalorder %s68, %s71
      %p80 = scmp.eq.s32.totalorder %s14, 3
      %p81 = por %p79, %p80
      %p82 = scmp.ne.s32.totalorder %s71, %s72
      %p83 = scmp.eq.s32.totalorder %s14, 0
      %p84 = por %p82, %p83
      %p85 = scmp.ne.s32.totalorder %s71, %s72
      %p86 = scmp.eq.s32.totalorder %s15, 3
      %p87 = por %p85, %p86
      %p89 = scmp.ne.s32.totalorder %s72, %s88
      %p90 = scmp.eq.s32.totalorder %s15, 0
      %p91 = por %p89, %p90
      %s92 = ssub.s32 %s17, %s31
      %p93 = scmp.eq.s32.totalorder %s92, 0
      %s95 = sadd.s32 %s94, 1
      %s96 = scalar_select %p93, %s94, %s95
      %p99 = pneg %p93
      %p100 = scmp.eq.s32.totalorder %s9, 3
      %p101 = por %p99, %p100
      %p102 = scmp.ne.s32.totalorder %s94, %s97
      %p103 = scmp.eq.s32.totalorder %s9, 0
      %p104 = por %p102, %p103
      %p105 = scmp.ne.s32.totalorder %s94, %s97
      %p106 = scmp.eq.s32.totalorder %s14, 3
      %p107 = por %p105, %p106
      %p108 = scmp.ne.s32.totalorder %s97, %s98
      %p109 = scmp.eq.s32.totalorder %s14, 0
      %p110 = por %p108, %p109
      %p111 = scmp.ne.s32.totalorder %s97, %s98
      %p112 = scmp.eq.s32.totalorder %s15, 3
      %p113 = por %p111, %p112
      %p115 = scmp.ne.s32.totalorder %s98, %s114
      %p116 = scmp.eq.s32.totalorder %s15, 0
      %p117 = por %p115, %p116
      %s118 = ssub.s32 %s16, %s35
      %s119 = ssub.s32 %s17, %s31
      %s120 = sor.u32 %s118, %s119
      %p121 = scmp.eq.s32.totalorder %s120, 0
      %s123 = sadd.s32 %s122, 1
      %s124 = scalar_select %p121, %s122, %s123
      %p127 = pneg %p121
      %p128 = scmp.eq.s32.totalorder %s9, 3
      %p129 = por %p127, %p128
      %p130 = scmp.ne.s32.totalorder %s122, %s125
      %p131 = scmp.eq.s32.totalorder %s9, 0
      %p132 = por %p130, %p131
      %p133 = scmp.ne.s32.totalorder %s122, %s125
      %p134 = scmp.eq.s32.totalorder %s14, 3
      %p135 = por %p133, %p134
      %p136 = scmp.ne.s32.totalorder %s125, %s126
      %p137 = scmp.eq.s32.totalorder %s14, 0
      %p138 = por %p136, %p137
      %p139 = scmp.ne.s32.totalorder %s125, %s126
      %p140 = scmp.eq.s32.totalorder %s15, 3
      %p141 = por %p139, %p140
      %p143 = scmp.ne.s32.totalorder %s126, %s142
      %p144 = scmp.eq.s32.totalorder %s15, 0
      %p145 = por %p143, %p144
      %p146 = scmp.le.s32.totalorder 1, %s9
      %p147 = scmp.lt.s32.totalorder %s9, 5
      %p148 = pnand %p146, %p147
      %p149 = pneg %p148
      // Predicated region
      $region9: #{forward.28} parent=5 // pred_check
        _
      $region10: #{forward.28} parent=5 // pred_check_branch
        %151 = sbr.rel (%p148) target = $region12
      $region11: #{forward.28} parent=5 // pred_region
        %s152 = ssub.s32 %s9, 1
        // Predicated region
        $region13: #{forward.28} parent=11 // pred_check
          %p153 = pneg %p56
        $region14: #{forward.28} parent=11 // pred_check_branch
          %155 = sbr.rel (%p153) target = $region16
        $region15: #{forward.28} parent=11 // pred_region
          %p156 = scmp.lt.s32.totalorder %s19, 0
          %s157 = scalar_select %p156, %s19, 0
          %p158 = scmp.lt.s32.totalorder %s21, 0
          %s159 = scalar_select %p158, %s21, 0
          %s160 = sadd.s32 %s159, %s157
          %s161 = smul.addr %s160, 4
          %s162 = scalar_lea.vmem %s0, %s161
        $region16: #{forward.28} parent=11 // pred_fallthru
          _
      $region12: #{forward.28} parent=5 // pred_fallthru
        _
      %p163 = scmp.lt.s32.totalorder %s9, 4
      // Predicated region
      $region17: #{forward.28} parent=5 // pred_check
        %p164 = pneg %p163
      $region18: #{forward.28} parent=5 // pred_check_branch
        %166 = sbr.rel (%p164) target = $region20
      $region19: #{forward.28} parent=5 // pred_region
        // Predicated region
        $region21: #{forward.28} parent=19 // pred_check
          %p167 = pneg %p78
        $region22: #{forward.28} parent=19 // pred_check_branch
          %169 = sbr.rel (%p167) target = $region24
        $region23: #{forward.28} parent=19 // pred_region
          %s170 = sand.u32 %s68, 1
          %s171 = sand.u32 %s68, 1
          %s172 = smul.addr %s171, 64
          %s173 = scalar_lea.vmem [#allocation3], %s172
          %s174 = smul.u32 4, %s18
          %s175 = smul.u32 4, %s17
          %s176 = smul.addr %s174, 16
          %s177 = sadd.s32 %s175, %s176
          %s178 = smul.addr %s177, 4
          %s179 = scalar_lea.vmem %s1, %s178
          // Predicated region
          $region25: #{forward.28} parent=23 // pred_check
            _
          $region26: #{forward.28} parent=23 // pred_check_branch
            %181 = sbr.rel (0) target = $region28
          $region27: #{forward.28} parent=23 // pred_region
            // Predicated region
            $region29: #{forward.28} parent=27 // pred_check
              _
            $region30: #{forward.28} parent=27 // pred_check_branch
              %183 = sbr.rel (0) target = $region32
            $region31: #{forward.28} parent=27 // pred_region
              loop: start=0, step=1, limit=1
              $region33: #{forward.28} parent=31 // loop_pre_header
                _
              $region34: #{forward.28} parent=31 // loop_header
                %s185 = sphi 0, %s189
                %p186 = scmp.ge.s32.totalorder %s185, 1
                %s190 = sphi %s179, %s179
                %s191 = sphi %s173, %s173
              $region35: #{forward.28} parent=31 // loop_header_branch
                %188 = sbr.rel (%p186) target = $region39
              $region36: #{forward.28} parent=31 // loop_body
                %v192 = vld [vmem:[%s190] sm:$0xff]
                %193 = vst [vmem:[%s191] sm:$0xff] %v192
                %v194 = vld [vmem:[%s190 + $0x8] sm:$0xff]
                %195 = vst [vmem:[%s191 + $0x8] sm:$0xff] %v194
                %v196 = vld [vmem:[%s190 + $0x40] sm:$0xff]
                %197 = vst [vmem:[%s191 + $0x10] sm:$0xff] %v196
                %v198 = vld [vmem:[%s190 + $0x48] sm:$0xff]
                %199 = vst [vmem:[%s191 + $0x18] sm:$0xff] %v198
                %v200 = vld [vmem:[%s190 + $0x80] sm:$0xff]
                %201 = vst [vmem:[%s191 + $0x20] sm:$0xff] %v200
                %v202 = vld [vmem:[%s190 + $0x88] sm:$0xff]
                %203 = vst [vmem:[%s191 + $0x28] sm:$0xff] %v202
                %v204 = vld [vmem:[%s190 + $0xc0] sm:$0xff]
                %205 = vst [vmem:[%s191 + $0x30] sm:$0xff] %v204
                %v206 = vld [vmem:[%s190 + $0xc8] sm:$0xff]
                %207 = vst [vmem:[%s191 + $0x38] sm:$0xff] %v206
              $region37: #{forward.28} parent=31 // loop_footer
                %s189 = sadd.s32 1, %s185
              $region38: #{forward.28} parent=31 // loop_footer_branch
                %184 = sbr.rel target = $region34
              $region39: #{forward.28} parent=31 // loop_exit
                _
            $region32: #{forward.28} parent=27 // pred_fallthru
              _
            // Predicated region
            $region40: #{forward.28} parent=27 // pred_check
              _
            $region41: #{forward.28} parent=27 // pred_check_branch
              %209 = sbr.rel target = $region43
            $region42: #{forward.28} parent=27 // pred_region
              _
            $region43: #{forward.28} parent=27 // pred_fallthru
              _
          $region28: #{forward.28} parent=23 // pred_fallthru
            _
          %210 = vnop
        $region24: #{forward.28} parent=19 // pred_fallthru
          _
        // Predicated region
        $region44: #{forward.28} parent=19 // pred_check
          %p211 = pneg %p104
        $region45: #{forward.28} parent=19 // pred_check_branch
          %213 = sbr.rel (%p211) target = $region47
        $region46: #{forward.28} parent=19 // pred_region
          %s214 = smul.u32 4, %s17
          %p215 = scmp.lt.s32.totalorder %s214, 15
          %s216 = scalar_select %p215, %s214, 15
          %s217 = scalar_lea.vmem %s2, %s216
          %s218 = smul.u32 4, %s17
        $region47: #{forward.28} parent=19 // pred_fallthru
          _
      $region20: #{forward.28} parent=5 // pred_fallthru
        _
      %p219 = scmp.le.s32.totalorder 1, %s9
      %p220 = scmp.lt.s32.totalorder %s9, 5
      %p221 = pnand %p219, %p220
      %p222 = pneg %p221
      // Predicated region
      $region48: #{forward.28} parent=5 // pred_check
        _
      $region49: #{forward.28} parent=5 // pred_check_branch
        %224 = sbr.rel (%p221) target = $region51
      $region50: #{forward.28} parent=5 // pred_region
        %s225 = ssub.s32 %s9, 1
        %s226 = sand.u32 %s71, 1
        %s227 = sand.u32 %s71, 1
        %s228 = smul.addr %s227, 64
        %s229 = scalar_lea.vmem [#allocation3], %s228
        // Predicated region
        $region52: #{forward.28} parent=50 // pred_check
          %p230 = pneg %p84
        $region53: #{forward.28} parent=50 // pred_check_branch
          %232 = sbr.rel (%p230) target = $region55
        $region54: #{forward.28} parent=50 // pred_region
          _
        $region55: #{forward.28} parent=50 // pred_fallthru
          _
        %p233 = scmp.lt.s32.totalorder %s19, 0
        %s234 = scalar_select %p233, %s19, 0
        %p235 = scmp.lt.s32.totalorder %s21, 0
        %s236 = scalar_select %p235, %s21, 0
        %s237 = sadd.s32 %s236, %s234
        %s238 = smul.addr %s237, 4
        %s239 = scalar_lea.vmem %s0, %s238
        %p240 = pneg %p56
        %p241 = pneg %p53
        %s242 = sand.u32 %s71, 1
        %s243 = sand.u32 %s71, 1
        %s244 = smul.addr %s243, 64
        %s245 = scalar_lea.vmem [#allocation3], %s244
        %p246 = pneg %p84
        %p247 = pneg %p81
        %s248 = smul.u32 4, %s20
        %p249 = scmp.lt.s32.totalorder %s248, 15
        %s250 = scalar_select %p249, %s248, 15
        %s251 = scalar_lea.vmem %s2, %s250
        %p252 = pneg %p110
        %p253 = pneg %p107
        %p254 = pneg %p138
        %p255 = pneg %p135
        %s256 = smul.u32 4, %s20
        %p257 = scmp.lt.s32.totalorder %s19, 0
        %s258 = scalar_select %p257, %s19, 0
        %p259 = scmp.lt.s32.totalorder %s256, 15
        %s260 = scalar_select %p259, %s256, 15
        %s261 = smul.addr %s258, 16
        %s262 = sadd.s32 %s260, %s261
        %s263 = smul.addr %s262, 8
        %s264 = scalar_lea.vmem %s3, %s263
        %p265 = scmp.lt.s32.totalorder %s19, 0
        %s266 = scalar_select %p265, %s19, 0
        %p267 = scmp.lt.s32.totalorder %s21, 0
        %s268 = scalar_select %p267, %s21, 0
        %s269 = sadd.s32 %s268, %s266
        %s270 = smul.addr %s269, 4
        %s271 = scalar_lea.vmem %s0, %s270
        %s272 = smul.u32 4, %s21
        %s273 = smul.u32 4, %s20
        %s274 = smul.u32 4, %s20
        %p275 = scmp.lt.s32.totalorder %s274, 15
        %s276 = scalar_select %p275, %s274, 15
        %s277 = scalar_lea.vmem %s2, %s276
        %s278 = smul.u32 4, %s20
        %s279 = smul.u32 4, %s20
        %p280 = scmp.lt.s32.totalorder %s19, 0
        %s281 = scalar_select %p280, %s19, 0
        %p282 = scmp.lt.s32.totalorder %s279, 15
        %s283 = scalar_select %p282, %s279, 15
        %s284 = smul.addr %s281, 16
        %s285 = sadd.s32 %s283, %s284
        %s286 = smul.addr %s285, 8
        %s287 = scalar_lea.vmem %s3, %s286
        %s288 = smul.u32 4, %s20
        %p290 = scmp.eq.s32.totalorder %s21, 0
        // Predicated region
        $region56: #{forward.28} parent=50 // pred_check
          %p291 = pneg %p290
        $region57: #{forward.28} parent=50 // pred_check_branch
          %293 = sbr.rel (%p291) target = $region59
        $region58: #{forward.28} parent=50 // pred_region
          %294 = vst [vmem:[#allocation2] sm:$0xff] 0.0
          %295 = vst [vmem:[#allocation2 + $0x8] sm:$0xff] 0.0
          %296 = vst [vmem:[#allocation2 + $0x10] sm:$0xff] 0.0
          %297 = vst [vmem:[#allocation2 + $0x18] sm:$0xff] 0.0
        $region59: #{forward.28} parent=50 // pred_fallthru
          _
        %v298 = vld [vmem:[#allocation2] sm:$0xff]
        %v299 = vld [vmem:[#allocation2 + $0x8] sm:$0xff]
        %v300 = vld [vmem:[#allocation2 + $0x10] sm:$0xff]
        %v301 = vld [vmem:[#allocation2 + $0x18] sm:$0xff]
        %v302 = vld [vmem:[%s271] sm:$0xf]
        %v303 = vld [vmem:[%s229] sm:$0xff]
        %v304 = vld [vmem:[%s229 + $0x8] sm:$0xff]
        %v305 = vld [vmem:[%s229 + $0x10] sm:$0xff]
        %v306 = vld [vmem:[%s229 + $0x18] sm:$0xff]
        %v307 = vld [vmem:[%s229 + $0x20] sm:$0xff]
        %v308 = vld [vmem:[%s229 + $0x28] sm:$0xff]
        %v309 = vld [vmem:[%s229 + $0x30] sm:$0xff]
        %v310 = vld [vmem:[%s229 + $0x38] sm:$0xff]
        %v319 = vunpack.c.l.b16 %v303
        %v320 = vunpack.c.h.b16 %v303
        %v321 = vunpack.c.l.b16 %v304
        %v322 = vunpack.c.h.b16 %v304
        %v323 = vunpack.c.l.b16 %v305
        %v324 = vunpack.c.h.b16 %v305
        %v325 = vunpack.c.l.b16 %v306
        %v326 = vunpack.c.h.b16 %v306
        %v327 = vunpack.c.l.b16 %v307
        %v328 = vunpack.c.h.b16 %v307
        %v329 = vunpack.c.l.b16 %v308
        %v330 = vunpack.c.h.b16 %v308
        %v331 = vunpack.c.l.b16 %v309
        %v332 = vunpack.c.h.b16 %v309
        %v333 = vunpack.c.l.b16 %v310
        %v334 = vunpack.c.h.b16 %v310
        %v335 = vpack.c.b16 %v323, %v319
        %v336 = vpack.c.b16 %v324, %v320
        %v337 = vpack.c.b16 %v325, %v321
        %v338 = vpack.c.b16 %v326, %v322
        %v339 = vpack.c.b16 %v331, %v327
        %v340 = vpack.c.b16 %v332, %v328
        %v341 = vpack.c.b16 %v333, %v329
        %v342 = vpack.c.b16 %v334, %v330
        %vm351 = vcmask 261120
        %v353 = vsel %vm351, %v302, 0
        %355 = vmatprep.subr.bf16.mxu0 0
        %356 = vmatpush1.bf16.msra.mxu0 0
        %357 = vmatprep.subr.bf16.mxu0 0
        %358 = vmatpush1.bf16.msra.mxu0 0
        %359 = vmatprep.subr.bf16.mxu0 0
        %360 = vmatpush1.bf16.msra.mxu0 0
        %361 = vmatprep.subr.bf16.mxu0 0
        %362 = vmatpush1.bf16.msra.mxu0 0
        %363 = vmatprep.subr.bf16.mxu0 0
        %364 = vmatpush1.bf16.msra.mxu0 0
        %365 = vmatprep.subr.bf16.mxu0 0
        %366 = vmatpush1.bf16.msra.mxu0 0
        %367 = vmatprep.subr.bf16.mxu0 %v340
        %368 = vmatpush1.bf16.msra.mxu0 %v339
        %369 = vmatprep.subr.bf16.mxu0 %v336
        %370 = vmatpush1.bf16.msra.mxu0 %v335
        %371 = vmatprep.subr.bf16.mxu0 0
        %372 = vmatpush2.bf16.msra.mxu0 0
        %373 = vmatprep.subr.bf16.mxu0 0
        %374 = vmatpush2.bf16.msra.mxu0 0
        %375 = vmatprep.subr.bf16.mxu0 0
        %376 = vmatpush2.bf16.msra.mxu0 0
        %377 = vmatprep.subr.bf16.mxu0 0
        %378 = vmatpush2.bf16.msra.mxu0 0
        %379 = vmatprep.subr.bf16.mxu0 0
        %380 = vmatpush2.bf16.msra.mxu0 0
        %381 = vmatprep.subr.bf16.mxu0 0
        %382 = vmatpush2.bf16.msra.mxu0 0
        %383 = vmatprep.subr.bf16.mxu0 0
        %384 = vmatpush2.bf16.msra.mxu0 0
        %385 = vmatprep.subr.bf16.mxu0 0
        %386 = vmatpush2.bf16.msra.mxu0 0
        %387 = vmatprep.mubr.bf16.mxu0 0
        %388 = vmatmul.mubr.bf16.gmra.mxu0 %v353
        %v389 = vpop.f32.mrf.mxu0
        %v390 = vadd.f32 0.0, %v389
        %v391 = vpop.f32.mrf.mxu0
        %v392 = vadd.f32 0.0, %v391
        %v393 = vpop.f32.mrf.mxu0
        %v394 = vpop.f32.mrf.mxu0
        %395 = vdwg.mxu0
        %396 = vmatprep.subr.bf16.mxu0 0
        %397 = vmatpush1.bf16.msra.mxu0 0
        %398 = vmatprep.subr.bf16.mxu0 0
        %399 = vmatpush1.bf16.msra.mxu0 0
        %400 = vmatprep.subr.bf16.mxu0 0
        %401 = vmatpush1.bf16.msra.mxu0 0
        %402 = vmatprep.subr.bf16.mxu0 0
        %403 = vmatpush1.bf16.msra.mxu0 0
        %404 = vmatprep.subr.bf16.mxu0 0
        %405 = vmatpush1.bf16.msra.mxu0 0
        %406 = vmatprep.subr.bf16.mxu0 0
        %407 = vmatpush1.bf16.msra.mxu0 0
        %408 = vmatprep.subr.bf16.mxu0 %v342
        %409 = vmatpush1.bf16.msra.mxu0 %v341
        %410 = vmatprep.subr.bf16.mxu0 %v338
        %411 = vmatpush1.bf16.msra.mxu0 %v337
        %412 = vmatprep.subr.bf16.mxu0 0
        %413 = vmatpush2.bf16.msra.mxu0 0
        %414 = vmatprep.subr.bf16.mxu0 0
        %415 = vmatpush2.bf16.msra.mxu0 0
        %416 = vmatprep.subr.bf16.mxu0 0
        %417 = vmatpush2.bf16.msra.mxu0 0
        %418 = vmatprep.subr.bf16.mxu0 0
        %419 = vmatpush2.bf16.msra.mxu0 0
        %420 = vmatprep.subr.bf16.mxu0 0
        %421 = vmatpush2.bf16.msra.mxu0 0
        %422 = vmatprep.subr.bf16.mxu0 0
        %423 = vmatpush2.bf16.msra.mxu0 0
        %424 = vmatprep.subr.bf16.mxu0 0
        %425 = vmatpush2.bf16.msra.mxu0 0
        %426 = vmatprep.subr.bf16.mxu0 0
        %427 = vmatpush2.bf16.msra.mxu0 0
        %428 = vmatprep.mubr.bf16.mxu0 0
        %429 = vmatmul.mubr.bf16.gmra.mxu0 %v353
        %v430 = vpop.f32.mrf.mxu0
        %v431 = vadd.f32 0.0, %v430
        %v432 = vpop.f32.mrf.mxu0
        %v433 = vadd.f32 0.0, %v432
        %v434 = vpop.f32.mrf.mxu0
        %v435 = vpop.f32.mrf.mxu0
        %436 = vdwg.mxu0
        %v437 = vadd.f32 %v298, %v390
        %v438 = vadd.f32 %v299, %v392
        %v439 = vadd.f32 %v300, %v431
        %v440 = vadd.f32 %v301, %v433
        %441 = vst [vmem:[#allocation2] sm:$0xff] %v437
        %442 = vst [vmem:[#allocation2 + $0x8] sm:$0xff] %v438
        %443 = vst [vmem:[#allocation2 + $0x10] sm:$0xff] %v439
        %444 = vst [vmem:[#allocation2 + $0x18] sm:$0xff] %v440
        // Predicated region
        $region60: #{forward.28} parent=50 // pred_check
          %p445 = pneg %p290
        $region61: #{forward.28} parent=50 // pred_check_branch
          %447 = sbr.rel (%p445) target = $region63
        $region62: #{forward.28} parent=50 // pred_region
          %v448 = vld [vmem:[#allocation2] sm:$0xff]
          %v449 = vld [vmem:[#allocation2 + $0x8] sm:$0xff]
          %v450 = vld [vmem:[#allocation2 + $0x10] sm:$0xff]
          %v451 = vld [vmem:[#allocation2 + $0x18] sm:$0xff]
          %v452 = vld [vmem:[%s277] sm:$0xf]
          %v454 = vlaneseq
          %v455 = vshrl.u32 %v454, 7
          %v456 = vsub.s32 0, %v455
          %v457 = vrot.slane %v452, %v456
          %v458 = vlaneseq
          %v459 = vshrl.u32 %v458, 7
          %v460 = vsub.s32 1, %v459
          %v461 = vrot.slane %v452, %v460
          %v462 = vlaneseq
          %v463 = vshrl.u32 %v462, 7
          %v464 = vsub.s32 2, %v463
          %v465 = vrot.slane %v452, %v464
          %v466 = vlaneseq
          %v467 = vshrl.u32 %v466, 7
          %v468 = vsub.s32 3, %v467
          %v469 = vrot.slane %v452, %v468
          %v474 = vadd.f32 %v448, %v457
          %v475 = vadd.f32 %v449, %v461
          %v476 = vadd.f32 %v450, %v465
          %v477 = vadd.f32 %v451, %v469
          %v478 = vmax.f32 %v474, 0.0
          %v479 = vmax.f32 %v475, 0.0
          %v480 = vmax.f32 %v476, 0.0
          %v481 = vmax.f32 %v477, 0.0
          %482 = vst [vmem:[%s287] sm:$0xff] %v478
          %483 = vst [vmem:[%s287 + $0x8] sm:$0xff] %v479
          %484 = vst [vmem:[%s287 + $0x10] sm:$0xff] %v480
          %485 = vst [vmem:[%s287 + $0x18] sm:$0xff] %v481
        $region63: #{forward.28} parent=50 // pred_fallthru
          _
        %s486 = smul.u32 4, %s20
        %p487 = scmp.lt.s32.totalorder %s19, 0
        %s488 = scalar_select %p487, %s19, 0
        %p489 = scmp.lt.s32.totalorder %s486, 15
        %s490 = scalar_select %p489, %s486, 15
        %s491 = smul.addr %s488, 16
        %s492 = sadd.s32 %s490, %s491
        %s493 = smul.addr %s492, 8
        %s494 = scalar_lea.vmem %s3, %s493
        // Predicated region
        $region64: #{forward.28} parent=50 // pred_check
          %p495 = pneg %p135
        $region65: #{forward.28} parent=50 // pred_check_branch
          %497 = sbr.rel (%p495) target = $region67
        $region66: #{forward.28} parent=50 // pred_region
          %s498 = smul.u32 4, %s20
        $region67: #{forward.28} parent=50 // pred_fallthru
          _
      $region51: #{forward.28} parent=5 // pred_fallthru
        _
      %p499 = scmp.le.s32.totalorder 2, %s9
      // Predicated region
      $region68: #{forward.28} parent=5 // pred_check
        %p500 = pneg %p499
      $region69: #{forward.28} parent=5 // pred_check_branch
        %502 = sbr.rel (%p500) target = $region71
      $region70: #{forward.28} parent=5 // pred_region
        %s503 = ssub.s32 %s9, 2
        // Predicated region
        $region72: #{forward.28} parent=70 // pred_check
          %p504 = pneg %p141
        $region73: #{forward.28} parent=70 // pred_check_branch
          %506 = sbr.rel (%p504) target = $region75
        $region74: #{forward.28} parent=70 // pred_region
          %s507 = smul.u32 4, %s23
          %p508 = scmp.lt.s32.totalorder %s22, 0
          %s509 = scalar_select %p508, %s22, 0
          %p510 = scmp.lt.s32.totalorder %s507, 15
          %s511 = scalar_select %p510, %s507, 15
          %s512 = smul.addr %s509, 16
          %s513 = sadd.s32 %s511, %s512
          %s514 = smul.addr %s513, 8
          %s515 = scalar_lea.vmem %s3, %s514
        $region75: #{forward.28} parent=70 // pred_fallthru
          _
      $region71: #{forward.28} parent=5 // pred_fallthru
        _
    $region6: #{forward.28} parent=1 // loop_footer
      %s13 = sadd.s32 1, %s9
    $region7: #{forward.28} parent=1 // loop_footer_branch
      %8 = sbr.rel target = $region3
    $region8: #{forward.28} parent=1 // loop_exit
      _

// kernel: tile.18
$region0: #{tile.18}
  #allocation0 [shape = 's32[1]{0}', space=sflag, size = 0x4, scoped, tag = 'scoped memory for tile.18']
  %s0 = inlined_call_operand.vmem [shape: f32[64], index: 0, kind: input, shape index: {}]
  %s1 = inlined_call_operand.vmem [shape: f32[4,64], index: 1, kind: output, shape index: {}]
  // Predicated region
  $region2: #{tile.18} parent=0 // pred_check
    _
  $region3: #{tile.18} parent=0 // pred_check_branch
    %3 = sbr.rel (0) target = $region5
  $region4: #{tile.18} parent=0 // pred_region
    _
  $region5: #{tile.18} parent=0 // pred_fallthru
    _
  %v4 = vld [vmem:[%s0] ss:$0 sm:$0xff]
  %5 = vst [vmem:[%s1] sm:$0xf] %v4

// kernel: forward.29
$region0: #{forward.29}
  #allocation0 [shape = 'u32[]', space=smem, size = 0x4, offset = 0x4, fixed_abs, tag = 'smem constant byte address 0x4 - core index']
  #allocation1 [shape = 'u32[144,128]{1,0:T(1,128)}', space=vmem, size = 0x12000, scoped, tag = 'internal scratch']
  #allocation2 [shape = 'f32[32,256]{1,0:T(8,128)}', space=vmem, size = 0x8000, scoped, tag = 'scratch operand']
  %s0 = inlined_call_operand.vmem [shape: bf16[32,512], index: 0, kind: input, shape index: {}]
  %s1 = inlined_call_operand.vmem [shape: bf16[512,256], index: 1, kind: input, shape index: {}]
  %s2 = inlined_call_operand.vmem [shape: f32[1,256], index: 2, kind: input, shape index: {}]
  %s3 = inlined_call_operand.vmem [shape: f32[32,256], index: 3, kind: output, shape index: {}]
  %s4 = sld [smem:[#allocation0]]
  $region30: #{forward.29} parent=0
    _
  %s6 = ssub.s32 1, %s4
  %s7 = scalar_select 0, %s6, %s4
  // Predicated region
  $region2: #{forward.29} parent=0 // pred_check
    _
  $region3: #{forward.29} parent=0 // pred_check_branch
    %9 = sbr.rel (0) target = $region5
  $region4: #{forward.29} parent=0 // pred_region
    _
  $region5: #{forward.29} parent=0 // pred_fallthru
    _
  // Predicated region
  $region6: #{forward.29} parent=0 // pred_check
    _
  $region7: #{forward.29} parent=0 // pred_check_branch
    %11 = sbr.rel (0) target = $region9
  $region8: #{forward.29} parent=0 // pred_region
    _
  $region9: #{forward.29} parent=0 // pred_fallthru
    _
  // Predicated region
  $region10: #{forward.29} parent=0 // pred_check
    _
  $region11: #{forward.29} parent=0 // pred_check_branch
    %13 = sbr.rel (0) target = $region13
  $region12: #{forward.29} parent=0 // pred_region
    _
  $region13: #{forward.29} parent=0 // pred_fallthru
    _
  %p14 = scmp.eq.s32.totalorder 0, 0
  // Predicated region
  $region14: #{forward.29} parent=0 // pred_check
    %p15 = pneg %p14
  $region15: #{forward.29} parent=0 // pred_check_branch
    %17 = sbr.rel (%p15) target = $region17
  $region16: #{forward.29} parent=0 // pred_region
    %18 = vst [vmem:[#allocation2] sm:$0xff] 0.0
    %19 = vst [vmem:[#allocation2 + $0x8] sm:$0xff] 0.0
    %20 = vst [vmem:[#allocation2 + $0x10] sm:$0xff] 0.0
    %21 = vst [vmem:[#allocation2 + $0x18] sm:$0xff] 0.0
    %22 = vst [vmem:[#allocation2 + $0x20] sm:$0xff] 0.0
    %23 = vst [vmem:[#allocation2 + $0x28] sm:$0xff] 0.0
    %24 = vst [vmem:[#allocation2 + $0x30] sm:$0xff] 0.0
    %25 = vst [vmem:[#allocation2 + $0x38] sm:$0xff] 0.0
  $region17: #{forward.29} parent=0 // pred_fallthru
    _
  %v26 = vld [vmem:[#allocation2] sm:$0xff]
  %v27 = vld [vmem:[#allocation2 + $0x8] sm:$0xff]
  %v28 = vld [vmem:[#allocation2 + $0x10] sm:$0xff]
  %v29 = vld [vmem:[#allocation2 + $0x18] sm:$0xff]
  %v30 = vld [vmem:[#allocation2 + $0x20] sm:$0xff]
  %v31 = vld [vmem:[#allocation2 + $0x28] sm:$0xff]
  %v32 = vld [vmem:[#allocation2 + $0x30] sm:$0xff]
  %v33 = vld [vmem:[#allocation2 + $0x38] sm:$0xff]
  %v34 = vld [vmem:[%s0] sm:$0xff]
  %v35 = vld [vmem:[%s0 + $0x8] sm:$0xff]
  %v36 = vld [vmem:[%s0 + $0x10] sm:$0xff]
  %v37 = vld [vmem:[%s0 + $0x18] sm:$0xff]
  %v38 = vld [vmem:[%s0 + $0x20] sm:$0xff]
  %v39 = vld [vmem:[%s0 + $0x28] sm:$0xff]
  %v40 = vld [vmem:[%s0 + $0x30] sm:$0xff]
  %v41 = vld [vmem:[%s0 + $0x38] sm:$0xff]
  %v42 = vld [vmem:[%s1] sm:$0xff]
  %v43 = vld [vmem:[%s1 + $0x8] sm:$0xff]
  %v44 = vld [vmem:[%s1 + $0x10] sm:$0xff]
  %v45 = vld [vmem:[%s1 + $0x18] sm:$0xff]
  %v46 = vld [vmem:[%s1 + $0x20] sm:$0xff]
  %v47 = vld [vmem:[%s1 + $0x28] sm:$0xff]
  %v48 = vld [vmem:[%s1 + $0x30] sm:$0xff]
  %v49 = vld [vmem:[%s1 + $0x38] sm:$0xff]
  %v50 = vld [vmem:[%s1 + $0x40] sm:$0xff]
  %v51 = vld [vmem:[%s1 + $0x48] sm:$0xff]
  %v52 = vld [vmem:[%s1 + $0x50] sm:$0xff]
  %v53 = vld [vmem:[%s1 + $0x58] sm:$0xff]
  %v54 = vld [vmem:[%s1 + $0x60] sm:$0xff]
  %v55 = vld [vmem:[%s1 + $0x68] sm:$0xff]
  %v56 = vld [vmem:[%s1 + $0x70] sm:$0xff]
  %v57 = vld [vmem:[%s1 + $0x78] sm:$0xff]
  %v58 = vld [vmem:[%s1 + $0x80] sm:$0xff]
  %v59 = vld [vmem:[%s1 + $0x88] sm:$0xff]
  %v60 = vld [vmem:[%s1 + $0x90] sm:$0xff]
  %v61 = vld [vmem:[%s1 + $0x98] sm:$0xff]
  %v62 = vld [vmem:[%s1 + $0xa0] sm:$0xff]
  %v63 = vld [vmem:[%s1 + $0xa8] sm:$0xff]
  %v64 = vld [vmem:[%s1 + $0xb0] sm:$0xff]
  %v65 = vld [vmem:[%s1 + $0xb8] sm:$0xff]
  %v66 = vld [vmem:[%s1 + $0xc0] sm:$0xff]
  %v67 = vld [vmem:[%s1 + $0xc8] sm:$0xff]
  %v68 = vld [vmem:[%s1 + $0xd0] sm:$0xff]
  %v69 = vld [vmem:[%s1 + $0xd8] sm:$0xff]
  %v70 = vld [vmem:[%s1 + $0xe0] sm:$0xff]
  %v71 = vld [vmem:[%s1 + $0xe8] sm:$0xff]
  %v72 = vld [vmem:[%s1 + $0xf0] sm:$0xff]
  %v73 = vld [vmem:[%s1 + $0xf8] sm:$0xff]
  %v74 = vld [vmem:[%s1 + $0x100] sm:$0xff]
  %v75 = vld [vmem:[%s1 + $0x108] sm:$0xff]
  %v76 = vld [vmem:[%s1 + $0x110] sm:$0xff]
  %v77 = vld [vmem:[%s1 + $0x118] sm:$0xff]
  %v78 = vld [vmem:[%s1 + $0x120] sm:$0xff]
  %v79 = vld [vmem:[%s1 + $0x128] sm:$0xff]
  %v80 = vld [vmem:[%s1 + $0x130] sm:$0xff]
  %v81 = vld [vmem:[%s1 + $0x138] sm:$0xff]
  %v82 = vld [vmem:[%s1 + $0x140] sm:$0xff]
  %v83 = vld [vmem:[%s1 + $0x148] sm:$0xff]
  %v84 = vld [vmem:[%s1 + $0x150] sm:$0xff]
  %v85 = vld [vmem:[%s1 + $0x158] sm:$0xff]
  %v86 = vld [vmem:[%s1 + $0x160] sm:$0xff]
  %v87 = vld [vmem:[%s1 + $0x168] sm:$0xff]
  %v88 = vld [vmem:[%s1 + $0x170] sm:$0xff]
  %v89 = vld [vmem:[%s1 + $0x178] sm:$0xff]
  %v90 = vld [vmem:[%s1 + $0x180] sm:$0xff]
  %v91 = vld [vmem:[%s1 + $0x188] sm:$0xff]
  %v92 = vld [vmem:[%s1 + $0x190] sm:$0xff]
  %v93 = vld [vmem:[%s1 + $0x198] sm:$0xff]
  %v94 = vld [vmem:[%s1 + $0x1a0] sm:$0xff]
  %v95 = vld [vmem:[%s1 + $0x1a8] sm:$0xff]
  %v96 = vld [vmem:[%s1 + $0x1b0] sm:$0xff]
  %v97 = vld [vmem:[%s1 + $0x1b8] sm:$0xff]
  %v98 = vld [vmem:[%s1 + $0x1c0] sm:$0xff]
  %v99 = vld [vmem:[%s1 + $0x1c8] sm:$0xff]
  %v100 = vld [vmem:[%s1 + $0x1d0] sm:$0xff]
  %v101 = vld [vmem:[%s1 + $0x1d8] sm:$0xff]
  %v102 = vld [vmem:[%s1 + $0x1e0] sm:$0xff]
  %v103 = vld [vmem:[%s1 + $0x1e8] sm:$0xff]
  %v104 = vld [vmem:[%s1 + $0x1f0] sm:$0xff]
  %v105 = vld [vmem:[%s1 + $0x1f8] sm:$0xff]
  %v114 = vunpack.c.l.b16 %v34
  %v115 = vunpack.c.h.b16 %v34
  %v116 = vunpack.c.l.b16 %v35
  %v117 = vunpack.c.h.b16 %v35
  %v118 = vunpack.c.l.b16 %v36
  %v119 = vunpack.c.h.b16 %v36
  %v120 = vunpack.c.l.b16 %v37
  %v121 = vunpack.c.h.b16 %v37
  %v122 = vunpack.c.l.b16 %v38
  %v123 = vunpack.c.h.b16 %v38
  %v124 = vunpack.c.l.b16 %v39
  %v125 = vunpack.c.h.b16 %v39
  %v126 = vunpack.c.l.b16 %v40
  %v127 = vunpack.c.h.b16 %v40
  %v128 = vunpack.c.l.b16 %v41
  %v129 = vunpack.c.h.b16 %v41
  %v130 = vpack.c.b16 %v118, %v114
  %v131 = vpack.c.b16 %v119, %v115
  %v132 = vpack.c.b16 %v120, %v116
  %v133 = vpack.c.b16 %v121, %v117
  %v134 = vpack.c.b16 %v126, %v122
  %v135 = vpack.c.b16 %v127, %v123
  %v136 = vpack.c.b16 %v128, %v124
  %v137 = vpack.c.b16 %v129, %v125
  %v210 = vunpack.c.l.b16 %v42
  %v211 = vunpack.c.h.b16 %v42
  %v212 = vunpack.c.l.b16 %v43
  %v213 = vunpack.c.h.b16 %v43
  %v214 = vunpack.c.l.b16 %v44
  %v215 = vunpack.c.h.b16 %v44
  %v216 = vunpack.c.l.b16 %v45
  %v217 = vunpack.c.h.b16 %v45
  %v218 = vunpack.c.l.b16 %v46
  %v219 = vunpack.c.h.b16 %v46
  %v220 = vunpack.c.l.b16 %v47
  %v221 = vunpack.c.h.b16 %v47
  %v222 = vunpack.c.l.b16 %v48
  %v223 = vunpack.c.h.b16 %v48
  %v224 = vunpack.c.l.b16 %v49
  %v225 = vunpack.c.h.b16 %v49
  %v226 = vunpack.c.l.b16 %v50
  %v227 = vunpack.c.h.b16 %v50
  %v228 = vunpack.c.l.b16 %v51
  %v229 = vunpack.c.h.b16 %v51
  %v230 = vunpack.c.l.b16 %v52
  %v231 = vunpack.c.h.b16 %v52
  %v232 = vunpack.c.l.b16 %v53
  %v233 = vunpack.c.h.b16 %v53
  %v234 = vunpack.c.l.b16 %v54
  %v235 = vunpack.c.h.b16 %v54
  %v236 = vunpack.c.l.b16 %v55
  %v237 = vunpack.c.h.b16 %v55
  %v238 = vunpack.c.l.b16 %v56
  %v239 = vunpack.c.h.b16 %v56
  %v240 = vunpack.c.l.b16 %v57
  %v241 = vunpack.c.h.b16 %v57
  %v242 = vunpack.c.l.b16 %v58
  %v243 = vunpack.c.h.b16 %v58
  %v244 = vunpack.c.l.b16 %v59
  %v245 = vunpack.c.h.b16 %v59
  %v246 = vunpack.c.l.b16 %v60
  %v247 = vunpack.c.h.b16 %v60
  %v248 = vunpack.c.l.b16 %v61
  %v249 = vunpack.c.h.b16 %v61
  %v250 = vunpack.c.l.b16 %v62
  %v251 = vunpack.c.h.b16 %v62
  %v252 = vunpack.c.l.b16 %v63
  %v253 = vunpack.c.h.b16 %v63
  %v254 = vunpack.c.l.b16 %v64
  %v255 = vunpack.c.h.b16 %v64
  %v256 = vunpack.c.l.b16 %v65
  %v257 = vunpack.c.h.b16 %v65
  %v258 = vunpack.c.l.b16 %v66
  %v259 = vunpack.c.h.b16 %v66
  %v260 = vunpack.c.l.b16 %v67
  %v261 = vunpack.c.h.b16 %v67
  %v262 = vunpack.c.l.b16 %v68
  %v263 = vunpack.c.h.b16 %v68
  %v264 = vunpack.c.l.b16 %v69
  %v265 = vunpack.c.h.b16 %v69
  %v266 = vunpack.c.l.b16 %v70
  %v267 = vunpack.c.h.b16 %v70
  %v268 = vunpack.c.l.b16 %v71
  %v269 = vunpack.c.h.b16 %v71
  %v270 = vunpack.c.l.b16 %v72
  %v271 = vunpack.c.h.b16 %v72
  %v272 = vunpack.c.l.b16 %v73
  %v273 = vunpack.c.h.b16 %v73
  %v274 = vunpack.c.l.b16 %v74
  %v275 = vunpack.c.h.b16 %v74
  %v276 = vunpack.c.l.b16 %v75
  %v277 = vunpack.c.h.b16 %v75
  %v278 = vunpack.c.l.b16 %v76
  %v279 = vunpack.c.h.b16 %v76
  %v280 = vunpack.c.l.b16 %v77
  %v281 = vunpack.c.h.b16 %v77
  %v282 = vunpack.c.l.b16 %v78
  %v283 = vunpack.c.h.b16 %v78
  %v284 = vunpack.c.l.b16 %v79
  %v285 = vunpack.c.h.b16 %v79
  %v286 = vunpack.c.l.b16 %v80
  %v287 = vunpack.c.h.b16 %v80
  %v288 = vunpack.c.l.b16 %v81
  %v289 = vunpack.c.h.b16 %v81
  %v290 = vunpack.c.l.b16 %v82
  %v291 = vunpack.c.h.b16 %v82
  %v292 = vunpack.c.l.b16 %v83
  %v293 = vunpack.c.h.b16 %v83
  %v294 = vunpack.c.l.b16 %v84
  %v295 = vunpack.c.h.b16 %v84
  %v296 = vunpack.c.l.b16 %v85
  %v297 = vunpack.c.h.b16 %v85
  %v298 = vunpack.c.l.b16 %v86
  %v299 = vunpack.c.h.b16 %v86
  %v300 = vunpack.c.l.b16 %v87
  %v301 = vunpack.c.h.b16 %v87
  %v302 = vunpack.c.l.b16 %v88
  %v303 = vunpack.c.h.b16 %v88
  %v304 = vunpack.c.l.b16 %v89
  %v305 = vunpack.c.h.b16 %v89
  %v306 = vunpack.c.l.b16 %v90
  %v307 = vunpack.c.h.b16 %v90
  %v308 = vunpack.c.l.b16 %v91
  %v309 = vunpack.c.h.b16 %v91
  %v310 = vunpack.c.l.b16 %v92
  %v311 = vunpack.c.h.b16 %v92
  %v312 = vunpack.c.l.b16 %v93
  %v313 = vunpack.c.h.b16 %v93
  %v314 = vunpack.c.l.b16 %v94
  %v315 = vunpack.c.h.b16 %v94
  %v316 = vunpack.c.l.b16 %v95
  %v317 = vunpack.c.h.b16 %v95
  %v318 = vunpack.c.l.b16 %v96
  %v319 = vunpack.c.h.b16 %v96
  %v320 = vunpack.c.l.b16 %v97
  %v321 = vunpack.c.h.b16 %v97
  %v322 = vunpack.c.l.b16 %v98
  %v323 = vunpack.c.h.b16 %v98
  %v324 = vunpack.c.l.b16 %v99
  %v325 = vunpack.c.h.b16 %v99
  %v326 = vunpack.c.l.b16 %v100
  %v327 = vunpack.c.h.b16 %v100
  %v328 = vunpack.c.l.b16 %v101
  %v329 = vunpack.c.h.b16 %v101
  %v330 = vunpack.c.l.b16 %v102
  %v331 = vunpack.c.h.b16 %v102
  %v332 = vunpack.c.l.b16 %v103
  %v333 = vunpack.c.h.b16 %v103
  %v334 = vunpack.c.l.b16 %v104
  %v335 = vunpack.c.h.b16 %v104
  %v336 = vunpack.c.l.b16 %v105
  %v337 = vunpack.c.h.b16 %v105
  %v338 = vpack.c.b16 %v212, %v210
  %v339 = vpack.c.b16 %v213, %v211
  %v340 = vpack.c.b16 %v216, %v214
  %v341 = vpack.c.b16 %v217, %v215
  %v342 = vpack.c.b16 %v220, %v218
  %v343 = vpack.c.b16 %v221, %v219
  %v344 = vpack.c.b16 %v224, %v222
  %v345 = vpack.c.b16 %v225, %v223
  %v346 = vpack.c.b16 %v228, %v226
  %v347 = vpack.c.b16 %v229, %v227
  %v348 = vpack.c.b16 %v232, %v230
  %v349 = vpack.c.b16 %v233, %v231
  %v350 = vpack.c.b16 %v236, %v234
  %v351 = vpack.c.b16 %v237, %v235
  %v352 = vpack.c.b16 %v240, %v238
  %v353 = vpack.c.b16 %v241, %v239
  %v354 = vpack.c.b16 %v244, %v242
  %v355 = vpack.c.b16 %v245, %v243
  %v356 = vpack.c.b16 %v248, %v246
  %v357 = vpack.c.b16 %v249, %v247
  %v358 = vpack.c.b16 %v252, %v250
  %v359 = vpack.c.b16 %v253, %v251
  %v360 = vpack.c.b16 %v256, %v254
  %v361 = vpack.c.b16 %v257, %v255
  %v362 = vpack.c.b16 %v260, %v258
  %v363 = vpack.c.b16 %v261, %v259
  %v364 = vpack.c.b16 %v264, %v262
  %v365 = vpack.c.b16 %v265, %v263
  %v366 = vpack.c.b16 %v268, %v266
  %v367 = vpack.c.b16 %v269, %v267
  %v368 = vpack.c.b16 %v272, %v270
  %v369 = vpack.c.b16 %v273, %v271
  %v370 = vpack.c.b16 %v276, %v274
  %v371 = vpack.c.b16 %v277, %v275
  %v372 = vpack.c.b16 %v280, %v278
  %v373 = vpack.c.b16 %v281, %v279
  %v374 = vpack.c.b16 %v284, %v282
  %v375 = vpack.c.b16 %v285, %v283
  %v376 = vpack.c.b16 %v288, %v286
  %v377 = vpack.c.b16 %v289, %v287
  %v378 = vpack.c.b16 %v292, %v290
  %v379 = vpack.c.b16 %v293, %v291
  %v380 = vpack.c.b16 %v296, %v294
  %v381 = vpack.c.b16 %v297, %v295
  %v382 = vpack.c.b16 %v300, %v298
  %v383 = vpack.c.b16 %v301, %v299
  %v384 = vpack.c.b16 %v304, %v302
  %v385 = vpack.c.b16 %v305, %v303
  %v386 = vpack.c.b16 %v308, %v306
  %v387 = vpack.c.b16 %v309, %v307
  %v388 = vpack.c.b16 %v312, %v310
  %v389 = vpack.c.b16 %v313, %v311
  %v390 = vpack.c.b16 %v316, %v314
  %v391 = vpack.c.b16 %v317, %v315
  %v392 = vpack.c.b16 %v320, %v318
  %v393 = vpack.c.b16 %v321, %v319
  %v394 = vpack.c.b16 %v324, %v322
  %v395 = vpack.c.b16 %v325, %v323
  %v396 = vpack.c.b16 %v328, %v326
  %v397 = vpack.c.b16 %v329, %v327
  %v398 = vpack.c.b16 %v332, %v330
  %v399 = vpack.c.b16 %v333, %v331
  %v400 = vpack.c.b16 %v336, %v334
  %v401 = vpack.c.b16 %v337, %v335
  %466 = vmatprep.subr.bf16.mxu0 %v353
  %467 = vmatpush1.bf16.msra.mxu0 %v352
  %468 = vmatprep.subr.bf16.mxu0 %v351
  %469 = vmatpush1.bf16.msra.mxu0 %v350
  %470 = vmatprep.subr.bf16.mxu0 %v349
  %471 = vmatpush1.bf16.msra.mxu0 %v348
  %472 = vmatprep.subr.bf16.mxu0 %v347
  %473 = vmatpush1.bf16.msra.mxu0 %v346
  %474 = vmatprep.subr.bf16.mxu0 %v345
  %475 = vmatpush1.bf16.msra.mxu0 %v344
  %476 = vmatprep.subr.bf16.mxu0 %v343
  %477 = vmatpush1.bf16.msra.mxu0 %v342
  %478 = vmatprep.subr.bf16.mxu0 %v341
  %479 = vmatpush1.bf16.msra.mxu0 %v340
  %480 = vmatprep.subr.bf16.mxu0 %v339
  %481 = vmatpush1.bf16.msra.mxu0 %v338
  %482 = vmatprep.subr.bf16.mxu0 %v369
  %483 = vmatpush2.bf16.msra.mxu0 %v368
  %484 = vmatprep.subr.bf16.mxu0 %v367
  %485 = vmatpush2.bf16.msra.mxu0 %v366
  %486 = vmatprep.subr.bf16.mxu0 %v365
  %487 = vmatpush2.bf16.msra.mxu0 %v364
  %488 = vmatprep.subr.bf16.mxu0 %v363
  %489 = vmatpush2.bf16.msra.mxu0 %v362
  %490 = vmatprep.subr.bf16.mxu0 %v361
  %491 = vmatpush2.bf16.msra.mxu0 %v360
  %492 = vmatprep.subr.bf16.mxu0 %v359
  %493 = vmatpush2.bf16.msra.mxu0 %v358
  %494 = vmatprep.subr.bf16.mxu0 %v357
  %495 = vmatpush2.bf16.msra.mxu0 %v356
  %496 = vmatprep.subr.bf16.mxu0 %v355
  %497 = vmatpush2.bf16.msra.mxu0 %v354
  %498 = vmatprep.mubr.bf16.mxu0 %v131
  %499 = vmatmul.mubr.bf16.gmra.mxu0 %v130
  %v500 = vpop.f32.mrf.mxu0
  %v501 = vadd.f32 0.0, %v500
  %v502 = vpop.f32.mrf.mxu0
  %v503 = vadd.f32 0.0, %v502
  %v504 = vpop.f32.mrf.mxu0
  %v505 = vadd.f32 0.0, %v504
  %v506 = vpop.f32.mrf.mxu0
  %v507 = vadd.f32 0.0, %v506
  %508 = vmatprep.mubr.bf16.mxu0 %v135
  %509 = vmatmul.mubr.bf16.gmra.mxu0 %v134
  %v510 = vpop.f32.mrf.mxu0
  %v511 = vadd.f32 0.0, %v510
  %v512 = vpop.f32.mrf.mxu0
  %v513 = vadd.f32 0.0, %v512
  %v514 = vpop.f32.mrf.mxu0
  %v515 = vadd.f32 0.0, %v514
  %v516 = vpop.f32.mrf.mxu0
  %v517 = vadd.f32 0.0, %v516
  %518 = vdwg.mxu0
  %519 = vmatprep.subr.bf16.mxu0 %v385
  %520 = vmatpush1.bf16.msra.mxu0 %v384
  %521 = vmatprep.subr.bf16.mxu0 %v383
  %522 = vmatpush1.bf16.msra.mxu0 %v382
  %523 = vmatprep.subr.bf16.mxu0 %v381
  %524 = vmatpush1.bf16.msra.mxu0 %v380
  %525 = vmatprep.subr.bf16.mxu0 %v379
  %526 = vmatpush1.bf16.msra.mxu0 %v378
  %527 = vmatprep.subr.bf16.mxu0 %v377
  %528 = vmatpush1.bf16.msra.mxu0 %v376
  %529 = vmatprep.subr.bf16.mxu0 %v375
  %530 = vmatpush1.bf16.msra.mxu0 %v374
  %531 = vmatprep.subr.bf16.mxu0 %v373
  %532 = vmatpush1.bf16.msra.mxu0 %v372
  %533 = vmatprep.subr.bf16.mxu0 %v371
  %534 = vmatpush1.bf16.msra.mxu0 %v370
  %535 = vmatprep.subr.bf16.mxu0 %v401
  %536 = vmatpush2.bf16.msra.mxu0 %v400
  %537 = vmatprep.subr.bf16.mxu0 %v399
  %538 = vmatpush2.bf16.msra.mxu0 %v398
  %539 = vmatprep.subr.bf16.mxu0 %v397
  %540 = vmatpush2.bf16.msra.mxu0 %v396
  %541 = vmatprep.subr.bf16.mxu0 %v395
  %542 = vmatpush2.bf16.msra.mxu0 %v394
  %543 = vmatprep.subr.bf16.mxu0 %v393
  %544 = vmatpush2.bf16.msra.mxu0 %v392
  %545 = vmatprep.subr.bf16.mxu0 %v391
  %546 = vmatpush2.bf16.msra.mxu0 %v390
  %547 = vmatprep.subr.bf16.mxu0 %v389
  %548 = vmatpush2.bf16.msra.mxu0 %v388
  %549 = vmatprep.subr.bf16.mxu0 %v387
  %550 = vmatpush2.bf16.msra.mxu0 %v386
  %551 = vmatprep.mubr.bf16.mxu0 %v133
  %552 = vmatmul.mubr.bf16.gmra.mxu0 %v132
  %v553 = vpop.f32.mrf.mxu0
  %v554 = vadd.f32 %v501, %v553
  %v555 = vpop.f32.mrf.mxu0
  %v556 = vadd.f32 %v503, %v555
  %v557 = vpop.f32.mrf.mxu0
  %v558 = vadd.f32 %v505, %v557
  %v559 = vpop.f32.mrf.mxu0
  %v560 = vadd.f32 %v507, %v559
  %561 = vmatprep.mubr.bf16.mxu0 %v137
  %562 = vmatmul.mubr.bf16.gmra.mxu0 %v136
  %v563 = vpop.f32.mrf.mxu0
  %v564 = vadd.f32 %v511, %v563
  %v565 = vpop.f32.mrf.mxu0
  %v566 = vadd.f32 %v513, %v565
  %v567 = vpop.f32.mrf.mxu0
  %v568 = vadd.f32 %v515, %v567
  %v569 = vpop.f32.mrf.mxu0
  %v570 = vadd.f32 %v517, %v569
  %571 = vdwg.mxu0
  %v572 = vadd.f32 %v26, %v554
  %v573 = vadd.f32 %v27, %v556
  %v574 = vadd.f32 %v28, %v558
  %v575 = vadd.f32 %v29, %v560
  %v576 = vadd.f32 %v30, %v564
  %v577 = vadd.f32 %v31, %v566
  %v578 = vadd.f32 %v32, %v568
  %v579 = vadd.f32 %v33, %v570
  %580 = vst [vmem:[#allocation2] sm:$0xff] %v572
  %581 = vst [vmem:[#allocation2 + $0x8] sm:$0xff] %v573
  %582 = vst [vmem:[#allocation2 + $0x10] sm:$0xff] %v574
  %583 = vst [vmem:[#allocation2 + $0x18] sm:$0xff] %v575
  %584 = vst [vmem:[#allocation2 + $0x20] sm:$0xff] %v576
  %585 = vst [vmem:[#allocation2 + $0x28] sm:$0xff] %v577
  %586 = vst [vmem:[#allocation2 + $0x30] sm:$0xff] %v578
  %587 = vst [vmem:[#allocation2 + $0x38] sm:$0xff] %v579
  // Predicated region
  $region18: #{forward.29} parent=0 // pred_check
    %p588 = pneg %p14
  $region19: #{forward.29} parent=0 // pred_check_branch
    %590 = sbr.rel (%p588) target = $region21
  $region20: #{forward.29} parent=0 // pred_region
    %v591 = vld [vmem:[#allocation2] sm:$0xff]
    %v592 = vld [vmem:[#allocation2 + $0x8] sm:$0xff]
    %v593 = vld [vmem:[#allocation2 + $0x10] sm:$0xff]
    %v594 = vld [vmem:[#allocation2 + $0x18] sm:$0xff]
    %v595 = vld [vmem:[#allocation2 + $0x20] sm:$0xff]
    %v596 = vld [vmem:[#allocation2 + $0x28] sm:$0xff]
    %v597 = vld [vmem:[#allocation2 + $0x30] sm:$0xff]
    %v598 = vld [vmem:[#allocation2 + $0x38] sm:$0xff]
    %v599 = vld [vmem:[%s2] sm:$0x3]
    %v601 = vlaneseq
    %v602 = vshrl.u32 %v601, 7
    %v603 = vsub.s32 0, %v602
    %v604 = vrot.slane %v599, %v603
    %v605 = vlaneseq
    %v606 = vshrl.u32 %v605, 7
    %v607 = vsub.s32 1, %v606
    %v608 = vrot.slane %v599, %v607
    %v611 = vadd.f32 %v591, %v604
    %v612 = vadd.f32 %v592, %v608
    %v613 = vadd.f32 %v593, %v604
    %v614 = vadd.f32 %v594, %v608
    %v615 = vadd.f32 %v595, %v604
    %v616 = vadd.f32 %v596, %v608
    %v617 = vadd.f32 %v597, %v604
    %v618 = vadd.f32 %v598, %v608
    %v619 = vmax.f32 %v611, 0.0
    %v620 = vmax.f32 %v612, 0.0
    %v621 = vmax.f32 %v613, 0.0
    %v622 = vmax.f32 %v614, 0.0
    %v623 = vmax.f32 %v615, 0.0
    %v624 = vmax.f32 %v616, 0.0
    %v625 = vmax.f32 %v617, 0.0
    %v626 = vmax.f32 %v618, 0.0
    %627 = vst [vmem:[%s3] sm:$0xff] %v619
    %628 = vst [vmem:[%s3 + $0x8] sm:$0xff] %v620
    %629 = vst [vmem:[%s3 + $0x10] sm:$0xff] %v621
    %630 = vst [vmem:[%s3 + $0x18] sm:$0xff] %v622
    %631 = vst [vmem:[%s3 + $0x20] sm:$0xff] %v623
    %632 = vst [vmem:[%s3 + $0x28] sm:$0xff] %v624
    %633 = vst [vmem:[%s3 + $0x30] sm:$0xff] %v625
    %634 = vst [vmem:[%s3 + $0x38] sm:$0xff] %v626
  $region21: #{forward.29} parent=0 // pred_fallthru
    _
  // Predicated region
  $region22: #{forward.29} parent=0 // pred_check
    _
  $region23: #{forward.29} parent=0 // pred_check_branch
    %636 = sbr.rel (0) target = $region25
  $region24: #{forward.29} parent=0 // pred_region
    _
  $region25: #{forward.29} parent=0 // pred_fallthru
    _
  // Predicated region
  $region26: #{forward.29} parent=0 // pred_check
    _
  $region27: #{forward.29} parent=0 // pred_check_branch
    %638 = sbr.rel (0) target = $region29
  $region28: #{forward.29} parent=0 // pred_region
    _
  $region29: #{forward.29} parent=0 // pred_fallthru
    _

// kernel: tile.23
$region0: #{tile.23}
  #allocation0 [shape = 's32[1]{0}', space=sflag, size = 0x4, scoped, tag = 'scoped memory for tile.23']
  %s0 = inlined_call_operand.vmem [shape: f32[32], index: 0, kind: input, shape index: {}]
  %s1 = inlined_call_operand.vmem [shape: f32[4,32], index: 1, kind: output, shape index: {}]
  // Predicated region
  $region2: #{tile.23} parent=0 // pred_check
    _
  $region3: #{tile.23} parent=0 // pred_check_branch
    %3 = sbr.rel (0) target = $region5
  $region4: #{tile.23} parent=0 // pred_region
    _
  $region5: #{tile.23} parent=0 // pred_fallthru
    _
  %v4 = vld [vmem:[%s0] ss:$0 sm:$0xff]
  %5 = vst [vmem:[%s1] sm:$0xf] %v4

// kernel: forward.30
$region0: #{forward.30}
  #allocation0 [shape = 'u32[]', space=smem, size = 0x4, offset = 0x4, fixed_abs, tag = 'smem constant byte address 0x4 - core index']
  #allocation1 [shape = 'u32[144,128]{1,0:T(1,128)}', space=vmem, size = 0x12000, scoped, tag = 'internal scratch']
  #allocation2 [shape = 'f32[128,128]{1,0:T(8,128)}', space=vmem, size = 0x10000, scoped, tag = 'scratch operand']
  %s0 = inlined_call_operand.vmem [shape: bf16[128,256], index: 0, kind: input, shape index: {}]
  %s1 = inlined_call_operand.vmem [shape: bf16[256,128], index: 1, kind: input, shape index: {}]
  %s2 = inlined_call_operand.vmem [shape: f32[1,128], index: 2, kind: input, shape index: {}]
  %s3 = inlined_call_operand.vmem [shape: f32[128,128], index: 3, kind: output, shape index: {}]
  %s4 = sld [smem:[#allocation0]]
  $region30: #{forward.30} parent=0
    _
  %s6 = ssub.s32 1, %s4
  %s7 = scalar_select 0, %s6, %s4
  // Predicated region
  $region2: #{forward.30} parent=0 // pred_check
    _
  $region3: #{forward.30} parent=0 // pred_check_branch
    %9 = sbr.rel (0) target = $region5
  $region4: #{forward.30} parent=0 // pred_region
    _
  $region5: #{forward.30} parent=0 // pred_fallthru
    _
  // Predicated region
  $region6: #{forward.30} parent=0 // pred_check
    _
  $region7: #{forward.30} parent=0 // pred_check_branch
    %11 = sbr.rel (0) target = $region9
  $region8: #{forward.30} parent=0 // pred_region
    _
  $region9: #{forward.30} parent=0 // pred_fallthru
    _
  // Predicated region
  $region10: #{forward.30} parent=0 // pred_check
    _
  $region11: #{forward.30} parent=0 // pred_check_branch
    %13 = sbr.rel (0) target = $region13
  $region12: #{forward.30} parent=0 // pred_region
    _
  $region13: #{forward.30} parent=0 // pred_fallthru
    _
  %p15 = scmp.eq.s32.totalorder 0, 0
  // Predicated region
  $region14: #{forward.30} parent=0 // pred_check
    %p16 = pneg %p15
  $region15: #{forward.30} parent=0 // pred_check_branch
    %18 = sbr.rel (%p16) target = $region17
  $region16: #{forward.30} parent=0 // pred_region
    %19 = vst [vmem:[#allocation2] sm:$0xff] 0.0
    %20 = vst [vmem:[#allocation2 + $0x8] sm:$0xff] 0.0
    %21 = vst [vmem:[#allocation2 + $0x10] sm:$0xff] 0.0
    %22 = vst [vmem:[#allocation2 + $0x18] sm:$0xff] 0.0
    %23 = vst [vmem:[#allocation2 + $0x20] sm:$0xff] 0.0
    %24 = vst [vmem:[#allocation2 + $0x28] sm:$0xff] 0.0
    %25 = vst [vmem:[#allocation2 + $0x30] sm:$0xff] 0.0
    %26 = vst [vmem:[#allocation2 + $0x38] sm:$0xff] 0.0
    %27 = vst [vmem:[#allocation2 + $0x40] sm:$0xff] 0.0
    %28 = vst [vmem:[#allocation2 + $0x48] sm:$0xff] 0.0
    %29 = vst [vmem:[#allocation2 + $0x50] sm:$0xff] 0.0
    %30 = vst [vmem:[#allocation2 + $0x58] sm:$0xff] 0.0
    %31 = vst [vmem:[#allocation2 + $0x60] sm:$0xff] 0.0
    %32 = vst [vmem:[#allocation2 + $0x68] sm:$0xff] 0.0
    %33 = vst [vmem:[#allocation2 + $0x70] sm:$0xff] 0.0
    %34 = vst [vmem:[#allocation2 + $0x78] sm:$0xff] 0.0
  $region17: #{forward.30} parent=0 // pred_fallthru
    _
  %v35 = vld [vmem:[#allocation2] sm:$0xff]
  %v36 = vld [vmem:[#allocation2 + $0x8] sm:$0xff]
  %v37 = vld [vmem:[#allocation2 + $0x10] sm:$0xff]
  %v38 = vld [vmem:[#allocation2 + $0x18] sm:$0xff]
  %v39 = vld [vmem:[#allocation2 + $0x20] sm:$0xff]
  %v40 = vld [vmem:[#allocation2 + $0x28] sm:$0xff]
  %v41 = vld [vmem:[#allocation2 + $0x30] sm:$0xff]
  %v42 = vld [vmem:[#allocation2 + $0x38] sm:$0xff]
  %v43 = vld [vmem:[#allocation2 + $0x40] sm:$0xff]
  %v44 = vld [vmem:[#allocation2 + $0x48] sm:$0xff]
  %v45 = vld [vmem:[#allocation2 + $0x50] sm:$0xff]
  %v46 = vld [vmem:[#allocation2 + $0x58] sm:$0xff]
  %v47 = vld [vmem:[#allocation2 + $0x60] sm:$0xff]
  %v48 = vld [vmem:[#allocation2 + $0x68] sm:$0xff]
  %v49 = vld [vmem:[#allocation2 + $0x70] sm:$0xff]
  %v50 = vld [vmem:[#allocation2 + $0x78] sm:$0xff]
  %v51 = vld [vmem:[%s0] sm:$0xff]
  %v52 = vld [vmem:[%s0 + $0x8] sm:$0xff]
  %v53 = vld [vmem:[%s0 + $0x10] sm:$0xff]
  %v54 = vld [vmem:[%s0 + $0x18] sm:$0xff]
  %v55 = vld [vmem:[%s0 + $0x20] sm:$0xff]
  %v56 = vld [vmem:[%s0 + $0x28] sm:$0xff]
  %v57 = vld [vmem:[%s0 + $0x30] sm:$0xff]
  %v58 = vld [vmem:[%s0 + $0x38] sm:$0xff]
  %v59 = vld [vmem:[%s0 + $0x40] sm:$0xff]
  %v60 = vld [vmem:[%s0 + $0x48] sm:$0xff]
  %v61 = vld [vmem:[%s0 + $0x50] sm:$0xff]
  %v62 = vld [vmem:[%s0 + $0x58] sm:$0xff]
  %v63 = vld [vmem:[%s0 + $0x60] sm:$0xff]
  %v64 = vld [vmem:[%s0 + $0x68] sm:$0xff]
  %v65 = vld [vmem:[%s0 + $0x70] sm:$0xff]
  %v66 = vld [vmem:[%s0 + $0x78] sm:$0xff]
  %v67 = vld [vmem:[%s1] sm:$0xf]
  %v68 = vld [vmem:[%s1 + $0x4] sm:$0xf]
  %v69 = vld [vmem:[%s1 + $0x8] sm:$0xf]
  %v70 = vld [vmem:[%s1 + $0xc] sm:$0xf]
  %v71 = vld [vmem:[%s1 + $0x10] sm:$0xf]
  %v72 = vld [vmem:[%s1 + $0x14] sm:$0xf]
  %v73 = vld [vmem:[%s1 + $0x18] sm:$0xf]
  %v74 = vld [vmem:[%s1 + $0x1c] sm:$0xf]
  %v75 = vld [vmem:[%s1 + $0x20] sm:$0xf]
  %v76 = vld [vmem:[%s1 + $0x24] sm:$0xf]
  %v77 = vld [vmem:[%s1 + $0x28] sm:$0xf]
  %v78 = vld [vmem:[%s1 + $0x2c] sm:$0xf]
  %v79 = vld [vmem:[%s1 + $0x30] sm:$0xf]
  %v80 = vld [vmem:[%s1 + $0x34] sm:$0xf]
  %v81 = vld [vmem:[%s1 + $0x38] sm:$0xf]
  %v82 = vld [vmem:[%s1 + $0x3c] sm:$0xf]
  %v83 = vld [vmem:[%s1 + $0x40] sm:$0xf]
  %v84 = vld [vmem:[%s1 + $0x44] sm:$0xf]
  %v85 = vld [vmem:[%s1 + $0x48] sm:$0xf]
  %v86 = vld [vmem:[%s1 + $0x4c] sm:$0xf]
  %v87 = vld [vmem:[%s1 + $0x50] sm:$0xf]
  %v88 = vld [vmem:[%s1 + $0x54] sm:$0xf]
  %v89 = vld [vmem:[%s1 + $0x58] sm:$0xf]
  %v90 = vld [vmem:[%s1 + $0x5c] sm:$0xf]
  %v91 = vld [vmem:[%s1 + $0x60] sm:$0xf]
  %v92 = vld [vmem:[%s1 + $0x64] sm:$0xf]
  %v93 = vld [vmem:[%s1 + $0x68] sm:$0xf]
  %v94 = vld [vmem:[%s1 + $0x6c] sm:$0xf]
  %v95 = vld [vmem:[%s1 + $0x70] sm:$0xf]
  %v96 = vld [vmem:[%s1 + $0x74] sm:$0xf]
  %v97 = vld [vmem:[%s1 + $0x78] sm:$0xf]
  %v98 = vld [vmem:[%s1 + $0x7c] sm:$0xf]
  %v115 = vunpack.c.l.b16 %v51
  %v116 = vunpack.c.h.b16 %v51
  %v117 = vunpack.c.l.b16 %v52
  %v118 = vunpack.c.h.b16 %v52
  %v119 = vunpack.c.l.b16 %v53
  %v120 = vunpack.c.h.b16 %v53
  %v121 = vunpack.c.l.b16 %v54
  %v122 = vunpack.c.h.b16 %v54
  %v123 = vunpack.c.l.b16 %v55
  %v124 = vunpack.c.h.b16 %v55
  %v125 = vunpack.c.l.b16 %v56
  %v126 = vunpack.c.h.b16 %v56
  %v127 = vunpack.c.l.b16 %v57
  %v128 = vunpack.c.h.b16 %v57
  %v129 = vunpack.c.l.b16 %v58
  %v130 = vunpack.c.h.b16 %v58
  %v131 = vunpack.c.l.b16 %v59
  %v132 = vunpack.c.h.b16 %v59
  %v133 = vunpack.c.l.b16 %v60
  %v134 = vunpack.c.h.b16 %v60
  %v135 = vunpack.c.l.b16 %v61
  %v136 = vunpack.c.h.b16 %v61
  %v137 = vunpack.c.l.b16 %v62
  %v138 = vunpack.c.h.b16 %v62
  %v139 = vunpack.c.l.b16 %v63
  %v140 = vunpack.c.h.b16 %v63
  %v141 = vunpack.c.l.b16 %v64
  %v142 = vunpack.c.h.b16 %v64
  %v143 = vunpack.c.l.b16 %v65
  %v144 = vunpack.c.h.b16 %v65
  %v145 = vunpack.c.l.b16 %v66
  %v146 = vunpack.c.h.b16 %v66
  %v147 = vpack.c.b16 %v117, %v115
  %v148 = vpack.c.b16 %v118, %v116
  %v149 = vpack.c.b16 %v121, %v119
  %v150 = vpack.c.b16 %v122, %v120
  %v151 = vpack.c.b16 %v125, %v123
  %v152 = vpack.c.b16 %v126, %v124
  %v153 = vpack.c.b16 %v129, %v127
  %v154 = vpack.c.b16 %v130, %v128
  %v155 = vpack.c.b16 %v133, %v131
  %v156 = vpack.c.b16 %v134, %v132
  %v157 = vpack.c.b16 %v137, %v135
  %v158 = vpack.c.b16 %v138, %v136
  %v159 = vpack.c.b16 %v141, %v139
  %v160 = vpack.c.b16 %v142, %v140
  %v161 = vpack.c.b16 %v145, %v143
  %v162 = vpack.c.b16 %v146, %v144
  %v211 = vunpack.c.l.b16 %v67
  %v212 = vunpack.c.l.b16 %v68
  %v213 = vunpack.c.l.b16 %v69
  %v214 = vunpack.c.l.b16 %v70
  %v215 = vunpack.c.l.b16 %v71
  %v216 = vunpack.c.l.b16 %v72
  %v217 = vunpack.c.l.b16 %v73
  %v218 = vunpack.c.l.b16 %v74
  %v219 = vunpack.c.l.b16 %v75
  %v220 = vunpack.c.l.b16 %v76
  %v221 = vunpack.c.l.b16 %v77
  %v222 = vunpack.c.l.b16 %v78
  %v223 = vunpack.c.l.b16 %v79
  %v224 = vunpack.c.l.b16 %v80
  %v225 = vunpack.c.l.b16 %v81
  %v226 = vunpack.c.l.b16 %v82
  %v227 = vunpack.c.l.b16 %v83
  %v228 = vunpack.c.l.b16 %v84
  %v229 = vunpack.c.l.b16 %v85
  %v230 = vunpack.c.l.b16 %v86
  %v231 = vunpack.c.l.b16 %v87
  %v232 = vunpack.c.l.b16 %v88
  %v233 = vunpack.c.l.b16 %v89
  %v234 = vunpack.c.l.b16 %v90
  %v235 = vunpack.c.l.b16 %v91
  %v236 = vunpack.c.l.b16 %v92
  %v237 = vunpack.c.l.b16 %v93
  %v238 = vunpack.c.l.b16 %v94
  %v239 = vunpack.c.l.b16 %v95
  %v240 = vunpack.c.l.b16 %v96
  %v241 = vunpack.c.l.b16 %v97
  %v242 = vunpack.c.l.b16 %v98
  %v243 = vpack.c.b16 %v212, %v211
  %v244 = vpack.c.b16 %v214, %v213
  %v245 = vpack.c.b16 %v216, %v215
  %v246 = vpack.c.b16 %v218, %v217
  %v247 = vpack.c.b16 %v220, %v219
  %v248 = vpack.c.b16 %v222, %v221
  %v249 = vpack.c.b16 %v224, %v223
  %v250 = vpack.c.b16 %v226, %v225
  %v251 = vpack.c.b16 %v228, %v227
  %v252 = vpack.c.b16 %v230, %v229
  %v253 = vpack.c.b16 %v232, %v231
  %v254 = vpack.c.b16 %v234, %v233
  %v255 = vpack.c.b16 %v236, %v235
  %v256 = vpack.c.b16 %v238, %v237
  %v257 = vpack.c.b16 %v240, %v239
  %v258 = vpack.c.b16 %v242, %v241
  %275 = vmatprep.subr.bf16.mxu0 0
  %276 = vmatpush1.bf16.msra.mxu0 %v250
  %277 = vmatprep.subr.bf16.mxu0 0
  %278 = vmatpush1.bf16.msra.mxu0 %v249
  %279 = vmatprep.subr.bf16.mxu0 0
  %280 = vmatpush1.bf16.msra.mxu0 %v248
  %281 = vmatprep.subr.bf16.mxu0 0
  %282 = vmatpush1.bf16.msra.mxu0 %v247
  %283 = vmatprep.subr.bf16.mxu0 0
  %284 = vmatpush1.bf16.msra.mxu0 %v246
  %285 = vmatprep.subr.bf16.mxu0 0
  %286 = vmatpush1.bf16.msra.mxu0 %v245
  %287 = vmatprep.subr.bf16.mxu0 0
  %288 = vmatpush1.bf16.msra.mxu0 %v244
  %289 = vmatprep.subr.bf16.mxu0 0
  %290 = vmatpush1.bf16.msra.mxu0 %v243
  %291 = vmatprep.subr.bf16.mxu0 0
  %292 = vmatpush2.bf16.msra.mxu0 %v258
  %293 = vmatprep.subr.bf16.mxu0 0
  %294 = vmatpush2.bf16.msra.mxu0 %v257
  %295 = vmatprep.subr.bf16.mxu0 0
  %296 = vmatpush2.bf16.msra.mxu0 %v256
  %297 = vmatprep.subr.bf16.mxu0 0
  %298 = vmatpush2.bf16.msra.mxu0 %v255
  %299 = vmatprep.subr.bf16.mxu0 0
  %300 = vmatpush2.bf16.msra.mxu0 %v254
  %301 = vmatprep.subr.bf16.mxu0 0
  %302 = vmatpush2.bf16.msra.mxu0 %v253
  %303 = vmatprep.subr.bf16.mxu0 0
  %304 = vmatpush2.bf16.msra.mxu0 %v252
  %305 = vmatprep.subr.bf16.mxu0 0
  %306 = vmatpush2.bf16.msra.mxu0 %v251
  %307 = vmatprep.mubr.bf16.mxu0 %v148
  %308 = vmatmul.mubr.bf16.gmra.mxu0 %v147
  %v309 = vpop.f32.mrf.mxu0
  %v310 = vadd.f32 0.0, %v309
  %v311 = vpop.f32.mrf.mxu0
  %v312 = vpop.f32.mrf.mxu0
  %v313 = vadd.f32 0.0, %v312
  %v314 = vpop.f32.mrf.mxu0
  %315 = vmatprep.mubr.bf16.mxu0 %v150
  %316 = vmatmul.mubr.bf16.gmra.mxu0 %v149
  %v317 = vpop.f32.mrf.mxu0
  %v318 = vadd.f32 0.0, %v317
  %v319 = vpop.f32.mrf.mxu0
  %v320 = vpop.f32.mrf.mxu0
  %v321 = vadd.f32 0.0, %v320
  %v322 = vpop.f32.mrf.mxu0
  %323 = vmatprep.mubr.bf16.mxu0 %v152
  %324 = vmatmul.mubr.bf16.gmra.mxu0 %v151
  %v325 = vpop.f32.mrf.mxu0
  %v326 = vadd.f32 0.0, %v325
  %v327 = vpop.f32.mrf.mxu0
  %v328 = vpop.f32.mrf.mxu0
  %v329 = vadd.f32 0.0, %v328
  %v330 = vpop.f32.mrf.mxu0
  %331 = vmatprep.mubr.bf16.mxu0 %v154
  %332 = vmatmul.mubr.bf16.gmra.mxu0 %v153
  %v333 = vpop.f32.mrf.mxu0
  %v334 = vadd.f32 0.0, %v333
  %v335 = vpop.f32.mrf.mxu0
  %v336 = vpop.f32.mrf.mxu0
  %v337 = vadd.f32 0.0, %v336
  %v338 = vpop.f32.mrf.mxu0
  %339 = vmatprep.mubr.bf16.mxu0 %v156
  %340 = vmatmul.mubr.bf16.gmra.mxu0 %v155
  %v341 = vpop.f32.mrf.mxu0
  %v342 = vadd.f32 0.0, %v341
  %v343 = vpop.f32.mrf.mxu0
  %v344 = vpop.f32.mrf.mxu0
  %v345 = vadd.f32 0.0, %v344
  %v346 = vpop.f32.mrf.mxu0
  %347 = vmatprep.mubr.bf16.mxu0 %v158
  %348 = vmatmul.mubr.bf16.gmra.mxu0 %v157
  %v349 = vpop.f32.mrf.mxu0
  %v350 = vadd.f32 0.0, %v349
  %v351 = vpop.f32.mrf.mxu0
  %v352 = vpop.f32.mrf.mxu0
  %v353 = vadd.f32 0.0, %v352
  %v354 = vpop.f32.mrf.mxu0
  %355 = vmatprep.mubr.bf16.mxu0 %v160
  %356 = vmatmul.mubr.bf16.gmra.mxu0 %v159
  %v357 = vpop.f32.mrf.mxu0
  %v358 = vadd.f32 0.0, %v357
  %v359 = vpop.f32.mrf.mxu0
  %v360 = vpop.f32.mrf.mxu0
  %v361 = vadd.f32 0.0, %v360
  %v362 = vpop.f32.mrf.mxu0
  %363 = vmatprep.mubr.bf16.mxu0 %v162
  %364 = vmatmul.mubr.bf16.gmra.mxu0 %v161
  %v365 = vpop.f32.mrf.mxu0
  %v366 = vadd.f32 0.0, %v365
  %v367 = vpop.f32.mrf.mxu0
  %v368 = vpop.f32.mrf.mxu0
  %v369 = vadd.f32 0.0, %v368
  %v370 = vpop.f32.mrf.mxu0
  %371 = vdwg.mxu0
  %v372 = vadd.f32 %v35, %v310
  %v373 = vadd.f32 %v36, %v313
  %v374 = vadd.f32 %v37, %v318
  %v375 = vadd.f32 %v38, %v321
  %v376 = vadd.f32 %v39, %v326
  %v377 = vadd.f32 %v40, %v329
  %v378 = vadd.f32 %v41, %v334
  %v379 = vadd.f32 %v42, %v337
  %v380 = vadd.f32 %v43, %v342
  %v381 = vadd.f32 %v44, %v345
  %v382 = vadd.f32 %v45, %v350
  %v383 = vadd.f32 %v46, %v353
  %v384 = vadd.f32 %v47, %v358
  %v385 = vadd.f32 %v48, %v361
  %v386 = vadd.f32 %v49, %v366
  %v387 = vadd.f32 %v50, %v369
  %388 = vst [vmem:[#allocation2] sm:$0xff] %v372
  %389 = vst [vmem:[#allocation2 + $0x8] sm:$0xff] %v373
  %390 = vst [vmem:[#allocation2 + $0x10] sm:$0xff] %v374
  %391 = vst [vmem:[#allocation2 + $0x18] sm:$0xff] %v375
  %392 = vst [vmem:[#allocation2 + $0x20] sm:$0xff] %v376
  %393 = vst [vmem:[#allocation2 + $0x28] sm:$0xff] %v377
  %394 = vst [vmem:[#allocation2 + $0x30] sm:$0xff] %v378
  %395 = vst [vmem:[#allocation2 + $0x38] sm:$0xff] %v379
  %396 = vst [vmem:[#allocation2 + $0x40] sm:$0xff] %v380
  %397 = vst [vmem:[#allocation2 + $0x48] sm:$0xff] %v381
  %398 = vst [vmem:[#allocation2 + $0x50] sm:$0xff] %v382
  %399 = vst [vmem:[#allocation2 + $0x58] sm:$0xff] %v383
  %400 = vst [vmem:[#allocation2 + $0x60] sm:$0xff] %v384
  %401 = vst [vmem:[#allocation2 + $0x68] sm:$0xff] %v385
  %402 = vst [vmem:[#allocation2 + $0x70] sm:$0xff] %v386
  %403 = vst [vmem:[#allocation2 + $0x78] sm:$0xff] %v387
  // Predicated region
  $region18: #{forward.30} parent=0 // pred_check
    %p404 = pneg %p15
  $region19: #{forward.30} parent=0 // pred_check_branch
    %406 = sbr.rel (%p404) target = $region21
  $region20: #{forward.30} parent=0 // pred_region
    %v407 = vld [vmem:[#allocation2] sm:$0xff]
    %v408 = vld [vmem:[#allocation2 + $0x8] sm:$0xff]
    %v409 = vld [vmem:[#allocation2 + $0x10] sm:$0xff]
    %v410 = vld [vmem:[#allocation2 + $0x18] sm:$0xff]
    %v411 = vld [vmem:[#allocation2 + $0x20] sm:$0xff]
    %v412 = vld [vmem:[#allocation2 + $0x28] sm:$0xff]
    %v413 = vld [vmem:[#allocation2 + $0x30] sm:$0xff]
    %v414 = vld [vmem:[#allocation2 + $0x38] sm:$0xff]
    %v415 = vld [vmem:[#allocation2 + $0x40] sm:$0xff]
    %v416 = vld [vmem:[#allocation2 + $0x48] sm:$0xff]
    %v417 = vld [vmem:[#allocation2 + $0x50] sm:$0xff]
    %v418 = vld [vmem:[#allocation2 + $0x58] sm:$0xff]
    %v419 = vld [vmem:[#allocation2 + $0x60] sm:$0xff]
    %v420 = vld [vmem:[#allocation2 + $0x68] sm:$0xff]
    %v421 = vld [vmem:[#allocation2 + $0x70] sm:$0xff]
    %v422 = vld [vmem:[#allocation2 + $0x78] sm:$0xff]
    %v423 = vld [vmem:[%s2] sm:$0x1]
    %v425 = vlaneseq
    %v426 = vshrl.u32 %v425, 7
    %v427 = vsub.s32 0, %v426
    %v428 = vrot.slane %v423, %v427
    %v430 = vadd.f32 %v407, %v428
    %v431 = vadd.f32 %v408, %v428
    %v432 = vadd.f32 %v409, %v428
    %v433 = vadd.f32 %v410, %v428
    %v434 = vadd.f32 %v411, %v428
    %v435 = vadd.f32 %v412, %v428
    %v436 = vadd.f32 %v413, %v428
    %v437 = vadd.f32 %v414, %v428
    %v438 = vadd.f32 %v415, %v428
    %v439 = vadd.f32 %v416, %v428
    %v440 = vadd.f32 %v417, %v428
    %v441 = vadd.f32 %v418, %v428
    %v442 = vadd.f32 %v419, %v428
    %v443 = vadd.f32 %v420, %v428
    %v444 = vadd.f32 %v421, %v428
    %v445 = vadd.f32 %v422, %v428
    %v446 = vmax.f32 %v430, 0.0
    %v447 = vmax.f32 %v431, 0.0
    %v448 = vmax.f32 %v432, 0.0
    %v449 = vmax.f32 %v433, 0.0
    %v450 = vmax.f32 %v434, 0.0
    %v451 = vmax.f32 %v435, 0.0
    %v452 = vmax.f32 %v436, 0.0
    %v453 = vmax.f32 %v437, 0.0
    %v454 = vmax.f32 %v438, 0.0
    %v455 = vmax.f32 %v439, 0.0
    %v456 = vmax.f32 %v440, 0.0
    %v457 = vmax.f32 %v441, 0.0
    %v458 = vmax.f32 %v442, 0.0
    %v459 = vmax.f32 %v443, 0.0
    %v460 = vmax.f32 %v444, 0.0
    %v461 = vmax.f32 %v445, 0.0
    %462 = vst [vmem:[%s3] sm:$0xff] %v446
    %463 = vst [vmem:[%s3 + $0x8] sm:$0xff] %v447
    %464 = vst [vmem:[%s3 + $0x10] sm:$0xff] %v448
    %465 = vst [vmem:[%s3 + $0x18] sm:$0xff] %v449
    %466 = vst [vmem:[%s3 + $0x20] sm:$0xff] %v450
    %467 = vst [vmem:[%s3 + $0x28] sm:$0xff] %v451
    %468 = vst [vmem:[%s3 + $0x30] sm:$0xff] %v452
    %469 = vst [vmem:[%s3 + $0x38] sm:$0xff] %v453
    %470 = vst [vmem:[%s3 + $0x40] sm:$0xff] %v454
    %471 = vst [vmem:[%s3 + $0x48] sm:$0xff] %v455
    %472 = vst [vmem:[%s3 + $0x50] sm:$0xff] %v456
    %473 = vst [vmem:[%s3 + $0x58] sm:$0xff] %v457
    %474 = vst [vmem:[%s3 + $0x60] sm:$0xff] %v458
    %475 = vst [vmem:[%s3 + $0x68] sm:$0xff] %v459
    %476 = vst [vmem:[%s3 + $0x70] sm:$0xff] %v460
    %477 = vst [vmem:[%s3 + $0x78] sm:$0xff] %v461
  $region21: #{forward.30} parent=0 // pred_fallthru
    _
  // Predicated region
  $region22: #{forward.30} parent=0 // pred_check
    _
  $region23: #{forward.30} parent=0 // pred_check_branch
    %479 = sbr.rel (0) target = $region25
  $region24: #{forward.30} parent=0 // pred_region
    _
  $region25: #{forward.30} parent=0 // pred_fallthru
    _
  // Predicated region
  $region26: #{forward.30} parent=0 // pred_check
    _
  $region27: #{forward.30} parent=0 // pred_check_branch
    %481 = sbr.rel (0) target = $region29
  $region28: #{forward.30} parent=0 // pred_region
    _
  $region29: #{forward.30} parent=0 // pred_fallthru
    _

// kernel: tile.29
$region0: #{tile.29}
  %s0 = inlined_call_operand.vmem [shape: f32[4,3], index: 0, kind: input, shape index: {}]
  %s1 = inlined_call_operand.vmem [shape: f32[12], index: 1, kind: output, shape index: {}]
  $region1: #{tile.29} parent=0
    #allocation0 [shape = 'u8[4096]{0}', space=vmem, size = 0x1000, scoped, tag = 'scoped mem for output reshape']
    #allocation1 [shape = 'u8[4096]{0}', space=vmem, size = 0x1000, scoped, tag = 'scoped mem for input reshape']
    %s3 = sshll.u32 1, 4
    %s4 = ssub.s32 %s3, 1
    %v5 = vld [vmem:[%s0] sm:%s4]
    %6 = vst [vmem:[#allocation1] sm:%s4] %v5
    %v7 = vld [vmem:[#allocation1] sm:$0x1]
    %vm8 = vcmask 23552
    %9 = vst.msk [vmem:[#allocation0] sm:$0x1] %vm8, %v7
    %s10 = scalar_lea.vmem [#allocation1], 3
    %v11 = vld [vmem:[%s10] sm:$0x1]
    %12 = vrot.lane.b32.xlu0 %v11, 9
    %v13 = vpop.permute.xlu0 %12
    %vm14 = vcmask 97352
    %15 = vst.msk [vmem:[#allocation0] sm:$0x1] %vm14, %v13
    %s16 = scalar_lea.vmem [#allocation1], 2
    %v17 = vld [vmem:[%s16] sm:$0x1]
    %18 = vrot.lane.b32.xlu0 %v17, 6
    %v19 = vpop.permute.xlu0 %18
    %vm20 = vcmask 72752
    %21 = vst.msk [vmem:[#allocation0] sm:$0x1] %vm20, %v19
    %s22 = scalar_lea.vmem [#allocation1], 1
    %v23 = vld [vmem:[%s22] sm:$0x1]
    %24 = vrot.lane.b32.xlu0 %v23, 3
    %v25 = vpop.permute.xlu0 %24
    %vm26 = vcmask 48152
    %27 = vst.msk [vmem:[#allocation0] sm:$0x1] %vm26, %v25
    %s29 = sshll.u32 1, 1
    %s30 = ssub.s32 %s29, 1
    %v32 = vld [vmem:[#allocation0] sm:%s30]
    %s33 = sshll.u32 1, 1
    %s34 = ssub.s32 %s33, 1
    %35 = vst [vmem:[%s1] sm:%s34] %v32

// kernel: tile.28
$region0: #{tile.28}
  #allocation0 [shape = 's32[1]{0}', space=sflag, size = 0x4, scoped, tag = 'scoped memory for tile.28']
  %s0 = inlined_call_operand.vmem [shape: f32[3], index: 0, kind: input, shape index: {}]
  %s1 = inlined_call_operand.vmem [shape: f32[4,3], index: 1, kind: output, shape index: {}]
  // Predicated region
  $region2: #{tile.28} parent=0 // pred_check
    _
  $region3: #{tile.28} parent=0 // pred_check_branch
    %3 = sbr.rel (0) target = $region5
  $region4: #{tile.28} parent=0 // pred_region
    _
  $region5: #{tile.28} parent=0 // pred_fallthru
    _
  %v4 = vld [vmem:[%s0] ss:$0 sm:$0xff]
  %5 = vst [vmem:[%s1] sm:$0xf] %v4

// kernel: forward.31
$region0: #{forward.31}
  #allocation0 [shape = 'u32[]', space=smem, size = 0x4, offset = 0x4, fixed_abs, tag = 'smem constant byte address 0x4 - core index']
  #allocation1 [shape = 'u32[144,128]{1,0:T(1,128)}', space=vmem, size = 0x12000, scoped, tag = 'internal scratch']
  #allocation2 [shape = 'f32[512,128]{1,0:T(8,128)}', space=vmem, size = 0x40000, scoped, tag = 'scratch operand']
  %s0 = inlined_call_operand.vmem [shape: bf16[512,128], index: 0, kind: input, shape index: {}]
  %s1 = inlined_call_operand.vmem [shape: bf16[128,128], index: 1, kind: input, shape index: {}]
  %s2 = inlined_call_operand.vmem [shape: f32[1,128], index: 2, kind: input, shape index: {}]
  %s3 = inlined_call_operand.vmem [shape: f32[512,128], index: 3, kind: output, shape index: {}]
  %s4 = sld [smem:[#allocation0]]
  $region30: #{forward.31} parent=0
    _
  %s6 = ssub.s32 1, %s4
  %s7 = scalar_select 0, %s6, %s4
  // Predicated region
  $region2: #{forward.31} parent=0 // pred_check
    _
  $region3: #{forward.31} parent=0 // pred_check_branch
    %9 = sbr.rel (0) target = $region5
  $region4: #{forward.31} parent=0 // pred_region
    _
  $region5: #{forward.31} parent=0 // pred_fallthru
    _
  // Predicated region
  $region6: #{forward.31} parent=0 // pred_check
    _
  $region7: #{forward.31} parent=0 // pred_check_branch
    %11 = sbr.rel (0) target = $region9
  $region8: #{forward.31} parent=0 // pred_region
    _
  $region9: #{forward.31} parent=0 // pred_fallthru
    _
  // Predicated region
  $region10: #{forward.31} parent=0 // pred_check
    _
  $region11: #{forward.31} parent=0 // pred_check_branch
    %13 = sbr.rel (0) target = $region13
  $region12: #{forward.31} parent=0 // pred_region
    _
  $region13: #{forward.31} parent=0 // pred_fallthru
    _
  %p15 = scmp.eq.s32.totalorder 0, 0
  // Predicated region
  $region14: #{forward.31} parent=0 // pred_check
    %p16 = pneg %p15
  $region15: #{forward.31} parent=0 // pred_check_branch
    %18 = sbr.rel (%p16) target = $region17
  $region16: #{forward.31} parent=0 // pred_region
    %19 = vst [vmem:[#allocation2] sm:$0xff] 0.0
    %20 = vst [vmem:[#allocation2 + $0x8] sm:$0xff] 0.0
    %21 = vst [vmem:[#allocation2 + $0x10] sm:$0xff] 0.0
    %22 = vst [vmem:[#allocation2 + $0x18] sm:$0xff] 0.0
    %23 = vst [vmem:[#allocation2 + $0x20] sm:$0xff] 0.0
    %24 = vst [vmem:[#allocation2 + $0x28] sm:$0xff] 0.0
    %25 = vst [vmem:[#allocation2 + $0x30] sm:$0xff] 0.0
    %26 = vst [vmem:[#allocation2 + $0x38] sm:$0xff] 0.0
    %27 = vst [vmem:[#allocation2 + $0x40] sm:$0xff] 0.0
    %28 = vst [vmem:[#allocation2 + $0x48] sm:$0xff] 0.0
    %29 = vst [vmem:[#allocation2 + $0x50] sm:$0xff] 0.0
    %30 = vst [vmem:[#allocation2 + $0x58] sm:$0xff] 0.0
    %31 = vst [vmem:[#allocation2 + $0x60] sm:$0xff] 0.0
    %32 = vst [vmem:[#allocation2 + $0x68] sm:$0xff] 0.0
    %33 = vst [vmem:[#allocation2 + $0x70] sm:$0xff] 0.0
    %34 = vst [vmem:[#allocation2 + $0x78] sm:$0xff] 0.0
    %35 = vst [vmem:[#allocation2 + $0x80] sm:$0xff] 0.0
    %36 = vst [vmem:[#allocation2 + $0x88] sm:$0xff] 0.0
    %37 = vst [vmem:[#allocation2 + $0x90] sm:$0xff] 0.0
    %38 = vst [vmem:[#allocation2 + $0x98] sm:$0xff] 0.0
    %39 = vst [vmem:[#allocation2 + $0xa0] sm:$0xff] 0.0
    %40 = vst [vmem:[#allocation2 + $0xa8] sm:$0xff] 0.0
    %41 = vst [vmem:[#allocation2 + $0xb0] sm:$0xff] 0.0
    %42 = vst [vmem:[#allocation2 + $0xb8] sm:$0xff] 0.0
    %43 = vst [vmem:[#allocation2 + $0xc0] sm:$0xff] 0.0
    %44 = vst [vmem:[#allocation2 + $0xc8] sm:$0xff] 0.0
    %45 = vst [vmem:[#allocation2 + $0xd0] sm:$0xff] 0.0
    %46 = vst [vmem:[#allocation2 + $0xd8] sm:$0xff] 0.0
    %47 = vst [vmem:[#allocation2 + $0xe0] sm:$0xff] 0.0
    %48 = vst [vmem:[#allocation2 + $0xe8] sm:$0xff] 0.0
    %49 = vst [vmem:[#allocation2 + $0xf0] sm:$0xff] 0.0
    %50 = vst [vmem:[#allocation2 + $0xf8] sm:$0xff] 0.0
    %51 = vst [vmem:[#allocation2 + $0x100] sm:$0xff] 0.0
    %52 = vst [vmem:[#allocation2 + $0x108] sm:$0xff] 0.0
    %53 = vst [vmem:[#allocation2 + $0x110] sm:$0xff] 0.0
    %54 = vst [vmem:[#allocation2 + $0x118] sm:$0xff] 0.0
    %55 = vst [vmem:[#allocation2 + $0x120] sm:$0xff] 0.0
    %56 = vst [vmem:[#allocation2 + $0x128] sm:$0xff] 0.0
    %57 = vst [vmem:[#allocation2 + $0x130] sm:$0xff] 0.0
    %58 = vst [vmem:[#allocation2 + $0x138] sm:$0xff] 0.0
    %59 = vst [vmem:[#allocation2 + $0x140] sm:$0xff] 0.0
    %60 = vst [vmem:[#allocation2 + $0x148] sm:$0xff] 0.0
    %61 = vst [vmem:[#allocation2 + $0x150] sm:$0xff] 0.0
    %62 = vst [vmem:[#allocation2 + $0x158] sm:$0xff] 0.0
    %63 = vst [vmem:[#allocation2 + $0x160] sm:$0xff] 0.0
    %64 = vst [vmem:[#allocation2 + $0x168] sm:$0xff] 0.0
    %65 = vst [vmem:[#allocation2 + $0x170] sm:$0xff] 0.0
    %66 = vst [vmem:[#allocation2 + $0x178] sm:$0xff] 0.0
    %67 = vst [vmem:[#allocation2 + $0x180] sm:$0xff] 0.0
    %68 = vst [vmem:[#allocation2 + $0x188] sm:$0xff] 0.0
    %69 = vst [vmem:[#allocation2 + $0x190] sm:$0xff] 0.0
    %70 = vst [vmem:[#allocation2 + $0x198] sm:$0xff] 0.0
    %71 = vst [vmem:[#allocation2 + $0x1a0] sm:$0xff] 0.0
    %72 = vst [vmem:[#allocation2 + $0x1a8] sm:$0xff] 0.0
    %73 = vst [vmem:[#allocation2 + $0x1b0] sm:$0xff] 0.0
    %74 = vst [vmem:[#allocation2 + $0x1b8] sm:$0xff] 0.0
    %75 = vst [vmem:[#allocation2 + $0x1c0] sm:$0xff] 0.0
    %76 = vst [vmem:[#allocation2 + $0x1c8] sm:$0xff] 0.0
    %77 = vst [vmem:[#allocation2 + $0x1d0] sm:$0xff] 0.0
    %78 = vst [vmem:[#allocation2 + $0x1d8] sm:$0xff] 0.0
    %79 = vst [vmem:[#allocation2 + $0x1e0] sm:$0xff] 0.0
    %80 = vst [vmem:[#allocation2 + $0x1e8] sm:$0xff] 0.0
    %81 = vst [vmem:[#allocation2 + $0x1f0] sm:$0xff] 0.0
    %82 = vst [vmem:[#allocation2 + $0x1f8] sm:$0xff] 0.0
  $region17: #{forward.31} parent=0 // pred_fallthru
    _
  %v83 = vld [vmem:[#allocation2] sm:$0xff]
  %v84 = vld [vmem:[#allocation2 + $0x8] sm:$0xff]
  %v85 = vld [vmem:[#allocation2 + $0x10] sm:$0xff]
  %v86 = vld [vmem:[#allocation2 + $0x18] sm:$0xff]
  %v87 = vld [vmem:[#allocation2 + $0x20] sm:$0xff]
  %v88 = vld [vmem:[#allocation2 + $0x28] sm:$0xff]
  %v89 = vld [vmem:[#allocation2 + $0x30] sm:$0xff]
  %v90 = vld [vmem:[#allocation2 + $0x38] sm:$0xff]
  %v91 = vld [vmem:[#allocation2 + $0x40] sm:$0xff]
  %v92 = vld [vmem:[#allocation2 + $0x48] sm:$0xff]
  %v93 = vld [vmem:[#allocation2 + $0x50] sm:$0xff]
  %v94 = vld [vmem:[#allocation2 + $0x58] sm:$0xff]
  %v95 = vld [vmem:[#allocation2 + $0x60] sm:$0xff]
  %v96 = vld [vmem:[#allocation2 + $0x68] sm:$0xff]
  %v97 = vld [vmem:[#allocation2 + $0x70] sm:$0xff]
  %v98 = vld [vmem:[#allocation2 + $0x78] sm:$0xff]
  %v99 = vld [vmem:[#allocation2 + $0x80] sm:$0xff]
  %v100 = vld [vmem:[#allocation2 + $0x88] sm:$0xff]
  %v101 = vld [vmem:[#allocation2 + $0x90] sm:$0xff]
  %v102 = vld [vmem:[#allocation2 + $0x98] sm:$0xff]
  %v103 = vld [vmem:[#allocation2 + $0xa0] sm:$0xff]
  %v104 = vld [vmem:[#allocation2 + $0xa8] sm:$0xff]
  %v105 = vld [vmem:[#allocation2 + $0xb0] sm:$0xff]
  %v106 = vld [vmem:[#allocation2 + $0xb8] sm:$0xff]
  %v107 = vld [vmem:[#allocation2 + $0xc0] sm:$0xff]
  %v108 = vld [vmem:[#allocation2 + $0xc8] sm:$0xff]
  %v109 = vld [vmem:[#allocation2 + $0xd0] sm:$0xff]
  %v110 = vld [vmem:[#allocation2 + $0xd8] sm:$0xff]
  %v111 = vld [vmem:[#allocation2 + $0xe0] sm:$0xff]
  %v112 = vld [vmem:[#allocation2 + $0xe8] sm:$0xff]
  %v113 = vld [vmem:[#allocation2 + $0xf0] sm:$0xff]
  %v114 = vld [vmem:[#allocation2 + $0xf8] sm:$0xff]
  %v115 = vld [vmem:[#allocation2 + $0x100] sm:$0xff]
  %v116 = vld [vmem:[#allocation2 + $0x108] sm:$0xff]
  %v117 = vld [vmem:[#allocation2 + $0x110] sm:$0xff]
  %v118 = vld [vmem:[#allocation2 + $0x118] sm:$0xff]
  %v119 = vld [vmem:[#allocation2 + $0x120] sm:$0xff]
  %v120 = vld [vmem:[#allocation2 + $0x128] sm:$0xff]
  %v121 = vld [vmem:[#allocation2 + $0x130] sm:$0xff]
  %v122 = vld [vmem:[#allocation2 + $0x138] sm:$0xff]
  %v123 = vld [vmem:[#allocation2 + $0x140] sm:$0xff]
  %v124 = vld [vmem:[#allocation2 + $0x148] sm:$0xff]
  %v125 = vld [vmem:[#allocation2 + $0x150] sm:$0xff]
  %v126 = vld [vmem:[#allocation2 + $0x158] sm:$0xff]
  %v127 = vld [vmem:[#allocation2 + $0x160] sm:$0xff]
  %v128 = vld [vmem:[#allocation2 + $0x168] sm:$0xff]
  %v129 = vld [vmem:[#allocation2 + $0x170] sm:$0xff]
  %v130 = vld [vmem:[#allocation2 + $0x178] sm:$0xff]
  %v131 = vld [vmem:[#allocation2 + $0x180] sm:$0xff]
  %v132 = vld [vmem:[#allocation2 + $0x188] sm:$0xff]
  %v133 = vld [vmem:[#allocation2 + $0x190] sm:$0xff]
  %v134 = vld [vmem:[#allocation2 + $0x198] sm:$0xff]
  %v135 = vld [vmem:[#allocation2 + $0x1a0] sm:$0xff]
  %v136 = vld [vmem:[#allocation2 + $0x1a8] sm:$0xff]
  %v137 = vld [vmem:[#allocation2 + $0x1b0] sm:$0xff]
  %v138 = vld [vmem:[#allocation2 + $0x1b8] sm:$0xff]
  %v139 = vld [vmem:[#allocation2 + $0x1c0] sm:$0xff]
  %v140 = vld [vmem:[#allocation2 + $0x1c8] sm:$0xff]
  %v141 = vld [vmem:[#allocation2 + $0x1d0] sm:$0xff]
  %v142 = vld [vmem:[#allocation2 + $0x1d8] sm:$0xff]
  %v143 = vld [vmem:[#allocation2 + $0x1e0] sm:$0xff]
  %v144 = vld [vmem:[#allocation2 + $0x1e8] sm:$0xff]
  %v145 = vld [vmem:[#allocation2 + $0x1f0] sm:$0xff]
  %v146 = vld [vmem:[#allocation2 + $0x1f8] sm:$0xff]
  %v147 = vld [vmem:[%s0] sm:$0xf]
  %v148 = vld [vmem:[%s0 + $0x4] sm:$0xf]
  %v149 = vld [vmem:[%s0 + $0x8] sm:$0xf]
  %v150 = vld [vmem:[%s0 + $0xc] sm:$0xf]
  %v151 = vld [vmem:[%s0 + $0x10] sm:$0xf]
  %v152 = vld [vmem:[%s0 + $0x14] sm:$0xf]
  %v153 = vld [vmem:[%s0 + $0x18] sm:$0xf]
  %v154 = vld [vmem:[%s0 + $0x1c] sm:$0xf]
  %v155 = vld [vmem:[%s0 + $0x20] sm:$0xf]
  %v156 = vld [vmem:[%s0 + $0x24] sm:$0xf]
  %v157 = vld [vmem:[%s0 + $0x28] sm:$0xf]
  %v158 = vld [vmem:[%s0 + $0x2c] sm:$0xf]
  %v159 = vld [vmem:[%s0 + $0x30] sm:$0xf]
  %v160 = vld [vmem:[%s0 + $0x34] sm:$0xf]
  %v161 = vld [vmem:[%s0 + $0x38] sm:$0xf]
  %v162 = vld [vmem:[%s0 + $0x3c] sm:$0xf]
  %v163 = vld [vmem:[%s0 + $0x40] sm:$0xf]
  %v164 = vld [vmem:[%s0 + $0x44] sm:$0xf]
  %v165 = vld [vmem:[%s0 + $0x48] sm:$0xf]
  %v166 = vld [vmem:[%s0 + $0x4c] sm:$0xf]
  %v167 = vld [vmem:[%s0 + $0x50] sm:$0xf]
  %v168 = vld [vmem:[%s0 + $0x54] sm:$0xf]
  %v169 = vld [vmem:[%s0 + $0x58] sm:$0xf]
  %v170 = vld [vmem:[%s0 + $0x5c] sm:$0xf]
  %v171 = vld [vmem:[%s0 + $0x60] sm:$0xf]
  %v172 = vld [vmem:[%s0 + $0x64] sm:$0xf]
  %v173 = vld [vmem:[%s0 + $0x68] sm:$0xf]
  %v174 = vld [vmem:[%s0 + $0x6c] sm:$0xf]
  %v175 = vld [vmem:[%s0 + $0x70] sm:$0xf]
  %v176 = vld [vmem:[%s0 + $0x74] sm:$0xf]
  %v177 = vld [vmem:[%s0 + $0x78] sm:$0xf]
  %v178 = vld [vmem:[%s0 + $0x7c] sm:$0xf]
  %v179 = vld [vmem:[%s0 + $0x80] sm:$0xf]
  %v180 = vld [vmem:[%s0 + $0x84] sm:$0xf]
  %v181 = vld [vmem:[%s0 + $0x88] sm:$0xf]
  %v182 = vld [vmem:[%s0 + $0x8c] sm:$0xf]
  %v183 = vld [vmem:[%s0 + $0x90] sm:$0xf]
  %v184 = vld [vmem:[%s0 + $0x94] sm:$0xf]
  %v185 = vld [vmem:[%s0 + $0x98] sm:$0xf]
  %v186 = vld [vmem:[%s0 + $0x9c] sm:$0xf]
  %v187 = vld [vmem:[%s0 + $0xa0] sm:$0xf]
  %v188 = vld [vmem:[%s0 + $0xa4] sm:$0xf]
  %v189 = vld [vmem:[%s0 + $0xa8] sm:$0xf]
  %v190 = vld [vmem:[%s0 + $0xac] sm:$0xf]
  %v191 = vld [vmem:[%s0 + $0xb0] sm:$0xf]
  %v192 = vld [vmem:[%s0 + $0xb4] sm:$0xf]
  %v193 = vld [vmem:[%s0 + $0xb8] sm:$0xf]
  %v194 = vld [vmem:[%s0 + $0xbc] sm:$0xf]
  %v195 = vld [vmem:[%s0 + $0xc0] sm:$0xf]
  %v196 = vld [vmem:[%s0 + $0xc4] sm:$0xf]
  %v197 = vld [vmem:[%s0 + $0xc8] sm:$0xf]
  %v198 = vld [vmem:[%s0 + $0xcc] sm:$0xf]
  %v199 = vld [vmem:[%s0 + $0xd0] sm:$0xf]
  %v200 = vld [vmem:[%s0 + $0xd4] sm:$0xf]
  %v201 = vld [vmem:[%s0 + $0xd8] sm:$0xf]
  %v202 = vld [vmem:[%s0 + $0xdc] sm:$0xf]
  %v203 = vld [vmem:[%s0 + $0xe0] sm:$0xf]
  %v204 = vld [vmem:[%s0 + $0xe4] sm:$0xf]
  %v205 = vld [vmem:[%s0 + $0xe8] sm:$0xf]
  %v206 = vld [vmem:[%s0 + $0xec] sm:$0xf]
  %v207 = vld [vmem:[%s0 + $0xf0] sm:$0xf]
  %v208 = vld [vmem:[%s0 + $0xf4] sm:$0xf]
  %v209 = vld [vmem:[%s0 + $0xf8] sm:$0xf]
  %v210 = vld [vmem:[%s0 + $0xfc] sm:$0xf]
  %v211 = vld [vmem:[%s1] sm:$0xf]
  %v212 = vld [vmem:[%s1 + $0x4] sm:$0xf]
  %v213 = vld [vmem:[%s1 + $0x8] sm:$0xf]
  %v214 = vld [vmem:[%s1 + $0xc] sm:$0xf]
  %v215 = vld [vmem:[%s1 + $0x10] sm:$0xf]
  %v216 = vld [vmem:[%s1 + $0x14] sm:$0xf]
  %v217 = vld [vmem:[%s1 + $0x18] sm:$0xf]
  %v218 = vld [vmem:[%s1 + $0x1c] sm:$0xf]
  %v219 = vld [vmem:[%s1 + $0x20] sm:$0xf]
  %v220 = vld [vmem:[%s1 + $0x24] sm:$0xf]
  %v221 = vld [vmem:[%s1 + $0x28] sm:$0xf]
  %v222 = vld [vmem:[%s1 + $0x2c] sm:$0xf]
  %v223 = vld [vmem:[%s1 + $0x30] sm:$0xf]
  %v224 = vld [vmem:[%s1 + $0x34] sm:$0xf]
  %v225 = vld [vmem:[%s1 + $0x38] sm:$0xf]
  %v226 = vld [vmem:[%s1 + $0x3c] sm:$0xf]
  %v291 = vunpack.c.l.b16 %v147
  %v292 = vunpack.c.l.b16 %v148
  %v293 = vunpack.c.l.b16 %v149
  %v294 = vunpack.c.l.b16 %v150
  %v295 = vunpack.c.l.b16 %v151
  %v296 = vunpack.c.l.b16 %v152
  %v297 = vunpack.c.l.b16 %v153
  %v298 = vunpack.c.l.b16 %v154
  %v299 = vunpack.c.l.b16 %v155
  %v300 = vunpack.c.l.b16 %v156
  %v301 = vunpack.c.l.b16 %v157
  %v302 = vunpack.c.l.b16 %v158
  %v303 = vunpack.c.l.b16 %v159
  %v304 = vunpack.c.l.b16 %v160
  %v305 = vunpack.c.l.b16 %v161
  %v306 = vunpack.c.l.b16 %v162
  %v307 = vunpack.c.l.b16 %v163
  %v308 = vunpack.c.l.b16 %v164
  %v309 = vunpack.c.l.b16 %v165
  %v310 = vunpack.c.l.b16 %v166
  %v311 = vunpack.c.l.b16 %v167
  %v312 = vunpack.c.l.b16 %v168
  %v313 = vunpack.c.l.b16 %v169
  %v314 = vunpack.c.l.b16 %v170
  %v315 = vunpack.c.l.b16 %v171
  %v316 = vunpack.c.l.b16 %v172
  %v317 = vunpack.c.l.b16 %v173
  %v318 = vunpack.c.l.b16 %v174
  %v319 = vunpack.c.l.b16 %v175
  %v320 = vunpack.c.l.b16 %v176
  %v321 = vunpack.c.l.b16 %v177
  %v322 = vunpack.c.l.b16 %v178
  %v323 = vunpack.c.l.b16 %v179
  %v324 = vunpack.c.l.b16 %v180
  %v325 = vunpack.c.l.b16 %v181
  %v326 = vunpack.c.l.b16 %v182
  %v327 = vunpack.c.l.b16 %v183
  %v328 = vunpack.c.l.b16 %v184
  %v329 = vunpack.c.l.b16 %v185
  %v330 = vunpack.c.l.b16 %v186
  %v331 = vunpack.c.l.b16 %v187
  %v332 = vunpack.c.l.b16 %v188
  %v333 = vunpack.c.l.b16 %v189
  %v334 = vunpack.c.l.b16 %v190
  %v335 = vunpack.c.l.b16 %v191
  %v336 = vunpack.c.l.b16 %v192
  %v337 = vunpack.c.l.b16 %v193
  %v338 = vunpack.c.l.b16 %v194
  %v339 = vunpack.c.l.b16 %v195
  %v340 = vunpack.c.l.b16 %v196
  %v341 = vunpack.c.l.b16 %v197
  %v342 = vunpack.c.l.b16 %v198
  %v343 = vunpack.c.l.b16 %v199
  %v344 = vunpack.c.l.b16 %v200
  %v345 = vunpack.c.l.b16 %v201
  %v346 = vunpack.c.l.b16 %v202
  %v347 = vunpack.c.l.b16 %v203
  %v348 = vunpack.c.l.b16 %v204
  %v349 = vunpack.c.l.b16 %v205
  %v350 = vunpack.c.l.b16 %v206
  %v351 = vunpack.c.l.b16 %v207
  %v352 = vunpack.c.l.b16 %v208
  %v353 = vunpack.c.l.b16 %v209
  %v354 = vunpack.c.l.b16 %v210
  %v355 = vpack.c.b16 %v292, %v291
  %v356 = vpack.c.b16 %v294, %v293
  %v357 = vpack.c.b16 %v296, %v295
  %v358 = vpack.c.b16 %v298, %v297
  %v359 = vpack.c.b16 %v300, %v299
  %v360 = vpack.c.b16 %v302, %v301
  %v361 = vpack.c.b16 %v304, %v303
  %v362 = vpack.c.b16 %v306, %v305
  %v363 = vpack.c.b16 %v308, %v307
  %v364 = vpack.c.b16 %v310, %v309
  %v365 = vpack.c.b16 %v312, %v311
  %v366 = vpack.c.b16 %v314, %v313
  %v367 = vpack.c.b16 %v316, %v315
  %v368 = vpack.c.b16 %v318, %v317
  %v369 = vpack.c.b16 %v320, %v319
  %v370 = vpack.c.b16 %v322, %v321
  %v371 = vpack.c.b16 %v324, %v323
  %v372 = vpack.c.b16 %v326, %v325
  %v373 = vpack.c.b16 %v328, %v327
  %v374 = vpack.c.b16 %v330, %v329
  %v375 = vpack.c.b16 %v332, %v331
  %v376 = vpack.c.b16 %v334, %v333
  %v377 = vpack.c.b16 %v336, %v335
  %v378 = vpack.c.b16 %v338, %v337
  %v379 = vpack.c.b16 %v340, %v339
  %v380 = vpack.c.b16 %v342, %v341
  %v381 = vpack.c.b16 %v344, %v343
  %v382 = vpack.c.b16 %v346, %v345
  %v383 = vpack.c.b16 %v348, %v347
  %v384 = vpack.c.b16 %v350, %v349
  %v385 = vpack.c.b16 %v352, %v351
  %v386 = vpack.c.b16 %v354, %v353
  %v435 = vunpack.c.l.b16 %v211
  %v436 = vunpack.c.l.b16 %v212
  %v437 = vunpack.c.l.b16 %v213
  %v438 = vunpack.c.l.b16 %v214
  %v439 = vunpack.c.l.b16 %v215
  %v440 = vunpack.c.l.b16 %v216
  %v441 = vunpack.c.l.b16 %v217
  %v442 = vunpack.c.l.b16 %v218
  %v443 = vunpack.c.l.b16 %v219
  %v444 = vunpack.c.l.b16 %v220
  %v445 = vunpack.c.l.b16 %v221
  %v446 = vunpack.c.l.b16 %v222
  %v447 = vunpack.c.l.b16 %v223
  %v448 = vunpack.c.l.b16 %v224
  %v449 = vunpack.c.l.b16 %v225
  %v450 = vunpack.c.l.b16 %v226
  %v451 = vpack.c.b16 %v436, %v435
  %v452 = vpack.c.b16 %v438, %v437
  %v453 = vpack.c.b16 %v440, %v439
  %v454 = vpack.c.b16 %v442, %v441
  %v455 = vpack.c.b16 %v444, %v443
  %v456 = vpack.c.b16 %v446, %v445
  %v457 = vpack.c.b16 %v448, %v447
  %v458 = vpack.c.b16 %v450, %v449
  %467 = vmatprep.subr.bf16.mxu0 0
  %468 = vmatpush1.bf16.msra.mxu0 %v458
  %469 = vmatprep.subr.bf16.mxu0 0
  %470 = vmatpush1.bf16.msra.mxu0 %v457
  %471 = vmatprep.subr.bf16.mxu0 0
  %472 = vmatpush1.bf16.msra.mxu0 %v456
  %473 = vmatprep.subr.bf16.mxu0 0
  %474 = vmatpush1.bf16.msra.mxu0 %v455
  %475 = vmatprep.subr.bf16.mxu0 0
  %476 = vmatpush1.bf16.msra.mxu0 %v454
  %477 = vmatprep.subr.bf16.mxu0 0
  %478 = vmatpush1.bf16.msra.mxu0 %v453
  %479 = vmatprep.subr.bf16.mxu0 0
  %480 = vmatpush1.bf16.msra.mxu0 %v452
  %481 = vmatprep.subr.bf16.mxu0 0
  %482 = vmatpush1.bf16.msra.mxu0 %v451
  %483 = vmatprep.subr.bf16.mxu0 0
  %484 = vmatpush2.bf16.msra.mxu0 0
  %485 = vmatprep.subr.bf16.mxu0 0
  %486 = vmatpush2.bf16.msra.mxu0 0
  %487 = vmatprep.subr.bf16.mxu0 0
  %488 = vmatpush2.bf16.msra.mxu0 0
  %489 = vmatprep.subr.bf16.mxu0 0
  %490 = vmatpush2.bf16.msra.mxu0 0
  %491 = vmatprep.subr.bf16.mxu0 0
  %492 = vmatpush2.bf16.msra.mxu0 0
  %493 = vmatprep.subr.bf16.mxu0 0
  %494 = vmatpush2.bf16.msra.mxu0 0
  %495 = vmatprep.subr.bf16.mxu0 0
  %496 = vmatpush2.bf16.msra.mxu0 0
  %497 = vmatprep.subr.bf16.mxu0 0
  %498 = vmatpush2.bf16.msra.mxu0 0
  %499 = vmatprep.mubr.bf16.mxu0 0
  %500 = vmatmul.mubr.bf16.gmra.mxu0 %v355
  %v501 = vpop.f32.mrf.mxu0
  %v502 = vadd.f32 0.0, %v501
  %v503 = vpop.f32.mrf.mxu0
  %v504 = vpop.f32.mrf.mxu0
  %v505 = vadd.f32 0.0, %v504
  %v506 = vpop.f32.mrf.mxu0
  %507 = vmatprep.mubr.bf16.mxu0 0
  %508 = vmatmul.mubr.bf16.gmra.mxu0 %v356
  %v509 = vpop.f32.mrf.mxu0
  %v510 = vadd.f32 0.0, %v509
  %v511 = vpop.f32.mrf.mxu0
  %v512 = vpop.f32.mrf.mxu0
  %v513 = vadd.f32 0.0, %v512
  %v514 = vpop.f32.mrf.mxu0
  %515 = vmatprep.mubr.bf16.mxu0 0
  %516 = vmatmul.mubr.bf16.gmra.mxu0 %v357
  %v517 = vpop.f32.mrf.mxu0
  %v518 = vadd.f32 0.0, %v517
  %v519 = vpop.f32.mrf.mxu0
  %v520 = vpop.f32.mrf.mxu0
  %v521 = vadd.f32 0.0, %v520
  %v522 = vpop.f32.mrf.mxu0
  %523 = vmatprep.mubr.bf16.mxu0 0
  %524 = vmatmul.mubr.bf16.gmra.mxu0 %v358
  %v525 = vpop.f32.mrf.mxu0
  %v526 = vadd.f32 0.0, %v525
  %v527 = vpop.f32.mrf.mxu0
  %v528 = vpop.f32.mrf.mxu0
  %v529 = vadd.f32 0.0, %v528
  %v530 = vpop.f32.mrf.mxu0
  %531 = vmatprep.mubr.bf16.mxu0 0
  %532 = vmatmul.mubr.bf16.gmra.mxu0 %v359
  %v533 = vpop.f32.mrf.mxu0
  %v534 = vadd.f32 0.0, %v533
  %v535 = vpop.f32.mrf.mxu0
  %v536 = vpop.f32.mrf.mxu0
  %v537 = vadd.f32 0.0, %v536
  %v538 = vpop.f32.mrf.mxu0
  %539 = vmatprep.mubr.bf16.mxu0 0
  %540 = vmatmul.mubr.bf16.gmra.mxu0 %v360
  %v541 = vpop.f32.mrf.mxu0
  %v542 = vadd.f32 0.0, %v541
  %v543 = vpop.f32.mrf.mxu0
  %v544 = vpop.f32.mrf.mxu0
  %v545 = vadd.f32 0.0, %v544
  %v546 = vpop.f32.mrf.mxu0
  %547 = vmatprep.mubr.bf16.mxu0 0
  %548 = vmatmul.mubr.bf16.gmra.mxu0 %v361
  %v549 = vpop.f32.mrf.mxu0
  %v550 = vadd.f32 0.0, %v549
  %v551 = vpop.f32.mrf.mxu0
  %v552 = vpop.f32.mrf.mxu0
  %v553 = vadd.f32 0.0, %v552
  %v554 = vpop.f32.mrf.mxu0
  %555 = vmatprep.mubr.bf16.mxu0 0
  %556 = vmatmul.mubr.bf16.gmra.mxu0 %v362
  %v557 = vpop.f32.mrf.mxu0
  %v558 = vadd.f32 0.0, %v557
  %v559 = vpop.f32.mrf.mxu0
  %v560 = vpop.f32.mrf.mxu0
  %v561 = vadd.f32 0.0, %v560
  %v562 = vpop.f32.mrf.mxu0
  %563 = vmatprep.mubr.bf16.mxu0 0
  %564 = vmatmul.mubr.bf16.gmra.mxu0 %v363
  %v565 = vpop.f32.mrf.mxu0
  %v566 = vadd.f32 0.0, %v565
  %v567 = vpop.f32.mrf.mxu0
  %v568 = vpop.f32.mrf.mxu0
  %v569 = vadd.f32 0.0, %v568
  %v570 = vpop.f32.mrf.mxu0
  %571 = vmatprep.mubr.bf16.mxu0 0
  %572 = vmatmul.mubr.bf16.gmra.mxu0 %v364
  %v573 = vpop.f32.mrf.mxu0
  %v574 = vadd.f32 0.0, %v573
  %v575 = vpop.f32.mrf.mxu0
  %v576 = vpop.f32.mrf.mxu0
  %v577 = vadd.f32 0.0, %v576
  %v578 = vpop.f32.mrf.mxu0
  %579 = vmatprep.mubr.bf16.mxu0 0
  %580 = vmatmul.mubr.bf16.gmra.mxu0 %v365
  %v581 = vpop.f32.mrf.mxu0
  %v582 = vadd.f32 0.0, %v581
  %v583 = vpop.f32.mrf.mxu0
  %v584 = vpop.f32.mrf.mxu0
  %v585 = vadd.f32 0.0, %v584
  %v586 = vpop.f32.mrf.mxu0
  %587 = vmatprep.mubr.bf16.mxu0 0
  %588 = vmatmul.mubr.bf16.gmra.mxu0 %v366
  %v589 = vpop.f32.mrf.mxu0
  %v590 = vadd.f32 0.0, %v589
  %v591 = vpop.f32.mrf.mxu0
  %v592 = vpop.f32.mrf.mxu0
  %v593 = vadd.f32 0.0, %v592
  %v594 = vpop.f32.mrf.mxu0
  %595 = vmatprep.mubr.bf16.mxu0 0
  %596 = vmatmul.mubr.bf16.gmra.mxu0 %v367
  %v597 = vpop.f32.mrf.mxu0
  %v598 = vadd.f32 0.0, %v597
  %v599 = vpop.f32.mrf.mxu0
  %v600 = vpop.f32.mrf.mxu0
  %v601 = vadd.f32 0.0, %v600
  %v602 = vpop.f32.mrf.mxu0
  %603 = vmatprep.mubr.bf16.mxu0 0
  %604 = vmatmul.mubr.bf16.gmra.mxu0 %v368
  %v605 = vpop.f32.mrf.mxu0
  %v606 = vadd.f32 0.0, %v605
  %v607 = vpop.f32.mrf.mxu0
  %v608 = vpop.f32.mrf.mxu0
  %v609 = vadd.f32 0.0, %v608
  %v610 = vpop.f32.mrf.mxu0
  %611 = vmatprep.mubr.bf16.mxu0 0
  %612 = vmatmul.mubr.bf16.gmra.mxu0 %v369
  %v613 = vpop.f32.mrf.mxu0
  %v614 = vadd.f32 0.0, %v613
  %v615 = vpop.f32.mrf.mxu0
  %v616 = vpop.f32.mrf.mxu0
  %v617 = vadd.f32 0.0, %v616
  %v618 = vpop.f32.mrf.mxu0
  %619 = vmatprep.mubr.bf16.mxu0 0
  %620 = vmatmul.mubr.bf16.gmra.mxu0 %v370
  %v621 = vpop.f32.mrf.mxu0
  %v622 = vadd.f32 0.0, %v621
  %v623 = vpop.f32.mrf.mxu0
  %v624 = vpop.f32.mrf.mxu0
  %v625 = vadd.f32 0.0, %v624
  %v626 = vpop.f32.mrf.mxu0
  %627 = vmatprep.mubr.bf16.mxu0 0
  %628 = vmatmul.mubr.bf16.gmra.mxu0 %v371
  %v629 = vpop.f32.mrf.mxu0
  %v630 = vadd.f32 0.0, %v629
  %v631 = vpop.f32.mrf.mxu0
  %v632 = vpop.f32.mrf.mxu0
  %v633 = vadd.f32 0.0, %v632
  %v634 = vpop.f32.mrf.mxu0
  %635 = vmatprep.mubr.bf16.mxu0 0
  %636 = vmatmul.mubr.bf16.gmra.mxu0 %v372
  %v637 = vpop.f32.mrf.mxu0
  %v638 = vadd.f32 0.0, %v637
  %v639 = vpop.f32.mrf.mxu0
  %v640 = vpop.f32.mrf.mxu0
  %v641 = vadd.f32 0.0, %v640
  %v642 = vpop.f32.mrf.mxu0
  %643 = vmatprep.mubr.bf16.mxu0 0
  %644 = vmatmul.mubr.bf16.gmra.mxu0 %v373
  %v645 = vpop.f32.mrf.mxu0
  %v646 = vadd.f32 0.0, %v645
  %v647 = vpop.f32.mrf.mxu0
  %v648 = vpop.f32.mrf.mxu0
  %v649 = vadd.f32 0.0, %v648
  %v650 = vpop.f32.mrf.mxu0
  %651 = vmatprep.mubr.bf16.mxu0 0
  %652 = vmatmul.mubr.bf16.gmra.mxu0 %v374
  %v653 = vpop.f32.mrf.mxu0
  %v654 = vadd.f32 0.0, %v653
  %v655 = vpop.f32.mrf.mxu0
  %v656 = vpop.f32.mrf.mxu0
  %v657 = vadd.f32 0.0, %v656
  %v658 = vpop.f32.mrf.mxu0
  %659 = vmatprep.mubr.bf16.mxu0 0
  %660 = vmatmul.mubr.bf16.gmra.mxu0 %v375
  %v661 = vpop.f32.mrf.mxu0
  %v662 = vadd.f32 0.0, %v661
  %v663 = vpop.f32.mrf.mxu0
  %v664 = vpop.f32.mrf.mxu0
  %v665 = vadd.f32 0.0, %v664
  %v666 = vpop.f32.mrf.mxu0
  %667 = vmatprep.mubr.bf16.mxu0 0
  %668 = vmatmul.mubr.bf16.gmra.mxu0 %v376
  %v669 = vpop.f32.mrf.mxu0
  %v670 = vadd.f32 0.0, %v669
  %v671 = vpop.f32.mrf.mxu0
  %v672 = vpop.f32.mrf.mxu0
  %v673 = vadd.f32 0.0, %v672
  %v674 = vpop.f32.mrf.mxu0
  %675 = vmatprep.mubr.bf16.mxu0 0
  %676 = vmatmul.mubr.bf16.gmra.mxu0 %v377
  %v677 = vpop.f32.mrf.mxu0
  %v678 = vadd.f32 0.0, %v677
  %v679 = vpop.f32.mrf.mxu0
  %v680 = vpop.f32.mrf.mxu0
  %v681 = vadd.f32 0.0, %v680
  %v682 = vpop.f32.mrf.mxu0
  %683 = vmatprep.mubr.bf16.mxu0 0
  %684 = vmatmul.mubr.bf16.gmra.mxu0 %v378
  %v685 = vpop.f32.mrf.mxu0
  %v686 = vadd.f32 0.0, %v685
  %v687 = vpop.f32.mrf.mxu0
  %v688 = vpop.f32.mrf.mxu0
  %v689 = vadd.f32 0.0, %v688
  %v690 = vpop.f32.mrf.mxu0
  %691 = vmatprep.mubr.bf16.mxu0 0
  %692 = vmatmul.mubr.bf16.gmra.mxu0 %v379
  %v693 = vpop.f32.mrf.mxu0
  %v694 = vadd.f32 0.0, %v693
  %v695 = vpop.f32.mrf.mxu0
  %v696 = vpop.f32.mrf.mxu0
  %v697 = vadd.f32 0.0, %v696
  %v698 = vpop.f32.mrf.mxu0
  %699 = vmatprep.mubr.bf16.mxu0 0
  %700 = vmatmul.mubr.bf16.gmra.mxu0 %v380
  %v701 = vpop.f32.mrf.mxu0
  %v702 = vadd.f32 0.0, %v701
  %v703 = vpop.f32.mrf.mxu0
  %v704 = vpop.f32.mrf.mxu0
  %v705 = vadd.f32 0.0, %v704
  %v706 = vpop.f32.mrf.mxu0
  %707 = vmatprep.mubr.bf16.mxu0 0
  %708 = vmatmul.mubr.bf16.gmra.mxu0 %v381
  %v709 = vpop.f32.mrf.mxu0
  %v710 = vadd.f32 0.0, %v709
  %v711 = vpop.f32.mrf.mxu0
  %v712 = vpop.f32.mrf.mxu0
  %v713 = vadd.f32 0.0, %v712
  %v714 = vpop.f32.mrf.mxu0
  %715 = vmatprep.mubr.bf16.mxu0 0
  %716 = vmatmul.mubr.bf16.gmra.mxu0 %v382
  %v717 = vpop.f32.mrf.mxu0
  %v718 = vadd.f32 0.0, %v717
  %v719 = vpop.f32.mrf.mxu0
  %v720 = vpop.f32.mrf.mxu0
  %v721 = vadd.f32 0.0, %v720
  %v722 = vpop.f32.mrf.mxu0
  %723 = vmatprep.mubr.bf16.mxu0 0
  %724 = vmatmul.mubr.bf16.gmra.mxu0 %v383
  %v725 = vpop.f32.mrf.mxu0
  %v726 = vadd.f32 0.0, %v725
  %v727 = vpop.f32.mrf.mxu0
  %v728 = vpop.f32.mrf.mxu0
  %v729 = vadd.f32 0.0, %v728
  %v730 = vpop.f32.mrf.mxu0
  %731 = vmatprep.mubr.bf16.mxu0 0
  %732 = vmatmul.mubr.bf16.gmra.mxu0 %v384
  %v733 = vpop.f32.mrf.mxu0
  %v734 = vadd.f32 0.0, %v733
  %v735 = vpop.f32.mrf.mxu0
  %v736 = vpop.f32.mrf.mxu0
  %v737 = vadd.f32 0.0, %v736
  %v738 = vpop.f32.mrf.mxu0
  %739 = vmatprep.mubr.bf16.mxu0 0
  %740 = vmatmul.mubr.bf16.gmra.mxu0 %v385
  %v741 = vpop.f32.mrf.mxu0
  %v742 = vadd.f32 0.0, %v741
  %v743 = vpop.f32.mrf.mxu0
  %v744 = vpop.f32.mrf.mxu0
  %v745 = vadd.f32 0.0, %v744
  %v746 = vpop.f32.mrf.mxu0
  %747 = vmatprep.mubr.bf16.mxu0 0
  %748 = vmatmul.mubr.bf16.gmra.mxu0 %v386
  %v749 = vpop.f32.mrf.mxu0
  %v750 = vadd.f32 0.0, %v749
  %v751 = vpop.f32.mrf.mxu0
  %v752 = vpop.f32.mrf.mxu0
  %v753 = vadd.f32 0.0, %v752
  %v754 = vpop.f32.mrf.mxu0
  %755 = vdwg.mxu0
  %v756 = vadd.f32 %v83, %v502
  %v757 = vadd.f32 %v84, %v505
  %v758 = vadd.f32 %v85, %v510
  %v759 = vadd.f32 %v86, %v513
  %v760 = vadd.f32 %v87, %v518
  %v761 = vadd.f32 %v88, %v521
  %v762 = vadd.f32 %v89, %v526
  %v763 = vadd.f32 %v90, %v529
  %v764 = vadd.f32 %v91, %v534
  %v765 = vadd.f32 %v92, %v537
  %v766 = vadd.f32 %v93, %v542
  %v767 = vadd.f32 %v94, %v545
  %v768 = vadd.f32 %v95, %v550
  %v769 = vadd.f32 %v96, %v553
  %v770 = vadd.f32 %v97, %v558
  %v771 = vadd.f32 %v98, %v561
  %v772 = vadd.f32 %v99, %v566
  %v773 = vadd.f32 %v100, %v569
  %v774 = vadd.f32 %v101, %v574
  %v775 = vadd.f32 %v102, %v577
  %v776 = vadd.f32 %v103, %v582
  %v777 = vadd.f32 %v104, %v585
  %v778 = vadd.f32 %v105, %v590
  %v779 = vadd.f32 %v106, %v593
  %v780 = vadd.f32 %v107, %v598
  %v781 = vadd.f32 %v108, %v601
  %v782 = vadd.f32 %v109, %v606
  %v783 = vadd.f32 %v110, %v609
  %v784 = vadd.f32 %v111, %v614
  %v785 = vadd.f32 %v112, %v617
  %v786 = vadd.f32 %v113, %v622
  %v787 = vadd.f32 %v114, %v625
  %v788 = vadd.f32 %v115, %v630
  %v789 = vadd.f32 %v116, %v633
  %v790 = vadd.f32 %v117, %v638
  %v791 = vadd.f32 %v118, %v641
  %v792 = vadd.f32 %v119, %v646
  %v793 = vadd.f32 %v120, %v649
  %v794 = vadd.f32 %v121, %v654
  %v795 = vadd.f32 %v122, %v657
  %v796 = vadd.f32 %v123, %v662
  %v797 = vadd.f32 %v124, %v665
  %v798 = vadd.f32 %v125, %v670
  %v799 = vadd.f32 %v126, %v673
  %v800 = vadd.f32 %v127, %v678
  %v801 = vadd.f32 %v128, %v681
  %v802 = vadd.f32 %v129, %v686
  %v803 = vadd.f32 %v130, %v689
  %v804 = vadd.f32 %v131, %v694
  %v805 = vadd.f32 %v132, %v697
  %v806 = vadd.f32 %v133, %v702
  %v807 = vadd.f32 %v134, %v705
  %v808 = vadd.f32 %v135, %v710
  %v809 = vadd.f32 %v136, %v713
  %v810 = vadd.f32 %v137, %v718
  %v811 = vadd.f32 %v138, %v721
  %v812 = vadd.f32 %v139, %v726
  %v813 = vadd.f32 %v140, %v729
  %v814 = vadd.f32 %v141, %v734
  %v815 = vadd.f32 %v142, %v737
  %v816 = vadd.f32 %v143, %v742
  %v817 = vadd.f32 %v144, %v745
  %v818 = vadd.f32 %v145, %v750
  %v819 = vadd.f32 %v146, %v753
  %820 = vst [vmem:[#allocation2] sm:$0xff] %v756
  %821 = vst [vmem:[#allocation2 + $0x8] sm:$0xff] %v757
  %822 = vst [vmem:[#allocation2 + $0x10] sm:$0xff] %v758
  %823 = vst [vmem:[#allocation2 + $0x18] sm:$0xff] %v759
  %824 = vst [vmem:[#allocation2 + $0x20] sm:$0xff] %v760
  %825 = vst [vmem:[#allocation2 + $0x28] sm:$0xff] %v761
  %826 = vst [vmem:[#allocation2 + $0x30] sm:$0xff] %v762
  %827 = vst [vmem:[#allocation2 + $0x38] sm:$0xff] %v763
  %828 = vst [vmem:[#allocation2 + $0x40] sm:$0xff] %v764
  %829 = vst [vmem:[#allocation2 + $0x48] sm:$0xff] %v765
  %830 = vst [vmem:[#allocation2 + $0x50] sm:$0xff] %v766
  %831 = vst [vmem:[#allocation2 + $0x58] sm:$0xff] %v767
  %832 = vst [vmem:[#allocation2 + $0x60] sm:$0xff] %v768
  %833 = vst [vmem:[#allocation2 + $0x68] sm:$0xff] %v769
  %834 = vst [vmem:[#allocation2 + $0x70] sm:$0xff] %v770
  %835 = vst [vmem:[#allocation2 + $0x78] sm:$0xff] %v771
  %836 = vst [vmem:[#allocation2 + $0x80] sm:$0xff] %v772
  %837 = vst [vmem:[#allocation2 + $0x88] sm:$0xff] %v773
  %838 = vst [vmem:[#allocation2 + $0x90] sm:$0xff] %v774
  %839 = vst [vmem:[#allocation2 + $0x98] sm:$0xff] %v775
  %840 = vst [vmem:[#allocation2 + $0xa0] sm:$0xff] %v776
  %841 = vst [vmem:[#allocation2 + $0xa8] sm:$0xff] %v777
  %842 = vst [vmem:[#allocation2 + $0xb0] sm:$0xff] %v778
  %843 = vst [vmem:[#allocation2 + $0xb8] sm:$0xff] %v779
  %844 = vst [vmem:[#allocation2 + $0xc0] sm:$0xff] %v780
  %845 = vst [vmem:[#allocation2 + $0xc8] sm:$0xff] %v781
  %846 = vst [vmem:[#allocation2 + $0xd0] sm:$0xff] %v782
  %847 = vst [vmem:[#allocation2 + $0xd8] sm:$0xff] %v783
  %848 = vst [vmem:[#allocation2 + $0xe0] sm:$0xff] %v784
  %849 = vst [vmem:[#allocation2 + $0xe8] sm:$0xff] %v785
  %850 = vst [vmem:[#allocation2 + $0xf0] sm:$0xff] %v786
  %851 = vst [vmem:[#allocation2 + $0xf8] sm:$0xff] %v787
  %852 = vst [vmem:[#allocation2 + $0x100] sm:$0xff] %v788
  %853 = vst [vmem:[#allocation2 + $0x108] sm:$0xff] %v789
  %854 = vst [vmem:[#allocation2 + $0x110] sm:$0xff] %v790
  %855 = vst [vmem:[#allocation2 + $0x118] sm:$0xff] %v791
  %856 = vst [vmem:[#allocation2 + $0x120] sm:$0xff] %v792
  %857 = vst [vmem:[#allocation2 + $0x128] sm:$0xff] %v793
  %858 = vst [vmem:[#allocation2 + $0x130] sm:$0xff] %v794
  %859 = vst [vmem:[#allocation2 + $0x138] sm:$0xff] %v795
  %860 = vst [vmem:[#allocation2 + $0x140] sm:$0xff] %v796
  %861 = vst [vmem:[#allocation2 + $0x148] sm:$0xff] %v797
  %862 = vst [vmem:[#allocation2 + $0x150] sm:$0xff] %v798
  %863 = vst [vmem:[#allocation2 + $0x158] sm:$0xff] %v799
  %864 = vst [vmem:[#allocation2 + $0x160] sm:$0xff] %v800
  %865 = vst [vmem:[#allocation2 + $0x168] sm:$0xff] %v801
  %866 = vst [vmem:[#allocation2 + $0x170] sm:$0xff] %v802
  %867 = vst [vmem:[#allocation2 + $0x178] sm:$0xff] %v803
  %868 = vst [vmem:[#allocation2 + $0x180] sm:$0xff] %v804
  %869 = vst [vmem:[#allocation2 + $0x188] sm:$0xff] %v805
  %870 = vst [vmem:[#allocation2 + $0x190] sm:$0xff] %v806
  %871 = vst [vmem:[#allocation2 + $0x198] sm:$0xff] %v807
  %872 = vst [vmem:[#allocation2 + $0x1a0] sm:$0xff] %v808
  %873 = vst [vmem:[#allocation2 + $0x1a8] sm:$0xff] %v809
  %874 = vst [vmem:[#allocation2 + $0x1b0] sm:$0xff] %v810
  %875 = vst [vmem:[#allocation2 + $0x1b8] sm:$0xff] %v811
  %876 = vst [vmem:[#allocation2 + $0x1c0] sm:$0xff] %v812
  %877 = vst [vmem:[#allocation2 + $0x1c8] sm:$0xff] %v813
  %878 = vst [vmem:[#allocation2 + $0x1d0] sm:$0xff] %v814
  %879 = vst [vmem:[#allocation2 + $0x1d8] sm:$0xff] %v815
  %880 = vst [vmem:[#allocation2 + $0x1e0] sm:$0xff] %v816
  %881 = vst [vmem:[#allocation2 + $0x1e8] sm:$0xff] %v817
  %882 = vst [vmem:[#allocation2 + $0x1f0] sm:$0xff] %v818
  %883 = vst [vmem:[#allocation2 + $0x1f8] sm:$0xff] %v819
  // Predicated region
  $region18: #{forward.31} parent=0 // pred_check
    %p884 = pneg %p15
  $region19: #{forward.31} parent=0 // pred_check_branch
    %886 = sbr.rel (%p884) target = $region21
  $region20: #{forward.31} parent=0 // pred_region
    %v887 = vld [vmem:[#allocation2] sm:$0xff]
    %v888 = vld [vmem:[#allocation2 + $0x8] sm:$0xff]
    %v889 = vld [vmem:[#allocation2 + $0x10] sm:$0xff]
    %v890 = vld [vmem:[#allocation2 + $0x18] sm:$0xff]
    %v891 = vld [vmem:[#allocation2 + $0x20] sm:$0xff]
    %v892 = vld [vmem:[#allocation2 + $0x28] sm:$0xff]
    %v893 = vld [vmem:[#allocation2 + $0x30] sm:$0xff]
    %v894 = vld [vmem:[#allocation2 + $0x38] sm:$0xff]
    %v895 = vld [vmem:[#allocation2 + $0x40] sm:$0xff]
    %v896 = vld [vmem:[#allocation2 + $0x48] sm:$0xff]
    %v897 = vld [vmem:[#allocation2 + $0x50] sm:$0xff]
    %v898 = vld [vmem:[#allocation2 + $0x58] sm:$0xff]
    %v899 = vld [vmem:[#allocation2 + $0x60] sm:$0xff]
    %v900 = vld [vmem:[#allocation2 + $0x68] sm:$0xff]
    %v901 = vld [vmem:[#allocation2 + $0x70] sm:$0xff]
    %v902 = vld [vmem:[#allocation2 + $0x78] sm:$0xff]
    %v903 = vld [vmem:[#allocation2 + $0x80] sm:$0xff]
    %v904 = vld [vmem:[#allocation2 + $0x88] sm:$0xff]
    %v905 = vld [vmem:[#allocation2 + $0x90] sm:$0xff]
    %v906 = vld [vmem:[#allocation2 + $0x98] sm:$0xff]
    %v907 = vld [vmem:[#allocation2 + $0xa0] sm:$0xff]
    %v908 = vld [vmem:[#allocation2 + $0xa8] sm:$0xff]
    %v909 = vld [vmem:[#allocation2 + $0xb0] sm:$0xff]
    %v910 = vld [vmem:[#allocation2 + $0xb8] sm:$0xff]
    %v911 = vld [vmem:[#allocation2 + $0xc0] sm:$0xff]
    %v912 = vld [vmem:[#allocation2 + $0xc8] sm:$0xff]
    %v913 = vld [vmem:[#allocation2 + $0xd0] sm:$0xff]
    %v914 = vld [vmem:[#allocation2 + $0xd8] sm:$0xff]
    %v915 = vld [vmem:[#allocation2 + $0xe0] sm:$0xff]
    %v916 = vld [vmem:[#allocation2 + $0xe8] sm:$0xff]
    %v917 = vld [vmem:[#allocation2 + $0xf0] sm:$0xff]
    %v918 = vld [vmem:[#allocation2 + $0xf8] sm:$0xff]
    %v919 = vld [vmem:[#allocation2 + $0x100] sm:$0xff]
    %v920 = vld [vmem:[#allocation2 + $0x108] sm:$0xff]
    %v921 = vld [vmem:[#allocation2 + $0x110] sm:$0xff]
    %v922 = vld [vmem:[#allocation2 + $0x118] sm:$0xff]
    %v923 = vld [vmem:[#allocation2 + $0x120] sm:$0xff]
    %v924 = vld [vmem:[#allocation2 + $0x128] sm:$0xff]
    %v925 = vld [vmem:[#allocation2 + $0x130] sm:$0xff]
    %v926 = vld [vmem:[#allocation2 + $0x138] sm:$0xff]
    %v927 = vld [vmem:[#allocation2 + $0x140] sm:$0xff]
    %v928 = vld [vmem:[#allocation2 + $0x148] sm:$0xff]
    %v929 = vld [vmem:[#allocation2 + $0x150] sm:$0xff]
    %v930 = vld [vmem:[#allocation2 + $0x158] sm:$0xff]
    %v931 = vld [vmem:[#allocation2 + $0x160] sm:$0xff]
    %v932 = vld [vmem:[#allocation2 + $0x168] sm:$0xff]
    %v933 = vld [vmem:[#allocation2 + $0x170] sm:$0xff]
    %v934 = vld [vmem:[#allocation2 + $0x178] sm:$0xff]
    %v935 = vld [vmem:[#allocation2 + $0x180] sm:$0xff]
    %v936 = vld [vmem:[#allocation2 + $0x188] sm:$0xff]
    %v937 = vld [vmem:[#allocation2 + $0x190] sm:$0xff]
    %v938 = vld [vmem:[#allocation2 + $0x198] sm:$0xff]
    %v939 = vld [vmem:[#allocation2 + $0x1a0] sm:$0xff]
    %v940 = vld [vmem:[#allocation2 + $0x1a8] sm:$0xff]
    %v941 = vld [vmem:[#allocation2 + $0x1b0] sm:$0xff]
    %v942 = vld [vmem:[#allocation2 + $0x1b8] sm:$0xff]
    %v943 = vld [vmem:[#allocation2 + $0x1c0] sm:$0xff]
    %v944 = vld [vmem:[#allocation2 + $0x1c8] sm:$0xff]
    %v945 = vld [vmem:[#allocation2 + $0x1d0] sm:$0xff]
    %v946 = vld [vmem:[#allocation2 + $0x1d8] sm:$0xff]
    %v947 = vld [vmem:[#allocation2 + $0x1e0] sm:$0xff]
    %v948 = vld [vmem:[#allocation2 + $0x1e8] sm:$0xff]
    %v949 = vld [vmem:[#allocation2 + $0x1f0] sm:$0xff]
    %v950 = vld [vmem:[#allocation2 + $0x1f8] sm:$0xff]
    %v951 = vld [vmem:[%s2] sm:$0x1]
    %v953 = vlaneseq
    %v954 = vshrl.u32 %v953, 7
    %v955 = vsub.s32 0, %v954
    %v956 = vrot.slane %v951, %v955
    %v958 = vadd.f32 %v887, %v956
    %v959 = vadd.f32 %v888, %v956
    %v960 = vadd.f32 %v889, %v956
    %v961 = vadd.f32 %v890, %v956
    %v962 = vadd.f32 %v891, %v956
    %v963 = vadd.f32 %v892, %v956
    %v964 = vadd.f32 %v893, %v956
    %v965 = vadd.f32 %v894, %v956
    %v966 = vadd.f32 %v895, %v956
    %v967 = vadd.f32 %v896, %v956
    %v968 = vadd.f32 %v897, %v956
    %v969 = vadd.f32 %v898, %v956
    %v970 = vadd.f32 %v899, %v956
    %v971 = vadd.f32 %v900, %v956
    %v972 = vadd.f32 %v901, %v956
    %v973 = vadd.f32 %v902, %v956
    %v974 = vadd.f32 %v903, %v956
    %v975 = vadd.f32 %v904, %v956
    %v976 = vadd.f32 %v905, %v956
    %v977 = vadd.f32 %v906, %v956
    %v978 = vadd.f32 %v907, %v956
    %v979 = vadd.f32 %v908, %v956
    %v980 = vadd.f32 %v909, %v956
    %v981 = vadd.f32 %v910, %v956
    %v982 = vadd.f32 %v911, %v956
    %v983 = vadd.f32 %v912, %v956
    %v984 = vadd.f32 %v913, %v956
    %v985 = vadd.f32 %v914, %v956
    %v986 = vadd.f32 %v915, %v956
    %v987 = vadd.f32 %v916, %v956
    %v988 = vadd.f32 %v917, %v956
    %v989 = vadd.f32 %v918, %v956
    %v990 = vadd.f32 %v919, %v956
    %v991 = vadd.f32 %v920, %v956
    %v992 = vadd.f32 %v921, %v956
    %v993 = vadd.f32 %v922, %v956
    %v994 = vadd.f32 %v923, %v956
    %v995 = vadd.f32 %v924, %v956
    %v996 = vadd.f32 %v925, %v956
    %v997 = vadd.f32 %v926, %v956
    %v998 = vadd.f32 %v927, %v956
    %v999 = vadd.f32 %v928, %v956
    %v1000 = vadd.f32 %v929, %v956
    %v1001 = vadd.f32 %v930, %v956
    %v1002 = vadd.f32 %v931, %v956
    %v1003 = vadd.f32 %v932, %v956
    %v1004 = vadd.f32 %v933, %v956
    %v1005 = vadd.f32 %v934, %v956
    %v1006 = vadd.f32 %v935, %v956
    %v1007 = vadd.f32 %v936, %v956
    %v1008 = vadd.f32 %v937, %v956
    %v1009 = vadd.f32 %v938, %v956
    %v1010 = vadd.f32 %v939, %v956
    %v1011 = vadd.f32 %v940, %v956
    %v1012 = vadd.f32 %v941, %v956
    %v1013 = vadd.f32 %v942, %v956
    %v1014 = vadd.f32 %v943, %v956
    %v1015 = vadd.f32 %v944, %v956
    %v1016 = vadd.f32 %v945, %v956
    %v1017 = vadd.f32 %v946, %v956
    %v1018 = vadd.f32 %v947, %v956
    %v1019 = vadd.f32 %v948, %v956
    %v1020 = vadd.f32 %v949, %v956
    %v1021 = vadd.f32 %v950, %v956
    %v1022 = vxor.u32 %v958, 2147483648
    %v1023 = vxor.u32 %v959, 2147483648
    %v1024 = vxor.u32 %v960, 2147483648
    %v1025 = vxor.u32 %v961, 2147483648
    %v1026 = vxor.u32 %v962, 2147483648
    %v1027 = vxor.u32 %v963, 2147483648
    %v1028 = vxor.u32 %v964, 2147483648
    %v1029 = vxor.u32 %v965, 2147483648
    %v1030 = vxor.u32 %v966, 2147483648
    %v1031 = vxor.u32 %v967, 2147483648
    %v1032 = vxor.u32 %v968, 2147483648
    %v1033 = vxor.u32 %v969, 2147483648
    %v1034 = vxor.u32 %v970, 2147483648
    %v1035 = vxor.u32 %v971, 2147483648
    %v1036 = vxor.u32 %v972, 2147483648
    %v1037 = vxor.u32 %v973, 2147483648
    %v1038 = vxor.u32 %v974, 2147483648
    %v1039 = vxor.u32 %v975, 2147483648
    %v1040 = vxor.u32 %v976, 2147483648
    %v1041 = vxor.u32 %v977, 2147483648
    %v1042 = vxor.u32 %v978, 2147483648
    %v1043 = vxor.u32 %v979, 2147483648
    %v1044 = vxor.u32 %v980, 2147483648
    %v1045 = vxor.u32 %v981, 2147483648
    %v1046 = vxor.u32 %v982, 2147483648
    %v1047 = vxor.u32 %v983, 2147483648
    %v1048 = vxor.u32 %v984, 2147483648
    %v1049 = vxor.u32 %v985, 2147483648
    %v1050 = vxor.u32 %v986, 2147483648
    %v1051 = vxor.u32 %v987, 2147483648
    %v1052 = vxor.u32 %v988, 2147483648
    %v1053 = vxor.u32 %v989, 2147483648
    %v1054 = vxor.u32 %v990, 2147483648
    %v1055 = vxor.u32 %v991, 2147483648
    %v1056 = vxor.u32 %v992, 2147483648
    %v1057 = vxor.u32 %v993, 2147483648
    %v1058 = vxor.u32 %v994, 2147483648
    %v1059 = vxor.u32 %v995, 2147483648
    %v1060 = vxor.u32 %v996, 2147483648
    %v1061 = vxor.u32 %v997, 2147483648
    %v1062 = vxor.u32 %v998, 2147483648
    %v1063 = vxor.u32 %v999, 2147483648
    %v1064 = vxor.u32 %v1000, 2147483648
    %v1065 = vxor.u32 %v1001, 2147483648
    %v1066 = vxor.u32 %v1002, 2147483648
    %v1067 = vxor.u32 %v1003, 2147483648
    %v1068 = vxor.u32 %v1004, 2147483648
    %v1069 = vxor.u32 %v1005, 2147483648
    %v1070 = vxor.u32 %v1006, 2147483648
    %v1071 = vxor.u32 %v1007, 2147483648
    %v1072 = vxor.u32 %v1008, 2147483648
    %v1073 = vxor.u32 %v1009, 2147483648
    %v1074 = vxor.u32 %v1010, 2147483648
    %v1075 = vxor.u32 %v1011, 2147483648
    %v1076 = vxor.u32 %v1012, 2147483648
    %v1077 = vxor.u32 %v1013, 2147483648
    %v1078 = vxor.u32 %v1014, 2147483648
    %v1079 = vxor.u32 %v1015, 2147483648
    %v1080 = vxor.u32 %v1016, 2147483648
    %v1081 = vxor.u32 %v1017, 2147483648
    %v1082 = vxor.u32 %v1018, 2147483648
    %v1083 = vxor.u32 %v1019, 2147483648
    %v1084 = vxor.u32 %v1020, 2147483648
    %v1085 = vxor.u32 %v1021, 2147483648
    %v1086 = vmul.f32 %v1022, 1.442695
    %v1087 = vpow.pop %v1086
    %v1088 = vmul.f32 %v1023, 1.442695
    %v1089 = vpow.pop %v1088
    %v1090 = vmul.f32 %v1024, 1.442695
    %v1091 = vpow.pop %v1090
    %v1092 = vmul.f32 %v1025, 1.442695
    %v1093 = vpow.pop %v1092
    %v1094 = vmul.f32 %v1026, 1.442695
    %v1095 = vpow.pop %v1094
    %v1096 = vmul.f32 %v1027, 1.442695
    %v1097 = vpow.pop %v1096
    %v1098 = vmul.f32 %v1028, 1.442695
    %v1099 = vpow.pop %v1098
    %v1100 = vmul.f32 %v1029, 1.442695
    %v1101 = vpow.pop %v1100
    %v1102 = vmul.f32 %v1030, 1.442695
    %v1103 = vpow.pop %v1102
    %v1104 = vmul.f32 %v1031, 1.442695
    %v1105 = vpow.pop %v1104
    %v1106 = vmul.f32 %v1032, 1.442695
    %v1107 = vpow.pop %v1106
    %v1108 = vmul.f32 %v1033, 1.442695
    %v1109 = vpow.pop %v1108
    %v1110 = vmul.f32 %v1034, 1.442695
    %v1111 = vpow.pop %v1110
    %v1112 = vmul.f32 %v1035, 1.442695
    %v1113 = vpow.pop %v1112
    %v1114 = vmul.f32 %v1036, 1.442695
    %v1115 = vpow.pop %v1114
    %v1116 = vmul.f32 %v1037, 1.442695
    %v1117 = vpow.pop %v1116
    %v1118 = vmul.f32 %v1038, 1.442695
    %v1119 = vpow.pop %v1118
    %v1120 = vmul.f32 %v1039, 1.442695
    %v1121 = vpow.pop %v1120
    %v1122 = vmul.f32 %v1040, 1.442695
    %v1123 = vpow.pop %v1122
    %v1124 = vmul.f32 %v1041, 1.442695
    %v1125 = vpow.pop %v1124
    %v1126 = vmul.f32 %v1042, 1.442695
    %v1127 = vpow.pop %v1126
    %v1128 = vmul.f32 %v1043, 1.442695
    %v1129 = vpow.pop %v1128
    %v1130 = vmul.f32 %v1044, 1.442695
    %v1131 = vpow.pop %v1130
    %v1132 = vmul.f32 %v1045, 1.442695
    %v1133 = vpow.pop %v1132
    %v1134 = vmul.f32 %v1046, 1.442695
    %v1135 = vpow.pop %v1134
    %v1136 = vmul.f32 %v1047, 1.442695
    %v1137 = vpow.pop %v1136
    %v1138 = vmul.f32 %v1048, 1.442695
    %v1139 = vpow.pop %v1138
    %v1140 = vmul.f32 %v1049, 1.442695
    %v1141 = vpow.pop %v1140
    %v1142 = vmul.f32 %v1050, 1.442695
    %v1143 = vpow.pop %v1142
    %v1144 = vmul.f32 %v1051, 1.442695
    %v1145 = vpow.pop %v1144
    %v1146 = vmul.f32 %v1052, 1.442695
    %v1147 = vpow.pop %v1146
    %v1148 = vmul.f32 %v1053, 1.442695
    %v1149 = vpow.pop %v1148
    %v1150 = vmul.f32 %v1054, 1.442695
    %v1151 = vpow.pop %v1150
    %v1152 = vmul.f32 %v1055, 1.442695
    %v1153 = vpow.pop %v1152
    %v1154 = vmul.f32 %v1056, 1.442695
    %v1155 = vpow.pop %v1154
    %v1156 = vmul.f32 %v1057, 1.442695
    %v1157 = vpow.pop %v1156
    %v1158 = vmul.f32 %v1058, 1.442695
    %v1159 = vpow.pop %v1158
    %v1160 = vmul.f32 %v1059, 1.442695
    %v1161 = vpow.pop %v1160
    %v1162 = vmul.f32 %v1060, 1.442695
    %v1163 = vpow.pop %v1162
    %v1164 = vmul.f32 %v1061, 1.442695
    %v1165 = vpow.pop %v1164
    %v1166 = vmul.f32 %v1062, 1.442695
    %v1167 = vpow.pop %v1166
    %v1168 = vmul.f32 %v1063, 1.442695
    %v1169 = vpow.pop %v1168
    %v1170 = vmul.f32 %v1064, 1.442695
    %v1171 = vpow.pop %v1170
    %v1172 = vmul.f32 %v1065, 1.442695
    %v1173 = vpow.pop %v1172
    %v1174 = vmul.f32 %v1066, 1.442695
    %v1175 = vpow.pop %v1174
    %v1176 = vmul.f32 %v1067, 1.442695
    %v1177 = vpow.pop %v1176
    %v1178 = vmul.f32 %v1068, 1.442695
    %v1179 = vpow.pop %v1178
    %v1180 = vmul.f32 %v1069, 1.442695
    %v1181 = vpow.pop %v1180
    %v1182 = vmul.f32 %v1070, 1.442695
    %v1183 = vpow.pop %v1182
    %v1184 = vmul.f32 %v1071, 1.442695
    %v1185 = vpow.pop %v1184
    %v1186 = vmul.f32 %v1072, 1.442695
    %v1187 = vpow.pop %v1186
    %v1188 = vmul.f32 %v1073, 1.442695
    %v1189 = vpow.pop %v1188
    %v1190 = vmul.f32 %v1074, 1.442695
    %v1191 = vpow.pop %v1190
    %v1192 = vmul.f32 %v1075, 1.442695
    %v1193 = vpow.pop %v1192
    %v1194 = vmul.f32 %v1076, 1.442695
    %v1195 = vpow.pop %v1194
    %v1196 = vmul.f32 %v1077, 1.442695
    %v1197 = vpow.pop %v1196
    %v1198 = vmul.f32 %v1078, 1.442695
    %v1199 = vpow.pop %v1198
    %v1200 = vmul.f32 %v1079, 1.442695
    %v1201 = vpow.pop %v1200
    %v1202 = vmul.f32 %v1080, 1.442695
    %v1203 = vpow.pop %v1202
    %v1204 = vmul.f32 %v1081, 1.442695
    %v1205 = vpow.pop %v1204
    %v1206 = vmul.f32 %v1082, 1.442695
    %v1207 = vpow.pop %v1206
    %v1208 = vmul.f32 %v1083, 1.442695
    %v1209 = vpow.pop %v1208
    %v1210 = vmul.f32 %v1084, 1.442695
    %v1211 = vpow.pop %v1210
    %v1212 = vmul.f32 %v1085, 1.442695
    %v1213 = vpow.pop %v1212
    %v1214 = vadd.f32 %v1087, 1.0
    %v1215 = vadd.f32 %v1089, 1.0
    %v1216 = vadd.f32 %v1091, 1.0
    %v1217 = vadd.f32 %v1093, 1.0
    %v1218 = vadd.f32 %v1095, 1.0
    %v1219 = vadd.f32 %v1097, 1.0
    %v1220 = vadd.f32 %v1099, 1.0
    %v1221 = vadd.f32 %v1101, 1.0
    %v1222 = vadd.f32 %v1103, 1.0
    %v1223 = vadd.f32 %v1105, 1.0
    %v1224 = vadd.f32 %v1107, 1.0
    %v1225 = vadd.f32 %v1109, 1.0
    %v1226 = vadd.f32 %v1111, 1.0
    %v1227 = vadd.f32 %v1113, 1.0
    %v1228 = vadd.f32 %v1115, 1.0
    %v1229 = vadd.f32 %v1117, 1.0
    %v1230 = vadd.f32 %v1119, 1.0
    %v1231 = vadd.f32 %v1121, 1.0
    %v1232 = vadd.f32 %v1123, 1.0
    %v1233 = vadd.f32 %v1125, 1.0
    %v1234 = vadd.f32 %v1127, 1.0
    %v1235 = vadd.f32 %v1129, 1.0
    %v1236 = vadd.f32 %v1131, 1.0
    %v1237 = vadd.f32 %v1133, 1.0
    %v1238 = vadd.f32 %v1135, 1.0
    %v1239 = vadd.f32 %v1137, 1.0
    %v1240 = vadd.f32 %v1139, 1.0
    %v1241 = vadd.f32 %v1141, 1.0
    %v1242 = vadd.f32 %v1143, 1.0
    %v1243 = vadd.f32 %v1145, 1.0
    %v1244 = vadd.f32 %v1147, 1.0
    %v1245 = vadd.f32 %v1149, 1.0
    %v1246 = vadd.f32 %v1151, 1.0
    %v1247 = vadd.f32 %v1153, 1.0
    %v1248 = vadd.f32 %v1155, 1.0
    %v1249 = vadd.f32 %v1157, 1.0
    %v1250 = vadd.f32 %v1159, 1.0
    %v1251 = vadd.f32 %v1161, 1.0
    %v1252 = vadd.f32 %v1163, 1.0
    %v1253 = vadd.f32 %v1165, 1.0
    %v1254 = vadd.f32 %v1167, 1.0
    %v1255 = vadd.f32 %v1169, 1.0
    %v1256 = vadd.f32 %v1171, 1.0
    %v1257 = vadd.f32 %v1173, 1.0
    %v1258 = vadd.f32 %v1175, 1.0
    %v1259 = vadd.f32 %v1177, 1.0
    %v1260 = vadd.f32 %v1179, 1.0
    %v1261 = vadd.f32 %v1181, 1.0
    %v1262 = vadd.f32 %v1183, 1.0
    %v1263 = vadd.f32 %v1185, 1.0
    %v1264 = vadd.f32 %v1187, 1.0
    %v1265 = vadd.f32 %v1189, 1.0
    %v1266 = vadd.f32 %v1191, 1.0
    %v1267 = vadd.f32 %v1193, 1.0
    %v1268 = vadd.f32 %v1195, 1.0
    %v1269 = vadd.f32 %v1197, 1.0
    %v1270 = vadd.f32 %v1199, 1.0
    %v1271 = vadd.f32 %v1201, 1.0
    %v1272 = vadd.f32 %v1203, 1.0
    %v1273 = vadd.f32 %v1205, 1.0
    %v1274 = vadd.f32 %v1207, 1.0
    %v1275 = vadd.f32 %v1209, 1.0
    %v1276 = vadd.f32 %v1211, 1.0
    %v1277 = vadd.f32 %v1213, 1.0
    %v1278 = vrcp.pop %v1214
    %v1279 = vmul.f32 1.0, %v1278
    %v1280 = vrcp.pop %v1215
    %v1281 = vmul.f32 1.0, %v1280
    %v1282 = vrcp.pop %v1216
    %v1283 = vmul.f32 1.0, %v1282
    %v1284 = vrcp.pop %v1217
    %v1285 = vmul.f32 1.0, %v1284
    %v1286 = vrcp.pop %v1218
    %v1287 = vmul.f32 1.0, %v1286
    %v1288 = vrcp.pop %v1219
    %v1289 = vmul.f32 1.0, %v1288
    %v1290 = vrcp.pop %v1220
    %v1291 = vmul.f32 1.0, %v1290
    %v1292 = vrcp.pop %v1221
    %v1293 = vmul.f32 1.0, %v1292
    %v1294 = vrcp.pop %v1222
    %v1295 = vmul.f32 1.0, %v1294
    %v1296 = vrcp.pop %v1223
    %v1297 = vmul.f32 1.0, %v1296
    %v1298 = vrcp.pop %v1224
    %v1299 = vmul.f32 1.0, %v1298
    %v1300 = vrcp.pop %v1225
    %v1301 = vmul.f32 1.0, %v1300
    %v1302 = vrcp.pop %v1226
    %v1303 = vmul.f32 1.0, %v1302
    %v1304 = vrcp.pop %v1227
    %v1305 = vmul.f32 1.0, %v1304
    %v1306 = vrcp.pop %v1228
    %v1307 = vmul.f32 1.0, %v1306
    %v1308 = vrcp.pop %v1229
    %v1309 = vmul.f32 1.0, %v1308
    %v1310 = vrcp.pop %v1230
    %v1311 = vmul.f32 1.0, %v1310
    %v1312 = vrcp.pop %v1231
    %v1313 = vmul.f32 1.0, %v1312
    %v1314 = vrcp.pop %v1232
    %v1315 = vmul.f32 1.0, %v1314
    %v1316 = vrcp.pop %v1233
    %v1317 = vmul.f32 1.0, %v1316
    %v1318 = vrcp.pop %v1234
    %v1319 = vmul.f32 1.0, %v1318
    %v1320 = vrcp.pop %v1235
    %v1321 = vmul.f32 1.0, %v1320
    %v1322 = vrcp.pop %v1236
    %v1323 = vmul.f32 1.0, %v1322
    %v1324 = vrcp.pop %v1237
    %v1325 = vmul.f32 1.0, %v1324
    %v1326 = vrcp.pop %v1238
    %v1327 = vmul.f32 1.0, %v1326
    %v1328 = vrcp.pop %v1239
    %v1329 = vmul.f32 1.0, %v1328
    %v1330 = vrcp.pop %v1240
    %v1331 = vmul.f32 1.0, %v1330
    %v1332 = vrcp.pop %v1241
    %v1333 = vmul.f32 1.0, %v1332
    %v1334 = vrcp.pop %v1242
    %v1335 = vmul.f32 1.0, %v1334
    %v1336 = vrcp.pop %v1243
    %v1337 = vmul.f32 1.0, %v1336
    %v1338 = vrcp.pop %v1244
    %v1339 = vmul.f32 1.0, %v1338
    %v1340 = vrcp.pop %v1245
    %v1341 = vmul.f32 1.0, %v1340
    %v1342 = vrcp.pop %v1246
    %v1343 = vmul.f32 1.0, %v1342
    %v1344 = vrcp.pop %v1247
    %v1345 = vmul.f32 1.0, %v1344
    %v1346 = vrcp.pop %v1248
    %v1347 = vmul.f32 1.0, %v1346
    %v1348 = vrcp.pop %v1249
    %v1349 = vmul.f32 1.0, %v1348
    %v1350 = vrcp.pop %v1250
    %v1351 = vmul.f32 1.0, %v1350
    %v1352 = vrcp.pop %v1251
    %v1353 = vmul.f32 1.0, %v1352
    %v1354 = vrcp.pop %v1252
    %v1355 = vmul.f32 1.0, %v1354
    %v1356 = vrcp.pop %v1253
    %v1357 = vmul.f32 1.0, %v1356
    %v1358 = vrcp.pop %v1254
    %v1359 = vmul.f32 1.0, %v1358
    %v1360 = vrcp.pop %v1255
    %v1361 = vmul.f32 1.0, %v1360
    %v1362 = vrcp.pop %v1256
    %v1363 = vmul.f32 1.0, %v1362
    %v1364 = vrcp.pop %v1257
    %v1365 = vmul.f32 1.0, %v1364
    %v1366 = vrcp.pop %v1258
    %v1367 = vmul.f32 1.0, %v1366
    %v1368 = vrcp.pop %v1259
    %v1369 = vmul.f32 1.0, %v1368
    %v1370 = vrcp.pop %v1260
    %v1371 = vmul.f32 1.0, %v1370
    %v1372 = vrcp.pop %v1261
    %v1373 = vmul.f32 1.0, %v1372
    %v1374 = vrcp.pop %v1262
    %v1375 = vmul.f32 1.0, %v1374
    %v1376 = vrcp.pop %v1263
    %v1377 = vmul.f32 1.0, %v1376
    %v1378 = vrcp.pop %v1264
    %v1379 = vmul.f32 1.0, %v1378
    %v1380 = vrcp.pop %v1265
    %v1381 = vmul.f32 1.0, %v1380
    %v1382 = vrcp.pop %v1266
    %v1383 = vmul.f32 1.0, %v1382
    %v1384 = vrcp.pop %v1267
    %v1385 = vmul.f32 1.0, %v1384
    %v1386 = vrcp.pop %v1268
    %v1387 = vmul.f32 1.0, %v1386
    %v1388 = vrcp.pop %v1269
    %v1389 = vmul.f32 1.0, %v1388
    %v1390 = vrcp.pop %v1270
    %v1391 = vmul.f32 1.0, %v1390
    %v1392 = vrcp.pop %v1271
    %v1393 = vmul.f32 1.0, %v1392
    %v1394 = vrcp.pop %v1272
    %v1395 = vmul.f32 1.0, %v1394
    %v1396 = vrcp.pop %v1273
    %v1397 = vmul.f32 1.0, %v1396
    %v1398 = vrcp.pop %v1274
    %v1399 = vmul.f32 1.0, %v1398
    %v1400 = vrcp.pop %v1275
    %v1401 = vmul.f32 1.0, %v1400
    %v1402 = vrcp.pop %v1276
    %v1403 = vmul.f32 1.0, %v1402
    %v1404 = vrcp.pop %v1277
    %v1405 = vmul.f32 1.0, %v1404
    %1406 = vst [vmem:[%s3] sm:$0xff] %v1279
    %1407 = vst [vmem:[%s3 + $0x8] sm:$0xff] %v1281
    %1408 = vst [vmem:[%s3 + $0x10] sm:$0xff] %v1283
    %1409 = vst [vmem:[%s3 + $0x18] sm:$0xff] %v1285
    %1410 = vst [vmem:[%s3 + $0x20] sm:$0xff] %v1287
    %1411 = vst [vmem:[%s3 + $0x28] sm:$0xff] %v1289
    %1412 = vst [vmem:[%s3 + $0x30] sm:$0xff] %v1291
    %1413 = vst [vmem:[%s3 + $0x38] sm:$0xff] %v1293
    %1414 = vst [vmem:[%s3 + $0x40] sm:$0xff] %v1295
    %1415 = vst [vmem:[%s3 + $0x48] sm:$0xff] %v1297
    %1416 = vst [vmem:[%s3 + $0x50] sm:$0xff] %v1299
    %1417 = vst [vmem:[%s3 + $0x58] sm:$0xff] %v1301
    %1418 = vst [vmem:[%s3 + $0x60] sm:$0xff] %v1303
    %1419 = vst [vmem:[%s3 + $0x68] sm:$0xff] %v1305
    %1420 = vst [vmem:[%s3 + $0x70] sm:$0xff] %v1307
    %1421 = vst [vmem:[%s3 + $0x78] sm:$0xff] %v1309
    %1422 = vst [vmem:[%s3 + $0x80] sm:$0xff] %v1311
    %1423 = vst [vmem:[%s3 + $0x88] sm:$0xff] %v1313
    %1424 = vst [vmem:[%s3 + $0x90] sm:$0xff] %v1315
    %1425 = vst [vmem:[%s3 + $0x98] sm:$0xff] %v1317
    %1426 = vst [vmem:[%s3 + $0xa0] sm:$0xff] %v1319
    %1427 = vst [vmem:[%s3 + $0xa8] sm:$0xff] %v1321
    %1428 = vst [vmem:[%s3 + $0xb0] sm:$0xff] %v1323
    %1429 = vst [vmem:[%s3 + $0xb8] sm:$0xff] %v1325
    %1430 = vst [vmem:[%s3 + $0xc0] sm:$0xff] %v1327
    %1431 = vst [vmem:[%s3 + $0xc8] sm:$0xff] %v1329
    %1432 = vst [vmem:[%s3 + $0xd0] sm:$0xff] %v1331
    %1433 = vst [vmem:[%s3 + $0xd8] sm:$0xff] %v1333
    %1434 = vst [vmem:[%s3 + $0xe0] sm:$0xff] %v1335
    %1435 = vst [vmem:[%s3 + $0xe8] sm:$0xff] %v1337
    %1436 = vst [vmem:[%s3 + $0xf0] sm:$0xff] %v1339
    %1437 = vst [vmem:[%s3 + $0xf8] sm:$0xff] %v1341
    %1438 = vst [vmem:[%s3 + $0x100] sm:$0xff] %v1343
    %1439 = vst [vmem:[%s3 + $0x108] sm:$0xff] %v1345
    %1440 = vst [vmem:[%s3 + $0x110] sm:$0xff] %v1347
    %1441 = vst [vmem:[%s3 + $0x118] sm:$0xff] %v1349
    %1442 = vst [vmem:[%s3 + $0x120] sm:$0xff] %v1351
    %1443 = vst [vmem:[%s3 + $0x128] sm:$0xff] %v1353
    %1444 = vst [vmem:[%s3 + $0x130] sm:$0xff] %v1355
    %1445 = vst [vmem:[%s3 + $0x138] sm:$0xff] %v1357
    %1446 = vst [vmem:[%s3 + $0x140] sm:$0xff] %v1359
    %1447 = vst [vmem:[%s3 + $0x148] sm:$0xff] %v1361
    %1448 = vst [vmem:[%s3 + $0x150] sm:$0xff] %v1363
    %1449 = vst [vmem:[%s3 + $0x158] sm:$0xff] %v1365
    %1450 = vst [vmem:[%s3 + $0x160] sm:$0xff] %v1367
    %1451 = vst [vmem:[%s3 + $0x168] sm:$0xff] %v1369
    %1452 = vst [vmem:[%s3 + $0x170] sm:$0xff] %v1371
    %1453 = vst [vmem:[%s3 + $0x178] sm:$0xff] %v1373
    %1454 = vst [vmem:[%s3 + $0x180] sm:$0xff] %v1375
    %1455 = vst [vmem:[%s3 + $0x188] sm:$0xff] %v1377
    %1456 = vst [vmem:[%s3 + $0x190] sm:$0xff] %v1379
    %1457 = vst [vmem:[%s3 + $0x198] sm:$0xff] %v1381
    %1458 = vst [vmem:[%s3 + $0x1a0] sm:$0xff] %v1383
    %1459 = vst [vmem:[%s3 + $0x1a8] sm:$0xff] %v1385
    %1460 = vst [vmem:[%s3 + $0x1b0] sm:$0xff] %v1387
    %1461 = vst [vmem:[%s3 + $0x1b8] sm:$0xff] %v1389
    %1462 = vst [vmem:[%s3 + $0x1c0] sm:$0xff] %v1391
    %1463 = vst [vmem:[%s3 + $0x1c8] sm:$0xff] %v1393
    %1464 = vst [vmem:[%s3 + $0x1d0] sm:$0xff] %v1395
    %1465 = vst [vmem:[%s3 + $0x1d8] sm:$0xff] %v1397
    %1466 = vst [vmem:[%s3 + $0x1e0] sm:$0xff] %v1399
    %1467 = vst [vmem:[%s3 + $0x1e8] sm:$0xff] %v1401
    %1468 = vst [vmem:[%s3 + $0x1f0] sm:$0xff] %v1403
    %1469 = vst [vmem:[%s3 + $0x1f8] sm:$0xff] %v1405
  $region21: #{forward.31} parent=0 // pred_fallthru
    _
  // Predicated region
  $region22: #{forward.31} parent=0 // pred_check
    _
  $region23: #{forward.31} parent=0 // pred_check_branch
    %1471 = sbr.rel (0) target = $region25
  $region24: #{forward.31} parent=0 // pred_region
    _
  $region25: #{forward.31} parent=0 // pred_fallthru
    _
  // Predicated region
  $region26: #{forward.31} parent=0 // pred_check
    _
  $region27: #{forward.31} parent=0 // pred_check_branch
    %1473 = sbr.rel (0) target = $region29
  $region28: #{forward.31} parent=0 // pred_region
    _
  $region29: #{forward.31} parent=0 // pred_fallthru
    _

</llo_original>
